<compile_context>
chip_gen: v5e
topology: v5e:2x2
jax: 0.10.0
libtpu: 0.0.40
codegen_flags: <defaults>
</compile_context>

<pallas_src>
import functools

import jax
import jax.numpy as jnp
from jax import lax
from jax.experimental import pallas as pl
from jax.experimental.pallas import tpu as pltpu


# --------------------------- in-kernel helpers -------------------------------

def _ln(x, g, b):
    # torch.nn.LayerNorm: biased variance, eps=1e-5
    mu = jnp.mean(x, axis=-1, keepdims=True)
    var = jnp.mean((x - mu) ** 2, axis=-1, keepdims=True)
    return (x - mu) * lax.rsqrt(var + 1e-5) * g + b


def _gelu_exact(x):
    # exact (erf-based) GELU, matching torch.nn.functional.gelu default
    return 0.5 * x * (1.0 + lax.erf(x * (2.0 ** -0.5)))


def _mha(xn, cn, wq, wk, wv, wo, bo, scale):
    """Multi-head attention on pre-normed inputs.

    xn: (nq, qd), cn: (nk, cd)
    wq: (H, qd, dh), wk/wv: (H, cd, dh), wo: (H, dh, out), bo: (1, out)
    Head axis is a dot_general batch dim -> no sub-128 lane slicing.
    """
    H = wq.shape[0]
    xb = jnp.broadcast_to(xn[None], (H,) + xn.shape)        # (H, nq, qd)
    cb = jnp.broadcast_to(cn[None], (H,) + cn.shape)        # (H, nk, cd)
    proj = (((2,), (1,)), ((0,), (0,)))                      # (H,a,b)x(H,b,c)->(H,a,c)

    q = lax.dot_general(xb, wq, proj, preferred_element_type=jnp.float32) * scale
    k = lax.dot_general(cb, wk, proj, preferred_element_type=jnp.float32)
    v = lax.dot_general(cb, wv, proj, preferred_element_type=jnp.float32)

    # scores: (H, nq, nk), contract dh without materializing k^T
    s = lax.dot_general(q, k, (((2,), (2,)), ((0,), (0,))),
                        preferred_element_type=jnp.float32)
    s = s - jnp.max(s, axis=-1, keepdims=True)               # stable softmax
    p = jnp.exp(s)
    p = p * pl.reciprocal(jnp.sum(p, axis=-1, keepdims=True), approx=True)

    o = lax.dot_general(p, v, (((2,), (1,)), ((0,), (0,))),
                        preferred_element_type=jnp.float32)   # (H, nq, dh)
    out = lax.dot_general(o, wo, proj,
                          preferred_element_type=jnp.float32)  # (H, nq, out)
    return jnp.sum(out, axis=0) + bo                           # (nq, out)


def _ff_block(x, g, b, w1, b1, w2, b2):
    """PreNorm + Linear + GEGLU + Linear + residual (all operands in VMEM)."""
    xn = _ln(x, g, b)
    h = jnp.dot(xn, w1, preferred_element_type=jnp.float32) + b1
    half = h.shape[-1] // 2                                   # 128-aligned split
    act = h[:, :half] * _gelu_exact(h[:, half:])
    return jnp.dot(act, w2, preferred_element_type=jnp.float32) + b2 + x


# --------------------------- the single fused kernel -------------------------

def _perceiver_kernel(*refs, depth, scale_cross, scale_latent):
    it = iter(refs)
    data_ref = next(it)        # (seq, dim)        -- per-batch block
    latents_ref = next(it)     # (num_latents, LD) -- shared, resident
    query_ref = next(it)       # (1, QD)           -- shared, resident

    def take(n):
        return [next(it)[...] for _ in range(n)]

    data = data_ref[...]
    x = latents_ref[...]

    # --- encoder cross-attention (+ residual) ---
    ng, nb, ncg, ncb, wq, wk, wv, wo, bo = take(9)
    x = _mha(_ln(x, ng, nb), _ln(data, ncg, ncb),
             wq, wk, wv, wo, bo, scale_cross) + x

    # --- encoder feed-forward (+ residual) ---
    ng, nb, w1, b1, w2, b2 = take(6)
    x = _ff_block(x, ng, nb, w1, b1, w2, b2)

    # --- latent self-attention stack (unrolled over depth) ---
    for _ in range(depth):
        ng, nb, wq, wk, wv, wo, bo = take(7)
        xn = _ln(x, ng, nb)                      # torch: context defaults to normed x
        x = _mha(xn, xn, wq, wk, wv, wo, bo, scale_latent) + x
        ng, nb, w1, b1, w2, b2 = take(6)
        x = _ff_block(x, ng, nb, w1, b1, w2, b2)

    # --- decoder cross-attention (no residual) + to_logits ---
    ng, nb, ncg, ncb, wq, wk, wv, wo, bo = take(9)
    lat = _mha(_ln(query_ref[...], ng, nb), _ln(x, ncg, ncb),
               wq, wk, wv, wo, bo, scale_cross)               # (1, QD)
    wl, bl = take(2)
    o_ref = next(it)
    o_ref[...] = jnp.dot(lat, wl, preferred_element_type=jnp.float32) + bl


# --------------------------- wrapper ------------------------------------------

def perceiver_io_forward(params, data, cfg):
    b, seq, d = data.shape
    n_lat, ld = params["latents"].shape
    qd = params["out_query"].shape[1]
    logits_dim = params["to_logits_b"].shape[1]

    inputs = [data, params["latents"], params["out_query"]]
    in_specs = [
        pl.BlockSpec((None, seq, d), lambda i: (i, 0, 0)),     # batch-squeezed
        pl.BlockSpec((n_lat, ld), lambda i: (0, 0)),           # resident
        pl.BlockSpec((1, qd), lambda i: (0, 0)),               # resident
    ]

    def add(*arrs):
        for a in arrs:
            inputs.append(a)
            nd = a.ndim
            # constant block index -> loaded into VMEM once, stays resident
            in_specs.append(pl.BlockSpec(a.shape, lambda i, _nd=nd: (0,) * _nd))

    def add_attn(p):
        add(p["norm_g"], p["norm_b"])
        if "norm_ctx_g" in p:
            add(p["norm_ctx_g"], p["norm_ctx_b"])
        a = p["attn"]
        add(a["wq"], a["wk"], a["wv"], a["wo"], a["bo"])

    def add_ff(p):
        f = p["ff"]
        add(p["norm_g"], p["norm_b"], f["w1"], f["b1"], f["w2"], f["b2"])

    add_attn(params["cross_attn"])
    add_ff(params["cross_ff"])
    for layer in params["layers"]:
        add_attn(layer["attn_block"])
        add_ff(layer["ff_block"])
    add_attn(params["decoder_cross_attn"])
    add(params["to_logits_w"], params["to_logits_b"])

    kern = functools.partial(
        _perceiver_kernel,
        depth=cfg["depth"],
        scale_cross=cfg["cross_dim_head"] ** -0.5,
        scale_latent=cfg["latent_dim_head"] ** -0.5,
    )

    # --- advisory cost estimate ---
    def attn_fl(nq_, nk_, qd_, cd_, h_, dh_, od_):
        inner = h_ * dh_
        return 2 * (nq_ * qd_ * inner + 2 * nk_ * cd_ * inner
                    + 2 * h_ * nq_ * nk_ * dh_ + nq_ * inner * od_)

    def ff_fl(n_, d_):
        return 2 * (n_ * d_ * d_ * 8 + n_ * 4 * d_ * d_)

    per_b = (attn_fl(n_lat, seq, ld, d, cfg["cross_heads"], cfg["cross_dim_head"], ld)
             + ff_fl(n_lat, ld)
             + cfg["depth"] * (attn_fl(n_lat, n_lat, ld, ld, cfg["latent_heads"],
                                       cfg["latent_dim_head"], ld) + ff_fl(n_lat, ld))
             + attn_fl(1, n_lat, qd, ld, cfg["cross_heads"], cfg["cross_dim_head"], qd)
             + 2 * qd * logits_dim)
    transc = b * (cfg["cross_heads"] * n_lat * seq + 4 * n_lat * ld
                  + cfg["depth"] * (cfg["latent_heads"] * n_lat * n_lat + 4 * n_lat * ld)
                  + cfg["cross_heads"] * n_lat)
    bytes_accessed = 4 * (sum(int(a.size) for a in inputs) + b * logits_dim)

    return pl.pallas_call(
        kern,
        out_shape=jax.ShapeDtypeStruct((b, 1, logits_dim), jnp.float32),
        grid=(b,),
        in_specs=in_specs,
        out_specs=pl.BlockSpec((None, 1, logits_dim), lambda i: (i, 0, 0)),
        compiler_params=pltpu.CompilerParams(dimension_semantics=("parallel",)),
        cost_estimate=pl.CostEstimate(flops=b * per_b, transcendentals=transc,
                                      bytes_accessed=bytes_accessed),
    )(*inputs)


# --------------------------- parameters --------------------------------------

def init_params(key, cfg):
    keys = iter(jax.random.split(key, 128))

    def nrm(shape, scale):
        return jax.random.normal(next(keys), shape, jnp.float32) * scale

    def ln(dim):
        return jnp.ones((1, dim), jnp.float32), jnp.zeros((1, dim), jnp.float32)

    def attn_p(q_dim, ctx_dim, heads, dim_head):
        inner = heads * dim_head
        # per-head layouts: wq (H, qd, dh), wk/wv (H, cd, dh), wo (H, dh, qd)
        return dict(
            wq=nrm((heads, q_dim, dim_head), q_dim ** -0.5),      # bias-free
            wk=nrm((heads, ctx_dim, dim_head), ctx_dim ** -0.5),  # bias-free
            wv=nrm((heads, ctx_dim, dim_head), ctx_dim ** -0.5),  # bias-free
            wo=nrm((heads, dim_head, q_dim), inner ** -0.5),
            bo=nrm((1, q_dim), 0.01))

    def ff_p(dim, mult=4):
        return dict(
            w1=nrm((dim, dim * mult * 2), dim ** -0.5),
            b1=nrm((1, dim * mult * 2), 0.01),
            w2=nrm((dim * mult, dim), (dim * mult) ** -0.5),
            b2=nrm((1, dim), 0.01))

    D, QD, LD = cfg["dim"], cfg["queries_dim"], cfg["latent_dim"]
    params = {
        "latents": nrm((cfg["num_latents"], LD), 1.0),
        "out_query": nrm((1, QD), 1.0),
    }
    g, b = ln(LD)
    gc, bc = ln(D)
    params["cross_attn"] = dict(
        norm_g=g, norm_b=b, norm_ctx_g=gc, norm_ctx_b=bc,
        attn=attn_p(LD, D, cfg["cross_heads"], cfg["cross_dim_head"]))
    g, b = ln(LD)
    params["cross_ff"] = dict(norm_g=g, norm_b=b, ff=ff_p(LD))
    layers = []
    for _ in range(cfg["depth"]):   # weight_tie_layers=False -> fresh params per layer
        g1, b1 = ln(LD)
        g2, b2 = ln(LD)
        layers.append(dict(
            attn_block=dict(norm_g=g1, norm_b=b1,
                            attn=attn_p(LD, LD, cfg["latent_heads"],
                                        cfg["latent_dim_head"])),
            ff_block=dict(norm_g=g2, norm_b=b2, ff=ff_p(LD))))
    params["layers"] = layers
    g, b = ln(QD)
    gc, bc = ln(LD)
    params["decoder_cross_attn"] = dict(
        norm_g=g, norm_b=b, norm_ctx_g=gc, norm_ctx_b=bc,
        attn=attn_p(QD, LD, cfg["cross_heads"], cfg["cross_dim_head"]))
    # TODO(synk): decoder_ff=False in this config, so the PreNorm+FeedForward decoder branch is omitted.
    params["to_logits_w"] = nrm((QD, cfg["logits_dim"]), QD ** -0.5)
    params["to_logits_b"] = nrm((1, cfg["logits_dim"]), 0.01)
    return params


# --------------------------- main ---------------------------------------------

if __name__ == "__main__":
    cfg = dict(
        depth=2,
        dim=32,            # input feature dim
        queries_dim=32,
        logits_dim=8,
        num_latents=16,
        latent_dim=64,
        cross_heads=1,
        latent_heads=4,
        cross_dim_head=16,
        latent_dim_head=16,
    )
    key = jax.random.PRNGKey(0)
    kp, kd = jax.random.split(key)
    params = init_params(kp, cfg)

    batch, seq = 2, 8
    data = jax.random.normal(kd, (batch, seq, cfg["dim"]), jnp.float32)

    fwd = jax.jit(lambda p, d: perceiver_io_forward(p, d, cfg))
    out = jax.block_until_ready(fwd(params, data))
    assert out.shape == (batch, 1, cfg["logits_dim"]), out.shape
    assert bool(jnp.all(jnp.isfinite(out)))
    print("KERNEL_OK")
</pallas_src>

<mosaic_0001>
module attributes {stable_mosaic.version = 11 : i64} {
  func.func @_perceiver_kernel(%arg0: i32, %arg1: memref<1x8x32xf32, #tpu.memory_space<vmem>>, %arg2: memref<16x64xf32, #tpu.memory_space<vmem>>, %arg3: memref<1x32xf32, #tpu.memory_space<vmem>>, %arg4: memref<1x64xf32, #tpu.memory_space<vmem>>, %arg5: memref<1x64xf32, #tpu.memory_space<vmem>>, %arg6: memref<1x32xf32, #tpu.memory_space<vmem>>, %arg7: memref<1x32xf32, #tpu.memory_space<vmem>>, %arg8: memref<1x64x16xf32, #tpu.memory_space<vmem>>, %arg9: memref<1x32x16xf32, #tpu.memory_space<vmem>>, %arg10: memref<1x32x16xf32, #tpu.memory_space<vmem>>, %arg11: memref<1x16x64xf32, #tpu.memory_space<vmem>>, %arg12: memref<1x64xf32, #tpu.memory_space<vmem>>, %arg13: memref<1x64xf32, #tpu.memory_space<vmem>>, %arg14: memref<1x64xf32, #tpu.memory_space<vmem>>, %arg15: memref<64x512xf32, #tpu.memory_space<vmem>>, %arg16: memref<1x512xf32, #tpu.memory_space<vmem>>, %arg17: memref<256x64xf32, #tpu.memory_space<vmem>>, %arg18: memref<1x64xf32, #tpu.memory_space<vmem>>, %arg19: memref<1x64xf32, #tpu.memory_space<vmem>>, %arg20: memref<1x64xf32, #tpu.memory_space<vmem>>, %arg21: memref<4x64x16xf32, #tpu.memory_space<vmem>>, %arg22: memref<4x64x16xf32, #tpu.memory_space<vmem>>, %arg23: memref<4x64x16xf32, #tpu.memory_space<vmem>>, %arg24: memref<4x16x64xf32, #tpu.memory_space<vmem>>, %arg25: memref<1x64xf32, #tpu.memory_space<vmem>>, %arg26: memref<1x64xf32, #tpu.memory_space<vmem>>, %arg27: memref<1x64xf32, #tpu.memory_space<vmem>>, %arg28: memref<64x512xf32, #tpu.memory_space<vmem>>, %arg29: memref<1x512xf32, #tpu.memory_space<vmem>>, %arg30: memref<256x64xf32, #tpu.memory_space<vmem>>, %arg31: memref<1x64xf32, #tpu.memory_space<vmem>>, %arg32: memref<1x64xf32, #tpu.memory_space<vmem>>, %arg33: memref<1x64xf32, #tpu.memory_space<vmem>>, %arg34: memref<4x64x16xf32, #tpu.memory_space<vmem>>, %arg35: memref<4x64x16xf32, #tpu.memory_space<vmem>>, %arg36: memref<4x64x16xf32, #tpu.memory_space<vmem>>, %arg37: memref<4x16x64xf32, #tpu.memory_space<vmem>>, %arg38: memref<1x64xf32, #tpu.memory_space<vmem>>, %arg39: memref<1x64xf32, #tpu.memory_space<vmem>>, %arg40: memref<1x64xf32, #tpu.memory_space<vmem>>, %arg41: memref<64x512xf32, #tpu.memory_space<vmem>>, %arg42: memref<1x512xf32, #tpu.memory_space<vmem>>, %arg43: memref<256x64xf32, #tpu.memory_space<vmem>>, %arg44: memref<1x64xf32, #tpu.memory_space<vmem>>, %arg45: memref<1x32xf32, #tpu.memory_space<vmem>>, %arg46: memref<1x32xf32, #tpu.memory_space<vmem>>, %arg47: memref<1x64xf32, #tpu.memory_space<vmem>>, %arg48: memref<1x64xf32, #tpu.memory_space<vmem>>, %arg49: memref<1x32x16xf32, #tpu.memory_space<vmem>>, %arg50: memref<1x64x16xf32, #tpu.memory_space<vmem>>, %arg51: memref<1x64x16xf32, #tpu.memory_space<vmem>>, %arg52: memref<1x16x32xf32, #tpu.memory_space<vmem>>, %arg53: memref<1x32xf32, #tpu.memory_space<vmem>>, %arg54: memref<32x8xf32, #tpu.memory_space<vmem>>, %arg55: memref<1x8xf32, #tpu.memory_space<vmem>>, %arg56: memref<1x1x8xf32, #tpu.memory_space<vmem>>) attributes {dimension_semantics = [#tpu.dimension_semantics<parallel>], iteration_bounds = array<i64: 2>, scalar_prefetch = 0 : i64, scratch_operands = 0 : i64, tpu.core_type = #tpu.core_type<tc>, window_params = [{transform_indices = @transform_0, window_bounds = array<i64: 1, 8, 32>}, {pipeline_mode = #tpu.pipeline_mode<synchronous>, transform_indices = @transform_1, window_bounds = array<i64: 16, 64>}, {pipeline_mode = #tpu.pipeline_mode<synchronous>, transform_indices = @transform_2, window_bounds = array<i64: 1, 32>}, {pipeline_mode = #tpu.pipeline_mode<synchronous>, transform_indices = @transform_3, window_bounds = array<i64: 1, 64>}, {pipeline_mode = #tpu.pipeline_mode<synchronous>, transform_indices = @transform_4, window_bounds = array<i64: 1, 64>}, {pipeline_mode = #tpu.pipeline_mode<synchronous>, transform_indices = @transform_5, window_bounds = array<i64: 1, 32>}, {pipeline_mode = #tpu.pipeline_mode<synchronous>, transform_indices = @transform_6, window_bounds = array<i64: 1, 32>}, {pipeline_mode = #tpu.pipeline_mode<synchronous>, transform_indices = @transform_7, window_bounds = array<i64: 1, 64, 16>}, {pipeline_mode = #tpu.pipeline_mode<synchronous>, transform_indices = @transform_8, window_bounds = array<i64: 1, 32, 16>}, {pipeline_mode = #tpu.pipeline_mode<synchronous>, transform_indices = @transform_9, window_bounds = array<i64: 1, 32, 16>}, {pipeline_mode = #tpu.pipeline_mode<synchronous>, transform_indices = @transform_10, window_bounds = array<i64: 1, 16, 64>}, {pipeline_mode = #tpu.pipeline_mode<synchronous>, transform_indices = @transform_11, window_bounds = array<i64: 1, 64>}, {pipeline_mode = #tpu.pipeline_mode<synchronous>, transform_indices = @transform_12, window_bounds = array<i64: 1, 64>}, {pipeline_mode = #tpu.pipeline_mode<synchronous>, transform_indices = @transform_13, window_bounds = array<i64: 1, 64>}, {pipeline_mode = #tpu.pipeline_mode<synchronous>, transform_indices = @transform_14, window_bounds = array<i64: 64, 512>}, {pipeline_mode = #tpu.pipeline_mode<synchronous>, transform_indices = @transform_15, window_bounds = array<i64: 1, 512>}, {pipeline_mode = #tpu.pipeline_mode<synchronous>, transform_indices = @transform_16, window_bounds = array<i64: 256, 64>}, {pipeline_mode = #tpu.pipeline_mode<synchronous>, transform_indices = @transform_17, window_bounds = array<i64: 1, 64>}, {pipeline_mode = #tpu.pipeline_mode<synchronous>, transform_indices = @transform_18, window_bounds = array<i64: 1, 64>}, {pipeline_mode = #tpu.pipeline_mode<synchronous>, transform_indices = @transform_19, window_bounds = array<i64: 1, 64>}, {pipeline_mode = #tpu.pipeline_mode<synchronous>, transform_indices = @transform_20, window_bounds = array<i64: 4, 64, 16>}, {pipeline_mode = #tpu.pipeline_mode<synchronous>, transform_indices = @transform_21, window_bounds = array<i64: 4, 64, 16>}, {pipeline_mode = #tpu.pipeline_mode<synchronous>, transform_indices = @transform_22, window_bounds = array<i64: 4, 64, 16>}, {pipeline_mode = #tpu.pipeline_mode<synchronous>, transform_indices = @transform_23, window_bounds = array<i64: 4, 16, 64>}, {pipeline_mode = #tpu.pipeline_mode<synchronous>, transform_indices = @transform_24, window_bounds = array<i64: 1, 64>}, {pipeline_mode = #tpu.pipeline_mode<synchronous>, transform_indices = @transform_25, window_bounds = array<i64: 1, 64>}, {pipeline_mode = #tpu.pipeline_mode<synchronous>, transform_indices = @transform_26, window_bounds = array<i64: 1, 64>}, {pipeline_mode = #tpu.pipeline_mode<synchronous>, transform_indices = @transform_27, window_bounds = array<i64: 64, 512>}, {pipeline_mode = #tpu.pipeline_mode<synchronous>, transform_indices = @transform_28, window_bounds = array<i64: 1, 512>}, {pipeline_mode = #tpu.pipeline_mode<synchronous>, transform_indices = @transform_29, window_bounds = array<i64: 256, 64>}, {pipeline_mode = #tpu.pipeline_mode<synchronous>, transform_indices = @transform_30, window_bounds = array<i64: 1, 64>}, {pipeline_mode = #tpu.pipeline_mode<synchronous>, transform_indices = @transform_31, window_bounds = array<i64: 1, 64>}, {pipeline_mode = #tpu.pipeline_mode<synchronous>, transform_indices = @transform_32, window_bounds = array<i64: 1, 64>}, {pipeline_mode = #tpu.pipeline_mode<synchronous>, transform_indices = @transform_33, window_bounds = array<i64: 4, 64, 16>}, {pipeline_mode = #tpu.pipeline_mode<synchronous>, transform_indices = @transform_34, window_bounds = array<i64: 4, 64, 16>}, {pipeline_mode = #tpu.pipeline_mode<synchronous>, transform_indices = @transform_35, window_bounds = array<i64: 4, 64, 16>}, {pipeline_mode = #tpu.pipeline_mode<synchronous>, transform_indices = @transform_36, window_bounds = array<i64: 4, 16, 64>}, {pipeline_mode = #tpu.pipeline_mode<synchronous>, transform_indices = @transform_37, window_bounds = array<i64: 1, 64>}, {pipeline_mode = #tpu.pipeline_mode<synchronous>, transform_indices = @transform_38, window_bounds = array<i64: 1, 64>}, {pipeline_mode = #tpu.pipeline_mode<synchronous>, transform_indices = @transform_39, window_bounds = array<i64: 1, 64>}, {pipeline_mode = #tpu.pipeline_mode<synchronous>, transform_indices = @transform_40, window_bounds = array<i64: 64, 512>}, {pipeline_mode = #tpu.pipeline_mode<synchronous>, transform_indices = @transform_41, window_bounds = array<i64: 1, 512>}, {pipeline_mode = #tpu.pipeline_mode<synchronous>, transform_indices = @transform_42, window_bounds = array<i64: 256, 64>}, {pipeline_mode = #tpu.pipeline_mode<synchronous>, transform_indices = @transform_43, window_bounds = array<i64: 1, 64>}, {pipeline_mode = #tpu.pipeline_mode<synchronous>, transform_indices = @transform_44, window_bounds = array<i64: 1, 32>}, {pipeline_mode = #tpu.pipeline_mode<synchronous>, transform_indices = @transform_45, window_bounds = array<i64: 1, 32>}, {pipeline_mode = #tpu.pipeline_mode<synchronous>, transform_indices = @transform_46, window_bounds = array<i64: 1, 64>}, {pipeline_mode = #tpu.pipeline_mode<synchronous>, transform_indices = @transform_47, window_bounds = array<i64: 1, 64>}, {pipeline_mode = #tpu.pipeline_mode<synchronous>, transform_indices = @transform_48, window_bounds = array<i64: 1, 32, 16>}, {pipeline_mode = #tpu.pipeline_mode<synchronous>, transform_indices = @transform_49, window_bounds = array<i64: 1, 64, 16>}, {pipeline_mode = #tpu.pipeline_mode<synchronous>, transform_indices = @transform_50, window_bounds = array<i64: 1, 64, 16>}, {pipeline_mode = #tpu.pipeline_mode<synchronous>, transform_indices = @transform_51, window_bounds = array<i64: 1, 16, 32>}, {pipeline_mode = #tpu.pipeline_mode<synchronous>, transform_indices = @transform_52, window_bounds = array<i64: 1, 32>}, {pipeline_mode = #tpu.pipeline_mode<synchronous>, transform_indices = @transform_53, window_bounds = array<i64: 32, 8>}, {pipeline_mode = #tpu.pipeline_mode<synchronous>, transform_indices = @transform_54, window_bounds = array<i64: 1, 8>}, {transform_indices = @transform_55, window_bounds = array<i64: 1, 1, 8>}]} {
    %c0 = arith.constant 0 : index
    %c0_0 = arith.constant 0 : index
    %c0_1 = arith.constant 0 : index
    %0 = vector.load %arg1[%c0, %c0_0, %c0_1] : memref<1x8x32xf32, #tpu.memory_space<vmem>>, vector<1x8x32xf32>
    %1 = vector.shape_cast %0 : vector<1x8x32xf32> to vector<8x32xf32>
    %c0_2 = arith.constant 0 : index
    %c0_3 = arith.constant 0 : index
    %2 = vector.load %arg2[%c0_2, %c0_3] : memref<16x64xf32, #tpu.memory_space<vmem>>, vector<16x64xf32>
    %c0_4 = arith.constant 0 : index
    %c0_5 = arith.constant 0 : index
    %3 = vector.load %arg4[%c0_4, %c0_5] : memref<1x64xf32, #tpu.memory_space<vmem>>, vector<1x64xf32>
    %c0_6 = arith.constant 0 : index
    %c0_7 = arith.constant 0 : index
    %4 = vector.load %arg5[%c0_6, %c0_7] : memref<1x64xf32, #tpu.memory_space<vmem>>, vector<1x64xf32>
    %c0_8 = arith.constant 0 : index
    %c0_9 = arith.constant 0 : index
    %5 = vector.load %arg6[%c0_8, %c0_9] : memref<1x32xf32, #tpu.memory_space<vmem>>, vector<1x32xf32>
    %c0_10 = arith.constant 0 : index
    %c0_11 = arith.constant 0 : index
    %6 = vector.load %arg7[%c0_10, %c0_11] : memref<1x32xf32, #tpu.memory_space<vmem>>, vector<1x32xf32>
    %c0_12 = arith.constant 0 : index
    %c0_13 = arith.constant 0 : index
    %c0_14 = arith.constant 0 : index
    %7 = vector.load %arg8[%c0_12, %c0_13, %c0_14] : memref<1x64x16xf32, #tpu.memory_space<vmem>>, vector<1x64x16xf32>
    %c0_15 = arith.constant 0 : index
    %c0_16 = arith.constant 0 : index
    %c0_17 = arith.constant 0 : index
    %8 = vector.load %arg9[%c0_15, %c0_16, %c0_17] : memref<1x32x16xf32, #tpu.memory_space<vmem>>, vector<1x32x16xf32>
    %c0_18 = arith.constant 0 : index
    %c0_19 = arith.constant 0 : index
    %c0_20 = arith.constant 0 : index
    %9 = vector.load %arg10[%c0_18, %c0_19, %c0_20] : memref<1x32x16xf32, #tpu.memory_space<vmem>>, vector<1x32x16xf32>
    %c0_21 = arith.constant 0 : index
    %c0_22 = arith.constant 0 : index
    %c0_23 = arith.constant 0 : index
    %10 = vector.load %arg11[%c0_21, %c0_22, %c0_23] : memref<1x16x64xf32, #tpu.memory_space<vmem>>, vector<1x16x64xf32>
    %c0_24 = arith.constant 0 : index
    %c0_25 = arith.constant 0 : index
    %11 = vector.load %arg12[%c0_24, %c0_25] : memref<1x64xf32, #tpu.memory_space<vmem>>, vector<1x64xf32>
    %cst = arith.constant dense<0.000000e+00> : vector<16xf32>
    %12 = vector.multi_reduction <add>, %2, %cst [1] : vector<16x64xf32> to vector<16xf32>
    %13 = vector.shape_cast %12 : vector<16xf32> to vector<16x1xf32>
    %cst_26 = arith.constant 6.400000e+01 : f32
    %14 = vector.broadcast %cst_26 : f32 to vector<16x1xf32>
    %15 = arith.divf %13, %14 : vector<16x1xf32>
    %16 = vector.broadcast %15 : vector<16x1xf32> to vector<16x64xf32>
    %17 = arith.subf %2, %16 : vector<16x64xf32>
    %18 = arith.mulf %17, %17 : vector<16x64xf32>
    %cst_27 = arith.constant dense<0.000000e+00> : vector<16xf32>
    %19 = vector.multi_reduction <add>, %18, %cst_27 [1] : vector<16x64xf32> to vector<16xf32>
    %20 = vector.shape_cast %19 : vector<16xf32> to vector<16x1xf32>
    %cst_28 = arith.constant 6.400000e+01 : f32
    %21 = vector.broadcast %cst_28 : f32 to vector<16x1xf32>
    %22 = arith.divf %20, %21 : vector<16x1xf32>
    %23 = vector.broadcast %15 : vector<16x1xf32> to vector<16x64xf32>
    %24 = arith.subf %2, %23 : vector<16x64xf32>
    %cst_29 = arith.constant 9.99999974E-6 : f32
    %25 = vector.broadcast %cst_29 : f32 to vector<16x1xf32>
    %26 = arith.addf %22, %25 : vector<16x1xf32>
    %27 = math.rsqrt %26 : vector<16x1xf32>
    %28 = vector.broadcast %27 : vector<16x1xf32> to vector<16x64xf32>
    %29 = arith.mulf %24, %28 : vector<16x64xf32>
    %30 = vector.broadcast %3 : vector<1x64xf32> to vector<16x64xf32>
    %31 = arith.mulf %29, %30 : vector<16x64xf32>
    %32 = vector.broadcast %4 : vector<1x64xf32> to vector<16x64xf32>
    %33 = arith.addf %31, %32 : vector<16x64xf32>
    %cst_30 = arith.constant dense<0.000000e+00> : vector<8xf32>
    %34 = vector.multi_reduction <add>, %1, %cst_30 [1] : vector<8x32xf32> to vector<8xf32>
    %35 = vector.shape_cast %34 : vector<8xf32> to vector<8x1xf32>
    %cst_31 = arith.constant 3.200000e+01 : f32
    %36 = vector.broadcast %cst_31 : f32 to vector<8x1xf32>
    %37 = arith.divf %35, %36 : vector<8x1xf32>
    %38 = vector.broadcast %37 : vector<8x1xf32> to vector<8x32xf32>
    %39 = arith.subf %1, %38 : vector<8x32xf32>
    %40 = arith.mulf %39, %39 : vector<8x32xf32>
    %cst_32 = arith.constant dense<0.000000e+00> : vector<8xf32>
    %41 = vector.multi_reduction <add>, %40, %cst_32 [1] : vector<8x32xf32> to vector<8xf32>
    %42 = vector.shape_cast %41 : vector<8xf32> to vector<8x1xf32>
    %cst_33 = arith.constant 3.200000e+01 : f32
    %43 = vector.broadcast %cst_33 : f32 to vector<8x1xf32>
    %44 = arith.divf %42, %43 : vector<8x1xf32>
    %45 = vector.broadcast %37 : vector<8x1xf32> to vector<8x32xf32>
    %46 = arith.subf %1, %45 : vector<8x32xf32>
    %cst_34 = arith.constant 9.99999974E-6 : f32
    %47 = vector.broadcast %cst_34 : f32 to vector<8x1xf32>
    %48 = arith.addf %44, %47 : vector<8x1xf32>
    %49 = math.rsqrt %48 : vector<8x1xf32>
    %50 = vector.broadcast %49 : vector<8x1xf32> to vector<8x32xf32>
    %51 = arith.mulf %46, %50 : vector<8x32xf32>
    %52 = vector.broadcast %5 : vector<1x32xf32> to vector<8x32xf32>
    %53 = arith.mulf %51, %52 : vector<8x32xf32>
    %54 = vector.broadcast %6 : vector<1x32xf32> to vector<8x32xf32>
    %55 = arith.addf %53, %54 : vector<8x32xf32>
    %56 = vector.shape_cast %33 : vector<16x64xf32> to vector<1x16x64xf32>
    %57 = vector.shape_cast %55 : vector<8x32xf32> to vector<1x8x32xf32>
    %cst_35 = arith.constant dense<0.000000e+00> : vector<1x16x16xf32>
    %58 = tpu.matmul %56, %7, %cst_35 {dimension_numbers = #tpu.dot_dimension_numbers<[2], [1], [1], [2], [0, 0, 0, 1, 1, 2], [0], [0]>} : vector<1x16x64xf32>, vector<1x64x16xf32>, vector<1x16x16xf32> -> vector<1x16x16xf32>
    %cst_36 = arith.constant 2.500000e-01 : f32
    %59 = vector.broadcast %cst_36 : f32 to vector<1x16x16xf32>
    %60 = arith.mulf %58, %59 : vector<1x16x16xf32>
    %cst_37 = arith.constant dense<0.000000e+00> : vector<1x8x16xf32>
    %61 = tpu.matmul %57, %8, %cst_37 {dimension_numbers = #tpu.dot_dimension_numbers<[2], [1], [1], [2], [0, 0, 0, 1, 1, 2], [0], [0]>} : vector<1x8x32xf32>, vector<1x32x16xf32>, vector<1x8x16xf32> -> vector<1x8x16xf32>
    %cst_38 = arith.constant dense<0.000000e+00> : vector<1x8x16xf32>
    %62 = tpu.matmul %57, %9, %cst_38 {dimension_numbers = #tpu.dot_dimension_numbers<[2], [1], [1], [2], [0, 0, 0, 1, 1, 2], [0], [0]>} : vector<1x8x32xf32>, vector<1x32x16xf32>, vector<1x8x16xf32> -> vector<1x8x16xf32>
    %cst_39 = arith.constant dense<0.000000e+00> : vector<1x16x8xf32>
    %63 = tpu.matmul %60, %61, %cst_39 {dimension_numbers = #tpu.dot_dimension_numbers<[2], [2], [1], [1], [0, 0, 0, 1, 1, 1], [0], [0]>} : vector<1x16x16xf32>, vector<1x8x16xf32>, vector<1x16x8xf32> -> vector<1x16x8xf32>
    %cst_40 = arith.constant dense<0xFF800000> : vector<1x16xf32>
    %64 = vector.multi_reduction <maximumf>, %63, %cst_40 [2] : vector<1x16x8xf32> to vector<1x16xf32>
    %65 = vector.shape_cast %64 : vector<1x16xf32> to vector<1x16x1xf32>
    %66 = vector.broadcast %65 : vector<1x16x1xf32> to vector<1x16x8xf32>
    %67 = arith.subf %63, %66 : vector<1x16x8xf32>
    %68 = math.exp %67 : vector<1x16x8xf32>
    %cst_41 = arith.constant dense<0.000000e+00> : vector<1x16xf32>
    %69 = vector.multi_reduction <add>, %68, %cst_41 [2] : vector<1x16x8xf32> to vector<1x16xf32>
    %70 = vector.shape_cast %69 : vector<1x16xf32> to vector<1x16x1xf32>
    %71 = tpu.reciprocal %70 {approx = true} : vector<1x16x1xf32> -> vector<1x16x1xf32>
    %72 = vector.broadcast %71 : vector<1x16x1xf32> to vector<1x16x8xf32>
    %73 = arith.mulf %68, %72 : vector<1x16x8xf32>
    %cst_42 = arith.constant dense<0.000000e+00> : vector<1x16x16xf32>
    %74 = tpu.matmul %73, %62, %cst_42 {dimension_numbers = #tpu.dot_dimension_numbers<[2], [1], [1], [2], [0, 0, 0, 1, 1, 2], [0], [0]>} : vector<1x16x8xf32>, vector<1x8x16xf32>, vector<1x16x16xf32> -> vector<1x16x16xf32>
    %cst_43 = arith.constant dense<0.000000e+00> : vector<1x16x64xf32>
    %75 = tpu.matmul %74, %10, %cst_43 {dimension_numbers = #tpu.dot_dimension_numbers<[2], [1], [1], [2], [0, 0, 0, 1, 1, 2], [0], [0]>} : vector<1x16x16xf32>, vector<1x16x64xf32>, vector<1x16x64xf32> -> vector<1x16x64xf32>
    %cst_44 = arith.constant dense<0.000000e+00> : vector<16x64xf32>
    %76 = vector.multi_reduction <add>, %75, %cst_44 [0] : vector<1x16x64xf32> to vector<16x64xf32>
    %77 = vector.broadcast %11 : vector<1x64xf32> to vector<16x64xf32>
    %78 = arith.addf %76, %77 : vector<16x64xf32>
    %79 = arith.addf %78, %2 : vector<16x64xf32>
    %c0_45 = arith.constant 0 : index
    %c0_46 = arith.constant 0 : index
    %80 = vector.load %arg13[%c0_45, %c0_46] : memref<1x64xf32, #tpu.memory_space<vmem>>, vector<1x64xf32>
    %c0_47 = arith.constant 0 : index
    %c0_48 = arith.constant 0 : index
    %81 = vector.load %arg14[%c0_47, %c0_48] : memref<1x64xf32, #tpu.memory_space<vmem>>, vector<1x64xf32>
    %c0_49 = arith.constant 0 : index
    %c0_50 = arith.constant 0 : index
    %82 = vector.load %arg15[%c0_49, %c0_50] : memref<64x512xf32, #tpu.memory_space<vmem>>, vector<64x512xf32>
    %c0_51 = arith.constant 0 : index
    %c0_52 = arith.constant 0 : index
    %83 = vector.load %arg16[%c0_51, %c0_52] : memref<1x512xf32, #tpu.memory_space<vmem>>, vector<1x512xf32>
    %c0_53 = arith.constant 0 : index
    %c0_54 = arith.constant 0 : index
    %84 = vector.load %arg17[%c0_53, %c0_54] : memref<256x64xf32, #tpu.memory_space<vmem>>, vector<256x64xf32>
    %c0_55 = arith.constant 0 : index
    %c0_56 = arith.constant 0 : index
    %85 = vector.load %arg18[%c0_55, %c0_56] : memref<1x64xf32, #tpu.memory_space<vmem>>, vector<1x64xf32>
    %cst_57 = arith.constant dense<0.000000e+00> : vector<16xf32>
    %86 = vector.multi_reduction <add>, %79, %cst_57 [1] : vector<16x64xf32> to vector<16xf32>
    %87 = vector.shape_cast %86 : vector<16xf32> to vector<16x1xf32>
    %cst_58 = arith.constant 6.400000e+01 : f32
    %88 = vector.broadcast %cst_58 : f32 to vector<16x1xf32>
    %89 = arith.divf %87, %88 : vector<16x1xf32>
    %90 = vector.broadcast %89 : vector<16x1xf32> to vector<16x64xf32>
    %91 = arith.subf %79, %90 : vector<16x64xf32>
    %92 = arith.mulf %91, %91 : vector<16x64xf32>
    %cst_59 = arith.constant dense<0.000000e+00> : vector<16xf32>
    %93 = vector.multi_reduction <add>, %92, %cst_59 [1] : vector<16x64xf32> to vector<16xf32>
    %94 = vector.shape_cast %93 : vector<16xf32> to vector<16x1xf32>
    %cst_60 = arith.constant 6.400000e+01 : f32
    %95 = vector.broadcast %cst_60 : f32 to vector<16x1xf32>
    %96 = arith.divf %94, %95 : vector<16x1xf32>
    %97 = vector.broadcast %89 : vector<16x1xf32> to vector<16x64xf32>
    %98 = arith.subf %79, %97 : vector<16x64xf32>
    %cst_61 = arith.constant 9.99999974E-6 : f32
    %99 = vector.broadcast %cst_61 : f32 to vector<16x1xf32>
    %100 = arith.addf %96, %99 : vector<16x1xf32>
    %101 = math.rsqrt %100 : vector<16x1xf32>
    %102 = vector.broadcast %101 : vector<16x1xf32> to vector<16x64xf32>
    %103 = arith.mulf %98, %102 : vector<16x64xf32>
    %104 = vector.broadcast %80 : vector<1x64xf32> to vector<16x64xf32>
    %105 = arith.mulf %103, %104 : vector<16x64xf32>
    %106 = vector.broadcast %81 : vector<1x64xf32> to vector<16x64xf32>
    %107 = arith.addf %105, %106 : vector<16x64xf32>
    %cst_62 = arith.constant dense<0.000000e+00> : vector<16x512xf32>
    %108 = tpu.matmul %107, %82, %cst_62 {dimension_numbers = #tpu.dot_dimension_numbers<[1], [0], [0], [1], [0, 0, 1, 1], [], []>} : vector<16x64xf32>, vector<64x512xf32>, vector<16x512xf32> -> vector<16x512xf32>
    %109 = vector.broadcast %83 : vector<1x512xf32> to vector<16x512xf32>
    %110 = arith.addf %108, %109 : vector<16x512xf32>
    %111 = vector.extract_strided_slice %110 {offsets = [0, 0], sizes = [16, 256], strides = [1, 1]} : vector<16x512xf32> to vector<16x256xf32>
    %112 = vector.extract_strided_slice %110 {offsets = [0, 256], sizes = [16, 256], strides = [1, 1]} : vector<16x512xf32> to vector<16x256xf32>
    %cst_63 = arith.constant 5.000000e-01 : f32
    %113 = vector.broadcast %cst_63 : f32 to vector<16x256xf32>
    %114 = arith.mulf %113, %112 : vector<16x256xf32>
    %cst_64 = arith.constant 0.707106769 : f32
    %115 = vector.broadcast %cst_64 : f32 to vector<16x256xf32>
    %116 = arith.mulf %112, %115 : vector<16x256xf32>
    %117 = math.erf %116 : vector<16x256xf32>
    %cst_65 = arith.constant 1.000000e+00 : f32
    %118 = vector.broadcast %cst_65 : f32 to vector<16x256xf32>
    %119 = arith.addf %118, %117 : vector<16x256xf32>
    %120 = arith.mulf %114, %119 : vector<16x256xf32>
    %121 = arith.mulf %111, %120 : vector<16x256xf32>
    %cst_66 = arith.constant dense<0.000000e+00> : vector<16x64xf32>
    %122 = tpu.matmul %121, %84, %cst_66 {dimension_numbers = #tpu.dot_dimension_numbers<[1], [0], [0], [1], [0, 0, 1, 1], [], []>} : vector<16x256xf32>, vector<256x64xf32>, vector<16x64xf32> -> vector<16x64xf32>
    %123 = vector.broadcast %85 : vector<1x64xf32> to vector<16x64xf32>
    %124 = arith.addf %122, %123 : vector<16x64xf32>
    %125 = arith.addf %124, %79 : vector<16x64xf32>
    %c0_67 = arith.constant 0 : index
    %c0_68 = arith.constant 0 : index
    %126 = vector.load %arg19[%c0_67, %c0_68] : memref<1x64xf32, #tpu.memory_space<vmem>>, vector<1x64xf32>
    %c0_69 = arith.constant 0 : index
    %c0_70 = arith.constant 0 : index
    %127 = vector.load %arg20[%c0_69, %c0_70] : memref<1x64xf32, #tpu.memory_space<vmem>>, vector<1x64xf32>
    %c0_71 = arith.constant 0 : index
    %c0_72 = arith.constant 0 : index
    %c0_73 = arith.constant 0 : index
    %128 = vector.load %arg21[%c0_71, %c0_72, %c0_73] : memref<4x64x16xf32, #tpu.memory_space<vmem>>, vector<4x64x16xf32>
    %c0_74 = arith.constant 0 : index
    %c0_75 = arith.constant 0 : index
    %c0_76 = arith.constant 0 : index
    %129 = vector.load %arg22[%c0_74, %c0_75, %c0_76] : memref<4x64x16xf32, #tpu.memory_space<vmem>>, vector<4x64x16xf32>
    %c0_77 = arith.constant 0 : index
    %c0_78 = arith.constant 0 : index
    %c0_79 = arith.constant 0 : index
    %130 = vector.load %arg23[%c0_77, %c0_78, %c0_79] : memref<4x64x16xf32, #tpu.memory_space<vmem>>, vector<4x64x16xf32>
    %c0_80 = arith.constant 0 : index
    %c0_81 = arith.constant 0 : index
    %c0_82 = arith.constant 0 : index
    %131 = vector.load %arg24[%c0_80, %c0_81, %c0_82] : memref<4x16x64xf32, #tpu.memory_space<vmem>>, vector<4x16x64xf32>
    %c0_83 = arith.constant 0 : index
    %c0_84 = arith.constant 0 : index
    %132 = vector.load %arg25[%c0_83, %c0_84] : memref<1x64xf32, #tpu.memory_space<vmem>>, vector<1x64xf32>
    %cst_85 = arith.constant dense<0.000000e+00> : vector<16xf32>
    %133 = vector.multi_reduction <add>, %125, %cst_85 [1] : vector<16x64xf32> to vector<16xf32>
    %134 = vector.shape_cast %133 : vector<16xf32> to vector<16x1xf32>
    %cst_86 = arith.constant 6.400000e+01 : f32
    %135 = vector.broadcast %cst_86 : f32 to vector<16x1xf32>
    %136 = arith.divf %134, %135 : vector<16x1xf32>
    %137 = vector.broadcast %136 : vector<16x1xf32> to vector<16x64xf32>
    %138 = arith.subf %125, %137 : vector<16x64xf32>
    %139 = arith.mulf %138, %138 : vector<16x64xf32>
    %cst_87 = arith.constant dense<0.000000e+00> : vector<16xf32>
    %140 = vector.multi_reduction <add>, %139, %cst_87 [1] : vector<16x64xf32> to vector<16xf32>
    %141 = vector.shape_cast %140 : vector<16xf32> to vector<16x1xf32>
    %cst_88 = arith.constant 6.400000e+01 : f32
    %142 = vector.broadcast %cst_88 : f32 to vector<16x1xf32>
    %143 = arith.divf %141, %142 : vector<16x1xf32>
    %144 = vector.broadcast %136 : vector<16x1xf32> to vector<16x64xf32>
    %145 = arith.subf %125, %144 : vector<16x64xf32>
    %cst_89 = arith.constant 9.99999974E-6 : f32
    %146 = vector.broadcast %cst_89 : f32 to vector<16x1xf32>
    %147 = arith.addf %143, %146 : vector<16x1xf32>
    %148 = math.rsqrt %147 : vector<16x1xf32>
    %149 = vector.broadcast %148 : vector<16x1xf32> to vector<16x64xf32>
    %150 = arith.mulf %145, %149 : vector<16x64xf32>
    %151 = vector.broadcast %126 : vector<1x64xf32> to vector<16x64xf32>
    %152 = arith.mulf %150, %151 : vector<16x64xf32>
    %153 = vector.broadcast %127 : vector<1x64xf32> to vector<16x64xf32>
    %154 = arith.addf %152, %153 : vector<16x64xf32>
    %155 = vector.shape_cast %154 : vector<16x64xf32> to vector<1x16x64xf32>
    %156 = vector.shape_cast %155 : vector<1x16x64xf32> to vector<1x16x64xf32>
    %157 = vector.broadcast %156 : vector<1x16x64xf32> to vector<4x16x64xf32>
    %158 = vector.shape_cast %154 : vector<16x64xf32> to vector<1x16x64xf32>
    %159 = vector.shape_cast %158 : vector<1x16x64xf32> to vector<1x16x64xf32>
    %160 = vector.broadcast %159 : vector<1x16x64xf32> to vector<4x16x64xf32>
    %cst_90 = arith.constant dense<0.000000e+00> : vector<4x16x16xf32>
    %161 = tpu.matmul %157, %128, %cst_90 {dimension_numbers = #tpu.dot_dimension_numbers<[2], [1], [1], [2], [0, 0, 0, 1, 1, 2], [0], [0]>} : vector<4x16x64xf32>, vector<4x64x16xf32>, vector<4x16x16xf32> -> vector<4x16x16xf32>
    %cst_91 = arith.constant 2.500000e-01 : f32
    %162 = vector.broadcast %cst_91 : f32 to vector<4x16x16xf32>
    %163 = arith.mulf %161, %162 : vector<4x16x16xf32>
    %cst_92 = arith.constant dense<0.000000e+00> : vector<4x16x16xf32>
    %164 = tpu.matmul %160, %129, %cst_92 {dimension_numbers = #tpu.dot_dimension_numbers<[2], [1], [1], [2], [0, 0, 0, 1, 1, 2], [0], [0]>} : vector<4x16x64xf32>, vector<4x64x16xf32>, vector<4x16x16xf32> -> vector<4x16x16xf32>
    %cst_93 = arith.constant dense<0.000000e+00> : vector<4x16x16xf32>
    %165 = tpu.matmul %160, %130, %cst_93 {dimension_numbers = #tpu.dot_dimension_numbers<[2], [1], [1], [2], [0, 0, 0, 1, 1, 2], [0], [0]>} : vector<4x16x64xf32>, vector<4x64x16xf32>, vector<4x16x16xf32> -> vector<4x16x16xf32>
    %cst_94 = arith.constant dense<0.000000e+00> : vector<4x16x16xf32>
    %166 = tpu.matmul %163, %164, %cst_94 {dimension_numbers = #tpu.dot_dimension_numbers<[2], [2], [1], [1], [0, 0, 0, 1, 1, 1], [0], [0]>} : vector<4x16x16xf32>, vector<4x16x16xf32>, vector<4x16x16xf32> -> vector<4x16x16xf32>
    %cst_95 = arith.constant dense<0xFF800000> : vector<4x16xf32>
    %167 = vector.multi_reduction <maximumf>, %166, %cst_95 [2] : vector<4x16x16xf32> to vector<4x16xf32>
    %168 = vector.shape_cast %167 : vector<4x16xf32> to vector<4x16x1xf32>
    %169 = vector.broadcast %168 : vector<4x16x1xf32> to vector<4x16x16xf32>
    %170 = arith.subf %166, %169 : vector<4x16x16xf32>
    %171 = math.exp %170 : vector<4x16x16xf32>
    %cst_96 = arith.constant dense<0.000000e+00> : vector<4x16xf32>
    %172 = vector.multi_reduction <add>, %171, %cst_96 [2] : vector<4x16x16xf32> to vector<4x16xf32>
    %173 = vector.shape_cast %172 : vector<4x16xf32> to vector<4x16x1xf32>
    %174 = tpu.reciprocal %173 {approx = true} : vector<4x16x1xf32> -> vector<4x16x1xf32>
    %175 = vector.broadcast %174 : vector<4x16x1xf32> to vector<4x16x16xf32>
    %176 = arith.mulf %171, %175 : vector<4x16x16xf32>
    %cst_97 = arith.constant dense<0.000000e+00> : vector<4x16x16xf32>
    %177 = tpu.matmul %176, %165, %cst_97 {dimension_numbers = #tpu.dot_dimension_numbers<[2], [1], [1], [2], [0, 0, 0, 1, 1, 2], [0], [0]>} : vector<4x16x16xf32>, vector<4x16x16xf32>, vector<4x16x16xf32> -> vector<4x16x16xf32>
    %cst_98 = arith.constant dense<0.000000e+00> : vector<4x16x64xf32>
    %178 = tpu.matmul %177, %131, %cst_98 {dimension_numbers = #tpu.dot_dimension_numbers<[2], [1], [1], [2], [0, 0, 0, 1, 1, 2], [0], [0]>} : vector<4x16x16xf32>, vector<4x16x64xf32>, vector<4x16x64xf32> -> vector<4x16x64xf32>
    %cst_99 = arith.constant dense<0.000000e+00> : vector<16x64xf32>
    %179 = vector.multi_reduction <add>, %178, %cst_99 [0] : vector<4x16x64xf32> to vector<16x64xf32>
    %180 = vector.broadcast %132 : vector<1x64xf32> to vector<16x64xf32>
    %181 = arith.addf %179, %180 : vector<16x64xf32>
    %182 = arith.addf %181, %125 : vector<16x64xf32>
    %c0_100 = arith.constant 0 : index
    %c0_101 = arith.constant 0 : index
    %183 = vector.load %arg26[%c0_100, %c0_101] : memref<1x64xf32, #tpu.memory_space<vmem>>, vector<1x64xf32>
    %c0_102 = arith.constant 0 : index
    %c0_103 = arith.constant 0 : index
    %184 = vector.load %arg27[%c0_102, %c0_103] : memref<1x64xf32, #tpu.memory_space<vmem>>, vector<1x64xf32>
    %c0_104 = arith.constant 0 : index
    %c0_105 = arith.constant 0 : index
    %185 = vector.load %arg28[%c0_104, %c0_105] : memref<64x512xf32, #tpu.memory_space<vmem>>, vector<64x512xf32>
    %c0_106 = arith.constant 0 : index
    %c0_107 = arith.constant 0 : index
    %186 = vector.load %arg29[%c0_106, %c0_107] : memref<1x512xf32, #tpu.memory_space<vmem>>, vector<1x512xf32>
    %c0_108 = arith.constant 0 : index
    %c0_109 = arith.constant 0 : index
    %187 = vector.load %arg30[%c0_108, %c0_109] : memref<256x64xf32, #tpu.memory_space<vmem>>, vector<256x64xf32>
    %c0_110 = arith.constant 0 : index
    %c0_111 = arith.constant 0 : index
    %188 = vector.load %arg31[%c0_110, %c0_111] : memref<1x64xf32, #tpu.memory_space<vmem>>, vector<1x64xf32>
    %cst_112 = arith.constant dense<0.000000e+00> : vector<16xf32>
    %189 = vector.multi_reduction <add>, %182, %cst_112 [1] : vector<16x64xf32> to vector<16xf32>
    %190 = vector.shape_cast %189 : vector<16xf32> to vector<16x1xf32>
    %cst_113 = arith.constant 6.400000e+01 : f32
    %191 = vector.broadcast %cst_113 : f32 to vector<16x1xf32>
    %192 = arith.divf %190, %191 : vector<16x1xf32>
    %193 = vector.broadcast %192 : vector<16x1xf32> to vector<16x64xf32>
    %194 = arith.subf %182, %193 : vector<16x64xf32>
    %195 = arith.mulf %194, %194 : vector<16x64xf32>
    %cst_114 = arith.constant dense<0.000000e+00> : vector<16xf32>
    %196 = vector.multi_reduction <add>, %195, %cst_114 [1] : vector<16x64xf32> to vector<16xf32>
    %197 = vector.shape_cast %196 : vector<16xf32> to vector<16x1xf32>
    %cst_115 = arith.constant 6.400000e+01 : f32
    %198 = vector.broadcast %cst_115 : f32 to vector<16x1xf32>
    %199 = arith.divf %197, %198 : vector<16x1xf32>
    %200 = vector.broadcast %192 : vector<16x1xf32> to vector<16x64xf32>
    %201 = arith.subf %182, %200 : vector<16x64xf32>
    %cst_116 = arith.constant 9.99999974E-6 : f32
    %202 = vector.broadcast %cst_116 : f32 to vector<16x1xf32>
    %203 = arith.addf %199, %202 : vector<16x1xf32>
    %204 = math.rsqrt %203 : vector<16x1xf32>
    %205 = vector.broadcast %204 : vector<16x1xf32> to vector<16x64xf32>
    %206 = arith.mulf %201, %205 : vector<16x64xf32>
    %207 = vector.broadcast %183 : vector<1x64xf32> to vector<16x64xf32>
    %208 = arith.mulf %206, %207 : vector<16x64xf32>
    %209 = vector.broadcast %184 : vector<1x64xf32> to vector<16x64xf32>
    %210 = arith.addf %208, %209 : vector<16x64xf32>
    %cst_117 = arith.constant dense<0.000000e+00> : vector<16x512xf32>
    %211 = tpu.matmul %210, %185, %cst_117 {dimension_numbers = #tpu.dot_dimension_numbers<[1], [0], [0], [1], [0, 0, 1, 1], [], []>} : vector<16x64xf32>, vector<64x512xf32>, vector<16x512xf32> -> vector<16x512xf32>
    %212 = vector.broadcast %186 : vector<1x512xf32> to vector<16x512xf32>
    %213 = arith.addf %211, %212 : vector<16x512xf32>
    %214 = vector.extract_strided_slice %213 {offsets = [0, 0], sizes = [16, 256], strides = [1, 1]} : vector<16x512xf32> to vector<16x256xf32>
    %215 = vector.extract_strided_slice %213 {offsets = [0, 256], sizes = [16, 256], strides = [1, 1]} : vector<16x512xf32> to vector<16x256xf32>
    %cst_118 = arith.constant 5.000000e-01 : f32
    %216 = vector.broadcast %cst_118 : f32 to vector<16x256xf32>
    %217 = arith.mulf %216, %215 : vector<16x256xf32>
    %cst_119 = arith.constant 0.707106769 : f32
    %218 = vector.broadcast %cst_119 : f32 to vector<16x256xf32>
    %219 = arith.mulf %215, %218 : vector<16x256xf32>
    %220 = math.erf %219 : vector<16x256xf32>
    %cst_120 = arith.constant 1.000000e+00 : f32
    %221 = vector.broadcast %cst_120 : f32 to vector<16x256xf32>
    %222 = arith.addf %221, %220 : vector<16x256xf32>
    %223 = arith.mulf %217, %222 : vector<16x256xf32>
    %224 = arith.mulf %214, %223 : vector<16x256xf32>
    %cst_121 = arith.constant dense<0.000000e+00> : vector<16x64xf32>
    %225 = tpu.matmul %224, %187, %cst_121 {dimension_numbers = #tpu.dot_dimension_numbers<[1], [0], [0], [1], [0, 0, 1, 1], [], []>} : vector<16x256xf32>, vector<256x64xf32>, vector<16x64xf32> -> vector<16x64xf32>
    %226 = vector.broadcast %188 : vector<1x64xf32> to vector<16x64xf32>
    %227 = arith.addf %225, %226 : vector<16x64xf32>
    %228 = arith.addf %227, %182 : vector<16x64xf32>
    %c0_122 = arith.constant 0 : index
    %c0_123 = arith.constant 0 : index
    %229 = vector.load %arg32[%c0_122, %c0_123] : memref<1x64xf32, #tpu.memory_space<vmem>>, vector<1x64xf32>
    %c0_124 = arith.constant 0 : index
    %c0_125 = arith.constant 0 : index
    %230 = vector.load %arg33[%c0_124, %c0_125] : memref<1x64xf32, #tpu.memory_space<vmem>>, vector<1x64xf32>
    %c0_126 = arith.constant 0 : index
    %c0_127 = arith.constant 0 : index
    %c0_128 = arith.constant 0 : index
    %231 = vector.load %arg34[%c0_126, %c0_127, %c0_128] : memref<4x64x16xf32, #tpu.memory_space<vmem>>, vector<4x64x16xf32>
    %c0_129 = arith.constant 0 : index
    %c0_130 = arith.constant 0 : index
    %c0_131 = arith.constant 0 : index
    %232 = vector.load %arg35[%c0_129, %c0_130, %c0_131] : memref<4x64x16xf32, #tpu.memory_space<vmem>>, vector<4x64x16xf32>
    %c0_132 = arith.constant 0 : index
    %c0_133 = arith.constant 0 : index
    %c0_134 = arith.constant 0 : index
    %233 = vector.load %arg36[%c0_132, %c0_133, %c0_134] : memref<4x64x16xf32, #tpu.memory_space<vmem>>, vector<4x64x16xf32>
    %c0_135 = arith.constant 0 : index
    %c0_136 = arith.constant 0 : index
    %c0_137 = arith.constant 0 : index
    %234 = vector.load %arg37[%c0_135, %c0_136, %c0_137] : memref<4x16x64xf32, #tpu.memory_space<vmem>>, vector<4x16x64xf32>
    %c0_138 = arith.constant 0 : index
    %c0_139 = arith.constant 0 : index
    %235 = vector.load %arg38[%c0_138, %c0_139] : memref<1x64xf32, #tpu.memory_space<vmem>>, vector<1x64xf32>
    %cst_140 = arith.constant dense<0.000000e+00> : vector<16xf32>
    %236 = vector.multi_reduction <add>, %228, %cst_140 [1] : vector<16x64xf32> to vector<16xf32>
    %237 = vector.shape_cast %236 : vector<16xf32> to vector<16x1xf32>
    %cst_141 = arith.constant 6.400000e+01 : f32
    %238 = vector.broadcast %cst_141 : f32 to vector<16x1xf32>
    %239 = arith.divf %237, %238 : vector<16x1xf32>
    %240 = vector.broadcast %239 : vector<16x1xf32> to vector<16x64xf32>
    %241 = arith.subf %228, %240 : vector<16x64xf32>
    %242 = arith.mulf %241, %241 : vector<16x64xf32>
    %cst_142 = arith.constant dense<0.000000e+00> : vector<16xf32>
    %243 = vector.multi_reduction <add>, %242, %cst_142 [1] : vector<16x64xf32> to vector<16xf32>
    %244 = vector.shape_cast %243 : vector<16xf32> to vector<16x1xf32>
    %cst_143 = arith.constant 6.400000e+01 : f32
    %245 = vector.broadcast %cst_143 : f32 to vector<16x1xf32>
    %246 = arith.divf %244, %245 : vector<16x1xf32>
    %247 = vector.broadcast %239 : vector<16x1xf32> to vector<16x64xf32>
    %248 = arith.subf %228, %247 : vector<16x64xf32>
    %cst_144 = arith.constant 9.99999974E-6 : f32
    %249 = vector.broadcast %cst_144 : f32 to vector<16x1xf32>
    %250 = arith.addf %246, %249 : vector<16x1xf32>
    %251 = math.rsqrt %250 : vector<16x1xf32>
    %252 = vector.broadcast %251 : vector<16x1xf32> to vector<16x64xf32>
    %253 = arith.mulf %248, %252 : vector<16x64xf32>
    %254 = vector.broadcast %229 : vector<1x64xf32> to vector<16x64xf32>
    %255 = arith.mulf %253, %254 : vector<16x64xf32>
    %256 = vector.broadcast %230 : vector<1x64xf32> to vector<16x64xf32>
    %257 = arith.addf %255, %256 : vector<16x64xf32>
    %258 = vector.shape_cast %257 : vector<16x64xf32> to vector<1x16x64xf32>
    %259 = vector.shape_cast %258 : vector<1x16x64xf32> to vector<1x16x64xf32>
    %260 = vector.broadcast %259 : vector<1x16x64xf32> to vector<4x16x64xf32>
    %261 = vector.shape_cast %257 : vector<16x64xf32> to vector<1x16x64xf32>
    %262 = vector.shape_cast %261 : vector<1x16x64xf32> to vector<1x16x64xf32>
    %263 = vector.broadcast %262 : vector<1x16x64xf32> to vector<4x16x64xf32>
    %cst_145 = arith.constant dense<0.000000e+00> : vector<4x16x16xf32>
    %264 = tpu.matmul %260, %231, %cst_145 {dimension_numbers = #tpu.dot_dimension_numbers<[2], [1], [1], [2], [0, 0, 0, 1, 1, 2], [0], [0]>} : vector<4x16x64xf32>, vector<4x64x16xf32>, vector<4x16x16xf32> -> vector<4x16x16xf32>
    %cst_146 = arith.constant 2.500000e-01 : f32
    %265 = vector.broadcast %cst_146 : f32 to vector<4x16x16xf32>
    %266 = arith.mulf %264, %265 : vector<4x16x16xf32>
    %cst_147 = arith.constant dense<0.000000e+00> : vector<4x16x16xf32>
    %267 = tpu.matmul %263, %232, %cst_147 {dimension_numbers = #tpu.dot_dimension_numbers<[2], [1], [1], [2], [0, 0, 0, 1, 1, 2], [0], [0]>} : vector<4x16x64xf32>, vector<4x64x16xf32>, vector<4x16x16xf32> -> vector<4x16x16xf32>
    %cst_148 = arith.constant dense<0.000000e+00> : vector<4x16x16xf32>
    %268 = tpu.matmul %263, %233, %cst_148 {dimension_numbers = #tpu.dot_dimension_numbers<[2], [1], [1], [2], [0, 0, 0, 1, 1, 2], [0], [0]>} : vector<4x16x64xf32>, vector<4x64x16xf32>, vector<4x16x16xf32> -> vector<4x16x16xf32>
    %cst_149 = arith.constant dense<0.000000e+00> : vector<4x16x16xf32>
    %269 = tpu.matmul %266, %267, %cst_149 {dimension_numbers = #tpu.dot_dimension_numbers<[2], [2], [1], [1], [0, 0, 0, 1, 1, 1], [0], [0]>} : vector<4x16x16xf32>, vector<4x16x16xf32>, vector<4x16x16xf32> -> vector<4x16x16xf32>
    %cst_150 = arith.constant dense<0xFF800000> : vector<4x16xf32>
    %270 = vector.multi_reduction <maximumf>, %269, %cst_150 [2] : vector<4x16x16xf32> to vector<4x16xf32>
    %271 = vector.shape_cast %270 : vector<4x16xf32> to vector<4x16x1xf32>
    %272 = vector.broadcast %271 : vector<4x16x1xf32> to vector<4x16x16xf32>
    %273 = arith.subf %269, %272 : vector<4x16x16xf32>
    %274 = math.exp %273 : vector<4x16x16xf32>
    %cst_151 = arith.constant dense<0.000000e+00> : vector<4x16xf32>
    %275 = vector.multi_reduction <add>, %274, %cst_151 [2] : vector<4x16x16xf32> to vector<4x16xf32>
    %276 = vector.shape_cast %275 : vector<4x16xf32> to vector<4x16x1xf32>
    %277 = tpu.reciprocal %276 {approx = true} : vector<4x16x1xf32> -> vector<4x16x1xf32>
    %278 = vector.broadcast %277 : vector<4x16x1xf32> to vector<4x16x16xf32>
    %279 = arith.mulf %274, %278 : vector<4x16x16xf32>
    %cst_152 = arith.constant dense<0.000000e+00> : vector<4x16x16xf32>
    %280 = tpu.matmul %279, %268, %cst_152 {dimension_numbers = #tpu.dot_dimension_numbers<[2], [1], [1], [2], [0, 0, 0, 1, 1, 2], [0], [0]>} : vector<4x16x16xf32>, vector<4x16x16xf32>, vector<4x16x16xf32> -> vector<4x16x16xf32>
    %cst_153 = arith.constant dense<0.000000e+00> : vector<4x16x64xf32>
    %281 = tpu.matmul %280, %234, %cst_153 {dimension_numbers = #tpu.dot_dimension_numbers<[2], [1], [1], [2], [0, 0, 0, 1, 1, 2], [0], [0]>} : vector<4x16x16xf32>, vector<4x16x64xf32>, vector<4x16x64xf32> -> vector<4x16x64xf32>
    %cst_154 = arith.constant dense<0.000000e+00> : vector<16x64xf32>
    %282 = vector.multi_reduction <add>, %281, %cst_154 [0] : vector<4x16x64xf32> to vector<16x64xf32>
    %283 = vector.broadcast %235 : vector<1x64xf32> to vector<16x64xf32>
    %284 = arith.addf %282, %283 : vector<16x64xf32>
    %285 = arith.addf %284, %228 : vector<16x64xf32>
    %c0_155 = arith.constant 0 : index
    %c0_156 = arith.constant 0 : index
    %286 = vector.load %arg39[%c0_155, %c0_156] : memref<1x64xf32, #tpu.memory_space<vmem>>, vector<1x64xf32>
    %c0_157 = arith.constant 0 : index
    %c0_158 = arith.constant 0 : index
    %287 = vector.load %arg40[%c0_157, %c0_158] : memref<1x64xf32, #tpu.memory_space<vmem>>, vector<1x64xf32>
    %c0_159 = arith.constant 0 : index
    %c0_160 = arith.constant 0 : index
    %288 = vector.load %arg41[%c0_159, %c0_160] : memref<64x512xf32, #tpu.memory_space<vmem>>, vector<64x512xf32>
    %c0_161 = arith.constant 0 : index
    %c0_162 = arith.constant 0 : index
    %289 = vector.load %arg42[%c0_161, %c0_162] : memref<1x512xf32, #tpu.memory_space<vmem>>, vector<1x512xf32>
    %c0_163 = arith.constant 0 : index
    %c0_164 = arith.constant 0 : index
    %290 = vector.load %arg43[%c0_163, %c0_164] : memref<256x64xf32, #tpu.memory_space<vmem>>, vector<256x64xf32>
    %c0_165 = arith.constant 0 : index
    %c0_166 = arith.constant 0 : index
    %291 = vector.load %arg44[%c0_165, %c0_166] : memref<1x64xf32, #tpu.memory_space<vmem>>, vector<1x64xf32>
    %cst_167 = arith.constant dense<0.000000e+00> : vector<16xf32>
    %292 = vector.multi_reduction <add>, %285, %cst_167 [1] : vector<16x64xf32> to vector<16xf32>
    %293 = vector.shape_cast %292 : vector<16xf32> to vector<16x1xf32>
    %cst_168 = arith.constant 6.400000e+01 : f32
    %294 = vector.broadcast %cst_168 : f32 to vector<16x1xf32>
    %295 = arith.divf %293, %294 : vector<16x1xf32>
    %296 = vector.broadcast %295 : vector<16x1xf32> to vector<16x64xf32>
    %297 = arith.subf %285, %296 : vector<16x64xf32>
    %298 = arith.mulf %297, %297 : vector<16x64xf32>
    %cst_169 = arith.constant dense<0.000000e+00> : vector<16xf32>
    %299 = vector.multi_reduction <add>, %298, %cst_169 [1] : vector<16x64xf32> to vector<16xf32>
    %300 = vector.shape_cast %299 : vector<16xf32> to vector<16x1xf32>
    %cst_170 = arith.constant 6.400000e+01 : f32
    %301 = vector.broadcast %cst_170 : f32 to vector<16x1xf32>
    %302 = arith.divf %300, %301 : vector<16x1xf32>
    %303 = vector.broadcast %295 : vector<16x1xf32> to vector<16x64xf32>
    %304 = arith.subf %285, %303 : vector<16x64xf32>
    %cst_171 = arith.constant 9.99999974E-6 : f32
    %305 = vector.broadcast %cst_171 : f32 to vector<16x1xf32>
    %306 = arith.addf %302, %305 : vector<16x1xf32>
    %307 = math.rsqrt %306 : vector<16x1xf32>
    %308 = vector.broadcast %307 : vector<16x1xf32> to vector<16x64xf32>
    %309 = arith.mulf %304, %308 : vector<16x64xf32>
    %310 = vector.broadcast %286 : vector<1x64xf32> to vector<16x64xf32>
    %311 = arith.mulf %309, %310 : vector<16x64xf32>
    %312 = vector.broadcast %287 : vector<1x64xf32> to vector<16x64xf32>
    %313 = arith.addf %311, %312 : vector<16x64xf32>
    %cst_172 = arith.constant dense<0.000000e+00> : vector<16x512xf32>
    %314 = tpu.matmul %313, %288, %cst_172 {dimension_numbers = #tpu.dot_dimension_numbers<[1], [0], [0], [1], [0, 0, 1, 1], [], []>} : vector<16x64xf32>, vector<64x512xf32>, vector<16x512xf32> -> vector<16x512xf32>
    %315 = vector.broadcast %289 : vector<1x512xf32> to vector<16x512xf32>
    %316 = arith.addf %314, %315 : vector<16x512xf32>
    %317 = vector.extract_strided_slice %316 {offsets = [0, 0], sizes = [16, 256], strides = [1, 1]} : vector<16x512xf32> to vector<16x256xf32>
    %318 = vector.extract_strided_slice %316 {offsets = [0, 256], sizes = [16, 256], strides = [1, 1]} : vector<16x512xf32> to vector<16x256xf32>
    %cst_173 = arith.constant 5.000000e-01 : f32
    %319 = vector.broadcast %cst_173 : f32 to vector<16x256xf32>
    %320 = arith.mulf %319, %318 : vector<16x256xf32>
    %cst_174 = arith.constant 0.707106769 : f32
    %321 = vector.broadcast %cst_174 : f32 to vector<16x256xf32>
    %322 = arith.mulf %318, %321 : vector<16x256xf32>
    %323 = math.erf %322 : vector<16x256xf32>
    %cst_175 = arith.constant 1.000000e+00 : f32
    %324 = vector.broadcast %cst_175 : f32 to vector<16x256xf32>
    %325 = arith.addf %324, %323 : vector<16x256xf32>
    %326 = arith.mulf %320, %325 : vector<16x256xf32>
    %327 = arith.mulf %317, %326 : vector<16x256xf32>
    %cst_176 = arith.constant dense<0.000000e+00> : vector<16x64xf32>
    %328 = tpu.matmul %327, %290, %cst_176 {dimension_numbers = #tpu.dot_dimension_numbers<[1], [0], [0], [1], [0, 0, 1, 1], [], []>} : vector<16x256xf32>, vector<256x64xf32>, vector<16x64xf32> -> vector<16x64xf32>
    %329 = vector.broadcast %291 : vector<1x64xf32> to vector<16x64xf32>
    %330 = arith.addf %328, %329 : vector<16x64xf32>
    %331 = arith.addf %330, %285 : vector<16x64xf32>
    %c0_177 = arith.constant 0 : index
    %c0_178 = arith.constant 0 : index
    %332 = vector.load %arg45[%c0_177, %c0_178] : memref<1x32xf32, #tpu.memory_space<vmem>>, vector<1x32xf32>
    %c0_179 = arith.constant 0 : index
    %c0_180 = arith.constant 0 : index
    %333 = vector.load %arg46[%c0_179, %c0_180] : memref<1x32xf32, #tpu.memory_space<vmem>>, vector<1x32xf32>
    %c0_181 = arith.constant 0 : index
    %c0_182 = arith.constant 0 : index
    %334 = vector.load %arg47[%c0_181, %c0_182] : memref<1x64xf32, #tpu.memory_space<vmem>>, vector<1x64xf32>
    %c0_183 = arith.constant 0 : index
    %c0_184 = arith.constant 0 : index
    %335 = vector.load %arg48[%c0_183, %c0_184] : memref<1x64xf32, #tpu.memory_space<vmem>>, vector<1x64xf32>
    %c0_185 = arith.constant 0 : index
    %c0_186 = arith.constant 0 : index
    %c0_187 = arith.constant 0 : index
    %336 = vector.load %arg49[%c0_185, %c0_186, %c0_187] : memref<1x32x16xf32, #tpu.memory_space<vmem>>, vector<1x32x16xf32>
    %c0_188 = arith.constant 0 : index
    %c0_189 = arith.constant 0 : index
    %c0_190 = arith.constant 0 : index
    %337 = vector.load %arg50[%c0_188, %c0_189, %c0_190] : memref<1x64x16xf32, #tpu.memory_space<vmem>>, vector<1x64x16xf32>
    %c0_191 = arith.constant 0 : index
    %c0_192 = arith.constant 0 : index
    %c0_193 = arith.constant 0 : index
    %338 = vector.load %arg51[%c0_191, %c0_192, %c0_193] : memref<1x64x16xf32, #tpu.memory_space<vmem>>, vector<1x64x16xf32>
    %c0_194 = arith.constant 0 : index
    %c0_195 = arith.constant 0 : index
    %c0_196 = arith.constant 0 : index
    %339 = vector.load %arg52[%c0_194, %c0_195, %c0_196] : memref<1x16x32xf32, #tpu.memory_space<vmem>>, vector<1x16x32xf32>
    %c0_197 = arith.constant 0 : index
    %c0_198 = arith.constant 0 : index
    %340 = vector.load %arg53[%c0_197, %c0_198] : memref<1x32xf32, #tpu.memory_space<vmem>>, vector<1x32xf32>
    %c0_199 = arith.constant 0 : index
    %c0_200 = arith.constant 0 : index
    %341 = vector.load %arg3[%c0_199, %c0_200] : memref<1x32xf32, #tpu.memory_space<vmem>>, vector<1x32xf32>
    %cst_201 = arith.constant dense<0.000000e+00> : vector<1xf32>
    %342 = vector.multi_reduction <add>, %341, %cst_201 [1] : vector<1x32xf32> to vector<1xf32>
    %343 = vector.shape_cast %342 : vector<1xf32> to vector<1x1xf32>
    %cst_202 = arith.constant 3.200000e+01 : f32
    %344 = vector.broadcast %cst_202 : f32 to vector<1x1xf32>
    %345 = arith.divf %343, %344 : vector<1x1xf32>
    %346 = vector.broadcast %345 : vector<1x1xf32> to vector<1x32xf32>
    %347 = arith.subf %341, %346 : vector<1x32xf32>
    %348 = arith.mulf %347, %347 : vector<1x32xf32>
    %cst_203 = arith.constant dense<0.000000e+00> : vector<1xf32>
    %349 = vector.multi_reduction <add>, %348, %cst_203 [1] : vector<1x32xf32> to vector<1xf32>
    %350 = vector.shape_cast %349 : vector<1xf32> to vector<1x1xf32>
    %cst_204 = arith.constant 3.200000e+01 : f32
    %351 = vector.broadcast %cst_204 : f32 to vector<1x1xf32>
    %352 = arith.divf %350, %351 : vector<1x1xf32>
    %353 = vector.broadcast %345 : vector<1x1xf32> to vector<1x32xf32>
    %354 = arith.subf %341, %353 : vector<1x32xf32>
    %cst_205 = arith.constant 9.99999974E-6 : f32
    %355 = vector.broadcast %cst_205 : f32 to vector<1x1xf32>
    %356 = arith.addf %352, %355 : vector<1x1xf32>
    %357 = math.rsqrt %356 : vector<1x1xf32>
    %358 = vector.broadcast %357 : vector<1x1xf32> to vector<1x32xf32>
    %359 = arith.mulf %354, %358 : vector<1x32xf32>
    %360 = arith.mulf %359, %332 : vector<1x32xf32>
    %361 = arith.addf %360, %333 : vector<1x32xf32>
    %cst_206 = arith.constant dense<0.000000e+00> : vector<16xf32>
    %362 = vector.multi_reduction <add>, %331, %cst_206 [1] : vector<16x64xf32> to vector<16xf32>
    %363 = vector.shape_cast %362 : vector<16xf32> to vector<16x1xf32>
    %cst_207 = arith.constant 6.400000e+01 : f32
    %364 = vector.broadcast %cst_207 : f32 to vector<16x1xf32>
    %365 = arith.divf %363, %364 : vector<16x1xf32>
    %366 = vector.broadcast %365 : vector<16x1xf32> to vector<16x64xf32>
    %367 = arith.subf %331, %366 : vector<16x64xf32>
    %368 = arith.mulf %367, %367 : vector<16x64xf32>
    %cst_208 = arith.constant dense<0.000000e+00> : vector<16xf32>
    %369 = vector.multi_reduction <add>, %368, %cst_208 [1] : vector<16x64xf32> to vector<16xf32>
    %370 = vector.shape_cast %369 : vector<16xf32> to vector<16x1xf32>
    %cst_209 = arith.constant 6.400000e+01 : f32
    %371 = vector.broadcast %cst_209 : f32 to vector<16x1xf32>
    %372 = arith.divf %370, %371 : vector<16x1xf32>
    %373 = vector.broadcast %365 : vector<16x1xf32> to vector<16x64xf32>
    %374 = arith.subf %331, %373 : vector<16x64xf32>
    %cst_210 = arith.constant 9.99999974E-6 : f32
    %375 = vector.broadcast %cst_210 : f32 to vector<16x1xf32>
    %376 = arith.addf %372, %375 : vector<16x1xf32>
    %377 = math.rsqrt %376 : vector<16x1xf32>
    %378 = vector.broadcast %377 : vector<16x1xf32> to vector<16x64xf32>
    %379 = arith.mulf %374, %378 : vector<16x64xf32>
    %380 = vector.broadcast %334 : vector<1x64xf32> to vector<16x64xf32>
    %381 = arith.mulf %379, %380 : vector<16x64xf32>
    %382 = vector.broadcast %335 : vector<1x64xf32> to vector<16x64xf32>
    %383 = arith.addf %381, %382 : vector<16x64xf32>
    %384 = vector.shape_cast %361 : vector<1x32xf32> to vector<1x1x32xf32>
    %385 = vector.shape_cast %383 : vector<16x64xf32> to vector<1x16x64xf32>
    %cst_211 = arith.constant dense<0.000000e+00> : vector<1x1x16xf32>
    %386 = tpu.matmul %384, %336, %cst_211 {dimension_numbers = #tpu.dot_dimension_numbers<[2], [1], [1], [2], [0, 0, 0, 1, 1, 2], [0], [0]>} : vector<1x1x32xf32>, vector<1x32x16xf32>, vector<1x1x16xf32> -> vector<1x1x16xf32>
    %cst_212 = arith.constant 2.500000e-01 : f32
    %387 = vector.broadcast %cst_212 : f32 to vector<1x1x16xf32>
    %388 = arith.mulf %386, %387 : vector<1x1x16xf32>
    %cst_213 = arith.constant dense<0.000000e+00> : vector<1x16x16xf32>
    %389 = tpu.matmul %385, %337, %cst_213 {dimension_numbers = #tpu.dot_dimension_numbers<[2], [1], [1], [2], [0, 0, 0, 1, 1, 2], [0], [0]>} : vector<1x16x64xf32>, vector<1x64x16xf32>, vector<1x16x16xf32> -> vector<1x16x16xf32>
    %cst_214 = arith.constant dense<0.000000e+00> : vector<1x16x16xf32>
    %390 = tpu.matmul %385, %338, %cst_214 {dimension_numbers = #tpu.dot_dimension_numbers<[2], [1], [1], [2], [0, 0, 0, 1, 1, 2], [0], [0]>} : vector<1x16x64xf32>, vector<1x64x16xf32>, vector<1x16x16xf32> -> vector<1x16x16xf32>
    %cst_215 = arith.constant dense<0.000000e+00> : vector<1x1x16xf32>
    %391 = tpu.matmul %388, %389, %cst_215 {dimension_numbers = #tpu.dot_dimension_numbers<[2], [2], [1], [1], [0, 0, 0, 1, 1, 1], [0], [0]>} : vector<1x1x16xf32>, vector<1x16x16xf32>, vector<1x1x16xf32> -> vector<1x1x16xf32>
    %cst_216 = arith.constant dense<0xFF800000> : vector<1x1xf32>
    %392 = vector.multi_reduction <maximumf>, %391, %cst_216 [2] : vector<1x1x16xf32> to vector<1x1xf32>
    %393 = vector.shape_cast %392 : vector<1x1xf32> to vector<1x1x1xf32>
    %394 = vector.broadcast %393 : vector<1x1x1xf32> to vector<1x1x16xf32>
    %395 = arith.subf %391, %394 : vector<1x1x16xf32>
    %396 = math.exp %395 : vector<1x1x16xf32>
    %cst_217 = arith.constant dense<0.000000e+00> : vector<1x1xf32>
    %397 = vector.multi_reduction <add>, %396, %cst_217 [2] : vector<1x1x16xf32> to vector<1x1xf32>
    %398 = vector.shape_cast %397 : vector<1x1xf32> to vector<1x1x1xf32>
    %399 = tpu.reciprocal %398 {approx = true} : vector<1x1x1xf32> -> vector<1x1x1xf32>
    %400 = vector.broadcast %399 : vector<1x1x1xf32> to vector<1x1x16xf32>
    %401 = arith.mulf %396, %400 : vector<1x1x16xf32>
    %cst_218 = arith.constant dense<0.000000e+00> : vector<1x1x16xf32>
    %402 = tpu.matmul %401, %390, %cst_218 {dimension_numbers = #tpu.dot_dimension_numbers<[2], [1], [1], [2], [0, 0, 0, 1, 1, 2], [0], [0]>} : vector<1x1x16xf32>, vector<1x16x16xf32>, vector<1x1x16xf32> -> vector<1x1x16xf32>
    %cst_219 = arith.constant dense<0.000000e+00> : vector<1x1x32xf32>
    %403 = tpu.matmul %402, %339, %cst_219 {dimension_numbers = #tpu.dot_dimension_numbers<[2], [1], [1], [2], [0, 0, 0, 1, 1, 2], [0], [0]>} : vector<1x1x16xf32>, vector<1x16x32xf32>, vector<1x1x32xf32> -> vector<1x1x32xf32>
    %cst_220 = arith.constant dense<0.000000e+00> : vector<1x32xf32>
    %404 = vector.multi_reduction <add>, %403, %cst_220 [0] : vector<1x1x32xf32> to vector<1x32xf32>
    %405 = arith.addf %404, %340 : vector<1x32xf32>
    %c0_221 = arith.constant 0 : index
    %c0_222 = arith.constant 0 : index
    %406 = vector.load %arg54[%c0_221, %c0_222] : memref<32x8xf32, #tpu.memory_space<vmem>>, vector<32x8xf32>
    %c0_223 = arith.constant 0 : index
    %c0_224 = arith.constant 0 : index
    %407 = vector.load %arg55[%c0_223, %c0_224] : memref<1x8xf32, #tpu.memory_space<vmem>>, vector<1x8xf32>
    %cst_225 = arith.constant dense<0.000000e+00> : vector<1x8xf32>
    %408 = tpu.matmul %405, %406, %cst_225 {dimension_numbers = #tpu.dot_dimension_numbers<[1], [0], [0], [1], [0, 0, 1, 1], [], []>} : vector<1x32xf32>, vector<32x8xf32>, vector<1x8xf32> -> vector<1x8xf32>
    %409 = arith.addf %408, %407 : vector<1x8xf32>
    %c0_226 = arith.constant 0 : index
    %c0_227 = arith.constant 0 : index
    %c0_228 = arith.constant 0 : index
    %410 = vector.load %arg56[%c0_226, %c0_227, %c0_228] : memref<1x1x8xf32, #tpu.memory_space<vmem>>, vector<1x1x8xf32>
    %411 = vector.shape_cast %410 : vector<1x1x8xf32> to vector<1x8xf32>
    %412 = vector.shape_cast %409 : vector<1x8xf32> to vector<1x1x8xf32>
    tpu.vector_store %arg56[%c0_226, %c0_227, %c0_228], %412 {strides = array<i32>} : memref<1x1x8xf32, #tpu.memory_space<vmem>>, vector<1x1x8xf32>,
    return
  }
  func.func @transform_0(%arg0: i32) -> (i32, i32, i32) {
    %c0_i32 = arith.constant 0 : i32
    %c0_i32_0 = arith.constant 0 : i32
    %c0_i32_1 = arith.constant 0 : i32
    return %arg0, %c0_i32, %c0_i32_0 : i32, i32, i32
  }
  func.func @transform_1(%arg0: i32) -> (i32, i32) {
    %c0_i32 = arith.constant 0 : i32
    %c0_i32_0 = arith.constant 0 : i32
    %c0_i32_1 = arith.constant 0 : i32
    return %c0_i32, %c0_i32_0 : i32, i32
  }
  func.func @transform_2(%arg0: i32) -> (i32, i32) {
    %c0_i32 = arith.constant 0 : i32
    %c0_i32_0 = arith.constant 0 : i32
    %c0_i32_1 = arith.constant 0 : i32
    return %c0_i32, %c0_i32_0 : i32, i32
  }
  func.func @transform_3(%arg0: i32) -> (i32, i32) {
    %c0_i32 = arith.constant 0 : i32
    %c0_i32_0 = arith.constant 0 : i32
    %c0_i32_1 = arith.constant 0 : i32
    return %c0_i32, %c0_i32_0 : i32, i32
  }
  func.func @transform_4(%arg0: i32) -> (i32, i32) {
    %c0_i32 = arith.constant 0 : i32
    %c0_i32_0 = arith.constant 0 : i32
    %c0_i32_1 = arith.constant 0 : i32
    return %c0_i32, %c0_i32_0 : i32, i32
  }
  func.func @transform_5(%arg0: i32) -> (i32, i32) {
    %c0_i32 = arith.constant 0 : i32
    %c0_i32_0 = arith.constant 0 : i32
    %c0_i32_1 = arith.constant 0 : i32
    return %c0_i32, %c0_i32_0 : i32, i32
  }
  func.func @transform_6(%arg0: i32) -> (i32, i32) {
    %c0_i32 = arith.constant 0 : i32
    %c0_i32_0 = arith.constant 0 : i32
    %c0_i32_1 = arith.constant 0 : i32
    return %c0_i32, %c0_i32_0 : i32, i32
  }
  func.func @transform_7(%arg0: i32) -> (i32, i32, i32) {
    %c0_i32 = arith.constant 0 : i32
    %c0_i32_0 = arith.constant 0 : i32
    %c0_i32_1 = arith.constant 0 : i32
    %c0_i32_2 = arith.constant 0 : i32
    return %c0_i32, %c0_i32_0, %c0_i32_1 : i32, i32, i32
  }
  func.func @transform_8(%arg0: i32) -> (i32, i32, i32) {
    %c0_i32 = arith.constant 0 : i32
    %c0_i32_0 = arith.constant 0 : i32
    %c0_i32_1 = arith.constant 0 : i32
    %c0_i32_2 = arith.constant 0 : i32
    return %c0_i32, %c0_i32_0, %c0_i32_1 : i32, i32, i32
  }
  func.func @transform_9(%arg0: i32) -> (i32, i32, i32) {
    %c0_i32 = arith.constant 0 : i32
    %c0_i32_0 = arith.constant 0 : i32
    %c0_i32_1 = arith.constant 0 : i32
    %c0_i32_2 = arith.constant 0 : i32
    return %c0_i32, %c0_i32_0, %c0_i32_1 : i32, i32, i32
  }
  func.func @transform_10(%arg0: i32) -> (i32, i32, i32) {
    %c0_i32 = arith.constant 0 : i32
    %c0_i32_0 = arith.constant 0 : i32
    %c0_i32_1 = arith.constant 0 : i32
    %c0_i32_2 = arith.constant 0 : i32
    return %c0_i32, %c0_i32_0, %c0_i32_1 : i32, i32, i32
  }
  func.func @transform_11(%arg0: i32) -> (i32, i32) {
    %c0_i32 = arith.constant 0 : i32
    %c0_i32_0 = arith.constant 0 : i32
    %c0_i32_1 = arith.constant 0 : i32
    return %c0_i32, %c0_i32_0 : i32, i32
  }
  func.func @transform_12(%arg0: i32) -> (i32, i32) {
    %c0_i32 = arith.constant 0 : i32
    %c0_i32_0 = arith.constant 0 : i32
    %c0_i32_1 = arith.constant 0 : i32
    return %c0_i32, %c0_i32_0 : i32, i32
  }
  func.func @transform_13(%arg0: i32) -> (i32, i32) {
    %c0_i32 = arith.constant 0 : i32
    %c0_i32_0 = arith.constant 0 : i32
    %c0_i32_1 = arith.constant 0 : i32
    return %c0_i32, %c0_i32_0 : i32, i32
  }
  func.func @transform_14(%arg0: i32) -> (i32, i32) {
    %c0_i32 = arith.constant 0 : i32
    %c0_i32_0 = arith.constant 0 : i32
    %c0_i32_1 = arith.constant 0 : i32
    return %c0_i32, %c0_i32_0 : i32, i32
  }
  func.func @transform_15(%arg0: i32) -> (i32, i32) {
    %c0_i32 = arith.constant 0 : i32
    %c0_i32_0 = arith.constant 0 : i32
    %c0_i32_1 = arith.constant 0 : i32
    return %c0_i32, %c0_i32_0 : i32, i32
  }
  func.func @transform_16(%arg0: i32) -> (i32, i32) {
    %c0_i32 = arith.constant 0 : i32
    %c0_i32_0 = arith.constant 0 : i32
    %c0_i32_1 = arith.constant 0 : i32
    return %c0_i32, %c0_i32_0 : i32, i32
  }
  func.func @transform_17(%arg0: i32) -> (i32, i32) {
    %c0_i32 = arith.constant 0 : i32
    %c0_i32_0 = arith.constant 0 : i32
    %c0_i32_1 = arith.constant 0 : i32
    return %c0_i32, %c0_i32_0 : i32, i32
  }
  func.func @transform_18(%arg0: i32) -> (i32, i32) {
    %c0_i32 = arith.constant 0 : i32
    %c0_i32_0 = arith.constant 0 : i32
    %c0_i32_1 = arith.constant 0 : i32
    return %c0_i32, %c0_i32_0 : i32, i32
  }
  func.func @transform_19(%arg0: i32) -> (i32, i32) {
    %c0_i32 = arith.constant 0 : i32
    %c0_i32_0 = arith.constant 0 : i32
    %c0_i32_1 = arith.constant 0 : i32
    return %c0_i32, %c0_i32_0 : i32, i32
  }
  func.func @transform_20(%arg0: i32) -> (i32, i32, i32) {
    %c0_i32 = arith.constant 0 : i32
    %c0_i32_0 = arith.constant 0 : i32
    %c0_i32_1 = arith.constant 0 : i32
    %c0_i32_2 = arith.constant 0 : i32
    return %c0_i32, %c0_i32_0, %c0_i32_1 : i32, i32, i32
  }
  func.func @transform_21(%arg0: i32) -> (i32, i32, i32) {
    %c0_i32 = arith.constant 0 : i32
    %c0_i32_0 = arith.constant 0 : i32
    %c0_i32_1 = arith.constant 0 : i32
    %c0_i32_2 = arith.constant 0 : i32
    return %c0_i32, %c0_i32_0, %c0_i32_1 : i32, i32, i32
  }
  func.func @transform_22(%arg0: i32) -> (i32, i32, i32) {
    %c0_i32 = arith.constant 0 : i32
    %c0_i32_0 = arith.constant 0 : i32
    %c0_i32_1 = arith.constant 0 : i32
    %c0_i32_2 = arith.constant 0 : i32
    return %c0_i32, %c0_i32_0, %c0_i32_1 : i32, i32, i32
  }
  func.func @transform_23(%arg0: i32) -> (i32, i32, i32) {
    %c0_i32 = arith.constant 0 : i32
    %c0_i32_0 = arith.constant 0 : i32
    %c0_i32_1 = arith.constant 0 : i32
    %c0_i32_2 = arith.constant 0 : i32
    return %c0_i32, %c0_i32_0, %c0_i32_1 : i32, i32, i32
  }
  func.func @transform_24(%arg0: i32) -> (i32, i32) {
    %c0_i32 = arith.constant 0 : i32
    %c0_i32_0 = arith.constant 0 : i32
    %c0_i32_1 = arith.constant 0 : i32
    return %c0_i32, %c0_i32_0 : i32, i32
  }
  func.func @transform_25(%arg0: i32) -> (i32, i32) {
    %c0_i32 = arith.constant 0 : i32
    %c0_i32_0 = arith.constant 0 : i32
    %c0_i32_1 = arith.constant 0 : i32
    return %c0_i32, %c0_i32_0 : i32, i32
  }
  func.func @transform_26(%arg0: i32) -> (i32, i32) {
    %c0_i32 = arith.constant 0 : i32
    %c0_i32_0 = arith.constant 0 : i32
    %c0_i32_1 = arith.constant 0 : i32
    return %c0_i32, %c0_i32_0 : i32, i32
  }
  func.func @transform_27(%arg0: i32) -> (i32, i32) {
    %c0_i32 = arith.constant 0 : i32
    %c0_i32_0 = arith.constant 0 : i32
    %c0_i32_1 = arith.constant 0 : i32
    return %c0_i32, %c0_i32_0 : i32, i32
  }
  func.func @transform_28(%arg0: i32) -> (i32, i32) {
    %c0_i32 = arith.constant 0 : i32
    %c0_i32_0 = arith.constant 0 : i32
    %c0_i32_1 = arith.constant 0 : i32
    return %c0_i32, %c0_i32_0 : i32, i32
  }
  func.func @transform_29(%arg0: i32) -> (i32, i32) {
    %c0_i32 = arith.constant 0 : i32
    %c0_i32_0 = arith.constant 0 : i32
    %c0_i32_1 = arith.constant 0 : i32
    return %c0_i32, %c0_i32_0 : i32, i32
  }
  func.func @transform_30(%arg0: i32) -> (i32, i32) {
    %c0_i32 = arith.constant 0 : i32
    %c0_i32_0 = arith.constant 0 : i32
    %c0_i32_1 = arith.constant 0 : i32
    return %c0_i32, %c0_i32_0 : i32, i32
  }
  func.func @transform_31(%arg0: i32) -> (i32, i32) {
    %c0_i32 = arith.constant 0 : i32
    %c0_i32_0 = arith.constant 0 : i32
    %c0_i32_1 = arith.constant 0 : i32
    return %c0_i32, %c0_i32_0 : i32, i32
  }
  func.func @transform_32(%arg0: i32) -> (i32, i32) {
    %c0_i32 = arith.constant 0 : i32
    %c0_i32_0 = arith.constant 0 : i32
    %c0_i32_1 = arith.constant 0 : i32
    return %c0_i32, %c0_i32_0 : i32, i32
  }
  func.func @transform_33(%arg0: i32) -> (i32, i32, i32) {
    %c0_i32 = arith.constant 0 : i32
    %c0_i32_0 = arith.constant 0 : i32
    %c0_i32_1 = arith.constant 0 : i32
    %c0_i32_2 = arith.constant 0 : i32
    return %c0_i32, %c0_i32_0, %c0_i32_1 : i32, i32, i32
  }
  func.func @transform_34(%arg0: i32) -> (i32, i32, i32) {
    %c0_i32 = arith.constant 0 : i32
    %c0_i32_0 = arith.constant 0 : i32
    %c0_i32_1 = arith.constant 0 : i32
    %c0_i32_2 = arith.constant 0 : i32
    return %c0_i32, %c0_i32_0, %c0_i32_1 : i32, i32, i32
  }
  func.func @transform_35(%arg0: i32) -> (i32, i32, i32) {
    %c0_i32 = arith.constant 0 : i32
    %c0_i32_0 = arith.constant 0 : i32
    %c0_i32_1 = arith.constant 0 : i32
    %c0_i32_2 = arith.constant 0 : i32
    return %c0_i32, %c0_i32_0, %c0_i32_1 : i32, i32, i32
  }
  func.func @transform_36(%arg0: i32) -> (i32, i32, i32) {
    %c0_i32 = arith.constant 0 : i32
    %c0_i32_0 = arith.constant 0 : i32
    %c0_i32_1 = arith.constant 0 : i32
    %c0_i32_2 = arith.constant 0 : i32
    return %c0_i32, %c0_i32_0, %c0_i32_1 : i32, i32, i32
  }
  func.func @transform_37(%arg0: i32) -> (i32, i32) {
    %c0_i32 = arith.constant 0 : i32
    %c0_i32_0 = arith.constant 0 : i32
    %c0_i32_1 = arith.constant 0 : i32
    return %c0_i32, %c0_i32_0 : i32, i32
  }
  func.func @transform_38(%arg0: i32) -> (i32, i32) {
    %c0_i32 = arith.constant 0 : i32
    %c0_i32_0 = arith.constant 0 : i32
    %c0_i32_1 = arith.constant 0 : i32
    return %c0_i32, %c0_i32_0 : i32, i32
  }
  func.func @transform_39(%arg0: i32) -> (i32, i32) {
    %c0_i32 = arith.constant 0 : i32
    %c0_i32_0 = arith.constant 0 : i32
    %c0_i32_1 = arith.constant 0 : i32
    return %c0_i32, %c0_i32_0 : i32, i32
  }
  func.func @transform_40(%arg0: i32) -> (i32, i32) {
    %c0_i32 = arith.constant 0 : i32
    %c0_i32_0 = arith.constant 0 : i32
    %c0_i32_1 = arith.constant 0 : i32
    return %c0_i32, %c0_i32_0 : i32, i32
  }
  func.func @transform_41(%arg0: i32) -> (i32, i32) {
    %c0_i32 = arith.constant 0 : i32
    %c0_i32_0 = arith.constant 0 : i32
    %c0_i32_1 = arith.constant 0 : i32
    return %c0_i32, %c0_i32_0 : i32, i32
  }
  func.func @transform_42(%arg0: i32) -> (i32, i32) {
    %c0_i32 = arith.constant 0 : i32
    %c0_i32_0 = arith.constant 0 : i32
    %c0_i32_1 = arith.constant 0 : i32
    return %c0_i32, %c0_i32_0 : i32, i32
  }
  func.func @transform_43(%arg0: i32) -> (i32, i32) {
    %c0_i32 = arith.constant 0 : i32
    %c0_i32_0 = arith.constant 0 : i32
    %c0_i32_1 = arith.constant 0 : i32
    return %c0_i32, %c0_i32_0 : i32, i32
  }
  func.func @transform_44(%arg0: i32) -> (i32, i32) {
    %c0_i32 = arith.constant 0 : i32
    %c0_i32_0 = arith.constant 0 : i32
    %c0_i32_1 = arith.constant 0 : i32
    return %c0_i32, %c0_i32_0 : i32, i32
  }
  func.func @transform_45(%arg0: i32) -> (i32, i32) {
    %c0_i32 = arith.constant 0 : i32
    %c0_i32_0 = arith.constant 0 : i32
    %c0_i32_1 = arith.constant 0 : i32
    return %c0_i32, %c0_i32_0 : i32, i32
  }
  func.func @transform_46(%arg0: i32) -> (i32, i32) {
    %c0_i32 = arith.constant 0 : i32
    %c0_i32_0 = arith.constant 0 : i32
    %c0_i32_1 = arith.constant 0 : i32
    return %c0_i32, %c0_i32_0 : i32, i32
  }
  func.func @transform_47(%arg0: i32) -> (i32, i32) {
    %c0_i32 = arith.constant 0 : i32
    %c0_i32_0 = arith.constant 0 : i32
    %c0_i32_1 = arith.constant 0 : i32
    return %c0_i32, %c0_i32_0 : i32, i32
  }
  func.func @transform_48(%arg0: i32) -> (i32, i32, i32) {
    %c0_i32 = arith.constant 0 : i32
    %c0_i32_0 = arith.constant 0 : i32
    %c0_i32_1 = arith.constant 0 : i32
    %c0_i32_2 = arith.constant 0 : i32
    return %c0_i32, %c0_i32_0, %c0_i32_1 : i32, i32, i32
  }
  func.func @transform_49(%arg0: i32) -> (i32, i32, i32) {
    %c0_i32 = arith.constant 0 : i32
    %c0_i32_0 = arith.constant 0 : i32
    %c0_i32_1 = arith.constant 0 : i32
    %c0_i32_2 = arith.constant 0 : i32
    return %c0_i32, %c0_i32_0, %c0_i32_1 : i32, i32, i32
  }
  func.func @transform_50(%arg0: i32) -> (i32, i32, i32) {
    %c0_i32 = arith.constant 0 : i32
    %c0_i32_0 = arith.constant 0 : i32
    %c0_i32_1 = arith.constant 0 : i32
    %c0_i32_2 = arith.constant 0 : i32
    return %c0_i32, %c0_i32_0, %c0_i32_1 : i32, i32, i32
  }
  func.func @transform_51(%arg0: i32) -> (i32, i32, i32) {
    %c0_i32 = arith.constant 0 : i32
    %c0_i32_0 = arith.constant 0 : i32
    %c0_i32_1 = arith.constant 0 : i32
    %c0_i32_2 = arith.constant 0 : i32
    return %c0_i32, %c0_i32_0, %c0_i32_1 : i32, i32, i32
  }
  func.func @transform_52(%arg0: i32) -> (i32, i32) {
    %c0_i32 = arith.constant 0 : i32
    %c0_i32_0 = arith.constant 0 : i32
    %c0_i32_1 = arith.constant 0 : i32
    return %c0_i32, %c0_i32_0 : i32, i32
  }
  func.func @transform_53(%arg0: i32) -> (i32, i32) {
    %c0_i32 = arith.constant 0 : i32
    %c0_i32_0 = arith.constant 0 : i32
    %c0_i32_1 = arith.constant 0 : i32
    return %c0_i32, %c0_i32_0 : i32, i32
  }
  func.func @transform_54(%arg0: i32) -> (i32, i32) {
    %c0_i32 = arith.constant 0 : i32
    %c0_i32_0 = arith.constant 0 : i32
    %c0_i32_1 = arith.constant 0 : i32
    return %c0_i32, %c0_i32_0 : i32, i32
  }
  func.func @transform_55(%arg0: i32) -> (i32, i32, i32) {
    %c0_i32 = arith.constant 0 : i32
    %c0_i32_0 = arith.constant 0 : i32
    %c0_i32_1 = arith.constant 0 : i32
    return %arg0, %c0_i32, %c0_i32_0 : i32, i32, i32
  }
}

</mosaic_0001>

<llo_original>
// kernel: _lambda_.1
$region0: #{_lambda_.1}
  #allocation0 [shape = 'u32[]', space=smem, size = 0x4, offset = 0x4, fixed_abs, tag = 'smem constant byte address 0x4 - core index']
  #allocation1 [shape = 'u32[72,128]{1,0:T(1,128)}', space=vmem, size = 0x9000, scoped, tag = 'internal scratch']
  %s0 = inlined_call_operand.smem [shape: u32[56], index: -1, kind: input, shape index: {}]
  %s1 = sld [smem:[%s0]]
  %s2 = scalar_lea.smem %s0, 1
  %s3 = sld [smem:[%s2]]
  %s4 = scalar_lea.smem %s0, 2
  %s5 = sld [smem:[%s4]]
  %s6 = scalar_lea.smem %s0, 3
  %s7 = sld [smem:[%s6]]
  %s8 = scalar_lea.smem %s0, 4
  %s9 = sld [smem:[%s8]]
  %s10 = scalar_lea.smem %s0, 5
  %s11 = sld [smem:[%s10]]
  %s12 = scalar_lea.smem %s0, 6
  %s13 = sld [smem:[%s12]]
  %s14 = scalar_lea.smem %s0, 7
  %s15 = sld [smem:[%s14]]
  %s16 = scalar_lea.smem %s0, 8
  %s17 = sld [smem:[%s16]]
  %s18 = scalar_lea.smem %s0, 9
  %s19 = sld [smem:[%s18]]
  %s20 = scalar_lea.smem %s0, 10
  %s21 = sld [smem:[%s20]]
  %s22 = scalar_lea.smem %s0, 11
  %s23 = sld [smem:[%s22]]
  %s24 = scalar_lea.smem %s0, 12
  %s25 = sld [smem:[%s24]]
  %s26 = scalar_lea.smem %s0, 13
  %s27 = sld [smem:[%s26]]
  %s28 = scalar_lea.smem %s0, 14
  %s29 = sld [smem:[%s28]]
  %s30 = scalar_lea.smem %s0, 15
  %s31 = sld [smem:[%s30]]
  %s32 = scalar_lea.smem %s0, 16
  %s33 = sld [smem:[%s32]]
  %s34 = scalar_lea.smem %s0, 17
  %s35 = sld [smem:[%s34]]
  %s36 = scalar_lea.smem %s0, 18
  %s37 = sld [smem:[%s36]]
  %s38 = scalar_lea.smem %s0, 19
  %s39 = sld [smem:[%s38]]
  %s40 = scalar_lea.smem %s0, 20
  %s41 = sld [smem:[%s40]]
  %s42 = scalar_lea.smem %s0, 21
  %s43 = sld [smem:[%s42]]
  %s44 = scalar_lea.smem %s0, 22
  %s45 = sld [smem:[%s44]]
  %s46 = scalar_lea.smem %s0, 23
  %s47 = sld [smem:[%s46]]
  %s48 = scalar_lea.smem %s0, 24
  %s49 = sld [smem:[%s48]]
  %s50 = scalar_lea.smem %s0, 25
  %s51 = sld [smem:[%s50]]
  %s52 = scalar_lea.smem %s0, 26
  %s53 = sld [smem:[%s52]]
  %s54 = scalar_lea.smem %s0, 27
  %s55 = sld [smem:[%s54]]
  %s56 = scalar_lea.smem %s0, 28
  %s57 = sld [smem:[%s56]]
  %s58 = scalar_lea.smem %s0, 29
  %s59 = sld [smem:[%s58]]
  %s60 = scalar_lea.smem %s0, 30
  %s61 = sld [smem:[%s60]]
  %s62 = scalar_lea.smem %s0, 31
  %s63 = sld [smem:[%s62]]
  %s64 = scalar_lea.smem %s0, 32
  %s65 = sld [smem:[%s64]]
  %s66 = scalar_lea.smem %s0, 33
  %s67 = sld [smem:[%s66]]
  %s68 = scalar_lea.smem %s0, 34
  %s69 = sld [smem:[%s68]]
  %s70 = scalar_lea.smem %s0, 35
  %s71 = sld [smem:[%s70]]
  %s72 = scalar_lea.smem %s0, 36
  %s73 = sld [smem:[%s72]]
  %s74 = scalar_lea.smem %s0, 37
  %s75 = sld [smem:[%s74]]
  %s76 = scalar_lea.smem %s0, 38
  %s77 = sld [smem:[%s76]]
  %s78 = scalar_lea.smem %s0, 39
  %s79 = sld [smem:[%s78]]
  %s80 = scalar_lea.smem %s0, 40
  %s81 = sld [smem:[%s80]]
  %s82 = scalar_lea.smem %s0, 41
  %s83 = sld [smem:[%s82]]
  %s84 = scalar_lea.smem %s0, 42
  %s85 = sld [smem:[%s84]]
  %s86 = scalar_lea.smem %s0, 43
  %s87 = sld [smem:[%s86]]
  %s88 = scalar_lea.smem %s0, 44
  %s89 = sld [smem:[%s88]]
  %s90 = scalar_lea.smem %s0, 45
  %s91 = sld [smem:[%s90]]
  %s92 = scalar_lea.smem %s0, 46
  %s93 = sld [smem:[%s92]]
  %s94 = scalar_lea.smem %s0, 47
  %s95 = sld [smem:[%s94]]
  %s96 = scalar_lea.smem %s0, 48
  %s97 = sld [smem:[%s96]]
  %s98 = scalar_lea.smem %s0, 49
  %s99 = sld [smem:[%s98]]
  %s100 = scalar_lea.smem %s0, 50
  %s101 = sld [smem:[%s100]]
  %s102 = scalar_lea.smem %s0, 51
  %s103 = sld [smem:[%s102]]
  %s104 = scalar_lea.smem %s0, 52
  %s105 = sld [smem:[%s104]]
  %s106 = scalar_lea.smem %s0, 53
  %s107 = sld [smem:[%s106]]
  %s108 = scalar_lea.smem %s0, 54
  %s109 = sld [smem:[%s108]]
  %s110 = scalar_lea.smem %s0, 55
  %s111 = sld [smem:[%s110]]
  %s112 = sld [smem:[#allocation0]]
  $region269: #{_lambda_.1} parent=0
    _
  %s114 = ssub.s32 1, %s112
  %s115 = scalar_select 0, %s114, %s112
  $region1: #{_lambda_.1} parent=0
    #allocation2 [shape = 'u8[512]{0}', space=vmem, size = 0x400, scoped, tag = 'input window, operand 46, single buffered']
    #allocation3 [shape = 's32[2]{0}', space=sflag, size = 0x8, scoped, tag = 'scoped memory for _lambda_.1']
    #allocation4 [shape = 's32[2]{0}', space=sflag, size = 0x8, scoped, tag = 'scoped memory for _lambda_.1']
    #allocation5 [shape = 'u8[512]{0}', space=vmem, size = 0x400, scoped, tag = 'input window, operand 47, single buffered']
    #allocation6 [shape = 's32[1]{0}', space=sflag, size = 0x4, scoped, tag = 'scoped memory for _lambda_.1']
    #allocation7 [shape = 'u8[512]{0}', space=vmem, size = 0x400, scoped, tag = 'input window, operand 52, single buffered']
    #allocation8 [shape = 'u8[512]{0}', space=vmem, size = 0x400, scoped, tag = 'input window, operand 54, single buffered']
    #allocation9 [shape = 's32[1]{0}', space=sflag, size = 0x4, scoped, tag = 'scoped memory for _lambda_.1']
    #allocation10 [shape = 'u8[1024]{0}', space=vmem, size = 0x400, scoped, tag = 'output window, operand 0']
    %116 = vsyncpa [#allocation3], 0
    %117 = vsyncpa [#allocation6], 0
    %118 = vsyncpa [#allocation9], 0
    %119 = vsyncpa [#allocation4], 0
    %s120 = scalar_lea.sflag [#allocation4], 1
    %121 = vsyncpa %s120, 0
    loop: start=0, step=1, limit=4
    $region2: #{_lambda_.1} parent=1 // loop_pre_header
      _
    $region3: #{_lambda_.1} parent=1 // loop_header
      %s123 = sphi 0, %s127
      %p124 = scmp.ge.s32.totalorder %s123, 4
      %s133 = sphi 0, %s135
      %s136 = sphi 0, %s133
      %s137 = sphi 0, %s136
      %s153 = sphi 0, %s137
      %s157 = sphi 0, %s157
      %s159 = sphi 0, %s157
      %s160 = sphi 0, %s159
      %s174 = sphi 0, %s160
      %s178 = sphi 0, %s178
      %s180 = sphi 0, %s178
      %s181 = sphi 0, %s180
      %s195 = sphi 0, %s181
      %s199 = sphi 0, %s199
      %s201 = sphi 0, %s199
      %s202 = sphi 0, %s201
      %s216 = sphi 0, %s202
      %s220 = sphi 0, %s220
      %s222 = sphi 0, %s220
      %s223 = sphi 0, %s222
      %s237 = sphi 0, %s223
      %s241 = sphi 0, %s241
      %s243 = sphi 0, %s241
      %s244 = sphi 0, %s243
      %s258 = sphi 0, %s244
      %s262 = sphi 0, %s262
      %s264 = sphi 0, %s262
      %s265 = sphi 0, %s264
      %s279 = sphi 0, %s265
      %s283 = sphi 0, %s283
      %s285 = sphi 0, %s283
      %s286 = sphi 0, %s285
      %s300 = sphi 0, %s286
      %s304 = sphi 0, %s304
      %s306 = sphi 0, %s304
      %s307 = sphi 0, %s306
      %s321 = sphi 0, %s307
      %s325 = sphi 0, %s325
      %s327 = sphi 0, %s325
      %s328 = sphi 0, %s327
      %s342 = sphi 0, %s328
      %s346 = sphi 0, %s346
      %s348 = sphi 0, %s346
      %s349 = sphi 0, %s348
      %s363 = sphi 0, %s349
      %s367 = sphi 0, %s367
      %s369 = sphi 0, %s367
      %s370 = sphi 0, %s369
      %s384 = sphi 0, %s370
      %s388 = sphi 0, %s388
      %s390 = sphi 0, %s388
      %s391 = sphi 0, %s390
      %s405 = sphi 0, %s391
      %s409 = sphi 0, %s409
      %s411 = sphi 0, %s409
      %s412 = sphi 0, %s411
      %s426 = sphi 0, %s412
      %s430 = sphi 0, %s430
      %s432 = sphi 0, %s430
      %s433 = sphi 0, %s432
      %s447 = sphi 0, %s433
      %s451 = sphi 0, %s451
      %s453 = sphi 0, %s451
      %s454 = sphi 0, %s453
      %s468 = sphi 0, %s454
      %s472 = sphi 0, %s472
      %s474 = sphi 0, %s472
      %s475 = sphi 0, %s474
      %s489 = sphi 0, %s475
      %s493 = sphi 0, %s493
      %s495 = sphi 0, %s493
      %s496 = sphi 0, %s495
      %s510 = sphi 0, %s496
      %s514 = sphi 0, %s514
      %s516 = sphi 0, %s514
      %s517 = sphi 0, %s516
      %s531 = sphi 0, %s517
      %s535 = sphi 0, %s535
      %s537 = sphi 0, %s535
      %s538 = sphi 0, %s537
      %s552 = sphi 0, %s538
      %s556 = sphi 0, %s556
      %s558 = sphi 0, %s556
      %s559 = sphi 0, %s558
      %s573 = sphi 0, %s559
      %s577 = sphi 0, %s577
      %s579 = sphi 0, %s577
      %s580 = sphi 0, %s579
      %s594 = sphi 0, %s580
      %s598 = sphi 0, %s598
      %s600 = sphi 0, %s598
      %s601 = sphi 0, %s600
      %s615 = sphi 0, %s601
      %s619 = sphi 0, %s619
      %s621 = sphi 0, %s619
      %s622 = sphi 0, %s621
      %s636 = sphi 0, %s622
      %s640 = sphi 0, %s640
      %s642 = sphi 0, %s640
      %s643 = sphi 0, %s642
      %s657 = sphi 0, %s643
      %s661 = sphi 0, %s661
      %s663 = sphi 0, %s661
      %s664 = sphi 0, %s663
      %s678 = sphi 0, %s664
      %s682 = sphi 0, %s682
      %s684 = sphi 0, %s682
      %s685 = sphi 0, %s684
      %s699 = sphi 0, %s685
      %s703 = sphi 0, %s703
      %s705 = sphi 0, %s703
      %s706 = sphi 0, %s705
      %s720 = sphi 0, %s706
      %s724 = sphi 0, %s724
      %s726 = sphi 0, %s724
      %s727 = sphi 0, %s726
      %s741 = sphi 0, %s727
      %s745 = sphi 0, %s745
      %s747 = sphi 0, %s745
      %s748 = sphi 0, %s747
      %s762 = sphi 0, %s748
      %s766 = sphi 0, %s766
      %s768 = sphi 0, %s766
      %s769 = sphi 0, %s768
      %s783 = sphi 0, %s769
      %s787 = sphi 0, %s787
      %s789 = sphi 0, %s787
      %s790 = sphi 0, %s789
      %s804 = sphi 0, %s790
      %s808 = sphi 0, %s808
      %s810 = sphi 0, %s808
      %s811 = sphi 0, %s810
      %s825 = sphi 0, %s811
      %s829 = sphi 0, %s829
      %s831 = sphi 0, %s829
      %s832 = sphi 0, %s831
      %s846 = sphi 0, %s832
      %s850 = sphi 0, %s850
      %s852 = sphi 0, %s850
      %s853 = sphi 0, %s852
      %s867 = sphi 0, %s853
      %s871 = sphi 0, %s871
      %s873 = sphi 0, %s871
      %s874 = sphi 0, %s873
      %s888 = sphi 0, %s874
      %s892 = sphi 0, %s892
      %s894 = sphi 0, %s892
      %s895 = sphi 0, %s894
      %s909 = sphi 0, %s895
      %s913 = sphi 0, %s913
      %s915 = sphi 0, %s913
      %s916 = sphi 0, %s915
      %s930 = sphi 0, %s916
      %s934 = sphi 0, %s934
      %s936 = sphi 0, %s934
      %s937 = sphi 0, %s936
      %s951 = sphi 0, %s937
      %s955 = sphi 0, %s955
      %s957 = sphi 0, %s955
      %s958 = sphi 0, %s957
      %s972 = sphi 0, %s958
      %s976 = sphi 0, %s976
      %s978 = sphi 0, %s976
      %s979 = sphi 0, %s978
      %s993 = sphi 0, %s979
      %s997 = sphi 0, %s997
      %s999 = sphi 0, %s997
      %s1000 = sphi 0, %s999
      %s1014 = sphi 0, %s1000
      %s1018 = sphi 0, %s1018
      %s1020 = sphi 0, %s1018
      %s1021 = sphi 0, %s1020
      %s1035 = sphi 0, %s1021
      %s1039 = sphi 0, %s1039
      %s1041 = sphi 0, %s1039
      %s1042 = sphi 0, %s1041
      %s1056 = sphi 0, %s1042
      %s1060 = sphi 0, %s1060
      %s1062 = sphi 0, %s1060
      %s1063 = sphi 0, %s1062
      %s1077 = sphi 0, %s1063
      %s1081 = sphi 0, %s1081
      %s1083 = sphi 0, %s1081
      %s1084 = sphi 0, %s1083
      %s1098 = sphi 0, %s1084
      %s1102 = sphi 0, %s1102
      %s1104 = sphi 0, %s1102
      %s1105 = sphi 0, %s1104
      %s1119 = sphi 0, %s1105
      %s1123 = sphi 0, %s1123
      %s1125 = sphi 0, %s1123
      %s1126 = sphi 0, %s1125
      %s1140 = sphi 0, %s1126
      %s1144 = sphi 0, %s1144
      %s1146 = sphi 0, %s1144
      %s1147 = sphi 0, %s1146
      %s1161 = sphi 0, %s1147
      %s1165 = sphi 0, %s1165
      %s1167 = sphi 0, %s1165
      %s1168 = sphi 0, %s1167
      %s1182 = sphi 0, %s1168
      %s1186 = sphi 0, %s1186
      %s1188 = sphi 0, %s1186
      %s1189 = sphi 0, %s1188
      %s1203 = sphi 0, %s1189
      %s1207 = sphi 0, %s1207
      %s1209 = sphi 0, %s1207
      %s1210 = sphi 0, %s1209
      %s1224 = sphi 0, %s1210
      %s1228 = sphi 0, %s1228
      %s1230 = sphi 0, %s1228
      %s1231 = sphi 0, %s1230
      %s1245 = sphi 0, %s1231
      %s1249 = sphi 0, %s1249
      %s1251 = sphi 0, %s1249
      %s1252 = sphi 0, %s1251
      %s1266 = sphi 0, %s1252
      %s1270 = sphi 0, %s1270
      %s1272 = sphi 0, %s1270
      %s1273 = sphi 0, %s1272
      %s1287 = sphi 0, %s1273
      %s1293 = sphi 0, %s1295
      %s1296 = sphi 0, %s1293
      %s1297 = sphi 0, %s1296
      %s1313 = sphi 0, %s1297
    $region4: #{_lambda_.1} parent=1 // loop_header_branch
      %126 = sbr.rel (%p124) target = $region8
    $region5: #{_lambda_.1} parent=1 // loop_body
      %s128 = ssub.s32 %s123, 1
      %s129 = ssub.s32 %s123, 2
      %s130 = sadd.s32 %s123, 1
      %s131 = ssub.s32 %s123, %s130
      %p132 = scmp.eq.s32.totalorder %s131, 0
      %s134 = sadd.s32 %s133, 1
      %s135 = scalar_select %p132, %s133, %s134
      %p138 = pneg %p132
      %p139 = scmp.eq.s32.totalorder %s123, 1
      %p140 = por %p138, %p139
      %p141 = scmp.ne.s32.totalorder %s133, %s136
      %p142 = scmp.eq.s32.totalorder %s123, 0
      %p143 = por %p141, %p142
      %p144 = scmp.ne.s32.totalorder %s133, %s136
      %p145 = scmp.eq.s32.totalorder %s128, 1
      %p146 = por %p144, %p145
      %p147 = scmp.ne.s32.totalorder %s136, %s137
      %p148 = scmp.eq.s32.totalorder %s128, 0
      %p149 = por %p147, %p148
      %p150 = scmp.ne.s32.totalorder %s136, %s137
      %p151 = scmp.eq.s32.totalorder %s129, 1
      %p152 = por %p150, %p151
      %p154 = scmp.ne.s32.totalorder %s137, %s153
      %p155 = scmp.eq.s32.totalorder %s129, 0
      %p156 = por %p154, %p155
      %s158 = sadd.s32 %s157, 1
      %p161 = scmp.eq.s32.totalorder %s123, 1
      %p162 = scmp.ne.s32.totalorder %s157, %s159
      %p163 = scmp.eq.s32.totalorder %s123, 0
      %p164 = por %p162, %p163
      %p165 = scmp.ne.s32.totalorder %s157, %s159
      %p166 = scmp.eq.s32.totalorder %s128, 1
      %p167 = por %p165, %p166
      %p168 = scmp.ne.s32.totalorder %s159, %s160
      %p169 = scmp.eq.s32.totalorder %s128, 0
      %p170 = por %p168, %p169
      %p171 = scmp.ne.s32.totalorder %s159, %s160
      %p172 = scmp.eq.s32.totalorder %s129, 1
      %p173 = por %p171, %p172
      %p175 = scmp.ne.s32.totalorder %s160, %s174
      %p176 = scmp.eq.s32.totalorder %s129, 0
      %p177 = por %p175, %p176
      %s179 = sadd.s32 %s178, 1
      %p182 = scmp.eq.s32.totalorder %s123, 1
      %p183 = scmp.ne.s32.totalorder %s178, %s180
      %p184 = scmp.eq.s32.totalorder %s123, 0
      %p185 = por %p183, %p184
      %p186 = scmp.ne.s32.totalorder %s178, %s180
      %p187 = scmp.eq.s32.totalorder %s128, 1
      %p188 = por %p186, %p187
      %p189 = scmp.ne.s32.totalorder %s180, %s181
      %p190 = scmp.eq.s32.totalorder %s128, 0
      %p191 = por %p189, %p190
      %p192 = scmp.ne.s32.totalorder %s180, %s181
      %p193 = scmp.eq.s32.totalorder %s129, 1
      %p194 = por %p192, %p193
      %p196 = scmp.ne.s32.totalorder %s181, %s195
      %p197 = scmp.eq.s32.totalorder %s129, 0
      %p198 = por %p196, %p197
      %s200 = sadd.s32 %s199, 1
      %p203 = scmp.eq.s32.totalorder %s123, 1
      %p204 = scmp.ne.s32.totalorder %s199, %s201
      %p205 = scmp.eq.s32.totalorder %s123, 0
      %p206 = por %p204, %p205
      %p207 = scmp.ne.s32.totalorder %s199, %s201
      %p208 = scmp.eq.s32.totalorder %s128, 1
      %p209 = por %p207, %p208
      %p210 = scmp.ne.s32.totalorder %s201, %s202
      %p211 = scmp.eq.s32.totalorder %s128, 0
      %p212 = por %p210, %p211
      %p213 = scmp.ne.s32.totalorder %s201, %s202
      %p214 = scmp.eq.s32.totalorder %s129, 1
      %p215 = por %p213, %p214
      %p217 = scmp.ne.s32.totalorder %s202, %s216
      %p218 = scmp.eq.s32.totalorder %s129, 0
      %p219 = por %p217, %p218
      %s221 = sadd.s32 %s220, 1
      %p224 = scmp.eq.s32.totalorder %s123, 1
      %p225 = scmp.ne.s32.totalorder %s220, %s222
      %p226 = scmp.eq.s32.totalorder %s123, 0
      %p227 = por %p225, %p226
      %p228 = scmp.ne.s32.totalorder %s220, %s222
      %p229 = scmp.eq.s32.totalorder %s128, 1
      %p230 = por %p228, %p229
      %p231 = scmp.ne.s32.totalorder %s222, %s223
      %p232 = scmp.eq.s32.totalorder %s128, 0
      %p233 = por %p231, %p232
      %p234 = scmp.ne.s32.totalorder %s222, %s223
      %p235 = scmp.eq.s32.totalorder %s129, 1
      %p236 = por %p234, %p235
      %p238 = scmp.ne.s32.totalorder %s223, %s237
      %p239 = scmp.eq.s32.totalorder %s129, 0
      %p240 = por %p238, %p239
      %s242 = sadd.s32 %s241, 1
      %p245 = scmp.eq.s32.totalorder %s123, 1
      %p246 = scmp.ne.s32.totalorder %s241, %s243
      %p247 = scmp.eq.s32.totalorder %s123, 0
      %p248 = por %p246, %p247
      %p249 = scmp.ne.s32.totalorder %s241, %s243
      %p250 = scmp.eq.s32.totalorder %s128, 1
      %p251 = por %p249, %p250
      %p252 = scmp.ne.s32.totalorder %s243, %s244
      %p253 = scmp.eq.s32.totalorder %s128, 0
      %p254 = por %p252, %p253
      %p255 = scmp.ne.s32.totalorder %s243, %s244
      %p256 = scmp.eq.s32.totalorder %s129, 1
      %p257 = por %p255, %p256
      %p259 = scmp.ne.s32.totalorder %s244, %s258
      %p260 = scmp.eq.s32.totalorder %s129, 0
      %p261 = por %p259, %p260
      %s263 = sadd.s32 %s262, 1
      %p266 = scmp.eq.s32.totalorder %s123, 1
      %p267 = scmp.ne.s32.totalorder %s262, %s264
      %p268 = scmp.eq.s32.totalorder %s123, 0
      %p269 = por %p267, %p268
      %p270 = scmp.ne.s32.totalorder %s262, %s264
      %p271 = scmp.eq.s32.totalorder %s128, 1
      %p272 = por %p270, %p271
      %p273 = scmp.ne.s32.totalorder %s264, %s265
      %p274 = scmp.eq.s32.totalorder %s128, 0
      %p275 = por %p273, %p274
      %p276 = scmp.ne.s32.totalorder %s264, %s265
      %p277 = scmp.eq.s32.totalorder %s129, 1
      %p278 = por %p276, %p277
      %p280 = scmp.ne.s32.totalorder %s265, %s279
      %p281 = scmp.eq.s32.totalorder %s129, 0
      %p282 = por %p280, %p281
      %s284 = sadd.s32 %s283, 1
      %p287 = scmp.eq.s32.totalorder %s123, 1
      %p288 = scmp.ne.s32.totalorder %s283, %s285
      %p289 = scmp.eq.s32.totalorder %s123, 0
      %p290 = por %p288, %p289
      %p291 = scmp.ne.s32.totalorder %s283, %s285
      %p292 = scmp.eq.s32.totalorder %s128, 1
      %p293 = por %p291, %p292
      %p294 = scmp.ne.s32.totalorder %s285, %s286
      %p295 = scmp.eq.s32.totalorder %s128, 0
      %p296 = por %p294, %p295
      %p297 = scmp.ne.s32.totalorder %s285, %s286
      %p298 = scmp.eq.s32.totalorder %s129, 1
      %p299 = por %p297, %p298
      %p301 = scmp.ne.s32.totalorder %s286, %s300
      %p302 = scmp.eq.s32.totalorder %s129, 0
      %p303 = por %p301, %p302
      %s305 = sadd.s32 %s304, 1
      %p308 = scmp.eq.s32.totalorder %s123, 1
      %p309 = scmp.ne.s32.totalorder %s304, %s306
      %p310 = scmp.eq.s32.totalorder %s123, 0
      %p311 = por %p309, %p310
      %p312 = scmp.ne.s32.totalorder %s304, %s306
      %p313 = scmp.eq.s32.totalorder %s128, 1
      %p314 = por %p312, %p313
      %p315 = scmp.ne.s32.totalorder %s306, %s307
      %p316 = scmp.eq.s32.totalorder %s128, 0
      %p317 = por %p315, %p316
      %p318 = scmp.ne.s32.totalorder %s306, %s307
      %p319 = scmp.eq.s32.totalorder %s129, 1
      %p320 = por %p318, %p319
      %p322 = scmp.ne.s32.totalorder %s307, %s321
      %p323 = scmp.eq.s32.totalorder %s129, 0
      %p324 = por %p322, %p323
      %s326 = sadd.s32 %s325, 1
      %p329 = scmp.eq.s32.totalorder %s123, 1
      %p330 = scmp.ne.s32.totalorder %s325, %s327
      %p331 = scmp.eq.s32.totalorder %s123, 0
      %p332 = por %p330, %p331
      %p333 = scmp.ne.s32.totalorder %s325, %s327
      %p334 = scmp.eq.s32.totalorder %s128, 1
      %p335 = por %p333, %p334
      %p336 = scmp.ne.s32.totalorder %s327, %s328
      %p337 = scmp.eq.s32.totalorder %s128, 0
      %p338 = por %p336, %p337
      %p339 = scmp.ne.s32.totalorder %s327, %s328
      %p340 = scmp.eq.s32.totalorder %s129, 1
      %p341 = por %p339, %p340
      %p343 = scmp.ne.s32.totalorder %s328, %s342
      %p344 = scmp.eq.s32.totalorder %s129, 0
      %p345 = por %p343, %p344
      %s347 = sadd.s32 %s346, 1
      %p350 = scmp.eq.s32.totalorder %s123, 1
      %p351 = scmp.ne.s32.totalorder %s346, %s348
      %p352 = scmp.eq.s32.totalorder %s123, 0
      %p353 = por %p351, %p352
      %p354 = scmp.ne.s32.totalorder %s346, %s348
      %p355 = scmp.eq.s32.totalorder %s128, 1
      %p356 = por %p354, %p355
      %p357 = scmp.ne.s32.totalorder %s348, %s349
      %p358 = scmp.eq.s32.totalorder %s128, 0
      %p359 = por %p357, %p358
      %p360 = scmp.ne.s32.totalorder %s348, %s349
      %p361 = scmp.eq.s32.totalorder %s129, 1
      %p362 = por %p360, %p361
      %p364 = scmp.ne.s32.totalorder %s349, %s363
      %p365 = scmp.eq.s32.totalorder %s129, 0
      %p366 = por %p364, %p365
      %s368 = sadd.s32 %s367, 1
      %p371 = scmp.eq.s32.totalorder %s123, 1
      %p372 = scmp.ne.s32.totalorder %s367, %s369
      %p373 = scmp.eq.s32.totalorder %s123, 0
      %p374 = por %p372, %p373
      %p375 = scmp.ne.s32.totalorder %s367, %s369
      %p376 = scmp.eq.s32.totalorder %s128, 1
      %p377 = por %p375, %p376
      %p378 = scmp.ne.s32.totalorder %s369, %s370
      %p379 = scmp.eq.s32.totalorder %s128, 0
      %p380 = por %p378, %p379
      %p381 = scmp.ne.s32.totalorder %s369, %s370
      %p382 = scmp.eq.s32.totalorder %s129, 1
      %p383 = por %p381, %p382
      %p385 = scmp.ne.s32.totalorder %s370, %s384
      %p386 = scmp.eq.s32.totalorder %s129, 0
      %p387 = por %p385, %p386
      %s389 = sadd.s32 %s388, 1
      %p392 = scmp.eq.s32.totalorder %s123, 1
      %p393 = scmp.ne.s32.totalorder %s388, %s390
      %p394 = scmp.eq.s32.totalorder %s123, 0
      %p395 = por %p393, %p394
      %p396 = scmp.ne.s32.totalorder %s388, %s390
      %p397 = scmp.eq.s32.totalorder %s128, 1
      %p398 = por %p396, %p397
      %p399 = scmp.ne.s32.totalorder %s390, %s391
      %p400 = scmp.eq.s32.totalorder %s128, 0
      %p401 = por %p399, %p400
      %p402 = scmp.ne.s32.totalorder %s390, %s391
      %p403 = scmp.eq.s32.totalorder %s129, 1
      %p404 = por %p402, %p403
      %p406 = scmp.ne.s32.totalorder %s391, %s405
      %p407 = scmp.eq.s32.totalorder %s129, 0
      %p408 = por %p406, %p407
      %s410 = sadd.s32 %s409, 1
      %p413 = scmp.eq.s32.totalorder %s123, 1
      %p414 = scmp.ne.s32.totalorder %s409, %s411
      %p415 = scmp.eq.s32.totalorder %s123, 0
      %p416 = por %p414, %p415
      %p417 = scmp.ne.s32.totalorder %s409, %s411
      %p418 = scmp.eq.s32.totalorder %s128, 1
      %p419 = por %p417, %p418
      %p420 = scmp.ne.s32.totalorder %s411, %s412
      %p421 = scmp.eq.s32.totalorder %s128, 0
      %p422 = por %p420, %p421
      %p423 = scmp.ne.s32.totalorder %s411, %s412
      %p424 = scmp.eq.s32.totalorder %s129, 1
      %p425 = por %p423, %p424
      %p427 = scmp.ne.s32.totalorder %s412, %s426
      %p428 = scmp.eq.s32.totalorder %s129, 0
      %p429 = por %p427, %p428
      %s431 = sadd.s32 %s430, 1
      %p434 = scmp.eq.s32.totalorder %s123, 1
      %p435 = scmp.ne.s32.totalorder %s430, %s432
      %p436 = scmp.eq.s32.totalorder %s123, 0
      %p437 = por %p435, %p436
      %p438 = scmp.ne.s32.totalorder %s430, %s432
      %p439 = scmp.eq.s32.totalorder %s128, 1
      %p440 = por %p438, %p439
      %p441 = scmp.ne.s32.totalorder %s432, %s433
      %p442 = scmp.eq.s32.totalorder %s128, 0
      %p443 = por %p441, %p442
      %p444 = scmp.ne.s32.totalorder %s432, %s433
      %p445 = scmp.eq.s32.totalorder %s129, 1
      %p446 = por %p444, %p445
      %p448 = scmp.ne.s32.totalorder %s433, %s447
      %p449 = scmp.eq.s32.totalorder %s129, 0
      %p450 = por %p448, %p449
      %s452 = sadd.s32 %s451, 1
      %p455 = scmp.eq.s32.totalorder %s123, 1
      %p456 = scmp.ne.s32.totalorder %s451, %s453
      %p457 = scmp.eq.s32.totalorder %s123, 0
      %p458 = por %p456, %p457
      %p459 = scmp.ne.s32.totalorder %s451, %s453
      %p460 = scmp.eq.s32.totalorder %s128, 1
      %p461 = por %p459, %p460
      %p462 = scmp.ne.s32.totalorder %s453, %s454
      %p463 = scmp.eq.s32.totalorder %s128, 0
      %p464 = por %p462, %p463
      %p465 = scmp.ne.s32.totalorder %s453, %s454
      %p466 = scmp.eq.s32.totalorder %s129, 1
      %p467 = por %p465, %p466
      %p469 = scmp.ne.s32.totalorder %s454, %s468
      %p470 = scmp.eq.s32.totalorder %s129, 0
      %p471 = por %p469, %p470
      %s473 = sadd.s32 %s472, 1
      %p476 = scmp.eq.s32.totalorder %s123, 1
      %p477 = scmp.ne.s32.totalorder %s472, %s474
      %p478 = scmp.eq.s32.totalorder %s123, 0
      %p479 = por %p477, %p478
      %p480 = scmp.ne.s32.totalorder %s472, %s474
      %p481 = scmp.eq.s32.totalorder %s128, 1
      %p482 = por %p480, %p481
      %p483 = scmp.ne.s32.totalorder %s474, %s475
      %p484 = scmp.eq.s32.totalorder %s128, 0
      %p485 = por %p483, %p484
      %p486 = scmp.ne.s32.totalorder %s474, %s475
      %p487 = scmp.eq.s32.totalorder %s129, 1
      %p488 = por %p486, %p487
      %p490 = scmp.ne.s32.totalorder %s475, %s489
      %p491 = scmp.eq.s32.totalorder %s129, 0
      %p492 = por %p490, %p491
      %s494 = sadd.s32 %s493, 1
      %p497 = scmp.eq.s32.totalorder %s123, 1
      %p498 = scmp.ne.s32.totalorder %s493, %s495
      %p499 = scmp.eq.s32.totalorder %s123, 0
      %p500 = por %p498, %p499
      %p501 = scmp.ne.s32.totalorder %s493, %s495
      %p502 = scmp.eq.s32.totalorder %s128, 1
      %p503 = por %p501, %p502
      %p504 = scmp.ne.s32.totalorder %s495, %s496
      %p505 = scmp.eq.s32.totalorder %s128, 0
      %p506 = por %p504, %p505
      %p507 = scmp.ne.s32.totalorder %s495, %s496
      %p508 = scmp.eq.s32.totalorder %s129, 1
      %p509 = por %p507, %p508
      %p511 = scmp.ne.s32.totalorder %s496, %s510
      %p512 = scmp.eq.s32.totalorder %s129, 0
      %p513 = por %p511, %p512
      %s515 = sadd.s32 %s514, 1
      %p518 = scmp.eq.s32.totalorder %s123, 1
      %p519 = scmp.ne.s32.totalorder %s514, %s516
      %p520 = scmp.eq.s32.totalorder %s123, 0
      %p521 = por %p519, %p520
      %p522 = scmp.ne.s32.totalorder %s514, %s516
      %p523 = scmp.eq.s32.totalorder %s128, 1
      %p524 = por %p522, %p523
      %p525 = scmp.ne.s32.totalorder %s516, %s517
      %p526 = scmp.eq.s32.totalorder %s128, 0
      %p527 = por %p525, %p526
      %p528 = scmp.ne.s32.totalorder %s516, %s517
      %p529 = scmp.eq.s32.totalorder %s129, 1
      %p530 = por %p528, %p529
      %p532 = scmp.ne.s32.totalorder %s517, %s531
      %p533 = scmp.eq.s32.totalorder %s129, 0
      %p534 = por %p532, %p533
      %s536 = sadd.s32 %s535, 1
      %p539 = scmp.eq.s32.totalorder %s123, 1
      %p540 = scmp.ne.s32.totalorder %s535, %s537
      %p541 = scmp.eq.s32.totalorder %s123, 0
      %p542 = por %p540, %p541
      %p543 = scmp.ne.s32.totalorder %s535, %s537
      %p544 = scmp.eq.s32.totalorder %s128, 1
      %p545 = por %p543, %p544
      %p546 = scmp.ne.s32.totalorder %s537, %s538
      %p547 = scmp.eq.s32.totalorder %s128, 0
      %p548 = por %p546, %p547
      %p549 = scmp.ne.s32.totalorder %s537, %s538
      %p550 = scmp.eq.s32.totalorder %s129, 1
      %p551 = por %p549, %p550
      %p553 = scmp.ne.s32.totalorder %s538, %s552
      %p554 = scmp.eq.s32.totalorder %s129, 0
      %p555 = por %p553, %p554
      %s557 = sadd.s32 %s556, 1
      %p560 = scmp.eq.s32.totalorder %s123, 1
      %p561 = scmp.ne.s32.totalorder %s556, %s558
      %p562 = scmp.eq.s32.totalorder %s123, 0
      %p563 = por %p561, %p562
      %p564 = scmp.ne.s32.totalorder %s556, %s558
      %p565 = scmp.eq.s32.totalorder %s128, 1
      %p566 = por %p564, %p565
      %p567 = scmp.ne.s32.totalorder %s558, %s559
      %p568 = scmp.eq.s32.totalorder %s128, 0
      %p569 = por %p567, %p568
      %p570 = scmp.ne.s32.totalorder %s558, %s559
      %p571 = scmp.eq.s32.totalorder %s129, 1
      %p572 = por %p570, %p571
      %p574 = scmp.ne.s32.totalorder %s559, %s573
      %p575 = scmp.eq.s32.totalorder %s129, 0
      %p576 = por %p574, %p575
      %s578 = sadd.s32 %s577, 1
      %p581 = scmp.eq.s32.totalorder %s123, 1
      %p582 = scmp.ne.s32.totalorder %s577, %s579
      %p583 = scmp.eq.s32.totalorder %s123, 0
      %p584 = por %p582, %p583
      %p585 = scmp.ne.s32.totalorder %s577, %s579
      %p586 = scmp.eq.s32.totalorder %s128, 1
      %p587 = por %p585, %p586
      %p588 = scmp.ne.s32.totalorder %s579, %s580
      %p589 = scmp.eq.s32.totalorder %s128, 0
      %p590 = por %p588, %p589
      %p591 = scmp.ne.s32.totalorder %s579, %s580
      %p592 = scmp.eq.s32.totalorder %s129, 1
      %p593 = por %p591, %p592
      %p595 = scmp.ne.s32.totalorder %s580, %s594
      %p596 = scmp.eq.s32.totalorder %s129, 0
      %p597 = por %p595, %p596
      %s599 = sadd.s32 %s598, 1
      %p602 = scmp.eq.s32.totalorder %s123, 1
      %p603 = scmp.ne.s32.totalorder %s598, %s600
      %p604 = scmp.eq.s32.totalorder %s123, 0
      %p605 = por %p603, %p604
      %p606 = scmp.ne.s32.totalorder %s598, %s600
      %p607 = scmp.eq.s32.totalorder %s128, 1
      %p608 = por %p606, %p607
      %p609 = scmp.ne.s32.totalorder %s600, %s601
      %p610 = scmp.eq.s32.totalorder %s128, 0
      %p611 = por %p609, %p610
      %p612 = scmp.ne.s32.totalorder %s600, %s601
      %p613 = scmp.eq.s32.totalorder %s129, 1
      %p614 = por %p612, %p613
      %p616 = scmp.ne.s32.totalorder %s601, %s615
      %p617 = scmp.eq.s32.totalorder %s129, 0
      %p618 = por %p616, %p617
      %s620 = sadd.s32 %s619, 1
      %p623 = scmp.eq.s32.totalorder %s123, 1
      %p624 = scmp.ne.s32.totalorder %s619, %s621
      %p625 = scmp.eq.s32.totalorder %s123, 0
      %p626 = por %p624, %p625
      %p627 = scmp.ne.s32.totalorder %s619, %s621
      %p628 = scmp.eq.s32.totalorder %s128, 1
      %p629 = por %p627, %p628
      %p630 = scmp.ne.s32.totalorder %s621, %s622
      %p631 = scmp.eq.s32.totalorder %s128, 0
      %p632 = por %p630, %p631
      %p633 = scmp.ne.s32.totalorder %s621, %s622
      %p634 = scmp.eq.s32.totalorder %s129, 1
      %p635 = por %p633, %p634
      %p637 = scmp.ne.s32.totalorder %s622, %s636
      %p638 = scmp.eq.s32.totalorder %s129, 0
      %p639 = por %p637, %p638
      %s641 = sadd.s32 %s640, 1
      %p644 = scmp.eq.s32.totalorder %s123, 1
      %p645 = scmp.ne.s32.totalorder %s640, %s642
      %p646 = scmp.eq.s32.totalorder %s123, 0
      %p647 = por %p645, %p646
      %p648 = scmp.ne.s32.totalorder %s640, %s642
      %p649 = scmp.eq.s32.totalorder %s128, 1
      %p650 = por %p648, %p649
      %p651 = scmp.ne.s32.totalorder %s642, %s643
      %p652 = scmp.eq.s32.totalorder %s128, 0
      %p653 = por %p651, %p652
      %p654 = scmp.ne.s32.totalorder %s642, %s643
      %p655 = scmp.eq.s32.totalorder %s129, 1
      %p656 = por %p654, %p655
      %p658 = scmp.ne.s32.totalorder %s643, %s657
      %p659 = scmp.eq.s32.totalorder %s129, 0
      %p660 = por %p658, %p659
      %s662 = sadd.s32 %s661, 1
      %p665 = scmp.eq.s32.totalorder %s123, 1
      %p666 = scmp.ne.s32.totalorder %s661, %s663
      %p667 = scmp.eq.s32.totalorder %s123, 0
      %p668 = por %p666, %p667
      %p669 = scmp.ne.s32.totalorder %s661, %s663
      %p670 = scmp.eq.s32.totalorder %s128, 1
      %p671 = por %p669, %p670
      %p672 = scmp.ne.s32.totalorder %s663, %s664
      %p673 = scmp.eq.s32.totalorder %s128, 0
      %p674 = por %p672, %p673
      %p675 = scmp.ne.s32.totalorder %s663, %s664
      %p676 = scmp.eq.s32.totalorder %s129, 1
      %p677 = por %p675, %p676
      %p679 = scmp.ne.s32.totalorder %s664, %s678
      %p680 = scmp.eq.s32.totalorder %s129, 0
      %p681 = por %p679, %p680
      %s683 = sadd.s32 %s682, 1
      %p686 = scmp.eq.s32.totalorder %s123, 1
      %p687 = scmp.ne.s32.totalorder %s682, %s684
      %p688 = scmp.eq.s32.totalorder %s123, 0
      %p689 = por %p687, %p688
      %p690 = scmp.ne.s32.totalorder %s682, %s684
      %p691 = scmp.eq.s32.totalorder %s128, 1
      %p692 = por %p690, %p691
      %p693 = scmp.ne.s32.totalorder %s684, %s685
      %p694 = scmp.eq.s32.totalorder %s128, 0
      %p695 = por %p693, %p694
      %p696 = scmp.ne.s32.totalorder %s684, %s685
      %p697 = scmp.eq.s32.totalorder %s129, 1
      %p698 = por %p696, %p697
      %p700 = scmp.ne.s32.totalorder %s685, %s699
      %p701 = scmp.eq.s32.totalorder %s129, 0
      %p702 = por %p700, %p701
      %s704 = sadd.s32 %s703, 1
      %p707 = scmp.eq.s32.totalorder %s123, 1
      %p708 = scmp.ne.s32.totalorder %s703, %s705
      %p709 = scmp.eq.s32.totalorder %s123, 0
      %p710 = por %p708, %p709
      %p711 = scmp.ne.s32.totalorder %s703, %s705
      %p712 = scmp.eq.s32.totalorder %s128, 1
      %p713 = por %p711, %p712
      %p714 = scmp.ne.s32.totalorder %s705, %s706
      %p715 = scmp.eq.s32.totalorder %s128, 0
      %p716 = por %p714, %p715
      %p717 = scmp.ne.s32.totalorder %s705, %s706
      %p718 = scmp.eq.s32.totalorder %s129, 1
      %p719 = por %p717, %p718
      %p721 = scmp.ne.s32.totalorder %s706, %s720
      %p722 = scmp.eq.s32.totalorder %s129, 0
      %p723 = por %p721, %p722
      %s725 = sadd.s32 %s724, 1
      %p728 = scmp.eq.s32.totalorder %s123, 1
      %p729 = scmp.ne.s32.totalorder %s724, %s726
      %p730 = scmp.eq.s32.totalorder %s123, 0
      %p731 = por %p729, %p730
      %p732 = scmp.ne.s32.totalorder %s724, %s726
      %p733 = scmp.eq.s32.totalorder %s128, 1
      %p734 = por %p732, %p733
      %p735 = scmp.ne.s32.totalorder %s726, %s727
      %p736 = scmp.eq.s32.totalorder %s128, 0
      %p737 = por %p735, %p736
      %p738 = scmp.ne.s32.totalorder %s726, %s727
      %p739 = scmp.eq.s32.totalorder %s129, 1
      %p740 = por %p738, %p739
      %p742 = scmp.ne.s32.totalorder %s727, %s741
      %p743 = scmp.eq.s32.totalorder %s129, 0
      %p744 = por %p742, %p743
      %s746 = sadd.s32 %s745, 1
      %p749 = scmp.eq.s32.totalorder %s123, 1
      %p750 = scmp.ne.s32.totalorder %s745, %s747
      %p751 = scmp.eq.s32.totalorder %s123, 0
      %p752 = por %p750, %p751
      %p753 = scmp.ne.s32.totalorder %s745, %s747
      %p754 = scmp.eq.s32.totalorder %s128, 1
      %p755 = por %p753, %p754
      %p756 = scmp.ne.s32.totalorder %s747, %s748
      %p757 = scmp.eq.s32.totalorder %s128, 0
      %p758 = por %p756, %p757
      %p759 = scmp.ne.s32.totalorder %s747, %s748
      %p760 = scmp.eq.s32.totalorder %s129, 1
      %p761 = por %p759, %p760
      %p763 = scmp.ne.s32.totalorder %s748, %s762
      %p764 = scmp.eq.s32.totalorder %s129, 0
      %p765 = por %p763, %p764
      %s767 = sadd.s32 %s766, 1
      %p770 = scmp.eq.s32.totalorder %s123, 1
      %p771 = scmp.ne.s32.totalorder %s766, %s768
      %p772 = scmp.eq.s32.totalorder %s123, 0
      %p773 = por %p771, %p772
      %p774 = scmp.ne.s32.totalorder %s766, %s768
      %p775 = scmp.eq.s32.totalorder %s128, 1
      %p776 = por %p774, %p775
      %p777 = scmp.ne.s32.totalorder %s768, %s769
      %p778 = scmp.eq.s32.totalorder %s128, 0
      %p779 = por %p777, %p778
      %p780 = scmp.ne.s32.totalorder %s768, %s769
      %p781 = scmp.eq.s32.totalorder %s129, 1
      %p782 = por %p780, %p781
      %p784 = scmp.ne.s32.totalorder %s769, %s783
      %p785 = scmp.eq.s32.totalorder %s129, 0
      %p786 = por %p784, %p785
      %s788 = sadd.s32 %s787, 1
      %p791 = scmp.eq.s32.totalorder %s123, 1
      %p792 = scmp.ne.s32.totalorder %s787, %s789
      %p793 = scmp.eq.s32.totalorder %s123, 0
      %p794 = por %p792, %p793
      %p795 = scmp.ne.s32.totalorder %s787, %s789
      %p796 = scmp.eq.s32.totalorder %s128, 1
      %p797 = por %p795, %p796
      %p798 = scmp.ne.s32.totalorder %s789, %s790
      %p799 = scmp.eq.s32.totalorder %s128, 0
      %p800 = por %p798, %p799
      %p801 = scmp.ne.s32.totalorder %s789, %s790
      %p802 = scmp.eq.s32.totalorder %s129, 1
      %p803 = por %p801, %p802
      %p805 = scmp.ne.s32.totalorder %s790, %s804
      %p806 = scmp.eq.s32.totalorder %s129, 0
      %p807 = por %p805, %p806
      %s809 = sadd.s32 %s808, 1
      %p812 = scmp.eq.s32.totalorder %s123, 1
      %p813 = scmp.ne.s32.totalorder %s808, %s810
      %p814 = scmp.eq.s32.totalorder %s123, 0
      %p815 = por %p813, %p814
      %p816 = scmp.ne.s32.totalorder %s808, %s810
      %p817 = scmp.eq.s32.totalorder %s128, 1
      %p818 = por %p816, %p817
      %p819 = scmp.ne.s32.totalorder %s810, %s811
      %p820 = scmp.eq.s32.totalorder %s128, 0
      %p821 = por %p819, %p820
      %p822 = scmp.ne.s32.totalorder %s810, %s811
      %p823 = scmp.eq.s32.totalorder %s129, 1
      %p824 = por %p822, %p823
      %p826 = scmp.ne.s32.totalorder %s811, %s825
      %p827 = scmp.eq.s32.totalorder %s129, 0
      %p828 = por %p826, %p827
      %s830 = sadd.s32 %s829, 1
      %p833 = scmp.eq.s32.totalorder %s123, 1
      %p834 = scmp.ne.s32.totalorder %s829, %s831
      %p835 = scmp.eq.s32.totalorder %s123, 0
      %p836 = por %p834, %p835
      %p837 = scmp.ne.s32.totalorder %s829, %s831
      %p838 = scmp.eq.s32.totalorder %s128, 1
      %p839 = por %p837, %p838
      %p840 = scmp.ne.s32.totalorder %s831, %s832
      %p841 = scmp.eq.s32.totalorder %s128, 0
      %p842 = por %p840, %p841
      %p843 = scmp.ne.s32.totalorder %s831, %s832
      %p844 = scmp.eq.s32.totalorder %s129, 1
      %p845 = por %p843, %p844
      %p847 = scmp.ne.s32.totalorder %s832, %s846
      %p848 = scmp.eq.s32.totalorder %s129, 0
      %p849 = por %p847, %p848
      %s851 = sadd.s32 %s850, 1
      %p854 = scmp.eq.s32.totalorder %s123, 1
      %p855 = scmp.ne.s32.totalorder %s850, %s852
      %p856 = scmp.eq.s32.totalorder %s123, 0
      %p857 = por %p855, %p856
      %p858 = scmp.ne.s32.totalorder %s850, %s852
      %p859 = scmp.eq.s32.totalorder %s128, 1
      %p860 = por %p858, %p859
      %p861 = scmp.ne.s32.totalorder %s852, %s853
      %p862 = scmp.eq.s32.totalorder %s128, 0
      %p863 = por %p861, %p862
      %p864 = scmp.ne.s32.totalorder %s852, %s853
      %p865 = scmp.eq.s32.totalorder %s129, 1
      %p866 = por %p864, %p865
      %p868 = scmp.ne.s32.totalorder %s853, %s867
      %p869 = scmp.eq.s32.totalorder %s129, 0
      %p870 = por %p868, %p869
      %s872 = sadd.s32 %s871, 1
      %p875 = scmp.eq.s32.totalorder %s123, 1
      %p876 = scmp.ne.s32.totalorder %s871, %s873
      %p877 = scmp.eq.s32.totalorder %s123, 0
      %p878 = por %p876, %p877
      %p879 = scmp.ne.s32.totalorder %s871, %s873
      %p880 = scmp.eq.s32.totalorder %s128, 1
      %p881 = por %p879, %p880
      %p882 = scmp.ne.s32.totalorder %s873, %s874
      %p883 = scmp.eq.s32.totalorder %s128, 0
      %p884 = por %p882, %p883
      %p885 = scmp.ne.s32.totalorder %s873, %s874
      %p886 = scmp.eq.s32.totalorder %s129, 1
      %p887 = por %p885, %p886
      %p889 = scmp.ne.s32.totalorder %s874, %s888
      %p890 = scmp.eq.s32.totalorder %s129, 0
      %p891 = por %p889, %p890
      %s893 = sadd.s32 %s892, 1
      %p896 = scmp.eq.s32.totalorder %s123, 1
      %p897 = scmp.ne.s32.totalorder %s892, %s894
      %p898 = scmp.eq.s32.totalorder %s123, 0
      %p899 = por %p897, %p898
      %p900 = scmp.ne.s32.totalorder %s892, %s894
      %p901 = scmp.eq.s32.totalorder %s128, 1
      %p902 = por %p900, %p901
      %p903 = scmp.ne.s32.totalorder %s894, %s895
      %p904 = scmp.eq.s32.totalorder %s128, 0
      %p905 = por %p903, %p904
      %p906 = scmp.ne.s32.totalorder %s894, %s895
      %p907 = scmp.eq.s32.totalorder %s129, 1
      %p908 = por %p906, %p907
      %p910 = scmp.ne.s32.totalorder %s895, %s909
      %p911 = scmp.eq.s32.totalorder %s129, 0
      %p912 = por %p910, %p911
      %s914 = sadd.s32 %s913, 1
      %p917 = scmp.eq.s32.totalorder %s123, 1
      %p918 = scmp.ne.s32.totalorder %s913, %s915
      %p919 = scmp.eq.s32.totalorder %s123, 0
      %p920 = por %p918, %p919
      %p921 = scmp.ne.s32.totalorder %s913, %s915
      %p922 = scmp.eq.s32.totalorder %s128, 1
      %p923 = por %p921, %p922
      %p924 = scmp.ne.s32.totalorder %s915, %s916
      %p925 = scmp.eq.s32.totalorder %s128, 0
      %p926 = por %p924, %p925
      %p927 = scmp.ne.s32.totalorder %s915, %s916
      %p928 = scmp.eq.s32.totalorder %s129, 1
      %p929 = por %p927, %p928
      %p931 = scmp.ne.s32.totalorder %s916, %s930
      %p932 = scmp.eq.s32.totalorder %s129, 0
      %p933 = por %p931, %p932
      %s935 = sadd.s32 %s934, 1
      %p938 = scmp.eq.s32.totalorder %s123, 1
      %p939 = scmp.ne.s32.totalorder %s934, %s936
      %p940 = scmp.eq.s32.totalorder %s123, 0
      %p941 = por %p939, %p940
      %p942 = scmp.ne.s32.totalorder %s934, %s936
      %p943 = scmp.eq.s32.totalorder %s128, 1
      %p944 = por %p942, %p943
      %p945 = scmp.ne.s32.totalorder %s936, %s937
      %p946 = scmp.eq.s32.totalorder %s128, 0
      %p947 = por %p945, %p946
      %p948 = scmp.ne.s32.totalorder %s936, %s937
      %p949 = scmp.eq.s32.totalorder %s129, 1
      %p950 = por %p948, %p949
      %p952 = scmp.ne.s32.totalorder %s937, %s951
      %p953 = scmp.eq.s32.totalorder %s129, 0
      %p954 = por %p952, %p953
      %s956 = sadd.s32 %s955, 1
      %p959 = scmp.eq.s32.totalorder %s123, 1
      %p960 = scmp.ne.s32.totalorder %s955, %s957
      %p961 = scmp.eq.s32.totalorder %s123, 0
      %p962 = por %p960, %p961
      %p963 = scmp.ne.s32.totalorder %s955, %s957
      %p964 = scmp.eq.s32.totalorder %s128, 1
      %p965 = por %p963, %p964
      %p966 = scmp.ne.s32.totalorder %s957, %s958
      %p967 = scmp.eq.s32.totalorder %s128, 0
      %p968 = por %p966, %p967
      %p969 = scmp.ne.s32.totalorder %s957, %s958
      %p970 = scmp.eq.s32.totalorder %s129, 1
      %p971 = por %p969, %p970
      %p973 = scmp.ne.s32.totalorder %s958, %s972
      %p974 = scmp.eq.s32.totalorder %s129, 0
      %p975 = por %p973, %p974
      %s977 = sadd.s32 %s976, 1
      %p980 = scmp.eq.s32.totalorder %s123, 1
      %p981 = scmp.ne.s32.totalorder %s976, %s978
      %p982 = scmp.eq.s32.totalorder %s123, 0
      %p983 = por %p981, %p982
      %p984 = scmp.ne.s32.totalorder %s976, %s978
      %p985 = scmp.eq.s32.totalorder %s128, 1
      %p986 = por %p984, %p985
      %p987 = scmp.ne.s32.totalorder %s978, %s979
      %p988 = scmp.eq.s32.totalorder %s128, 0
      %p989 = por %p987, %p988
      %p990 = scmp.ne.s32.totalorder %s978, %s979
      %p991 = scmp.eq.s32.totalorder %s129, 1
      %p992 = por %p990, %p991
      %p994 = scmp.ne.s32.totalorder %s979, %s993
      %p995 = scmp.eq.s32.totalorder %s129, 0
      %p996 = por %p994, %p995
      %s998 = sadd.s32 %s997, 1
      %p1001 = scmp.eq.s32.totalorder %s123, 1
      %p1002 = scmp.ne.s32.totalorder %s997, %s999
      %p1003 = scmp.eq.s32.totalorder %s123, 0
      %p1004 = por %p1002, %p1003
      %p1005 = scmp.ne.s32.totalorder %s997, %s999
      %p1006 = scmp.eq.s32.totalorder %s128, 1
      %p1007 = por %p1005, %p1006
      %p1008 = scmp.ne.s32.totalorder %s999, %s1000
      %p1009 = scmp.eq.s32.totalorder %s128, 0
      %p1010 = por %p1008, %p1009
      %p1011 = scmp.ne.s32.totalorder %s999, %s1000
      %p1012 = scmp.eq.s32.totalorder %s129, 1
      %p1013 = por %p1011, %p1012
      %p1015 = scmp.ne.s32.totalorder %s1000, %s1014
      %p1016 = scmp.eq.s32.totalorder %s129, 0
      %p1017 = por %p1015, %p1016
      %s1019 = sadd.s32 %s1018, 1
      %p1022 = scmp.eq.s32.totalorder %s123, 1
      %p1023 = scmp.ne.s32.totalorder %s1018, %s1020
      %p1024 = scmp.eq.s32.totalorder %s123, 0
      %p1025 = por %p1023, %p1024
      %p1026 = scmp.ne.s32.totalorder %s1018, %s1020
      %p1027 = scmp.eq.s32.totalorder %s128, 1
      %p1028 = por %p1026, %p1027
      %p1029 = scmp.ne.s32.totalorder %s1020, %s1021
      %p1030 = scmp.eq.s32.totalorder %s128, 0
      %p1031 = por %p1029, %p1030
      %p1032 = scmp.ne.s32.totalorder %s1020, %s1021
      %p1033 = scmp.eq.s32.totalorder %s129, 1
      %p1034 = por %p1032, %p1033
      %p1036 = scmp.ne.s32.totalorder %s1021, %s1035
      %p1037 = scmp.eq.s32.totalorder %s129, 0
      %p1038 = por %p1036, %p1037
      %s1040 = sadd.s32 %s1039, 1
      %p1043 = scmp.eq.s32.totalorder %s123, 1
      %p1044 = scmp.ne.s32.totalorder %s1039, %s1041
      %p1045 = scmp.eq.s32.totalorder %s123, 0
      %p1046 = por %p1044, %p1045
      %p1047 = scmp.ne.s32.totalorder %s1039, %s1041
      %p1048 = scmp.eq.s32.totalorder %s128, 1
      %p1049 = por %p1047, %p1048
      %p1050 = scmp.ne.s32.totalorder %s1041, %s1042
      %p1051 = scmp.eq.s32.totalorder %s128, 0
      %p1052 = por %p1050, %p1051
      %p1053 = scmp.ne.s32.totalorder %s1041, %s1042
      %p1054 = scmp.eq.s32.totalorder %s129, 1
      %p1055 = por %p1053, %p1054
      %p1057 = scmp.ne.s32.totalorder %s1042, %s1056
      %p1058 = scmp.eq.s32.totalorder %s129, 0
      %p1059 = por %p1057, %p1058
      %s1061 = sadd.s32 %s1060, 1
      %p1064 = scmp.eq.s32.totalorder %s123, 1
      %p1065 = scmp.ne.s32.totalorder %s1060, %s1062
      %p1066 = scmp.eq.s32.totalorder %s123, 0
      %p1067 = por %p1065, %p1066
      %p1068 = scmp.ne.s32.totalorder %s1060, %s1062
      %p1069 = scmp.eq.s32.totalorder %s128, 1
      %p1070 = por %p1068, %p1069
      %p1071 = scmp.ne.s32.totalorder %s1062, %s1063
      %p1072 = scmp.eq.s32.totalorder %s128, 0
      %p1073 = por %p1071, %p1072
      %p1074 = scmp.ne.s32.totalorder %s1062, %s1063
      %p1075 = scmp.eq.s32.totalorder %s129, 1
      %p1076 = por %p1074, %p1075
      %p1078 = scmp.ne.s32.totalorder %s1063, %s1077
      %p1079 = scmp.eq.s32.totalorder %s129, 0
      %p1080 = por %p1078, %p1079
      %s1082 = sadd.s32 %s1081, 1
      %p1085 = scmp.eq.s32.totalorder %s123, 1
      %p1086 = scmp.ne.s32.totalorder %s1081, %s1083
      %p1087 = scmp.eq.s32.totalorder %s123, 0
      %p1088 = por %p1086, %p1087
      %p1089 = scmp.ne.s32.totalorder %s1081, %s1083
      %p1090 = scmp.eq.s32.totalorder %s128, 1
      %p1091 = por %p1089, %p1090
      %p1092 = scmp.ne.s32.totalorder %s1083, %s1084
      %p1093 = scmp.eq.s32.totalorder %s128, 0
      %p1094 = por %p1092, %p1093
      %p1095 = scmp.ne.s32.totalorder %s1083, %s1084
      %p1096 = scmp.eq.s32.totalorder %s129, 1
      %p1097 = por %p1095, %p1096
      %p1099 = scmp.ne.s32.totalorder %s1084, %s1098
      %p1100 = scmp.eq.s32.totalorder %s129, 0
      %p1101 = por %p1099, %p1100
      %s1103 = sadd.s32 %s1102, 1
      %p1106 = scmp.eq.s32.totalorder %s123, 1
      %p1107 = scmp.ne.s32.totalorder %s1102, %s1104
      %p1108 = scmp.eq.s32.totalorder %s123, 0
      %p1109 = por %p1107, %p1108
      %p1110 = scmp.ne.s32.totalorder %s1102, %s1104
      %p1111 = scmp.eq.s32.totalorder %s128, 1
      %p1112 = por %p1110, %p1111
      %p1113 = scmp.ne.s32.totalorder %s1104, %s1105
      %p1114 = scmp.eq.s32.totalorder %s128, 0
      %p1115 = por %p1113, %p1114
      %p1116 = scmp.ne.s32.totalorder %s1104, %s1105
      %p1117 = scmp.eq.s32.totalorder %s129, 1
      %p1118 = por %p1116, %p1117
      %p1120 = scmp.ne.s32.totalorder %s1105, %s1119
      %p1121 = scmp.eq.s32.totalorder %s129, 0
      %p1122 = por %p1120, %p1121
      %s1124 = sadd.s32 %s1123, 1
      %p1127 = scmp.eq.s32.totalorder %s123, 1
      %p1128 = scmp.ne.s32.totalorder %s1123, %s1125
      %p1129 = scmp.eq.s32.totalorder %s123, 0
      %p1130 = por %p1128, %p1129
      %p1131 = scmp.ne.s32.totalorder %s1123, %s1125
      %p1132 = scmp.eq.s32.totalorder %s128, 1
      %p1133 = por %p1131, %p1132
      %p1134 = scmp.ne.s32.totalorder %s1125, %s1126
      %p1135 = scmp.eq.s32.totalorder %s128, 0
      %p1136 = por %p1134, %p1135
      %p1137 = scmp.ne.s32.totalorder %s1125, %s1126
      %p1138 = scmp.eq.s32.totalorder %s129, 1
      %p1139 = por %p1137, %p1138
      %p1141 = scmp.ne.s32.totalorder %s1126, %s1140
      %p1142 = scmp.eq.s32.totalorder %s129, 0
      %p1143 = por %p1141, %p1142
      %s1145 = sadd.s32 %s1144, 1
      %p1148 = scmp.eq.s32.totalorder %s123, 1
      %p1149 = scmp.ne.s32.totalorder %s1144, %s1146
      %p1150 = scmp.eq.s32.totalorder %s123, 0
      %p1151 = por %p1149, %p1150
      %p1152 = scmp.ne.s32.totalorder %s1144, %s1146
      %p1153 = scmp.eq.s32.totalorder %s128, 1
      %p1154 = por %p1152, %p1153
      %p1155 = scmp.ne.s32.totalorder %s1146, %s1147
      %p1156 = scmp.eq.s32.totalorder %s128, 0
      %p1157 = por %p1155, %p1156
      %p1158 = scmp.ne.s32.totalorder %s1146, %s1147
      %p1159 = scmp.eq.s32.totalorder %s129, 1
      %p1160 = por %p1158, %p1159
      %p1162 = scmp.ne.s32.totalorder %s1147, %s1161
      %p1163 = scmp.eq.s32.totalorder %s129, 0
      %p1164 = por %p1162, %p1163
      %s1166 = sadd.s32 %s1165, 1
      %p1169 = scmp.eq.s32.totalorder %s123, 1
      %p1170 = scmp.ne.s32.totalorder %s1165, %s1167
      %p1171 = scmp.eq.s32.totalorder %s123, 0
      %p1172 = por %p1170, %p1171
      %p1173 = scmp.ne.s32.totalorder %s1165, %s1167
      %p1174 = scmp.eq.s32.totalorder %s128, 1
      %p1175 = por %p1173, %p1174
      %p1176 = scmp.ne.s32.totalorder %s1167, %s1168
      %p1177 = scmp.eq.s32.totalorder %s128, 0
      %p1178 = por %p1176, %p1177
      %p1179 = scmp.ne.s32.totalorder %s1167, %s1168
      %p1180 = scmp.eq.s32.totalorder %s129, 1
      %p1181 = por %p1179, %p1180
      %p1183 = scmp.ne.s32.totalorder %s1168, %s1182
      %p1184 = scmp.eq.s32.totalorder %s129, 0
      %p1185 = por %p1183, %p1184
      %s1187 = sadd.s32 %s1186, 1
      %p1190 = scmp.eq.s32.totalorder %s123, 1
      %p1191 = scmp.ne.s32.totalorder %s1186, %s1188
      %p1192 = scmp.eq.s32.totalorder %s123, 0
      %p1193 = por %p1191, %p1192
      %p1194 = scmp.ne.s32.totalorder %s1186, %s1188
      %p1195 = scmp.eq.s32.totalorder %s128, 1
      %p1196 = por %p1194, %p1195
      %p1197 = scmp.ne.s32.totalorder %s1188, %s1189
      %p1198 = scmp.eq.s32.totalorder %s128, 0
      %p1199 = por %p1197, %p1198
      %p1200 = scmp.ne.s32.totalorder %s1188, %s1189
      %p1201 = scmp.eq.s32.totalorder %s129, 1
      %p1202 = por %p1200, %p1201
      %p1204 = scmp.ne.s32.totalorder %s1189, %s1203
      %p1205 = scmp.eq.s32.totalorder %s129, 0
      %p1206 = por %p1204, %p1205
      %s1208 = sadd.s32 %s1207, 1
      %p1211 = scmp.eq.s32.totalorder %s123, 1
      %p1212 = scmp.ne.s32.totalorder %s1207, %s1209
      %p1213 = scmp.eq.s32.totalorder %s123, 0
      %p1214 = por %p1212, %p1213
      %p1215 = scmp.ne.s32.totalorder %s1207, %s1209
      %p1216 = scmp.eq.s32.totalorder %s128, 1
      %p1217 = por %p1215, %p1216
      %p1218 = scmp.ne.s32.totalorder %s1209, %s1210
      %p1219 = scmp.eq.s32.totalorder %s128, 0
      %p1220 = por %p1218, %p1219
      %p1221 = scmp.ne.s32.totalorder %s1209, %s1210
      %p1222 = scmp.eq.s32.totalorder %s129, 1
      %p1223 = por %p1221, %p1222
      %p1225 = scmp.ne.s32.totalorder %s1210, %s1224
      %p1226 = scmp.eq.s32.totalorder %s129, 0
      %p1227 = por %p1225, %p1226
      %s1229 = sadd.s32 %s1228, 1
      %p1232 = scmp.eq.s32.totalorder %s123, 1
      %p1233 = scmp.ne.s32.totalorder %s1228, %s1230
      %p1234 = scmp.eq.s32.totalorder %s123, 0
      %p1235 = por %p1233, %p1234
      %p1236 = scmp.ne.s32.totalorder %s1228, %s1230
      %p1237 = scmp.eq.s32.totalorder %s128, 1
      %p1238 = por %p1236, %p1237
      %p1239 = scmp.ne.s32.totalorder %s1230, %s1231
      %p1240 = scmp.eq.s32.totalorder %s128, 0
      %p1241 = por %p1239, %p1240
      %p1242 = scmp.ne.s32.totalorder %s1230, %s1231
      %p1243 = scmp.eq.s32.totalorder %s129, 1
      %p1244 = por %p1242, %p1243
      %p1246 = scmp.ne.s32.totalorder %s1231, %s1245
      %p1247 = scmp.eq.s32.totalorder %s129, 0
      %p1248 = por %p1246, %p1247
      %s1250 = sadd.s32 %s1249, 1
      %p1253 = scmp.eq.s32.totalorder %s123, 1
      %p1254 = scmp.ne.s32.totalorder %s1249, %s1251
      %p1255 = scmp.eq.s32.totalorder %s123, 0
      %p1256 = por %p1254, %p1255
      %p1257 = scmp.ne.s32.totalorder %s1249, %s1251
      %p1258 = scmp.eq.s32.totalorder %s128, 1
      %p1259 = por %p1257, %p1258
      %p1260 = scmp.ne.s32.totalorder %s1251, %s1252
      %p1261 = scmp.eq.s32.totalorder %s128, 0
      %p1262 = por %p1260, %p1261
      %p1263 = scmp.ne.s32.totalorder %s1251, %s1252
      %p1264 = scmp.eq.s32.totalorder %s129, 1
      %p1265 = por %p1263, %p1264
      %p1267 = scmp.ne.s32.totalorder %s1252, %s1266
      %p1268 = scmp.eq.s32.totalorder %s129, 0
      %p1269 = por %p1267, %p1268
      %s1271 = sadd.s32 %s1270, 1
      %p1274 = scmp.eq.s32.totalorder %s123, 1
      %p1275 = scmp.ne.s32.totalorder %s1270, %s1272
      %p1276 = scmp.eq.s32.totalorder %s123, 0
      %p1277 = por %p1275, %p1276
      %p1278 = scmp.ne.s32.totalorder %s1270, %s1272
      %p1279 = scmp.eq.s32.totalorder %s128, 1
      %p1280 = por %p1278, %p1279
      %p1281 = scmp.ne.s32.totalorder %s1272, %s1273
      %p1282 = scmp.eq.s32.totalorder %s128, 0
      %p1283 = por %p1281, %p1282
      %p1284 = scmp.ne.s32.totalorder %s1272, %s1273
      %p1285 = scmp.eq.s32.totalorder %s129, 1
      %p1286 = por %p1284, %p1285
      %p1288 = scmp.ne.s32.totalorder %s1273, %s1287
      %p1289 = scmp.eq.s32.totalorder %s129, 0
      %p1290 = por %p1288, %p1289
      %s1291 = ssub.s32 %s123, %s130
      %p1292 = scmp.eq.s32.totalorder %s1291, 0
      %s1294 = sadd.s32 %s1293, 1
      %s1295 = scalar_select %p1292, %s1293, %s1294
      %p1298 = pneg %p1292
      %p1299 = scmp.eq.s32.totalorder %s123, 1
      %p1300 = por %p1298, %p1299
      %p1301 = scmp.ne.s32.totalorder %s1293, %s1296
      %p1302 = scmp.eq.s32.totalorder %s123, 0
      %p1303 = por %p1301, %p1302
      %p1304 = scmp.ne.s32.totalorder %s1293, %s1296
      %p1305 = scmp.eq.s32.totalorder %s128, 1
      %p1306 = por %p1304, %p1305
      %p1307 = scmp.ne.s32.totalorder %s1296, %s1297
      %p1308 = scmp.eq.s32.totalorder %s128, 0
      %p1309 = por %p1307, %p1308
      %p1310 = scmp.ne.s32.totalorder %s1296, %s1297
      %p1311 = scmp.eq.s32.totalorder %s129, 1
      %p1312 = por %p1310, %p1311
      %p1314 = scmp.ne.s32.totalorder %s1297, %s1313
      %p1315 = scmp.eq.s32.totalorder %s129, 0
      %p1316 = por %p1314, %p1315
      %p1317 = scmp.le.s32.totalorder 1, %s123
      %p1318 = scmp.lt.s32.totalorder %s123, 3
      %p1319 = pnand %p1317, %p1318
      %p1320 = pneg %p1319
      // Predicated region
      $region9: #{_lambda_.1} parent=5 // pred_check
        _
      $region10: #{_lambda_.1} parent=5 // pred_check_branch
        %1322 = sbr.rel (%p1319) target = $region12
      $region11: #{_lambda_.1} parent=5 // pred_region
        %s1323 = ssub.s32 %s123, 1
        // Predicated region
        $region13: #{_lambda_.1} parent=11 // pred_check
          %p1324 = pneg %p170
        $region14: #{_lambda_.1} parent=11 // pred_check_branch
          %1326 = sbr.rel (%p1324) target = $region16
        $region15: #{_lambda_.1} parent=11 // pred_region
          _
        $region16: #{_lambda_.1} parent=11 // pred_fallthru
          _
        // Predicated region
        $region17: #{_lambda_.1} parent=11 // pred_check
          %p1327 = pneg %p191
        $region18: #{_lambda_.1} parent=11 // pred_check_branch
          %1329 = sbr.rel (%p1327) target = $region20
        $region19: #{_lambda_.1} parent=11 // pred_region
          _
        $region20: #{_lambda_.1} parent=11 // pred_fallthru
          _
        // Predicated region
        $region21: #{_lambda_.1} parent=11 // pred_check
          %p1330 = pneg %p212
        $region22: #{_lambda_.1} parent=11 // pred_check_branch
          %1332 = sbr.rel (%p1330) target = $region24
        $region23: #{_lambda_.1} parent=11 // pred_region
          _
        $region24: #{_lambda_.1} parent=11 // pred_fallthru
          _
        // Predicated region
        $region25: #{_lambda_.1} parent=11 // pred_check
          %p1333 = pneg %p233
        $region26: #{_lambda_.1} parent=11 // pred_check_branch
          %1335 = sbr.rel (%p1333) target = $region28
        $region27: #{_lambda_.1} parent=11 // pred_region
          _
        $region28: #{_lambda_.1} parent=11 // pred_fallthru
          _
        // Predicated region
        $region29: #{_lambda_.1} parent=11 // pred_check
          %p1336 = pneg %p254
        $region30: #{_lambda_.1} parent=11 // pred_check_branch
          %1338 = sbr.rel (%p1336) target = $region32
        $region31: #{_lambda_.1} parent=11 // pred_region
          _
        $region32: #{_lambda_.1} parent=11 // pred_fallthru
          _
        // Predicated region
        $region33: #{_lambda_.1} parent=11 // pred_check
          %p1339 = pneg %p275
        $region34: #{_lambda_.1} parent=11 // pred_check_branch
          %1341 = sbr.rel (%p1339) target = $region36
        $region35: #{_lambda_.1} parent=11 // pred_region
          _
        $region36: #{_lambda_.1} parent=11 // pred_fallthru
          _
        // Predicated region
        $region37: #{_lambda_.1} parent=11 // pred_check
          %p1342 = pneg %p296
        $region38: #{_lambda_.1} parent=11 // pred_check_branch
          %1344 = sbr.rel (%p1342) target = $region40
        $region39: #{_lambda_.1} parent=11 // pred_region
          _
        $region40: #{_lambda_.1} parent=11 // pred_fallthru
          _
        // Predicated region
        $region41: #{_lambda_.1} parent=11 // pred_check
          %p1345 = pneg %p317
        $region42: #{_lambda_.1} parent=11 // pred_check_branch
          %1347 = sbr.rel (%p1345) target = $region44
        $region43: #{_lambda_.1} parent=11 // pred_region
          _
        $region44: #{_lambda_.1} parent=11 // pred_fallthru
          _
        // Predicated region
        $region45: #{_lambda_.1} parent=11 // pred_check
          %p1348 = pneg %p338
        $region46: #{_lambda_.1} parent=11 // pred_check_branch
          %1350 = sbr.rel (%p1348) target = $region48
        $region47: #{_lambda_.1} parent=11 // pred_region
          _
        $region48: #{_lambda_.1} parent=11 // pred_fallthru
          _
        // Predicated region
        $region49: #{_lambda_.1} parent=11 // pred_check
          %p1351 = pneg %p359
        $region50: #{_lambda_.1} parent=11 // pred_check_branch
          %1353 = sbr.rel (%p1351) target = $region52
        $region51: #{_lambda_.1} parent=11 // pred_region
          _
        $region52: #{_lambda_.1} parent=11 // pred_fallthru
          _
        // Predicated region
        $region53: #{_lambda_.1} parent=11 // pred_check
          %p1354 = pneg %p380
        $region54: #{_lambda_.1} parent=11 // pred_check_branch
          %1356 = sbr.rel (%p1354) target = $region56
        $region55: #{_lambda_.1} parent=11 // pred_region
          _
        $region56: #{_lambda_.1} parent=11 // pred_fallthru
          _
        // Predicated region
        $region57: #{_lambda_.1} parent=11 // pred_check
          %p1357 = pneg %p401
        $region58: #{_lambda_.1} parent=11 // pred_check_branch
          %1359 = sbr.rel (%p1357) target = $region60
        $region59: #{_lambda_.1} parent=11 // pred_region
          _
        $region60: #{_lambda_.1} parent=11 // pred_fallthru
          _
        // Predicated region
        $region61: #{_lambda_.1} parent=11 // pred_check
          %p1360 = pneg %p422
        $region62: #{_lambda_.1} parent=11 // pred_check_branch
          %1362 = sbr.rel (%p1360) target = $region64
        $region63: #{_lambda_.1} parent=11 // pred_region
          _
        $region64: #{_lambda_.1} parent=11 // pred_fallthru
          _
        // Predicated region
        $region65: #{_lambda_.1} parent=11 // pred_check
          %p1363 = pneg %p443
        $region66: #{_lambda_.1} parent=11 // pred_check_branch
          %1365 = sbr.rel (%p1363) target = $region68
        $region67: #{_lambda_.1} parent=11 // pred_region
          _
        $region68: #{_lambda_.1} parent=11 // pred_fallthru
          _
        // Predicated region
        $region69: #{_lambda_.1} parent=11 // pred_check
          %p1366 = pneg %p464
        $region70: #{_lambda_.1} parent=11 // pred_check_branch
          %1368 = sbr.rel (%p1366) target = $region72
        $region71: #{_lambda_.1} parent=11 // pred_region
          _
        $region72: #{_lambda_.1} parent=11 // pred_fallthru
          _
        // Predicated region
        $region73: #{_lambda_.1} parent=11 // pred_check
          %p1369 = pneg %p485
        $region74: #{_lambda_.1} parent=11 // pred_check_branch
          %1371 = sbr.rel (%p1369) target = $region76
        $region75: #{_lambda_.1} parent=11 // pred_region
          _
        $region76: #{_lambda_.1} parent=11 // pred_fallthru
          _
        // Predicated region
        $region77: #{_lambda_.1} parent=11 // pred_check
          %p1372 = pneg %p506
        $region78: #{_lambda_.1} parent=11 // pred_check_branch
          %1374 = sbr.rel (%p1372) target = $region80
        $region79: #{_lambda_.1} parent=11 // pred_region
          _
        $region80: #{_lambda_.1} parent=11 // pred_fallthru
          _
        // Predicated region
        $region81: #{_lambda_.1} parent=11 // pred_check
          %p1375 = pneg %p527
        $region82: #{_lambda_.1} parent=11 // pred_check_branch
          %1377 = sbr.rel (%p1375) target = $region84
        $region83: #{_lambda_.1} parent=11 // pred_region
          _
        $region84: #{_lambda_.1} parent=11 // pred_fallthru
          _
        // Predicated region
        $region85: #{_lambda_.1} parent=11 // pred_check
          %p1378 = pneg %p548
        $region86: #{_lambda_.1} parent=11 // pred_check_branch
          %1380 = sbr.rel (%p1378) target = $region88
        $region87: #{_lambda_.1} parent=11 // pred_region
          _
        $region88: #{_lambda_.1} parent=11 // pred_fallthru
          _
        // Predicated region
        $region89: #{_lambda_.1} parent=11 // pred_check
          %p1381 = pneg %p569
        $region90: #{_lambda_.1} parent=11 // pred_check_branch
          %1383 = sbr.rel (%p1381) target = $region92
        $region91: #{_lambda_.1} parent=11 // pred_region
          _
        $region92: #{_lambda_.1} parent=11 // pred_fallthru
          _
        // Predicated region
        $region93: #{_lambda_.1} parent=11 // pred_check
          %p1384 = pneg %p590
        $region94: #{_lambda_.1} parent=11 // pred_check_branch
          %1386 = sbr.rel (%p1384) target = $region96
        $region95: #{_lambda_.1} parent=11 // pred_region
          _
        $region96: #{_lambda_.1} parent=11 // pred_fallthru
          _
        // Predicated region
        $region97: #{_lambda_.1} parent=11 // pred_check
          %p1387 = pneg %p611
        $region98: #{_lambda_.1} parent=11 // pred_check_branch
          %1389 = sbr.rel (%p1387) target = $region100
        $region99: #{_lambda_.1} parent=11 // pred_region
          _
        $region100: #{_lambda_.1} parent=11 // pred_fallthru
          _
        // Predicated region
        $region101: #{_lambda_.1} parent=11 // pred_check
          %p1390 = pneg %p632
        $region102: #{_lambda_.1} parent=11 // pred_check_branch
          %1392 = sbr.rel (%p1390) target = $region104
        $region103: #{_lambda_.1} parent=11 // pred_region
          _
        $region104: #{_lambda_.1} parent=11 // pred_fallthru
          _
        // Predicated region
        $region105: #{_lambda_.1} parent=11 // pred_check
          %p1393 = pneg %p653
        $region106: #{_lambda_.1} parent=11 // pred_check_branch
          %1395 = sbr.rel (%p1393) target = $region108
        $region107: #{_lambda_.1} parent=11 // pred_region
          _
        $region108: #{_lambda_.1} parent=11 // pred_fallthru
          _
        // Predicated region
        $region109: #{_lambda_.1} parent=11 // pred_check
          %p1396 = pneg %p674
        $region110: #{_lambda_.1} parent=11 // pred_check_branch
          %1398 = sbr.rel (%p1396) target = $region112
        $region111: #{_lambda_.1} parent=11 // pred_region
          _
        $region112: #{_lambda_.1} parent=11 // pred_fallthru
          _
        // Predicated region
        $region113: #{_lambda_.1} parent=11 // pred_check
          %p1399 = pneg %p695
        $region114: #{_lambda_.1} parent=11 // pred_check_branch
          %1401 = sbr.rel (%p1399) target = $region116
        $region115: #{_lambda_.1} parent=11 // pred_region
          _
        $region116: #{_lambda_.1} parent=11 // pred_fallthru
          _
        // Predicated region
        $region117: #{_lambda_.1} parent=11 // pred_check
          %p1402 = pneg %p716
        $region118: #{_lambda_.1} parent=11 // pred_check_branch
          %1404 = sbr.rel (%p1402) target = $region120
        $region119: #{_lambda_.1} parent=11 // pred_region
          _
        $region120: #{_lambda_.1} parent=11 // pred_fallthru
          _
        // Predicated region
        $region121: #{_lambda_.1} parent=11 // pred_check
          %p1405 = pneg %p737
        $region122: #{_lambda_.1} parent=11 // pred_check_branch
          %1407 = sbr.rel (%p1405) target = $region124
        $region123: #{_lambda_.1} parent=11 // pred_region
          _
        $region124: #{_lambda_.1} parent=11 // pred_fallthru
          _
        // Predicated region
        $region125: #{_lambda_.1} parent=11 // pred_check
          %p1408 = pneg %p758
        $region126: #{_lambda_.1} parent=11 // pred_check_branch
          %1410 = sbr.rel (%p1408) target = $region128
        $region127: #{_lambda_.1} parent=11 // pred_region
          _
        $region128: #{_lambda_.1} parent=11 // pred_fallthru
          _
        // Predicated region
        $region129: #{_lambda_.1} parent=11 // pred_check
          %p1411 = pneg %p779
        $region130: #{_lambda_.1} parent=11 // pred_check_branch
          %1413 = sbr.rel (%p1411) target = $region132
        $region131: #{_lambda_.1} parent=11 // pred_region
          _
        $region132: #{_lambda_.1} parent=11 // pred_fallthru
          _
        // Predicated region
        $region133: #{_lambda_.1} parent=11 // pred_check
          %p1414 = pneg %p800
        $region134: #{_lambda_.1} parent=11 // pred_check_branch
          %1416 = sbr.rel (%p1414) target = $region136
        $region135: #{_lambda_.1} parent=11 // pred_region
          _
        $region136: #{_lambda_.1} parent=11 // pred_fallthru
          _
        // Predicated region
        $region137: #{_lambda_.1} parent=11 // pred_check
          %p1417 = pneg %p821
        $region138: #{_lambda_.1} parent=11 // pred_check_branch
          %1419 = sbr.rel (%p1417) target = $region140
        $region139: #{_lambda_.1} parent=11 // pred_region
          _
        $region140: #{_lambda_.1} parent=11 // pred_fallthru
          _
        // Predicated region
        $region141: #{_lambda_.1} parent=11 // pred_check
          %p1420 = pneg %p842
        $region142: #{_lambda_.1} parent=11 // pred_check_branch
          %1422 = sbr.rel (%p1420) target = $region144
        $region143: #{_lambda_.1} parent=11 // pred_region
          _
        $region144: #{_lambda_.1} parent=11 // pred_fallthru
          _
        // Predicated region
        $region145: #{_lambda_.1} parent=11 // pred_check
          %p1423 = pneg %p863
        $region146: #{_lambda_.1} parent=11 // pred_check_branch
          %1425 = sbr.rel (%p1423) target = $region148
        $region147: #{_lambda_.1} parent=11 // pred_region
          _
        $region148: #{_lambda_.1} parent=11 // pred_fallthru
          _
        // Predicated region
        $region149: #{_lambda_.1} parent=11 // pred_check
          %p1426 = pneg %p884
        $region150: #{_lambda_.1} parent=11 // pred_check_branch
          %1428 = sbr.rel (%p1426) target = $region152
        $region151: #{_lambda_.1} parent=11 // pred_region
          _
        $region152: #{_lambda_.1} parent=11 // pred_fallthru
          _
        // Predicated region
        $region153: #{_lambda_.1} parent=11 // pred_check
          %p1429 = pneg %p905
        $region154: #{_lambda_.1} parent=11 // pred_check_branch
          %1431 = sbr.rel (%p1429) target = $region156
        $region155: #{_lambda_.1} parent=11 // pred_region
          _
        $region156: #{_lambda_.1} parent=11 // pred_fallthru
          _
        // Predicated region
        $region157: #{_lambda_.1} parent=11 // pred_check
          %p1432 = pneg %p926
        $region158: #{_lambda_.1} parent=11 // pred_check_branch
          %1434 = sbr.rel (%p1432) target = $region160
        $region159: #{_lambda_.1} parent=11 // pred_region
          _
        $region160: #{_lambda_.1} parent=11 // pred_fallthru
          _
        // Predicated region
        $region161: #{_lambda_.1} parent=11 // pred_check
          %p1435 = pneg %p947
        $region162: #{_lambda_.1} parent=11 // pred_check_branch
          %1437 = sbr.rel (%p1435) target = $region164
        $region163: #{_lambda_.1} parent=11 // pred_region
          _
        $region164: #{_lambda_.1} parent=11 // pred_fallthru
          _
        // Predicated region
        $region165: #{_lambda_.1} parent=11 // pred_check
          %p1438 = pneg %p968
        $region166: #{_lambda_.1} parent=11 // pred_check_branch
          %1440 = sbr.rel (%p1438) target = $region168
        $region167: #{_lambda_.1} parent=11 // pred_region
          _
        $region168: #{_lambda_.1} parent=11 // pred_fallthru
          _
        // Predicated region
        $region169: #{_lambda_.1} parent=11 // pred_check
          %p1441 = pneg %p989
        $region170: #{_lambda_.1} parent=11 // pred_check_branch
          %1443 = sbr.rel (%p1441) target = $region172
        $region171: #{_lambda_.1} parent=11 // pred_region
          _
        $region172: #{_lambda_.1} parent=11 // pred_fallthru
          _
        // Predicated region
        $region173: #{_lambda_.1} parent=11 // pred_check
          %p1444 = pneg %p1010
        $region174: #{_lambda_.1} parent=11 // pred_check_branch
          %1446 = sbr.rel (%p1444) target = $region176
        $region175: #{_lambda_.1} parent=11 // pred_region
          _
        $region176: #{_lambda_.1} parent=11 // pred_fallthru
          _
        // Predicated region
        $region177: #{_lambda_.1} parent=11 // pred_check
          %p1447 = pneg %p1031
        $region178: #{_lambda_.1} parent=11 // pred_check_branch
          %1449 = sbr.rel (%p1447) target = $region180
        $region179: #{_lambda_.1} parent=11 // pred_region
          _
        $region180: #{_lambda_.1} parent=11 // pred_fallthru
          _
        // Predicated region
        $region181: #{_lambda_.1} parent=11 // pred_check
          %p1450 = pneg %p1052
        $region182: #{_lambda_.1} parent=11 // pred_check_branch
          %1452 = sbr.rel (%p1450) target = $region184
        $region183: #{_lambda_.1} parent=11 // pred_region
          _
        $region184: #{_lambda_.1} parent=11 // pred_fallthru
          _
        // Predicated region
        $region185: #{_lambda_.1} parent=11 // pred_check
          %p1453 = pneg %p1073
        $region186: #{_lambda_.1} parent=11 // pred_check_branch
          %1455 = sbr.rel (%p1453) target = $region188
        $region187: #{_lambda_.1} parent=11 // pred_region
          _
        $region188: #{_lambda_.1} parent=11 // pred_fallthru
          _
        // Predicated region
        $region189: #{_lambda_.1} parent=11 // pred_check
          %p1456 = pneg %p1094
        $region190: #{_lambda_.1} parent=11 // pred_check_branch
          %1458 = sbr.rel (%p1456) target = $region192
        $region191: #{_lambda_.1} parent=11 // pred_region
          _
        $region192: #{_lambda_.1} parent=11 // pred_fallthru
          _
        // Predicated region
        $region193: #{_lambda_.1} parent=11 // pred_check
          %p1459 = pneg %p1115
        $region194: #{_lambda_.1} parent=11 // pred_check_branch
          %1461 = sbr.rel (%p1459) target = $region196
        $region195: #{_lambda_.1} parent=11 // pred_region
          %1463 = vsyncadd [#allocation3], 0
          %s1465 = sshll.u32 %s93, 4
          %s1466 = int_to_ptr.hbm [resolvable:$true] %s1465
          %s1467 = sshll.u32 [#allocation2], 4
          %s1468 = int_to_ptr.vmem [resolvable:$true] %s1467
          %1470 = dma.hbm_to_vmem [thread:$0]  %s1466, 16, %s1468, [#allocation3]
        $region196: #{_lambda_.1} parent=11 // pred_fallthru
          _
        // Predicated region
        $region197: #{_lambda_.1} parent=11 // pred_check
          %p1471 = pneg %p1136
        $region198: #{_lambda_.1} parent=11 // pred_check_branch
          %1473 = sbr.rel (%p1471) target = $region200
        $region199: #{_lambda_.1} parent=11 // pred_region
          %1475 = vsyncadd [#allocation6], 0
          %s1477 = sshll.u32 %s95, 4
          %s1478 = int_to_ptr.hbm [resolvable:$true] %s1477
          %s1479 = sshll.u32 [#allocation5], 4
          %s1480 = int_to_ptr.vmem [resolvable:$true] %s1479
          %1482 = dma.hbm_to_vmem [thread:$0]  %s1478, 16, %s1480, [#allocation6]
        $region200: #{_lambda_.1} parent=11 // pred_fallthru
          _
        // Predicated region
        $region201: #{_lambda_.1} parent=11 // pred_check
          %p1483 = pneg %p1157
        $region202: #{_lambda_.1} parent=11 // pred_check_branch
          %1485 = sbr.rel (%p1483) target = $region204
        $region203: #{_lambda_.1} parent=11 // pred_region
          _
        $region204: #{_lambda_.1} parent=11 // pred_fallthru
          _
        // Predicated region
        $region205: #{_lambda_.1} parent=11 // pred_check
          %p1486 = pneg %p1178
        $region206: #{_lambda_.1} parent=11 // pred_check_branch
          %1488 = sbr.rel (%p1486) target = $region208
        $region207: #{_lambda_.1} parent=11 // pred_region
          _
        $region208: #{_lambda_.1} parent=11 // pred_fallthru
          _
        // Predicated region
        $region209: #{_lambda_.1} parent=11 // pred_check
          %p1489 = pneg %p1199
        $region210: #{_lambda_.1} parent=11 // pred_check_branch
          %1491 = sbr.rel (%p1489) target = $region212
        $region211: #{_lambda_.1} parent=11 // pred_region
          _
        $region212: #{_lambda_.1} parent=11 // pred_fallthru
          _
        // Predicated region
        $region213: #{_lambda_.1} parent=11 // pred_check
          %p1492 = pneg %p1220
        $region214: #{_lambda_.1} parent=11 // pred_check_branch
          %1494 = sbr.rel (%p1492) target = $region216
        $region215: #{_lambda_.1} parent=11 // pred_region
          _
        $region216: #{_lambda_.1} parent=11 // pred_fallthru
          _
        // Predicated region
        $region217: #{_lambda_.1} parent=11 // pred_check
          %p1495 = pneg %p1241
        $region218: #{_lambda_.1} parent=11 // pred_check_branch
          %1497 = sbr.rel (%p1495) target = $region220
        $region219: #{_lambda_.1} parent=11 // pred_region
          %1499 = vsyncadd [#allocation6], 0
          %s1501 = sshll.u32 %s105, 4
          %s1502 = int_to_ptr.hbm [resolvable:$true] %s1501
          %s1503 = sshll.u32 [#allocation7], 4
          %s1504 = int_to_ptr.vmem [resolvable:$true] %s1503
          %1506 = dma.hbm_to_vmem [thread:$0]  %s1502, 16, %s1504, [#allocation6]
        $region220: #{_lambda_.1} parent=11 // pred_fallthru
          _
        // Predicated region
        $region221: #{_lambda_.1} parent=11 // pred_check
          %p1507 = pneg %p1262
        $region222: #{_lambda_.1} parent=11 // pred_check_branch
          %1509 = sbr.rel (%p1507) target = $region224
        $region223: #{_lambda_.1} parent=11 // pred_region
          _
        $region224: #{_lambda_.1} parent=11 // pred_fallthru
          _
        // Predicated region
        $region225: #{_lambda_.1} parent=11 // pred_check
          %p1510 = pneg %p1283
        $region226: #{_lambda_.1} parent=11 // pred_check_branch
          %1512 = sbr.rel (%p1510) target = $region228
        $region227: #{_lambda_.1} parent=11 // pred_region
          %1514 = vsyncadd [#allocation9], 0
          %s1516 = sshll.u32 %s109, 4
          %s1517 = int_to_ptr.hbm [resolvable:$true] %s1516
          %s1518 = sshll.u32 [#allocation8], 4
          %s1519 = int_to_ptr.vmem [resolvable:$true] %s1518
          %1521 = dma.hbm_to_vmem [thread:$0]  %s1517, 16, %s1519, [#allocation9]
        $region228: #{_lambda_.1} parent=11 // pred_fallthru
          _
      $region12: #{_lambda_.1} parent=5 // pred_fallthru
        _
      %p1522 = scmp.lt.s32.totalorder %s123, 2
      // Predicated region
      $region229: #{_lambda_.1} parent=5 // pred_check
        %p1523 = pneg %p1522
      $region230: #{_lambda_.1} parent=5 // pred_check_branch
        %1525 = sbr.rel (%p1523) target = $region232
      $region231: #{_lambda_.1} parent=5 // pred_region
        // Predicated region
        $region233: #{_lambda_.1} parent=231 // pred_check
          %p1526 = pneg %p143
        $region234: #{_lambda_.1} parent=231 // pred_check_branch
          %1528 = sbr.rel (%p1526) target = $region236
        $region235: #{_lambda_.1} parent=231 // pred_region
          %p1529 = scmp.lt.s32.totalorder %s123, 1
          %s1530 = scalar_select %p1529, %s123, 1
          %s1531 = smul.addr %s1530, 8
          %s1532 = scalar_lea.vmem %s1, %s1531
        $region236: #{_lambda_.1} parent=231 // pred_fallthru
          _
      $region232: #{_lambda_.1} parent=5 // pred_fallthru
        _
      %p1533 = scmp.le.s32.totalorder 1, %s123
      %p1534 = scmp.lt.s32.totalorder %s123, 3
      %p1535 = pnand %p1533, %p1534
      %p1536 = pneg %p1535
      // Predicated region
      $region237: #{_lambda_.1} parent=5 // pred_check
        _
      $region238: #{_lambda_.1} parent=5 // pred_check_branch
        %1538 = sbr.rel (%p1535) target = $region240
      $region239: #{_lambda_.1} parent=5 // pred_region
        %s1539 = ssub.s32 %s123, 1
        // Predicated region
        $region241: #{_lambda_.1} parent=239 // pred_check
          %p1540 = pneg %p1115
        $region242: #{_lambda_.1} parent=239 // pred_check_branch
          %1542 = sbr.rel (%p1540) target = $region244
        $region243: #{_lambda_.1} parent=239 // pred_region
          %1544 = dma.done [#allocation3], 16
        $region244: #{_lambda_.1} parent=239 // pred_fallthru
          _
        // Predicated region
        $region245: #{_lambda_.1} parent=239 // pred_check
          %p1545 = pneg %p1136
        $region246: #{_lambda_.1} parent=239 // pred_check_branch
          %1547 = sbr.rel (%p1545) target = $region248
        $region247: #{_lambda_.1} parent=239 // pred_region
          %1549 = dma.done [#allocation6], 16
        $region248: #{_lambda_.1} parent=239 // pred_fallthru
          _
        // Predicated region
        $region249: #{_lambda_.1} parent=239 // pred_check
          %p1550 = pneg %p1241
        $region250: #{_lambda_.1} parent=239 // pred_check_branch
          %1552 = sbr.rel (%p1550) target = $region252
        $region251: #{_lambda_.1} parent=239 // pred_region
          %1554 = dma.done [#allocation6], 16
        $region252: #{_lambda_.1} parent=239 // pred_fallthru
          _
        // Predicated region
        $region253: #{_lambda_.1} parent=239 // pred_check
          %p1555 = pneg %p1283
        $region254: #{_lambda_.1} parent=239 // pred_check_branch
          %1557 = sbr.rel (%p1555) target = $region256
        $region255: #{_lambda_.1} parent=239 // pred_region
          %1559 = dma.done [#allocation9], 16
        $region256: #{_lambda_.1} parent=239 // pred_fallthru
          _
        %p1560 = scmp.lt.s32.totalorder %s128, 1
        %s1561 = scalar_select %p1560, %s128, 1
        %s1562 = smul.addr %s1561, 8
        %s1563 = scalar_lea.vmem %s1, %s1562
        %p1564 = pneg %p149
        %p1565 = pneg %p146
        %p1566 = pneg %p170
        %p1567 = pneg %p167
        %p1568 = pneg %p191
        %p1569 = pneg %p188
        %p1570 = pneg %p212
        %p1571 = pneg %p209
        %p1572 = pneg %p233
        %p1573 = pneg %p230
        %p1574 = pneg %p254
        %p1575 = pneg %p251
        %p1576 = pneg %p275
        %p1577 = pneg %p272
        %p1578 = pneg %p296
        %p1579 = pneg %p293
        %p1580 = pneg %p317
        %p1581 = pneg %p314
        %p1582 = pneg %p338
        %p1583 = pneg %p335
        %p1584 = pneg %p359
        %p1585 = pneg %p356
        %p1586 = pneg %p380
        %p1587 = pneg %p377
        %p1588 = pneg %p401
        %p1589 = pneg %p398
        %p1590 = pneg %p422
        %p1591 = pneg %p419
        %p1592 = pneg %p443
        %p1593 = pneg %p440
        %p1594 = pneg %p464
        %p1595 = pneg %p461
        %p1596 = pneg %p485
        %p1597 = pneg %p482
        %p1598 = pneg %p506
        %p1599 = pneg %p503
        %p1600 = pneg %p527
        %p1601 = pneg %p524
        %p1602 = pneg %p548
        %p1603 = pneg %p545
        %p1604 = pneg %p569
        %p1605 = pneg %p566
        %p1606 = pneg %p590
        %p1607 = pneg %p587
        %p1608 = pneg %p611
        %p1609 = pneg %p608
        %p1610 = pneg %p632
        %p1611 = pneg %p629
        %p1612 = pneg %p653
        %p1613 = pneg %p650
        %p1614 = pneg %p674
        %p1615 = pneg %p671
        %p1616 = pneg %p695
        %p1617 = pneg %p692
        %p1618 = pneg %p716
        %p1619 = pneg %p713
        %p1620 = pneg %p737
        %p1621 = pneg %p734
        %p1622 = pneg %p758
        %p1623 = pneg %p755
        %p1624 = pneg %p779
        %p1625 = pneg %p776
        %p1626 = pneg %p800
        %p1627 = pneg %p797
        %p1628 = pneg %p821
        %p1629 = pneg %p818
        %p1630 = pneg %p842
        %p1631 = pneg %p839
        %p1632 = pneg %p863
        %p1633 = pneg %p860
        %p1634 = pneg %p884
        %p1635 = pneg %p881
        %p1636 = pneg %p905
        %p1637 = pneg %p902
        %p1638 = pneg %p926
        %p1639 = pneg %p923
        %p1640 = pneg %p947
        %p1641 = pneg %p944
        %p1642 = pneg %p968
        %p1643 = pneg %p965
        %p1644 = pneg %p989
        %p1645 = pneg %p986
        %p1646 = pneg %p1010
        %p1647 = pneg %p1007
        %p1648 = pneg %p1031
        %p1649 = pneg %p1028
        %p1650 = pneg %p1052
        %p1651 = pneg %p1049
        %p1652 = pneg %p1073
        %p1653 = pneg %p1070
        %p1654 = pneg %p1094
        %p1655 = pneg %p1091
        %p1656 = pneg %p1115
        %p1657 = pneg %p1112
        %p1658 = pneg %p1136
        %p1659 = pneg %p1133
        %p1660 = pneg %p1157
        %p1661 = pneg %p1154
        %p1662 = pneg %p1178
        %p1663 = pneg %p1175
        %p1664 = pneg %p1199
        %p1665 = pneg %p1196
        %p1666 = pneg %p1220
        %p1667 = pneg %p1217
        %p1668 = pneg %p1241
        %p1669 = pneg %p1238
        %p1670 = pneg %p1262
        %p1671 = pneg %p1259
        %p1672 = pneg %p1283
        %p1673 = pneg %p1280
        %p1674 = pneg %p1309
        %p1675 = pneg %p1306
        %s1676 = sand.u32 %s1296, 1
        %s1677 = scalar_lea.sflag [#allocation4], %s1676
        %s1678 = sand.u32 %s1296, 1
        %s1679 = scalar_lea.vmem [#allocation10], %s1678
        %p1680 = scmp.lt.s32.totalorder %s128, 1
        %s1681 = scalar_select %p1680, %s128, 1
        %s1682 = smul.addr %s1681, 8
        %s1683 = scalar_lea.vmem %s1, %s1682
        %v1684 = vld [vmem:[%s1683] sm:$0xff]
        %v1685 = vld [vmem:[%s3] sm:$0xff]
        %v1686 = vld [vmem:[%s3 + $0x8] sm:$0xff]
        %v1687 = vld [vmem:[%s7] sm:$0x1]
        %v1688 = vld [vmem:[%s9] sm:$0x1]
        %v1689 = vld [vmem:[%s11] sm:$0x1]
        %v1690 = vld [vmem:[%s13] sm:$0x1]
        %v1691 = vld [vmem:[%s15] sm:$0xff]
        %v1692 = vld [vmem:[%s15 + $0x8] sm:$0xff]
        %v1693 = vld [vmem:[%s15 + $0x10] sm:$0xff]
        %v1694 = vld [vmem:[%s15 + $0x18] sm:$0xff]
        %v1695 = vld [vmem:[%s15 + $0x20] sm:$0xff]
        %v1696 = vld [vmem:[%s15 + $0x28] sm:$0xff]
        %v1697 = vld [vmem:[%s15 + $0x30] sm:$0xff]
        %v1698 = vld [vmem:[%s15 + $0x38] sm:$0xff]
        %v1699 = vld [vmem:[%s17] sm:$0xff]
        %v1700 = vld [vmem:[%s17 + $0x8] sm:$0xff]
        %v1701 = vld [vmem:[%s17 + $0x10] sm:$0xff]
        %v1702 = vld [vmem:[%s17 + $0x18] sm:$0xff]
        %v1703 = vld [vmem:[%s19] sm:$0xff]
        %v1704 = vld [vmem:[%s19 + $0x8] sm:$0xff]
        %v1705 = vld [vmem:[%s19 + $0x10] sm:$0xff]
        %v1706 = vld [vmem:[%s19 + $0x18] sm:$0xff]
        %v1707 = vld [vmem:[%s21] sm:$0xff]
        %v1708 = vld [vmem:[%s21 + $0x8] sm:$0xff]
        %v1709 = vld [vmem:[%s23] sm:$0x1]
        %vm1710 = vcmask 523264
        %v1711 = vsel %vm1710, %v1685, 0.0
        %1712 = vadd.xlane.f32.xlu0 %v1711
        %v1713 = vpop.xlane.xlu0 %1712
        %v1714 = vsel %vm1710, %v1686, 0.0
        %1715 = vadd.xlane.f32.xlu0 %v1714
        %v1716 = vpop.xlane.xlu0 %1715
        %v1717 = vrcp.pop 64.0
        %v1718 = vmul.f32 64.0, %v1717
        %v1719 = vsub.f32 1.0, %v1718
        %v1720 = vmul.f32 %v1717, %v1719
        %v1721 = vadd.f32 %v1717, %v1720
        %vm1722 = vweird.f32 %v1717
        %v1723 = vsel %vm1722, %v1717, %v1721
        %v1724 = vmul.f32 %v1713, %v1723
        %v1725 = vmul.f32 %v1716, %v1723
        %v1726 = vsub.f32 %v1685, %v1724
        %v1727 = vsub.f32 %v1686, %v1725
        %v1728 = vmul.f32 %v1726, %v1726
        %v1729 = vmul.f32 %v1727, %v1727
        %v1730 = vsel %vm1710, %v1728, 0.0
        %1731 = vadd.xlane.f32.xlu0 %v1730
        %v1732 = vpop.xlane.xlu0 %1731
        %v1733 = vsel %vm1710, %v1729, 0.0
        %1734 = vadd.xlane.f32.xlu0 %v1733
        %v1735 = vpop.xlane.xlu0 %1734
        %v1736 = vmul.f32 %v1732, %v1723
        %v1737 = vmul.f32 %v1735, %v1723
        %v1738 = vadd.f32 %v1736, 1e-05
        %v1739 = vadd.f32 %v1737, 1e-05
        %v1740 = vrsqrt.pop %v1738
        %v1741 = vmul.f32 %v1740, %v1738
        %v1742 = vmul.f32 %v1741, %v1740
        %v1743 = vmul.f32 0.5, %v1742
        %v1744 = vsub.f32 1.5, %v1743
        %v1745 = vmul.f32 %v1740, %v1744
        %vm1746 = vweird.f32 %v1738
        %vm1747 = vweird.f32 %v1740
        %vm1748 = vmor %vm1746, %vm1747
        %v1749 = vsel %vm1748, %v1740, %v1745
        %v1750 = vrsqrt.pop %v1739
        %v1751 = vmul.f32 %v1750, %v1739
        %v1752 = vmul.f32 %v1751, %v1750
        %v1753 = vmul.f32 0.5, %v1752
        %v1754 = vsub.f32 1.5, %v1753
        %v1755 = vmul.f32 %v1750, %v1754
        %vm1756 = vweird.f32 %v1739
        %vm1757 = vweird.f32 %v1750
        %vm1758 = vmor %vm1756, %vm1757
        %v1759 = vsel %vm1758, %v1750, %v1755
        %v1760 = vmul.f32 %v1726, %v1749
        %v1761 = vmul.f32 %v1727, %v1759
        %v1763 = vperm.slane %v1687, 0
        %v1765 = vmul.f32 %v1760, %v1763
        %v1766 = vmul.f32 %v1761, %v1763
        %v1768 = vperm.slane %v1688, 0
        %v1770 = vadd.f32 %v1765, %v1768
        %v1771 = vadd.f32 %v1766, %v1768
        %vm1772 = vcmask 261120
        %v1773 = vsel %vm1772, %v1684, 0.0
        %1774 = vadd.xlane.f32.xlu0 %v1773
        %v1775 = vpop.xlane.xlu0 %1774
        %v1776 = vrcp.pop 32.0
        %v1777 = vmul.f32 32.0, %v1776
        %v1778 = vsub.f32 1.0, %v1777
        %v1779 = vmul.f32 %v1776, %v1778
        %v1780 = vadd.f32 %v1776, %v1779
        %vm1781 = vweird.f32 %v1776
        %v1782 = vsel %vm1781, %v1776, %v1780
        %v1783 = vmul.f32 %v1775, %v1782
        %v1784 = vsub.f32 %v1684, %v1783
        %v1785 = vmul.f32 %v1784, %v1784
        %v1786 = vsel %vm1772, %v1785, 0.0
        %1787 = vadd.xlane.f32.xlu0 %v1786
        %v1788 = vpop.xlane.xlu0 %1787
        %v1789 = vmul.f32 %v1788, %v1782
        %v1790 = vadd.f32 %v1789, 1e-05
        %v1791 = vrsqrt.pop %v1790
        %v1792 = vmul.f32 %v1791, %v1790
        %v1793 = vmul.f32 %v1792, %v1791
        %v1794 = vmul.f32 0.5, %v1793
        %v1795 = vsub.f32 1.5, %v1794
        %v1796 = vmul.f32 %v1791, %v1795
        %vm1797 = vweird.f32 %v1790
        %vm1798 = vweird.f32 %v1791
        %vm1799 = vmor %vm1797, %vm1798
        %v1800 = vsel %vm1799, %v1791, %v1796
        %v1801 = vmul.f32 %v1784, %v1800
        %v1803 = vperm.slane %v1689, 0
        %v1805 = vmul.f32 %v1801, %v1803
        %v1807 = vperm.slane %v1690, 0
        %v1809 = vadd.f32 %v1805, %v1807
        %v1811 = vsel %vm1710, %v1770, 0
        %v1814 = vsel %vm1710, %v1771, 0
        %1816 = vmatpush.msra.mxu0 0.0
        %1817 = vmatpush.msra.mxu0 0.0
        %1818 = vmatpush.msra.mxu0 0.0
        %1819 = vmatpush.msra.mxu0 0.0
        %1820 = vmatpush.msra.mxu0 0.0
        %1821 = vmatpush.msra.mxu0 0.0
        %1822 = vmatpush.msra.mxu0 0.0
        %1823 = vmatpush.msra.mxu0 0.0
        %1824 = vmatpush.msra.mxu0 %v1698
        %1825 = vmatpush.msra.mxu0 %v1697
        %1826 = vmatpush.msra.mxu0 %v1696
        %1827 = vmatpush.msra.mxu0 %v1695
        %1828 = vmatpush.msra.mxu0 %v1694
        %1829 = vmatpush.msra.mxu0 %v1693
        %1830 = vmatpush.msra.mxu0 %v1692
        %1831 = vmatpush.msra.mxu0 %v1691
        %1832 = vmatmul.f32.gmra.mxu0 %v1811
        %v1833 = vpop.f32.mrf.mxu0
        %v1834 = vadd.f32 0.0, %v1833
        %1835 = vmatmul.f32.gmra.mxu0 %v1814
        %v1836 = vpop.f32.mrf.mxu0
        %v1837 = vadd.f32 0.0, %v1836
        %1838 = vdwg.mxu0
        %v1839 = vmul.f32 %v1834, 0.25
        %v1840 = vmul.f32 %v1837, 0.25
        %v1842 = vsel %vm1772, %v1809, 0
        %1844 = vmatpush.msra.mxu0 0.0
        %1845 = vmatpush.msra.mxu0 0.0
        %1846 = vmatpush.msra.mxu0 0.0
        %1847 = vmatpush.msra.mxu0 0.0
        %1848 = vmatpush.msra.mxu0 0.0
        %1849 = vmatpush.msra.mxu0 0.0
        %1850 = vmatpush.msra.mxu0 0.0
        %1851 = vmatpush.msra.mxu0 0.0
        %1852 = vmatpush.msra.mxu0 0.0
        %1853 = vmatpush.msra.mxu0 0.0
        %1854 = vmatpush.msra.mxu0 0.0
        %1855 = vmatpush.msra.mxu0 0.0
        %1856 = vmatpush.msra.mxu0 %v1702
        %1857 = vmatpush.msra.mxu0 %v1701
        %1858 = vmatpush.msra.mxu0 %v1700
        %1859 = vmatpush.msra.mxu0 %v1699
        %1860 = vmatmul.f32.gmra.mxu0 %v1842
        %v1861 = vpop.f32.mrf.mxu0
        %v1862 = vadd.f32 0.0, %v1861
        %1863 = vdwg.mxu0
        %1864 = vmatpush.msra.mxu0 0.0
        %1865 = vmatpush.msra.mxu0 0.0
        %1866 = vmatpush.msra.mxu0 0.0
        %1867 = vmatpush.msra.mxu0 0.0
        %1868 = vmatpush.msra.mxu0 0.0
        %1869 = vmatpush.msra.mxu0 0.0
        %1870 = vmatpush.msra.mxu0 0.0
        %1871 = vmatpush.msra.mxu0 0.0
        %1872 = vmatpush.msra.mxu0 0.0
        %1873 = vmatpush.msra.mxu0 0.0
        %1874 = vmatpush.msra.mxu0 0.0
        %1875 = vmatpush.msra.mxu0 0.0
        %1876 = vmatpush.msra.mxu0 %v1706
        %1877 = vmatpush.msra.mxu0 %v1705
        %1878 = vmatpush.msra.mxu0 %v1704
        %1879 = vmatpush.msra.mxu0 %v1703
        %1880 = vmatmul.f32.gmra.mxu0 %v1842
        %v1881 = vpop.f32.mrf.mxu0
        %v1882 = vadd.f32 0.0, %v1881
        %1883 = vdwg.mxu0
        %vm1884 = vcmask 130048
        %v1886 = vsel %vm1884, %v1839, 0
        %v1889 = vsel %vm1884, %v1840, 0
        %v1892 = vsel %vm1884, %v1862, 0
        %1894 = vmatpush.xpose.msra.mxu0 0.0
        %1895 = vmatpush.xpose.msra.mxu0 0.0
        %1896 = vmatpush.xpose.msra.mxu0 0.0
        %1897 = vmatpush.xpose.msra.mxu0 0.0
        %1898 = vmatpush.xpose.msra.mxu0 0.0
        %1899 = vmatpush.xpose.msra.mxu0 0.0
        %1900 = vmatpush.xpose.msra.mxu0 0.0
        %1901 = vmatpush.xpose.msra.mxu0 0.0
        %1902 = vmatpush.xpose.msra.mxu0 0.0
        %1903 = vmatpush.xpose.msra.mxu0 0.0
        %1904 = vmatpush.xpose.msra.mxu0 0.0
        %1905 = vmatpush.xpose.msra.mxu0 0.0
        %1906 = vmatpush.xpose.msra.mxu0 0.0
        %1907 = vmatpush.xpose.msra.mxu0 0.0
        %1908 = vmatpush.xpose.msra.mxu0 0.0
        %1909 = vmatpush.xpose.msra.mxu0 %v1892
        %1910 = vmatmul.f32.gmra.mxu0 %v1886
        %v1911 = vpop.f32.mrf.mxu0
        %v1912 = vadd.f32 0.0, %v1911
        %1913 = vmatmul.f32.gmra.mxu0 %v1889
        %v1914 = vpop.f32.mrf.mxu0
        %v1915 = vadd.f32 0.0, %v1914
        %1916 = vdwg.mxu0
        %vm1917 = vcmask 64512
        %v1918 = vsel %vm1917, %v1912, -inf
        %1919 = vmax.xlane.f32.xlu0 %v1918
        %v1920 = vpop.xlane.xlu0 %1919
        %v1921 = vsel %vm1917, %v1915, -inf
        %1922 = vmax.xlane.f32.xlu0 %v1921
        %v1923 = vpop.xlane.xlu0 %1922
        %v1924 = vsub.f32 %v1912, %v1920
        %v1925 = vsub.f32 %v1915, %v1923
        %v1926 = vmul.f32 %v1924, 1.442695
        %v1927 = vpow.pop %v1926
        %v1928 = vmul.f32 %v1925, 1.442695
        %v1929 = vpow.pop %v1928
        %v1930 = vsel %vm1917, %v1927, 0.0
        %1931 = vadd.xlane.f32.xlu0 %v1930
        %v1932 = vpop.xlane.xlu0 %1931
        %v1933 = vsel %vm1917, %v1929, 0.0
        %1934 = vadd.xlane.f32.xlu0 %v1933
        %v1935 = vpop.xlane.xlu0 %1934
        %v1936 = vrcp.pop %v1932
        %v1937 = vrcp.pop %v1935
        %v1938 = vmul.f32 %v1927, %v1936
        %v1939 = vmul.f32 %v1929, %v1937
        %v1941 = vsel %vm1917, %v1938, 0
        %v1944 = vsel %vm1917, %v1939, 0
        %1946 = vmatpush.msra.mxu0 0.0
        %1947 = vmatpush.msra.mxu0 0.0
        %1948 = vmatpush.msra.mxu0 0.0
        %1949 = vmatpush.msra.mxu0 0.0
        %1950 = vmatpush.msra.mxu0 0.0
        %1951 = vmatpush.msra.mxu0 0.0
        %1952 = vmatpush.msra.mxu0 0.0
        %1953 = vmatpush.msra.mxu0 0.0
        %1954 = vmatpush.msra.mxu0 0.0
        %1955 = vmatpush.msra.mxu0 0.0
        %1956 = vmatpush.msra.mxu0 0.0
        %1957 = vmatpush.msra.mxu0 0.0
        %1958 = vmatpush.msra.mxu0 0.0
        %1959 = vmatpush.msra.mxu0 0.0
        %1960 = vmatpush.msra.mxu0 0.0
        %1961 = vmatpush.msra.mxu0 %v1882
        %1962 = vmatmul.f32.gmra.mxu0 %v1941
        %v1963 = vpop.f32.mrf.mxu0
        %v1964 = vadd.f32 0.0, %v1963
        %1965 = vmatmul.f32.gmra.mxu0 %v1944
        %v1966 = vpop.f32.mrf.mxu0
        %v1967 = vadd.f32 0.0, %v1966
        %1968 = vdwg.mxu0
        %v1970 = vperm.slane %v1709, 0
        %v1973 = vsel %vm1884, %v1964, 0
        %v1976 = vsel %vm1884, %v1967, 0
        %1978 = vmatpush.msra.mxu0 0.0
        %1979 = vmatpush.msra.mxu0 0.0
        %1980 = vmatpush.msra.mxu0 0.0
        %1981 = vmatpush.msra.mxu0 0.0
        %1982 = vmatpush.msra.mxu0 0.0
        %1983 = vmatpush.msra.mxu0 0.0
        %1984 = vmatpush.msra.mxu0 0.0
        %1985 = vmatpush.msra.mxu0 0.0
        %1986 = vmatpush.msra.mxu0 0.0
        %1987 = vmatpush.msra.mxu0 0.0
        %1988 = vmatpush.msra.mxu0 0.0
        %1989 = vmatpush.msra.mxu0 0.0
        %1990 = vmatpush.msra.mxu0 0.0
        %1991 = vmatpush.msra.mxu0 0.0
        %1992 = vmatpush.msra.mxu0 %v1708
        %1993 = vmatpush.msra.mxu0 %v1707
        %1994 = vmatmul.f32.gmra.mxu0 %v1973
        %v1995 = vpop.f32.mrf.mxu0
        %v1996 = vadd.f32 %v1970, %v1995
        %1997 = vmatmul.f32.gmra.mxu0 %v1976
        %v1998 = vpop.f32.mrf.mxu0
        %v1999 = vadd.f32 %v1970, %v1998
        %2000 = vdwg.mxu0
        %v2001 = vadd.f32 %v1996, %v1685
        %v2002 = vadd.f32 %v1999, %v1686
        %v2003 = vld [vmem:[%s25] sm:$0x1]
        %v2004 = vld [vmem:[%s27] sm:$0x1]
        %v2005 = vld [vmem:[%s29] sm:$0xff]
        %v2006 = vld [vmem:[%s29 + $0x8] sm:$0xff]
        %v2007 = vld [vmem:[%s29 + $0x10] sm:$0xff]
        %v2008 = vld [vmem:[%s29 + $0x18] sm:$0xff]
        %v2009 = vld [vmem:[%s29 + $0x20] sm:$0xff]
        %v2010 = vld [vmem:[%s29 + $0x28] sm:$0xff]
        %v2011 = vld [vmem:[%s29 + $0x30] sm:$0xff]
        %v2012 = vld [vmem:[%s29 + $0x38] sm:$0xff]
        %v2013 = vld [vmem:[%s29 + $0x40] sm:$0xff]
        %v2014 = vld [vmem:[%s29 + $0x48] sm:$0xff]
        %v2015 = vld [vmem:[%s29 + $0x50] sm:$0xff]
        %v2016 = vld [vmem:[%s29 + $0x58] sm:$0xff]
        %v2017 = vld [vmem:[%s29 + $0x60] sm:$0xff]
        %v2018 = vld [vmem:[%s29 + $0x68] sm:$0xff]
        %v2019 = vld [vmem:[%s29 + $0x70] sm:$0xff]
        %v2020 = vld [vmem:[%s29 + $0x78] sm:$0xff]
        %v2021 = vld [vmem:[%s29 + $0x80] sm:$0xff]
        %v2022 = vld [vmem:[%s29 + $0x88] sm:$0xff]
        %v2023 = vld [vmem:[%s29 + $0x90] sm:$0xff]
        %v2024 = vld [vmem:[%s29 + $0x98] sm:$0xff]
        %v2025 = vld [vmem:[%s29 + $0xa0] sm:$0xff]
        %v2026 = vld [vmem:[%s29 + $0xa8] sm:$0xff]
        %v2027 = vld [vmem:[%s29 + $0xb0] sm:$0xff]
        %v2028 = vld [vmem:[%s29 + $0xb8] sm:$0xff]
        %v2029 = vld [vmem:[%s29 + $0xc0] sm:$0xff]
        %v2030 = vld [vmem:[%s29 + $0xc8] sm:$0xff]
        %v2031 = vld [vmem:[%s29 + $0xd0] sm:$0xff]
        %v2032 = vld [vmem:[%s29 + $0xd8] sm:$0xff]
        %v2033 = vld [vmem:[%s29 + $0xe0] sm:$0xff]
        %v2034 = vld [vmem:[%s29 + $0xe8] sm:$0xff]
        %v2035 = vld [vmem:[%s29 + $0xf0] sm:$0xff]
        %v2036 = vld [vmem:[%s29 + $0xf8] sm:$0xff]
        %v2037 = vld [vmem:[%s31] sm:$0xf]
        %v2038 = vld [vmem:[%s33] sm:$0xff]
        %v2039 = vld [vmem:[%s33 + $0x8] sm:$0xff]
        %v2040 = vld [vmem:[%s33 + $0x10] sm:$0xff]
        %v2041 = vld [vmem:[%s33 + $0x18] sm:$0xff]
        %v2042 = vld [vmem:[%s33 + $0x20] sm:$0xff]
        %v2043 = vld [vmem:[%s33 + $0x28] sm:$0xff]
        %v2044 = vld [vmem:[%s33 + $0x30] sm:$0xff]
        %v2045 = vld [vmem:[%s33 + $0x38] sm:$0xff]
        %v2046 = vld [vmem:[%s33 + $0x40] sm:$0xff]
        %v2047 = vld [vmem:[%s33 + $0x48] sm:$0xff]
        %v2048 = vld [vmem:[%s33 + $0x50] sm:$0xff]
        %v2049 = vld [vmem:[%s33 + $0x58] sm:$0xff]
        %v2050 = vld [vmem:[%s33 + $0x60] sm:$0xff]
        %v2051 = vld [vmem:[%s33 + $0x68] sm:$0xff]
        %v2052 = vld [vmem:[%s33 + $0x70] sm:$0xff]
        %v2053 = vld [vmem:[%s33 + $0x78] sm:$0xff]
        %v2054 = vld [vmem:[%s33 + $0x80] sm:$0xff]
        %v2055 = vld [vmem:[%s33 + $0x88] sm:$0xff]
        %v2056 = vld [vmem:[%s33 + $0x90] sm:$0xff]
        %v2057 = vld [vmem:[%s33 + $0x98] sm:$0xff]
        %v2058 = vld [vmem:[%s33 + $0xa0] sm:$0xff]
        %v2059 = vld [vmem:[%s33 + $0xa8] sm:$0xff]
        %v2060 = vld [vmem:[%s33 + $0xb0] sm:$0xff]
        %v2061 = vld [vmem:[%s33 + $0xb8] sm:$0xff]
        %v2062 = vld [vmem:[%s33 + $0xc0] sm:$0xff]
        %v2063 = vld [vmem:[%s33 + $0xc8] sm:$0xff]
        %v2064 = vld [vmem:[%s33 + $0xd0] sm:$0xff]
        %v2065 = vld [vmem:[%s33 + $0xd8] sm:$0xff]
        %v2066 = vld [vmem:[%s33 + $0xe0] sm:$0xff]
        %v2067 = vld [vmem:[%s33 + $0xe8] sm:$0xff]
        %v2068 = vld [vmem:[%s33 + $0xf0] sm:$0xff]
        %v2069 = vld [vmem:[%s33 + $0xf8] sm:$0xff]
        %v2070 = vld [vmem:[%s35] sm:$0x1]
        %v2071 = vsel %vm1710, %v2001, 0.0
        %2072 = vadd.xlane.f32.xlu0 %v2071
        %v2073 = vpop.xlane.xlu0 %2072
        %v2074 = vsel %vm1710, %v2002, 0.0
        %2075 = vadd.xlane.f32.xlu0 %v2074
        %v2076 = vpop.xlane.xlu0 %2075
        %v2077 = vmul.f32 %v2073, %v1723
        %v2078 = vmul.f32 %v2076, %v1723
        %v2079 = vsub.f32 %v2001, %v2077
        %v2080 = vsub.f32 %v2002, %v2078
        %v2081 = vmul.f32 %v2079, %v2079
        %v2082 = vmul.f32 %v2080, %v2080
        %v2083 = vsel %vm1710, %v2081, 0.0
        %2084 = vadd.xlane.f32.xlu0 %v2083
        %v2085 = vpop.xlane.xlu0 %2084
        %v2086 = vsel %vm1710, %v2082, 0.0
        %2087 = vadd.xlane.f32.xlu0 %v2086
        %v2088 = vpop.xlane.xlu0 %2087
        %v2089 = vmul.f32 %v2085, %v1723
        %v2090 = vmul.f32 %v2088, %v1723
        %v2091 = vadd.f32 %v2089, 1e-05
        %v2092 = vadd.f32 %v2090, 1e-05
        %v2093 = vrsqrt.pop %v2091
        %v2094 = vmul.f32 %v2093, %v2091
        %v2095 = vmul.f32 %v2094, %v2093
        %v2096 = vmul.f32 0.5, %v2095
        %v2097 = vsub.f32 1.5, %v2096
        %v2098 = vmul.f32 %v2093, %v2097
        %vm2099 = vweird.f32 %v2091
        %vm2100 = vweird.f32 %v2093
        %vm2101 = vmor %vm2099, %vm2100
        %v2102 = vsel %vm2101, %v2093, %v2098
        %v2103 = vrsqrt.pop %v2092
        %v2104 = vmul.f32 %v2103, %v2092
        %v2105 = vmul.f32 %v2104, %v2103
        %v2106 = vmul.f32 0.5, %v2105
        %v2107 = vsub.f32 1.5, %v2106
        %v2108 = vmul.f32 %v2103, %v2107
        %vm2109 = vweird.f32 %v2092
        %vm2110 = vweird.f32 %v2103
        %vm2111 = vmor %vm2109, %vm2110
        %v2112 = vsel %vm2111, %v2103, %v2108
        %v2113 = vmul.f32 %v2079, %v2102
        %v2114 = vmul.f32 %v2080, %v2112
        %v2116 = vperm.slane %v2003, 0
        %v2118 = vmul.f32 %v2113, %v2116
        %v2119 = vmul.f32 %v2114, %v2116
        %v2121 = vperm.slane %v2004, 0
        %v2123 = vadd.f32 %v2118, %v2121
        %v2124 = vadd.f32 %v2119, %v2121
        %v2126 = vperm.slane %v2037, 0
        %v2127 = vperm.slane %v2037, 1
        %v2128 = vperm.slane %v2037, 2
        %v2129 = vperm.slane %v2037, 3
        %v2135 = vsel %vm1710, %v2123, 0
        %v2138 = vsel %vm1710, %v2124, 0
        %2140 = vmatpush.msra.mxu0 0.0
        %2141 = vmatpush.msra.mxu0 0.0
        %2142 = vmatpush.msra.mxu0 0.0
        %2143 = vmatpush.msra.mxu0 0.0
        %2144 = vmatpush.msra.mxu0 0.0
        %2145 = vmatpush.msra.mxu0 0.0
        %2146 = vmatpush.msra.mxu0 0.0
        %2147 = vmatpush.msra.mxu0 0.0
        %2148 = vmatpush.msra.mxu0 %v2033
        %2149 = vmatpush.msra.mxu0 %v2029
        %2150 = vmatpush.msra.mxu0 %v2025
        %2151 = vmatpush.msra.mxu0 %v2021
        %2152 = vmatpush.msra.mxu0 %v2017
        %2153 = vmatpush.msra.mxu0 %v2013
        %2154 = vmatpush.msra.mxu0 %v2009
        %2155 = vmatpush.msra.mxu0 %v2005
        %2156 = vmatmul.f32.gmra.mxu0 %v2135
        %v2157 = vpop.f32.mrf.mxu0
        %v2158 = vadd.f32 %v2126, %v2157
        %2159 = vmatmul.f32.gmra.mxu0 %v2138
        %v2160 = vpop.f32.mrf.mxu0
        %v2161 = vadd.f32 %v2126, %v2160
        %2162 = vdwg.mxu0
        %2163 = vmatpush.msra.mxu0 0.0
        %2164 = vmatpush.msra.mxu0 0.0
        %2165 = vmatpush.msra.mxu0 0.0
        %2166 = vmatpush.msra.mxu0 0.0
        %2167 = vmatpush.msra.mxu0 0.0
        %2168 = vmatpush.msra.mxu0 0.0
        %2169 = vmatpush.msra.mxu0 0.0
        %2170 = vmatpush.msra.mxu0 0.0
        %2171 = vmatpush.msra.mxu0 %v2034
        %2172 = vmatpush.msra.mxu0 %v2030
        %2173 = vmatpush.msra.mxu0 %v2026
        %2174 = vmatpush.msra.mxu0 %v2022
        %2175 = vmatpush.msra.mxu0 %v2018
        %2176 = vmatpush.msra.mxu0 %v2014
        %2177 = vmatpush.msra.mxu0 %v2010
        %2178 = vmatpush.msra.mxu0 %v2006
        %2179 = vmatmul.f32.gmra.mxu0 %v2135
        %v2180 = vpop.f32.mrf.mxu0
        %v2181 = vadd.f32 %v2127, %v2180
        %2182 = vmatmul.f32.gmra.mxu0 %v2138
        %v2183 = vpop.f32.mrf.mxu0
        %v2184 = vadd.f32 %v2127, %v2183
        %2185 = vdwg.mxu0
        %2186 = vmatpush.msra.mxu0 0.0
        %2187 = vmatpush.msra.mxu0 0.0
        %2188 = vmatpush.msra.mxu0 0.0
        %2189 = vmatpush.msra.mxu0 0.0
        %2190 = vmatpush.msra.mxu0 0.0
        %2191 = vmatpush.msra.mxu0 0.0
        %2192 = vmatpush.msra.mxu0 0.0
        %2193 = vmatpush.msra.mxu0 0.0
        %2194 = vmatpush.msra.mxu0 %v2035
        %2195 = vmatpush.msra.mxu0 %v2031
        %2196 = vmatpush.msra.mxu0 %v2027
        %2197 = vmatpush.msra.mxu0 %v2023
        %2198 = vmatpush.msra.mxu0 %v2019
        %2199 = vmatpush.msra.mxu0 %v2015
        %2200 = vmatpush.msra.mxu0 %v2011
        %2201 = vmatpush.msra.mxu0 %v2007
        %2202 = vmatmul.f32.gmra.mxu0 %v2135
        %v2203 = vpop.f32.mrf.mxu0
        %v2204 = vadd.f32 %v2128, %v2203
        %2205 = vmatmul.f32.gmra.mxu0 %v2138
        %v2206 = vpop.f32.mrf.mxu0
        %v2207 = vadd.f32 %v2128, %v2206
        %2208 = vdwg.mxu0
        %2209 = vmatpush.msra.mxu0 0.0
        %2210 = vmatpush.msra.mxu0 0.0
        %2211 = vmatpush.msra.mxu0 0.0
        %2212 = vmatpush.msra.mxu0 0.0
        %2213 = vmatpush.msra.mxu0 0.0
        %2214 = vmatpush.msra.mxu0 0.0
        %2215 = vmatpush.msra.mxu0 0.0
        %2216 = vmatpush.msra.mxu0 0.0
        %2217 = vmatpush.msra.mxu0 %v2036
        %2218 = vmatpush.msra.mxu0 %v2032
        %2219 = vmatpush.msra.mxu0 %v2028
        %2220 = vmatpush.msra.mxu0 %v2024
        %2221 = vmatpush.msra.mxu0 %v2020
        %2222 = vmatpush.msra.mxu0 %v2016
        %2223 = vmatpush.msra.mxu0 %v2012
        %2224 = vmatpush.msra.mxu0 %v2008
        %2225 = vmatmul.f32.gmra.mxu0 %v2135
        %v2226 = vpop.f32.mrf.mxu0
        %v2227 = vadd.f32 %v2129, %v2226
        %2228 = vmatmul.f32.gmra.mxu0 %v2138
        %v2229 = vpop.f32.mrf.mxu0
        %v2230 = vadd.f32 %v2129, %v2229
        %2231 = vdwg.mxu0
        %v2232 = vmul.f32 %v2204, 0.5
        %v2233 = vmul.f32 %v2227, 0.5
        %v2234 = vmul.f32 %v2207, 0.5
        %v2235 = vmul.f32 %v2230, 0.5
        %v2236 = vmul.f32 %v2204, 0.70710677
        %v2237 = vmul.f32 %v2227, 0.70710677
        %v2238 = vmul.f32 %v2207, 0.70710677
        %v2239 = vmul.f32 %v2230, 0.70710677
        %v2240 = vmul.f32 %v2236, %v2236
        %v2241 = vmin.f32 16.0, %v2240
        %v2242 = vmul.f32 %v2241, 2.1237322e-06
        %v2243 = vadd.f32 %v2242, 0.00028619796
        %v2244 = vmul.f32 %v2241, %v2243
        %v2245 = vadd.f32 %v2244, 0.0036580483
        %v2246 = vmul.f32 %v2241, %v2245
        %v2247 = vadd.f32 %v2246, 0.05243302
        %v2248 = vmul.f32 %v2241, %v2247
        %v2249 = vadd.f32 %v2248, 0.18741608
        %v2250 = vmul.f32 %v2241, %v2249
        %v2251 = vadd.f32 %v2250, 1.1283791
        %v2252 = vmul.f32 %v2236, %v2251
        %v2253 = vmul.f32 %v2241, 3.8918573e-05
        %v2254 = vadd.f32 %v2253, 0.001143296
        %v2255 = vmul.f32 %v2241, %v2254
        %v2256 = vadd.f32 %v2255, 0.014752088
        %v2257 = vmul.f32 %v2241, %v2256
        %v2258 = vadd.f32 %v2257, 0.112945676
        %v2259 = vmul.f32 %v2241, %v2258
        %v2260 = vadd.f32 %v2259, 0.4994258
        %v2261 = vmul.f32 %v2241, %v2260
        %v2262 = vadd.f32 %v2261, 1.0
        %v2263 = vrcp.pop %v2262
        %v2264 = vmul.f32 %v2262, %v2263
        %v2265 = vsub.f32 1.0, %v2264
        %v2266 = vmul.f32 %v2263, %v2265
        %v2267 = vadd.f32 %v2263, %v2266
        %vm2268 = vweird.f32 %v2262
        %vm2269 = vweird.f32 %v2263
        %vm2270 = vmor %vm2268, %vm2269
        %v2271 = vsel %vm2270, %v2263, %v2267
        %v2272 = vand.u32 2147483647, %v2262
        %vm2273 = vcmp.eq.f32.partialorder %v2272, 8.507059e+37
        %v2274 = vand.u32 %v2262, 2147483648
        %v2275 = vor.u32 1.1754944e-38, %v2274
        %v2276 = vsel %vm2273, %v2275, %v2271
        %v2277 = vmul.f32 %v2252, %v2276
        %v2278 = vmin.f32 %v2277, 1.0
        %v2279 = vmax.f32 %v2278, -1.0
        %v2280 = vmul.f32 %v2237, %v2237
        %v2281 = vmin.f32 16.0, %v2280
        %v2282 = vmul.f32 %v2281, 2.1237322e-06
        %v2283 = vadd.f32 %v2282, 0.00028619796
        %v2284 = vmul.f32 %v2281, %v2283
        %v2285 = vadd.f32 %v2284, 0.0036580483
        %v2286 = vmul.f32 %v2281, %v2285
        %v2287 = vadd.f32 %v2286, 0.05243302
        %v2288 = vmul.f32 %v2281, %v2287
        %v2289 = vadd.f32 %v2288, 0.18741608
        %v2290 = vmul.f32 %v2281, %v2289
        %v2291 = vadd.f32 %v2290, 1.1283791
        %v2292 = vmul.f32 %v2237, %v2291
        %v2293 = vmul.f32 %v2281, 3.8918573e-05
        %v2294 = vadd.f32 %v2293, 0.001143296
        %v2295 = vmul.f32 %v2281, %v2294
        %v2296 = vadd.f32 %v2295, 0.014752088
        %v2297 = vmul.f32 %v2281, %v2296
        %v2298 = vadd.f32 %v2297, 0.112945676
        %v2299 = vmul.f32 %v2281, %v2298
        %v2300 = vadd.f32 %v2299, 0.4994258
        %v2301 = vmul.f32 %v2281, %v2300
        %v2302 = vadd.f32 %v2301, 1.0
        %v2303 = vrcp.pop %v2302
        %v2304 = vmul.f32 %v2302, %v2303
        %v2305 = vsub.f32 1.0, %v2304
        %v2306 = vmul.f32 %v2303, %v2305
        %v2307 = vadd.f32 %v2303, %v2306
        %vm2308 = vweird.f32 %v2302
        %vm2309 = vweird.f32 %v2303
        %vm2310 = vmor %vm2308, %vm2309
        %v2311 = vsel %vm2310, %v2303, %v2307
        %v2312 = vand.u32 2147483647, %v2302
        %vm2313 = vcmp.eq.f32.partialorder %v2312, 8.507059e+37
        %v2314 = vand.u32 %v2302, 2147483648
        %v2315 = vor.u32 1.1754944e-38, %v2314
        %v2316 = vsel %vm2313, %v2315, %v2311
        %v2317 = vmul.f32 %v2292, %v2316
        %v2318 = vmin.f32 %v2317, 1.0
        %v2319 = vmax.f32 %v2318, -1.0
        %v2320 = vmul.f32 %v2238, %v2238
        %v2321 = vmin.f32 16.0, %v2320
        %v2322 = vmul.f32 %v2321, 2.1237322e-06
        %v2323 = vadd.f32 %v2322, 0.00028619796
        %v2324 = vmul.f32 %v2321, %v2323
        %v2325 = vadd.f32 %v2324, 0.0036580483
        %v2326 = vmul.f32 %v2321, %v2325
        %v2327 = vadd.f32 %v2326, 0.05243302
        %v2328 = vmul.f32 %v2321, %v2327
        %v2329 = vadd.f32 %v2328, 0.18741608
        %v2330 = vmul.f32 %v2321, %v2329
        %v2331 = vadd.f32 %v2330, 1.1283791
        %v2332 = vmul.f32 %v2238, %v2331
        %v2333 = vmul.f32 %v2321, 3.8918573e-05
        %v2334 = vadd.f32 %v2333, 0.001143296
        %v2335 = vmul.f32 %v2321, %v2334
        %v2336 = vadd.f32 %v2335, 0.014752088
        %v2337 = vmul.f32 %v2321, %v2336
        %v2338 = vadd.f32 %v2337, 0.112945676
        %v2339 = vmul.f32 %v2321, %v2338
        %v2340 = vadd.f32 %v2339, 0.4994258
        %v2341 = vmul.f32 %v2321, %v2340
        %v2342 = vadd.f32 %v2341, 1.0
        %v2343 = vrcp.pop %v2342
        %v2344 = vmul.f32 %v2342, %v2343
        %v2345 = vsub.f32 1.0, %v2344
        %v2346 = vmul.f32 %v2343, %v2345
        %v2347 = vadd.f32 %v2343, %v2346
        %vm2348 = vweird.f32 %v2342
        %vm2349 = vweird.f32 %v2343
        %vm2350 = vmor %vm2348, %vm2349
        %v2351 = vsel %vm2350, %v2343, %v2347
        %v2352 = vand.u32 2147483647, %v2342
        %vm2353 = vcmp.eq.f32.partialorder %v2352, 8.507059e+37
        %v2354 = vand.u32 %v2342, 2147483648
        %v2355 = vor.u32 1.1754944e-38, %v2354
        %v2356 = vsel %vm2353, %v2355, %v2351
        %v2357 = vmul.f32 %v2332, %v2356
        %v2358 = vmin.f32 %v2357, 1.0
        %v2359 = vmax.f32 %v2358, -1.0
        %v2360 = vmul.f32 %v2239, %v2239
        %v2361 = vmin.f32 16.0, %v2360
        %v2362 = vmul.f32 %v2361, 2.1237322e-06
        %v2363 = vadd.f32 %v2362, 0.00028619796
        %v2364 = vmul.f32 %v2361, %v2363
        %v2365 = vadd.f32 %v2364, 0.0036580483
        %v2366 = vmul.f32 %v2361, %v2365
        %v2367 = vadd.f32 %v2366, 0.05243302
        %v2368 = vmul.f32 %v2361, %v2367
        %v2369 = vadd.f32 %v2368, 0.18741608
        %v2370 = vmul.f32 %v2361, %v2369
        %v2371 = vadd.f32 %v2370, 1.1283791
        %v2372 = vmul.f32 %v2239, %v2371
        %v2373 = vmul.f32 %v2361, 3.8918573e-05
        %v2374 = vadd.f32 %v2373, 0.001143296
        %v2375 = vmul.f32 %v2361, %v2374
        %v2376 = vadd.f32 %v2375, 0.014752088
        %v2377 = vmul.f32 %v2361, %v2376
        %v2378 = vadd.f32 %v2377, 0.112945676
        %v2379 = vmul.f32 %v2361, %v2378
        %v2380 = vadd.f32 %v2379, 0.4994258
        %v2381 = vmul.f32 %v2361, %v2380
        %v2382 = vadd.f32 %v2381, 1.0
        %v2383 = vrcp.pop %v2382
        %v2384 = vmul.f32 %v2382, %v2383
        %v2385 = vsub.f32 1.0, %v2384
        %v2386 = vmul.f32 %v2383, %v2385
        %v2387 = vadd.f32 %v2383, %v2386
        %vm2388 = vweird.f32 %v2382
        %vm2389 = vweird.f32 %v2383
        %vm2390 = vmor %vm2388, %vm2389
        %v2391 = vsel %vm2390, %v2383, %v2387
        %v2392 = vand.u32 2147483647, %v2382
        %vm2393 = vcmp.eq.f32.partialorder %v2392, 8.507059e+37
        %v2394 = vand.u32 %v2382, 2147483648
        %v2395 = vor.u32 1.1754944e-38, %v2394
        %v2396 = vsel %vm2393, %v2395, %v2391
        %v2397 = vmul.f32 %v2372, %v2396
        %v2398 = vmin.f32 %v2397, 1.0
        %v2399 = vmax.f32 %v2398, -1.0
        %v2400 = vadd.f32 %v2279, 1.0
        %v2401 = vadd.f32 %v2319, 1.0
        %v2402 = vadd.f32 %v2359, 1.0
        %v2403 = vadd.f32 %v2399, 1.0
        %v2404 = vmul.f32 %v2232, %v2400
        %v2405 = vmul.f32 %v2233, %v2401
        %v2406 = vmul.f32 %v2234, %v2402
        %v2407 = vmul.f32 %v2235, %v2403
        %v2408 = vmul.f32 %v2158, %v2404
        %v2409 = vmul.f32 %v2181, %v2405
        %v2410 = vmul.f32 %v2161, %v2406
        %v2411 = vmul.f32 %v2184, %v2407
        %v2413 = vperm.slane %v2070, 0
        %2415 = vmatpush.msra.mxu0 %v2053
        %2416 = vmatpush.msra.mxu0 %v2052
        %2417 = vmatpush.msra.mxu0 %v2051
        %2418 = vmatpush.msra.mxu0 %v2050
        %2419 = vmatpush.msra.mxu0 %v2049
        %2420 = vmatpush.msra.mxu0 %v2048
        %2421 = vmatpush.msra.mxu0 %v2047
        %2422 = vmatpush.msra.mxu0 %v2046
        %2423 = vmatpush.msra.mxu0 %v2045
        %2424 = vmatpush.msra.mxu0 %v2044
        %2425 = vmatpush.msra.mxu0 %v2043
        %2426 = vmatpush.msra.mxu0 %v2042
        %2427 = vmatpush.msra.mxu0 %v2041
        %2428 = vmatpush.msra.mxu0 %v2040
        %2429 = vmatpush.msra.mxu0 %v2039
        %2430 = vmatpush.msra.mxu0 %v2038
        %2431 = vmatmul.f32.gmra.mxu0 %v2408
        %v2432 = vpop.f32.mrf.mxu0
        %v2433 = vadd.f32 %v2413, %v2432
        %2434 = vmatmul.f32.gmra.mxu0 %v2410
        %v2435 = vpop.f32.mrf.mxu0
        %v2436 = vadd.f32 %v2413, %v2435
        %2437 = vdwg.mxu0
        %2438 = vmatpush.msra.mxu0 %v2069
        %2439 = vmatpush.msra.mxu0 %v2068
        %2440 = vmatpush.msra.mxu0 %v2067
        %2441 = vmatpush.msra.mxu0 %v2066
        %2442 = vmatpush.msra.mxu0 %v2065
        %2443 = vmatpush.msra.mxu0 %v2064
        %2444 = vmatpush.msra.mxu0 %v2063
        %2445 = vmatpush.msra.mxu0 %v2062
        %2446 = vmatpush.msra.mxu0 %v2061
        %2447 = vmatpush.msra.mxu0 %v2060
        %2448 = vmatpush.msra.mxu0 %v2059
        %2449 = vmatpush.msra.mxu0 %v2058
        %2450 = vmatpush.msra.mxu0 %v2057
        %2451 = vmatpush.msra.mxu0 %v2056
        %2452 = vmatpush.msra.mxu0 %v2055
        %2453 = vmatpush.msra.mxu0 %v2054
        %2454 = vmatmul.f32.gmra.mxu0 %v2409
        %v2455 = vpop.f32.mrf.mxu0
        %v2456 = vadd.f32 %v2433, %v2455
        %2457 = vmatmul.f32.gmra.mxu0 %v2411
        %v2458 = vpop.f32.mrf.mxu0
        %v2459 = vadd.f32 %v2436, %v2458
        %2460 = vdwg.mxu0
        %v2461 = vadd.f32 %v2456, %v2001
        %v2462 = vadd.f32 %v2459, %v2002
        %v2463 = vld [vmem:[%s37] sm:$0x1]
        %v2464 = vld [vmem:[%s39] sm:$0x1]
        %v2465 = vld [vmem:[%s41] sm:$0xff]
        %v2466 = vld [vmem:[%s41 + $0x8] sm:$0xff]
        %v2467 = vld [vmem:[%s41 + $0x10] sm:$0xff]
        %v2468 = vld [vmem:[%s41 + $0x18] sm:$0xff]
        %v2469 = vld [vmem:[%s41 + $0x20] sm:$0xff]
        %v2470 = vld [vmem:[%s41 + $0x28] sm:$0xff]
        %v2471 = vld [vmem:[%s41 + $0x30] sm:$0xff]
        %v2472 = vld [vmem:[%s41 + $0x38] sm:$0xff]
        %v2473 = vld [vmem:[%s41 + $0x40] sm:$0xff]
        %v2474 = vld [vmem:[%s41 + $0x48] sm:$0xff]
        %v2475 = vld [vmem:[%s41 + $0x50] sm:$0xff]
        %v2476 = vld [vmem:[%s41 + $0x58] sm:$0xff]
        %v2477 = vld [vmem:[%s41 + $0x60] sm:$0xff]
        %v2478 = vld [vmem:[%s41 + $0x68] sm:$0xff]
        %v2479 = vld [vmem:[%s41 + $0x70] sm:$0xff]
        %v2480 = vld [vmem:[%s41 + $0x78] sm:$0xff]
        %v2481 = vld [vmem:[%s41 + $0x80] sm:$0xff]
        %v2482 = vld [vmem:[%s41 + $0x88] sm:$0xff]
        %v2483 = vld [vmem:[%s41 + $0x90] sm:$0xff]
        %v2484 = vld [vmem:[%s41 + $0x98] sm:$0xff]
        %v2485 = vld [vmem:[%s41 + $0xa0] sm:$0xff]
        %v2486 = vld [vmem:[%s41 + $0xa8] sm:$0xff]
        %v2487 = vld [vmem:[%s41 + $0xb0] sm:$0xff]
        %v2488 = vld [vmem:[%s41 + $0xb8] sm:$0xff]
        %v2489 = vld [vmem:[%s41 + $0xc0] sm:$0xff]
        %v2490 = vld [vmem:[%s41 + $0xc8] sm:$0xff]
        %v2491 = vld [vmem:[%s41 + $0xd0] sm:$0xff]
        %v2492 = vld [vmem:[%s41 + $0xd8] sm:$0xff]
        %v2493 = vld [vmem:[%s41 + $0xe0] sm:$0xff]
        %v2494 = vld [vmem:[%s41 + $0xe8] sm:$0xff]
        %v2495 = vld [vmem:[%s41 + $0xf0] sm:$0xff]
        %v2496 = vld [vmem:[%s41 + $0xf8] sm:$0xff]
        %v2497 = vld [vmem:[%s43] sm:$0xff]
        %v2498 = vld [vmem:[%s43 + $0x8] sm:$0xff]
        %v2499 = vld [vmem:[%s43 + $0x10] sm:$0xff]
        %v2500 = vld [vmem:[%s43 + $0x18] sm:$0xff]
        %v2501 = vld [vmem:[%s43 + $0x20] sm:$0xff]
        %v2502 = vld [vmem:[%s43 + $0x28] sm:$0xff]
        %v2503 = vld [vmem:[%s43 + $0x30] sm:$0xff]
        %v2504 = vld [vmem:[%s43 + $0x38] sm:$0xff]
        %v2505 = vld [vmem:[%s43 + $0x40] sm:$0xff]
        %v2506 = vld [vmem:[%s43 + $0x48] sm:$0xff]
        %v2507 = vld [vmem:[%s43 + $0x50] sm:$0xff]
        %v2508 = vld [vmem:[%s43 + $0x58] sm:$0xff]
        %v2509 = vld [vmem:[%s43 + $0x60] sm:$0xff]
        %v2510 = vld [vmem:[%s43 + $0x68] sm:$0xff]
        %v2511 = vld [vmem:[%s43 + $0x70] sm:$0xff]
        %v2512 = vld [vmem:[%s43 + $0x78] sm:$0xff]
        %v2513 = vld [vmem:[%s43 + $0x80] sm:$0xff]
        %v2514 = vld [vmem:[%s43 + $0x88] sm:$0xff]
        %v2515 = vld [vmem:[%s43 + $0x90] sm:$0xff]
        %v2516 = vld [vmem:[%s43 + $0x98] sm:$0xff]
        %v2517 = vld [vmem:[%s43 + $0xa0] sm:$0xff]
        %v2518 = vld [vmem:[%s43 + $0xa8] sm:$0xff]
        %v2519 = vld [vmem:[%s43 + $0xb0] sm:$0xff]
        %v2520 = vld [vmem:[%s43 + $0xb8] sm:$0xff]
        %v2521 = vld [vmem:[%s43 + $0xc0] sm:$0xff]
        %v2522 = vld [vmem:[%s43 + $0xc8] sm:$0xff]
        %v2523 = vld [vmem:[%s43 + $0xd0] sm:$0xff]
        %v2524 = vld [vmem:[%s43 + $0xd8] sm:$0xff]
        %v2525 = vld [vmem:[%s43 + $0xe0] sm:$0xff]
        %v2526 = vld [vmem:[%s43 + $0xe8] sm:$0xff]
        %v2527 = vld [vmem:[%s43 + $0xf0] sm:$0xff]
        %v2528 = vld [vmem:[%s43 + $0xf8] sm:$0xff]
        %v2529 = vld [vmem:[%s45] sm:$0xff]
        %v2530 = vld [vmem:[%s45 + $0x8] sm:$0xff]
        %v2531 = vld [vmem:[%s45 + $0x10] sm:$0xff]
        %v2532 = vld [vmem:[%s45 + $0x18] sm:$0xff]
        %v2533 = vld [vmem:[%s45 + $0x20] sm:$0xff]
        %v2534 = vld [vmem:[%s45 + $0x28] sm:$0xff]
        %v2535 = vld [vmem:[%s45 + $0x30] sm:$0xff]
        %v2536 = vld [vmem:[%s45 + $0x38] sm:$0xff]
        %v2537 = vld [vmem:[%s45 + $0x40] sm:$0xff]
        %v2538 = vld [vmem:[%s45 + $0x48] sm:$0xff]
        %v2539 = vld [vmem:[%s45 + $0x50] sm:$0xff]
        %v2540 = vld [vmem:[%s45 + $0x58] sm:$0xff]
        %v2541 = vld [vmem:[%s45 + $0x60] sm:$0xff]
        %v2542 = vld [vmem:[%s45 + $0x68] sm:$0xff]
        %v2543 = vld [vmem:[%s45 + $0x70] sm:$0xff]
        %v2544 = vld [vmem:[%s45 + $0x78] sm:$0xff]
        %v2545 = vld [vmem:[%s45 + $0x80] sm:$0xff]
        %v2546 = vld [vmem:[%s45 + $0x88] sm:$0xff]
        %v2547 = vld [vmem:[%s45 + $0x90] sm:$0xff]
        %v2548 = vld [vmem:[%s45 + $0x98] sm:$0xff]
        %v2549 = vld [vmem:[%s45 + $0xa0] sm:$0xff]
        %v2550 = vld [vmem:[%s45 + $0xa8] sm:$0xff]
        %v2551 = vld [vmem:[%s45 + $0xb0] sm:$0xff]
        %v2552 = vld [vmem:[%s45 + $0xb8] sm:$0xff]
        %v2553 = vld [vmem:[%s45 + $0xc0] sm:$0xff]
        %v2554 = vld [vmem:[%s45 + $0xc8] sm:$0xff]
        %v2555 = vld [vmem:[%s45 + $0xd0] sm:$0xff]
        %v2556 = vld [vmem:[%s45 + $0xd8] sm:$0xff]
        %v2557 = vld [vmem:[%s45 + $0xe0] sm:$0xff]
        %v2558 = vld [vmem:[%s45 + $0xe8] sm:$0xff]
        %v2559 = vld [vmem:[%s45 + $0xf0] sm:$0xff]
        %v2560 = vld [vmem:[%s45 + $0xf8] sm:$0xff]
        %v2561 = vld [vmem:[%s47] sm:$0xff]
        %v2562 = vld [vmem:[%s47 + $0x8] sm:$0xff]
        %v2563 = vld [vmem:[%s47 + $0x10] sm:$0xff]
        %v2564 = vld [vmem:[%s47 + $0x18] sm:$0xff]
        %v2565 = vld [vmem:[%s47 + $0x20] sm:$0xff]
        %v2566 = vld [vmem:[%s47 + $0x28] sm:$0xff]
        %v2567 = vld [vmem:[%s47 + $0x30] sm:$0xff]
        %v2568 = vld [vmem:[%s47 + $0x38] sm:$0xff]
        %v2569 = vld [vmem:[%s49] sm:$0x1]
        %v2570 = vsel %vm1710, %v2461, 0.0
        %2571 = vadd.xlane.f32.xlu0 %v2570
        %v2572 = vpop.xlane.xlu0 %2571
        %v2573 = vsel %vm1710, %v2462, 0.0
        %2574 = vadd.xlane.f32.xlu0 %v2573
        %v2575 = vpop.xlane.xlu0 %2574
        %v2576 = vmul.f32 %v2572, %v1723
        %v2577 = vmul.f32 %v2575, %v1723
        %v2578 = vsub.f32 %v2461, %v2576
        %v2579 = vsub.f32 %v2462, %v2577
        %v2580 = vmul.f32 %v2578, %v2578
        %v2581 = vmul.f32 %v2579, %v2579
        %v2582 = vsel %vm1710, %v2580, 0.0
        %2583 = vadd.xlane.f32.xlu0 %v2582
        %v2584 = vpop.xlane.xlu0 %2583
        %v2585 = vsel %vm1710, %v2581, 0.0
        %2586 = vadd.xlane.f32.xlu0 %v2585
        %v2587 = vpop.xlane.xlu0 %2586
        %v2588 = vmul.f32 %v2584, %v1723
        %v2589 = vmul.f32 %v2587, %v1723
        %v2590 = vadd.f32 %v2588, 1e-05
        %v2591 = vadd.f32 %v2589, 1e-05
        %v2592 = vrsqrt.pop %v2590
        %v2593 = vmul.f32 %v2592, %v2590
        %v2594 = vmul.f32 %v2593, %v2592
        %v2595 = vmul.f32 0.5, %v2594
        %v2596 = vsub.f32 1.5, %v2595
        %v2597 = vmul.f32 %v2592, %v2596
        %vm2598 = vweird.f32 %v2590
        %vm2599 = vweird.f32 %v2592
        %vm2600 = vmor %vm2598, %vm2599
        %v2601 = vsel %vm2600, %v2592, %v2597
        %v2602 = vrsqrt.pop %v2591
        %v2603 = vmul.f32 %v2602, %v2591
        %v2604 = vmul.f32 %v2603, %v2602
        %v2605 = vmul.f32 0.5, %v2604
        %v2606 = vsub.f32 1.5, %v2605
        %v2607 = vmul.f32 %v2602, %v2606
        %vm2608 = vweird.f32 %v2591
        %vm2609 = vweird.f32 %v2602
        %vm2610 = vmor %vm2608, %vm2609
        %v2611 = vsel %vm2610, %v2602, %v2607
        %v2612 = vmul.f32 %v2578, %v2601
        %v2613 = vmul.f32 %v2579, %v2611
        %v2615 = vperm.slane %v2463, 0
        %v2617 = vmul.f32 %v2612, %v2615
        %v2618 = vmul.f32 %v2613, %v2615
        %v2620 = vperm.slane %v2464, 0
        %v2622 = vadd.f32 %v2617, %v2620
        %v2623 = vadd.f32 %v2618, %v2620
        %v2625 = vsel %vm1710, %v2622, 0
        %v2628 = vsel %vm1710, %v2623, 0
        %2630 = vmatpush.msra.mxu0 0.0
        %2631 = vmatpush.msra.mxu0 0.0
        %2632 = vmatpush.msra.mxu0 0.0
        %2633 = vmatpush.msra.mxu0 0.0
        %2634 = vmatpush.msra.mxu0 0.0
        %2635 = vmatpush.msra.mxu0 0.0
        %2636 = vmatpush.msra.mxu0 0.0
        %2637 = vmatpush.msra.mxu0 0.0
        %2638 = vmatpush.msra.mxu0 %v2472
        %2639 = vmatpush.msra.mxu0 %v2471
        %2640 = vmatpush.msra.mxu0 %v2470
        %2641 = vmatpush.msra.mxu0 %v2469
        %2642 = vmatpush.msra.mxu0 %v2468
        %2643 = vmatpush.msra.mxu0 %v2467
        %2644 = vmatpush.msra.mxu0 %v2466
        %2645 = vmatpush.msra.mxu0 %v2465
        %2646 = vmatmul.f32.gmra.mxu0 %v2625
        %v2647 = vpop.f32.mrf.mxu0
        %v2648 = vadd.f32 0.0, %v2647
        %2649 = vmatmul.f32.gmra.mxu0 %v2628
        %v2650 = vpop.f32.mrf.mxu0
        %v2651 = vadd.f32 0.0, %v2650
        %2652 = vdwg.mxu0
        %2653 = vmatpush.msra.mxu0 0.0
        %2654 = vmatpush.msra.mxu0 0.0
        %2655 = vmatpush.msra.mxu0 0.0
        %2656 = vmatpush.msra.mxu0 0.0
        %2657 = vmatpush.msra.mxu0 0.0
        %2658 = vmatpush.msra.mxu0 0.0
        %2659 = vmatpush.msra.mxu0 0.0
        %2660 = vmatpush.msra.mxu0 0.0
        %2661 = vmatpush.msra.mxu0 %v2480
        %2662 = vmatpush.msra.mxu0 %v2479
        %2663 = vmatpush.msra.mxu0 %v2478
        %2664 = vmatpush.msra.mxu0 %v2477
        %2665 = vmatpush.msra.mxu0 %v2476
        %2666 = vmatpush.msra.mxu0 %v2475
        %2667 = vmatpush.msra.mxu0 %v2474
        %2668 = vmatpush.msra.mxu0 %v2473
        %2669 = vmatmul.f32.gmra.mxu0 %v2625
        %v2670 = vpop.f32.mrf.mxu0
        %v2671 = vadd.f32 0.0, %v2670
        %2672 = vmatmul.f32.gmra.mxu0 %v2628
        %v2673 = vpop.f32.mrf.mxu0
        %v2674 = vadd.f32 0.0, %v2673
        %2675 = vdwg.mxu0
        %2676 = vmatpush.msra.mxu0 0.0
        %2677 = vmatpush.msra.mxu0 0.0
        %2678 = vmatpush.msra.mxu0 0.0
        %2679 = vmatpush.msra.mxu0 0.0
        %2680 = vmatpush.msra.mxu0 0.0
        %2681 = vmatpush.msra.mxu0 0.0
        %2682 = vmatpush.msra.mxu0 0.0
        %2683 = vmatpush.msra.mxu0 0.0
        %2684 = vmatpush.msra.mxu0 %v2488
        %2685 = vmatpush.msra.mxu0 %v2487
        %2686 = vmatpush.msra.mxu0 %v2486
        %2687 = vmatpush.msra.mxu0 %v2485
        %2688 = vmatpush.msra.mxu0 %v2484
        %2689 = vmatpush.msra.mxu0 %v2483
        %2690 = vmatpush.msra.mxu0 %v2482
        %2691 = vmatpush.msra.mxu0 %v2481
        %2692 = vmatmul.f32.gmra.mxu0 %v2625
        %v2693 = vpop.f32.mrf.mxu0
        %v2694 = vadd.f32 0.0, %v2693
        %2695 = vmatmul.f32.gmra.mxu0 %v2628
        %v2696 = vpop.f32.mrf.mxu0
        %v2697 = vadd.f32 0.0, %v2696
        %2698 = vdwg.mxu0
        %2699 = vmatpush.msra.mxu0 0.0
        %2700 = vmatpush.msra.mxu0 0.0
        %2701 = vmatpush.msra.mxu0 0.0
        %2702 = vmatpush.msra.mxu0 0.0
        %2703 = vmatpush.msra.mxu0 0.0
        %2704 = vmatpush.msra.mxu0 0.0
        %2705 = vmatpush.msra.mxu0 0.0
        %2706 = vmatpush.msra.mxu0 0.0
        %2707 = vmatpush.msra.mxu0 %v2496
        %2708 = vmatpush.msra.mxu0 %v2495
        %2709 = vmatpush.msra.mxu0 %v2494
        %2710 = vmatpush.msra.mxu0 %v2493
        %2711 = vmatpush.msra.mxu0 %v2492
        %2712 = vmatpush.msra.mxu0 %v2491
        %2713 = vmatpush.msra.mxu0 %v2490
        %2714 = vmatpush.msra.mxu0 %v2489
        %2715 = vmatmul.f32.gmra.mxu0 %v2625
        %v2716 = vpop.f32.mrf.mxu0
        %v2717 = vadd.f32 0.0, %v2716
        %2718 = vmatmul.f32.gmra.mxu0 %v2628
        %v2719 = vpop.f32.mrf.mxu0
        %v2720 = vadd.f32 0.0, %v2719
        %2721 = vdwg.mxu0
        %v2722 = vmul.f32 %v2648, 0.25
        %v2723 = vmul.f32 %v2651, 0.25
        %v2724 = vmul.f32 %v2671, 0.25
        %v2725 = vmul.f32 %v2674, 0.25
        %v2726 = vmul.f32 %v2694, 0.25
        %v2727 = vmul.f32 %v2697, 0.25
        %v2728 = vmul.f32 %v2717, 0.25
        %v2729 = vmul.f32 %v2720, 0.25
        %2730 = vmatpush.msra.mxu0 0.0
        %2731 = vmatpush.msra.mxu0 0.0
        %2732 = vmatpush.msra.mxu0 0.0
        %2733 = vmatpush.msra.mxu0 0.0
        %2734 = vmatpush.msra.mxu0 0.0
        %2735 = vmatpush.msra.mxu0 0.0
        %2736 = vmatpush.msra.mxu0 0.0
        %2737 = vmatpush.msra.mxu0 0.0
        %2738 = vmatpush.msra.mxu0 %v2504
        %2739 = vmatpush.msra.mxu0 %v2503
        %2740 = vmatpush.msra.mxu0 %v2502
        %2741 = vmatpush.msra.mxu0 %v2501
        %2742 = vmatpush.msra.mxu0 %v2500
        %2743 = vmatpush.msra.mxu0 %v2499
        %2744 = vmatpush.msra.mxu0 %v2498
        %2745 = vmatpush.msra.mxu0 %v2497
        %2746 = vmatmul.f32.gmra.mxu0 %v2625
        %v2747 = vpop.f32.mrf.mxu0
        %v2748 = vadd.f32 0.0, %v2747
        %2749 = vmatmul.f32.gmra.mxu0 %v2628
        %v2750 = vpop.f32.mrf.mxu0
        %v2751 = vadd.f32 0.0, %v2750
        %2752 = vdwg.mxu0
        %2753 = vmatpush.msra.mxu0 0.0
        %2754 = vmatpush.msra.mxu0 0.0
        %2755 = vmatpush.msra.mxu0 0.0
        %2756 = vmatpush.msra.mxu0 0.0
        %2757 = vmatpush.msra.mxu0 0.0
        %2758 = vmatpush.msra.mxu0 0.0
        %2759 = vmatpush.msra.mxu0 0.0
        %2760 = vmatpush.msra.mxu0 0.0
        %2761 = vmatpush.msra.mxu0 %v2512
        %2762 = vmatpush.msra.mxu0 %v2511
        %2763 = vmatpush.msra.mxu0 %v2510
        %2764 = vmatpush.msra.mxu0 %v2509
        %2765 = vmatpush.msra.mxu0 %v2508
        %2766 = vmatpush.msra.mxu0 %v2507
        %2767 = vmatpush.msra.mxu0 %v2506
        %2768 = vmatpush.msra.mxu0 %v2505
        %2769 = vmatmul.f32.gmra.mxu0 %v2625
        %v2770 = vpop.f32.mrf.mxu0
        %v2771 = vadd.f32 0.0, %v2770
        %2772 = vmatmul.f32.gmra.mxu0 %v2628
        %v2773 = vpop.f32.mrf.mxu0
        %v2774 = vadd.f32 0.0, %v2773
        %2775 = vdwg.mxu0
        %2776 = vmatpush.msra.mxu0 0.0
        %2777 = vmatpush.msra.mxu0 0.0
        %2778 = vmatpush.msra.mxu0 0.0
        %2779 = vmatpush.msra.mxu0 0.0
        %2780 = vmatpush.msra.mxu0 0.0
        %2781 = vmatpush.msra.mxu0 0.0
        %2782 = vmatpush.msra.mxu0 0.0
        %2783 = vmatpush.msra.mxu0 0.0
        %2784 = vmatpush.msra.mxu0 %v2520
        %2785 = vmatpush.msra.mxu0 %v2519
        %2786 = vmatpush.msra.mxu0 %v2518
        %2787 = vmatpush.msra.mxu0 %v2517
        %2788 = vmatpush.msra.mxu0 %v2516
        %2789 = vmatpush.msra.mxu0 %v2515
        %2790 = vmatpush.msra.mxu0 %v2514
        %2791 = vmatpush.msra.mxu0 %v2513
        %2792 = vmatmul.f32.gmra.mxu0 %v2625
        %v2793 = vpop.f32.mrf.mxu0
        %v2794 = vadd.f32 0.0, %v2793
        %2795 = vmatmul.f32.gmra.mxu0 %v2628
        %v2796 = vpop.f32.mrf.mxu0
        %v2797 = vadd.f32 0.0, %v2796
        %2798 = vdwg.mxu0
        %2799 = vmatpush.msra.mxu0 0.0
        %2800 = vmatpush.msra.mxu0 0.0
        %2801 = vmatpush.msra.mxu0 0.0
        %2802 = vmatpush.msra.mxu0 0.0
        %2803 = vmatpush.msra.mxu0 0.0
        %2804 = vmatpush.msra.mxu0 0.0
        %2805 = vmatpush.msra.mxu0 0.0
        %2806 = vmatpush.msra.mxu0 0.0
        %2807 = vmatpush.msra.mxu0 %v2528
        %2808 = vmatpush.msra.mxu0 %v2527
        %2809 = vmatpush.msra.mxu0 %v2526
        %2810 = vmatpush.msra.mxu0 %v2525
        %2811 = vmatpush.msra.mxu0 %v2524
        %2812 = vmatpush.msra.mxu0 %v2523
        %2813 = vmatpush.msra.mxu0 %v2522
        %2814 = vmatpush.msra.mxu0 %v2521
        %2815 = vmatmul.f32.gmra.mxu0 %v2625
        %v2816 = vpop.f32.mrf.mxu0
        %v2817 = vadd.f32 0.0, %v2816
        %2818 = vmatmul.f32.gmra.mxu0 %v2628
        %v2819 = vpop.f32.mrf.mxu0
        %v2820 = vadd.f32 0.0, %v2819
        %2821 = vdwg.mxu0
        %2822 = vmatpush.msra.mxu0 0.0
        %2823 = vmatpush.msra.mxu0 0.0
        %2824 = vmatpush.msra.mxu0 0.0
        %2825 = vmatpush.msra.mxu0 0.0
        %2826 = vmatpush.msra.mxu0 0.0
        %2827 = vmatpush.msra.mxu0 0.0
        %2828 = vmatpush.msra.mxu0 0.0
        %2829 = vmatpush.msra.mxu0 0.0
        %2830 = vmatpush.msra.mxu0 %v2536
        %2831 = vmatpush.msra.mxu0 %v2535
        %2832 = vmatpush.msra.mxu0 %v2534
        %2833 = vmatpush.msra.mxu0 %v2533
        %2834 = vmatpush.msra.mxu0 %v2532
        %2835 = vmatpush.msra.mxu0 %v2531
        %2836 = vmatpush.msra.mxu0 %v2530
        %2837 = vmatpush.msra.mxu0 %v2529
        %2838 = vmatmul.f32.gmra.mxu0 %v2625
        %v2839 = vpop.f32.mrf.mxu0
        %v2840 = vadd.f32 0.0, %v2839
        %2841 = vmatmul.f32.gmra.mxu0 %v2628
        %v2842 = vpop.f32.mrf.mxu0
        %v2843 = vadd.f32 0.0, %v2842
        %2844 = vdwg.mxu0
        %2845 = vmatpush.msra.mxu0 0.0
        %2846 = vmatpush.msra.mxu0 0.0
        %2847 = vmatpush.msra.mxu0 0.0
        %2848 = vmatpush.msra.mxu0 0.0
        %2849 = vmatpush.msra.mxu0 0.0
        %2850 = vmatpush.msra.mxu0 0.0
        %2851 = vmatpush.msra.mxu0 0.0
        %2852 = vmatpush.msra.mxu0 0.0
        %2853 = vmatpush.msra.mxu0 %v2544
        %2854 = vmatpush.msra.mxu0 %v2543
        %2855 = vmatpush.msra.mxu0 %v2542
        %2856 = vmatpush.msra.mxu0 %v2541
        %2857 = vmatpush.msra.mxu0 %v2540
        %2858 = vmatpush.msra.mxu0 %v2539
        %2859 = vmatpush.msra.mxu0 %v2538
        %2860 = vmatpush.msra.mxu0 %v2537
        %2861 = vmatmul.f32.gmra.mxu0 %v2625
        %v2862 = vpop.f32.mrf.mxu0
        %v2863 = vadd.f32 0.0, %v2862
        %2864 = vmatmul.f32.gmra.mxu0 %v2628
        %v2865 = vpop.f32.mrf.mxu0
        %v2866 = vadd.f32 0.0, %v2865
        %2867 = vdwg.mxu0
        %2868 = vmatpush.msra.mxu0 0.0
        %2869 = vmatpush.msra.mxu0 0.0
        %2870 = vmatpush.msra.mxu0 0.0
        %2871 = vmatpush.msra.mxu0 0.0
        %2872 = vmatpush.msra.mxu0 0.0
        %2873 = vmatpush.msra.mxu0 0.0
        %2874 = vmatpush.msra.mxu0 0.0
        %2875 = vmatpush.msra.mxu0 0.0
        %2876 = vmatpush.msra.mxu0 %v2552
        %2877 = vmatpush.msra.mxu0 %v2551
        %2878 = vmatpush.msra.mxu0 %v2550
        %2879 = vmatpush.msra.mxu0 %v2549
        %2880 = vmatpush.msra.mxu0 %v2548
        %2881 = vmatpush.msra.mxu0 %v2547
        %2882 = vmatpush.msra.mxu0 %v2546
        %2883 = vmatpush.msra.mxu0 %v2545
        %2884 = vmatmul.f32.gmra.mxu0 %v2625
        %v2885 = vpop.f32.mrf.mxu0
        %v2886 = vadd.f32 0.0, %v2885
        %2887 = vmatmul.f32.gmra.mxu0 %v2628
        %v2888 = vpop.f32.mrf.mxu0
        %v2889 = vadd.f32 0.0, %v2888
        %2890 = vdwg.mxu0
        %2891 = vmatpush.msra.mxu0 0.0
        %2892 = vmatpush.msra.mxu0 0.0
        %2893 = vmatpush.msra.mxu0 0.0
        %2894 = vmatpush.msra.mxu0 0.0
        %2895 = vmatpush.msra.mxu0 0.0
        %2896 = vmatpush.msra.mxu0 0.0
        %2897 = vmatpush.msra.mxu0 0.0
        %2898 = vmatpush.msra.mxu0 0.0
        %2899 = vmatpush.msra.mxu0 %v2560
        %2900 = vmatpush.msra.mxu0 %v2559
        %2901 = vmatpush.msra.mxu0 %v2558
        %2902 = vmatpush.msra.mxu0 %v2557
        %2903 = vmatpush.msra.mxu0 %v2556
        %2904 = vmatpush.msra.mxu0 %v2555
        %2905 = vmatpush.msra.mxu0 %v2554
        %2906 = vmatpush.msra.mxu0 %v2553
        %2907 = vmatmul.f32.gmra.mxu0 %v2625
        %v2908 = vpop.f32.mrf.mxu0
        %v2909 = vadd.f32 0.0, %v2908
        %2910 = vmatmul.f32.gmra.mxu0 %v2628
        %v2911 = vpop.f32.mrf.mxu0
        %v2912 = vadd.f32 0.0, %v2911
        %2913 = vdwg.mxu0
        %v2915 = vsel %vm1884, %v2722, 0
        %v2918 = vsel %vm1884, %v2723, 0
        %v2921 = vsel %vm1884, %v2748, 0
        %v2924 = vsel %vm1884, %v2751, 0
        %2926 = vmatpush.xpose.msra.mxu0 0.0
        %2927 = vmatpush.xpose.msra.mxu0 0.0
        %2928 = vmatpush.xpose.msra.mxu0 0.0
        %2929 = vmatpush.xpose.msra.mxu0 0.0
        %2930 = vmatpush.xpose.msra.mxu0 0.0
        %2931 = vmatpush.xpose.msra.mxu0 0.0
        %2932 = vmatpush.xpose.msra.mxu0 0.0
        %2933 = vmatpush.xpose.msra.mxu0 0.0
        %2934 = vmatpush.xpose.msra.mxu0 0.0
        %2935 = vmatpush.xpose.msra.mxu0 0.0
        %2936 = vmatpush.xpose.msra.mxu0 0.0
        %2937 = vmatpush.xpose.msra.mxu0 0.0
        %2938 = vmatpush.xpose.msra.mxu0 0.0
        %2939 = vmatpush.xpose.msra.mxu0 0.0
        %2940 = vmatpush.xpose.msra.mxu0 %v2924
        %2941 = vmatpush.xpose.msra.mxu0 %v2921
        %2942 = vmatmul.f32.gmra.mxu0 %v2915
        %v2943 = vpop.f32.mrf.mxu0
        %v2944 = vadd.f32 0.0, %v2943
        %2945 = vmatmul.f32.gmra.mxu0 %v2918
        %v2946 = vpop.f32.mrf.mxu0
        %v2947 = vadd.f32 0.0, %v2946
        %2948 = vdwg.mxu0
        %v2950 = vsel %vm1884, %v2724, 0
        %v2953 = vsel %vm1884, %v2725, 0
        %v2956 = vsel %vm1884, %v2771, 0
        %v2959 = vsel %vm1884, %v2774, 0
        %2961 = vmatpush.xpose.msra.mxu0 0.0
        %2962 = vmatpush.xpose.msra.mxu0 0.0
        %2963 = vmatpush.xpose.msra.mxu0 0.0
        %2964 = vmatpush.xpose.msra.mxu0 0.0
        %2965 = vmatpush.xpose.msra.mxu0 0.0
        %2966 = vmatpush.xpose.msra.mxu0 0.0
        %2967 = vmatpush.xpose.msra.mxu0 0.0
        %2968 = vmatpush.xpose.msra.mxu0 0.0
        %2969 = vmatpush.xpose.msra.mxu0 0.0
        %2970 = vmatpush.xpose.msra.mxu0 0.0
        %2971 = vmatpush.xpose.msra.mxu0 0.0
        %2972 = vmatpush.xpose.msra.mxu0 0.0
        %2973 = vmatpush.xpose.msra.mxu0 0.0
        %2974 = vmatpush.xpose.msra.mxu0 0.0
        %2975 = vmatpush.xpose.msra.mxu0 %v2959
        %2976 = vmatpush.xpose.msra.mxu0 %v2956
        %2977 = vmatmul.f32.gmra.mxu0 %v2950
        %v2978 = vpop.f32.mrf.mxu0
        %v2979 = vadd.f32 0.0, %v2978
        %2980 = vmatmul.f32.gmra.mxu0 %v2953
        %v2981 = vpop.f32.mrf.mxu0
        %v2982 = vadd.f32 0.0, %v2981
        %2983 = vdwg.mxu0
        %v2985 = vsel %vm1884, %v2726, 0
        %v2988 = vsel %vm1884, %v2727, 0
        %v2991 = vsel %vm1884, %v2794, 0
        %v2994 = vsel %vm1884, %v2797, 0
        %2996 = vmatpush.xpose.msra.mxu0 0.0
        %2997 = vmatpush.xpose.msra.mxu0 0.0
        %2998 = vmatpush.xpose.msra.mxu0 0.0
        %2999 = vmatpush.xpose.msra.mxu0 0.0
        %3000 = vmatpush.xpose.msra.mxu0 0.0
        %3001 = vmatpush.xpose.msra.mxu0 0.0
        %3002 = vmatpush.xpose.msra.mxu0 0.0
        %3003 = vmatpush.xpose.msra.mxu0 0.0
        %3004 = vmatpush.xpose.msra.mxu0 0.0
        %3005 = vmatpush.xpose.msra.mxu0 0.0
        %3006 = vmatpush.xpose.msra.mxu0 0.0
        %3007 = vmatpush.xpose.msra.mxu0 0.0
        %3008 = vmatpush.xpose.msra.mxu0 0.0
        %3009 = vmatpush.xpose.msra.mxu0 0.0
        %3010 = vmatpush.xpose.msra.mxu0 %v2994
        %3011 = vmatpush.xpose.msra.mxu0 %v2991
        %3012 = vmatmul.f32.gmra.mxu0 %v2985
        %v3013 = vpop.f32.mrf.mxu0
        %v3014 = vadd.f32 0.0, %v3013
        %3015 = vmatmul.f32.gmra.mxu0 %v2988
        %v3016 = vpop.f32.mrf.mxu0
        %v3017 = vadd.f32 0.0, %v3016
        %3018 = vdwg.mxu0
        %v3020 = vsel %vm1884, %v2728, 0
        %v3023 = vsel %vm1884, %v2729, 0
        %v3026 = vsel %vm1884, %v2817, 0
        %v3029 = vsel %vm1884, %v2820, 0
        %3031 = vmatpush.xpose.msra.mxu0 0.0
        %3032 = vmatpush.xpose.msra.mxu0 0.0
        %3033 = vmatpush.xpose.msra.mxu0 0.0
        %3034 = vmatpush.xpose.msra.mxu0 0.0
        %3035 = vmatpush.xpose.msra.mxu0 0.0
        %3036 = vmatpush.xpose.msra.mxu0 0.0
        %3037 = vmatpush.xpose.msra.mxu0 0.0
        %3038 = vmatpush.xpose.msra.mxu0 0.0
        %3039 = vmatpush.xpose.msra.mxu0 0.0
        %3040 = vmatpush.xpose.msra.mxu0 0.0
        %3041 = vmatpush.xpose.msra.mxu0 0.0
        %3042 = vmatpush.xpose.msra.mxu0 0.0
        %3043 = vmatpush.xpose.msra.mxu0 0.0
        %3044 = vmatpush.xpose.msra.mxu0 0.0
        %3045 = vmatpush.xpose.msra.mxu0 %v3029
        %3046 = vmatpush.xpose.msra.mxu0 %v3026
        %3047 = vmatmul.f32.gmra.mxu0 %v3020
        %v3048 = vpop.f32.mrf.mxu0
        %v3049 = vadd.f32 0.0, %v3048
        %3050 = vmatmul.f32.gmra.mxu0 %v3023
        %v3051 = vpop.f32.mrf.mxu0
        %v3052 = vadd.f32 0.0, %v3051
        %3053 = vdwg.mxu0
        %v3054 = vsel %vm1884, %v2944, -inf
        %3055 = vmax.xlane.f32.xlu0 %v3054
        %v3056 = vpop.xlane.xlu0 %3055
        %v3057 = vsel %vm1884, %v2947, -inf
        %3058 = vmax.xlane.f32.xlu0 %v3057
        %v3059 = vpop.xlane.xlu0 %3058
        %v3060 = vsel %vm1884, %v2979, -inf
        %3061 = vmax.xlane.f32.xlu0 %v3060
        %v3062 = vpop.xlane.xlu0 %3061
        %v3063 = vsel %vm1884, %v2982, -inf
        %3064 = vmax.xlane.f32.xlu0 %v3063
        %v3065 = vpop.xlane.xlu0 %3064
        %v3066 = vsel %vm1884, %v3014, -inf
        %3067 = vmax.xlane.f32.xlu0 %v3066
        %v3068 = vpop.xlane.xlu0 %3067
        %v3069 = vsel %vm1884, %v3017, -inf
        %3070 = vmax.xlane.f32.xlu0 %v3069
        %v3071 = vpop.xlane.xlu0 %3070
        %v3072 = vsel %vm1884, %v3049, -inf
        %3073 = vmax.xlane.f32.xlu0 %v3072
        %v3074 = vpop.xlane.xlu0 %3073
        %v3075 = vsel %vm1884, %v3052, -inf
        %3076 = vmax.xlane.f32.xlu0 %v3075
        %v3077 = vpop.xlane.xlu0 %3076
        %v3078 = vsub.f32 %v2944, %v3056
        %v3079 = vsub.f32 %v2947, %v3059
        %v3080 = vsub.f32 %v2979, %v3062
        %v3081 = vsub.f32 %v2982, %v3065
        %v3082 = vsub.f32 %v3014, %v3068
        %v3083 = vsub.f32 %v3017, %v3071
        %v3084 = vsub.f32 %v3049, %v3074
        %v3085 = vsub.f32 %v3052, %v3077
        %v3086 = vmul.f32 %v3078, 1.442695
        %v3087 = vpow.pop %v3086
        %v3088 = vmul.f32 %v3079, 1.442695
        %v3089 = vpow.pop %v3088
        %v3090 = vmul.f32 %v3080, 1.442695
        %v3091 = vpow.pop %v3090
        %v3092 = vmul.f32 %v3081, 1.442695
        %v3093 = vpow.pop %v3092
        %v3094 = vmul.f32 %v3082, 1.442695
        %v3095 = vpow.pop %v3094
        %v3096 = vmul.f32 %v3083, 1.442695
        %v3097 = vpow.pop %v3096
        %v3098 = vmul.f32 %v3084, 1.442695
        %v3099 = vpow.pop %v3098
        %v3100 = vmul.f32 %v3085, 1.442695
        %v3101 = vpow.pop %v3100
        %v3102 = vsel %vm1884, %v3087, 0.0
        %3103 = vadd.xlane.f32.xlu0 %v3102
        %v3104 = vpop.xlane.xlu0 %3103
        %v3105 = vsel %vm1884, %v3089, 0.0
        %3106 = vadd.xlane.f32.xlu0 %v3105
        %v3107 = vpop.xlane.xlu0 %3106
        %v3108 = vsel %vm1884, %v3091, 0.0
        %3109 = vadd.xlane.f32.xlu0 %v3108
        %v3110 = vpop.xlane.xlu0 %3109
        %v3111 = vsel %vm1884, %v3093, 0.0
        %3112 = vadd.xlane.f32.xlu0 %v3111
        %v3113 = vpop.xlane.xlu0 %3112
        %v3114 = vsel %vm1884, %v3095, 0.0
        %3115 = vadd.xlane.f32.xlu0 %v3114
        %v3116 = vpop.xlane.xlu0 %3115
        %v3117 = vsel %vm1884, %v3097, 0.0
        %3118 = vadd.xlane.f32.xlu0 %v3117
        %v3119 = vpop.xlane.xlu0 %3118
        %v3120 = vsel %vm1884, %v3099, 0.0
        %3121 = vadd.xlane.f32.xlu0 %v3120
        %v3122 = vpop.xlane.xlu0 %3121
        %v3123 = vsel %vm1884, %v3101, 0.0
        %3124 = vadd.xlane.f32.xlu0 %v3123
        %v3125 = vpop.xlane.xlu0 %3124
        %v3126 = vrcp.pop %v3104
        %v3127 = vrcp.pop %v3107
        %v3128 = vrcp.pop %v3110
        %v3129 = vrcp.pop %v3113
        %v3130 = vrcp.pop %v3116
        %v3131 = vrcp.pop %v3119
        %v3132 = vrcp.pop %v3122
        %v3133 = vrcp.pop %v3125
        %v3134 = vmul.f32 %v3087, %v3126
        %v3135 = vmul.f32 %v3089, %v3127
        %v3136 = vmul.f32 %v3091, %v3128
        %v3137 = vmul.f32 %v3093, %v3129
        %v3138 = vmul.f32 %v3095, %v3130
        %v3139 = vmul.f32 %v3097, %v3131
        %v3140 = vmul.f32 %v3099, %v3132
        %v3141 = vmul.f32 %v3101, %v3133
        %v3143 = vsel %vm1884, %v3134, 0
        %v3146 = vsel %vm1884, %v3135, 0
        %3148 = vmatpush.msra.mxu0 0.0
        %3149 = vmatpush.msra.mxu0 0.0
        %3150 = vmatpush.msra.mxu0 0.0
        %3151 = vmatpush.msra.mxu0 0.0
        %3152 = vmatpush.msra.mxu0 0.0
        %3153 = vmatpush.msra.mxu0 0.0
        %3154 = vmatpush.msra.mxu0 0.0
        %3155 = vmatpush.msra.mxu0 0.0
        %3156 = vmatpush.msra.mxu0 0.0
        %3157 = vmatpush.msra.mxu0 0.0
        %3158 = vmatpush.msra.mxu0 0.0
        %3159 = vmatpush.msra.mxu0 0.0
        %3160 = vmatpush.msra.mxu0 0.0
        %3161 = vmatpush.msra.mxu0 0.0
        %3162 = vmatpush.msra.mxu0 %v2843
        %3163 = vmatpush.msra.mxu0 %v2840
        %3164 = vmatmul.f32.gmra.mxu0 %v3143
        %v3165 = vpop.f32.mrf.mxu0
        %v3166 = vadd.f32 0.0, %v3165
        %3167 = vmatmul.f32.gmra.mxu0 %v3146
        %v3168 = vpop.f32.mrf.mxu0
        %v3169 = vadd.f32 0.0, %v3168
        %3170 = vdwg.mxu0
        %v3172 = vsel %vm1884, %v3136, 0
        %v3175 = vsel %vm1884, %v3137, 0
        %3177 = vmatpush.msra.mxu0 0.0
        %3178 = vmatpush.msra.mxu0 0.0
        %3179 = vmatpush.msra.mxu0 0.0
        %3180 = vmatpush.msra.mxu0 0.0
        %3181 = vmatpush.msra.mxu0 0.0
        %3182 = vmatpush.msra.mxu0 0.0
        %3183 = vmatpush.msra.mxu0 0.0
        %3184 = vmatpush.msra.mxu0 0.0
        %3185 = vmatpush.msra.mxu0 0.0
        %3186 = vmatpush.msra.mxu0 0.0
        %3187 = vmatpush.msra.mxu0 0.0
        %3188 = vmatpush.msra.mxu0 0.0
        %3189 = vmatpush.msra.mxu0 0.0
        %3190 = vmatpush.msra.mxu0 0.0
        %3191 = vmatpush.msra.mxu0 %v2866
        %3192 = vmatpush.msra.mxu0 %v2863
        %3193 = vmatmul.f32.gmra.mxu0 %v3172
        %v3194 = vpop.f32.mrf.mxu0
        %v3195 = vadd.f32 0.0, %v3194
        %3196 = vmatmul.f32.gmra.mxu0 %v3175
        %v3197 = vpop.f32.mrf.mxu0
        %v3198 = vadd.f32 0.0, %v3197
        %3199 = vdwg.mxu0
        %v3201 = vsel %vm1884, %v3138, 0
        %v3204 = vsel %vm1884, %v3139, 0
        %3206 = vmatpush.msra.mxu0 0.0
        %3207 = vmatpush.msra.mxu0 0.0
        %3208 = vmatpush.msra.mxu0 0.0
        %3209 = vmatpush.msra.mxu0 0.0
        %3210 = vmatpush.msra.mxu0 0.0
        %3211 = vmatpush.msra.mxu0 0.0
        %3212 = vmatpush.msra.mxu0 0.0
        %3213 = vmatpush.msra.mxu0 0.0
        %3214 = vmatpush.msra.mxu0 0.0
        %3215 = vmatpush.msra.mxu0 0.0
        %3216 = vmatpush.msra.mxu0 0.0
        %3217 = vmatpush.msra.mxu0 0.0
        %3218 = vmatpush.msra.mxu0 0.0
        %3219 = vmatpush.msra.mxu0 0.0
        %3220 = vmatpush.msra.mxu0 %v2889
        %3221 = vmatpush.msra.mxu0 %v2886
        %3222 = vmatmul.f32.gmra.mxu0 %v3201
        %v3223 = vpop.f32.mrf.mxu0
        %v3224 = vadd.f32 0.0, %v3223
        %3225 = vmatmul.f32.gmra.mxu0 %v3204
        %v3226 = vpop.f32.mrf.mxu0
        %v3227 = vadd.f32 0.0, %v3226
        %3228 = vdwg.mxu0
        %v3230 = vsel %vm1884, %v3140, 0
        %v3233 = vsel %vm1884, %v3141, 0
        %3235 = vmatpush.msra.mxu0 0.0
        %3236 = vmatpush.msra.mxu0 0.0
        %3237 = vmatpush.msra.mxu0 0.0
        %3238 = vmatpush.msra.mxu0 0.0
        %3239 = vmatpush.msra.mxu0 0.0
        %3240 = vmatpush.msra.mxu0 0.0
        %3241 = vmatpush.msra.mxu0 0.0
        %3242 = vmatpush.msra.mxu0 0.0
        %3243 = vmatpush.msra.mxu0 0.0
        %3244 = vmatpush.msra.mxu0 0.0
        %3245 = vmatpush.msra.mxu0 0.0
        %3246 = vmatpush.msra.mxu0 0.0
        %3247 = vmatpush.msra.mxu0 0.0
        %3248 = vmatpush.msra.mxu0 0.0
        %3249 = vmatpush.msra.mxu0 %v2912
        %3250 = vmatpush.msra.mxu0 %v2909
        %3251 = vmatmul.f32.gmra.mxu0 %v3230
        %v3252 = vpop.f32.mrf.mxu0
        %v3253 = vadd.f32 0.0, %v3252
        %3254 = vmatmul.f32.gmra.mxu0 %v3233
        %v3255 = vpop.f32.mrf.mxu0
        %v3256 = vadd.f32 0.0, %v3255
        %3257 = vdwg.mxu0
        %v3259 = vsel %vm1884, %v3166, 0
        %v3262 = vsel %vm1884, %v3169, 0
        %3264 = vmatpush.msra.mxu0 0.0
        %3265 = vmatpush.msra.mxu0 0.0
        %3266 = vmatpush.msra.mxu0 0.0
        %3267 = vmatpush.msra.mxu0 0.0
        %3268 = vmatpush.msra.mxu0 0.0
        %3269 = vmatpush.msra.mxu0 0.0
        %3270 = vmatpush.msra.mxu0 0.0
        %3271 = vmatpush.msra.mxu0 0.0
        %3272 = vmatpush.msra.mxu0 0.0
        %3273 = vmatpush.msra.mxu0 0.0
        %3274 = vmatpush.msra.mxu0 0.0
        %3275 = vmatpush.msra.mxu0 0.0
        %3276 = vmatpush.msra.mxu0 0.0
        %3277 = vmatpush.msra.mxu0 0.0
        %3278 = vmatpush.msra.mxu0 %v2562
        %3279 = vmatpush.msra.mxu0 %v2561
        %3280 = vmatmul.f32.gmra.mxu0 %v3259
        %v3281 = vpop.f32.mrf.mxu0
        %v3282 = vadd.f32 0.0, %v3281
        %3283 = vmatmul.f32.gmra.mxu0 %v3262
        %v3284 = vpop.f32.mrf.mxu0
        %v3285 = vadd.f32 0.0, %v3284
        %3286 = vdwg.mxu0
        %v3288 = vsel %vm1884, %v3195, 0
        %v3291 = vsel %vm1884, %v3198, 0
        %3293 = vmatpush.msra.mxu0 0.0
        %3294 = vmatpush.msra.mxu0 0.0
        %3295 = vmatpush.msra.mxu0 0.0
        %3296 = vmatpush.msra.mxu0 0.0
        %3297 = vmatpush.msra.mxu0 0.0
        %3298 = vmatpush.msra.mxu0 0.0
        %3299 = vmatpush.msra.mxu0 0.0
        %3300 = vmatpush.msra.mxu0 0.0
        %3301 = vmatpush.msra.mxu0 0.0
        %3302 = vmatpush.msra.mxu0 0.0
        %3303 = vmatpush.msra.mxu0 0.0
        %3304 = vmatpush.msra.mxu0 0.0
        %3305 = vmatpush.msra.mxu0 0.0
        %3306 = vmatpush.msra.mxu0 0.0
        %3307 = vmatpush.msra.mxu0 %v2564
        %3308 = vmatpush.msra.mxu0 %v2563
        %3309 = vmatmul.f32.gmra.mxu0 %v3288
        %v3310 = vpop.f32.mrf.mxu0
        %v3311 = vadd.f32 0.0, %v3310
        %3312 = vmatmul.f32.gmra.mxu0 %v3291
        %v3313 = vpop.f32.mrf.mxu0
        %v3314 = vadd.f32 0.0, %v3313
        %3315 = vdwg.mxu0
        %v3317 = vsel %vm1884, %v3224, 0
        %v3320 = vsel %vm1884, %v3227, 0
        %3322 = vmatpush.msra.mxu0 0.0
        %3323 = vmatpush.msra.mxu0 0.0
        %3324 = vmatpush.msra.mxu0 0.0
        %3325 = vmatpush.msra.mxu0 0.0
        %3326 = vmatpush.msra.mxu0 0.0
        %3327 = vmatpush.msra.mxu0 0.0
        %3328 = vmatpush.msra.mxu0 0.0
        %3329 = vmatpush.msra.mxu0 0.0
        %3330 = vmatpush.msra.mxu0 0.0
        %3331 = vmatpush.msra.mxu0 0.0
        %3332 = vmatpush.msra.mxu0 0.0
        %3333 = vmatpush.msra.mxu0 0.0
        %3334 = vmatpush.msra.mxu0 0.0
        %3335 = vmatpush.msra.mxu0 0.0
        %3336 = vmatpush.msra.mxu0 %v2566
        %3337 = vmatpush.msra.mxu0 %v2565
        %3338 = vmatmul.f32.gmra.mxu0 %v3317
        %v3339 = vpop.f32.mrf.mxu0
        %v3340 = vadd.f32 0.0, %v3339
        %3341 = vmatmul.f32.gmra.mxu0 %v3320
        %v3342 = vpop.f32.mrf.mxu0
        %v3343 = vadd.f32 0.0, %v3342
        %3344 = vdwg.mxu0
        %v3346 = vsel %vm1884, %v3253, 0
        %v3349 = vsel %vm1884, %v3256, 0
        %3351 = vmatpush.msra.mxu0 0.0
        %3352 = vmatpush.msra.mxu0 0.0
        %3353 = vmatpush.msra.mxu0 0.0
        %3354 = vmatpush.msra.mxu0 0.0
        %3355 = vmatpush.msra.mxu0 0.0
        %3356 = vmatpush.msra.mxu0 0.0
        %3357 = vmatpush.msra.mxu0 0.0
        %3358 = vmatpush.msra.mxu0 0.0
        %3359 = vmatpush.msra.mxu0 0.0
        %3360 = vmatpush.msra.mxu0 0.0
        %3361 = vmatpush.msra.mxu0 0.0
        %3362 = vmatpush.msra.mxu0 0.0
        %3363 = vmatpush.msra.mxu0 0.0
        %3364 = vmatpush.msra.mxu0 0.0
        %3365 = vmatpush.msra.mxu0 %v2568
        %3366 = vmatpush.msra.mxu0 %v2567
        %3367 = vmatmul.f32.gmra.mxu0 %v3346
        %v3368 = vpop.f32.mrf.mxu0
        %v3369 = vadd.f32 0.0, %v3368
        %3370 = vmatmul.f32.gmra.mxu0 %v3349
        %v3371 = vpop.f32.mrf.mxu0
        %v3372 = vadd.f32 0.0, %v3371
        %3373 = vdwg.mxu0
        %v3374 = vsel %vm1710, %v3282, 0.0
        %v3375 = vsel %vm1710, %v3311, 0.0
        %v3376 = vadd.f32 %v3374, %v3375
        %v3377 = vsel %vm1710, %v3340, 0.0
        %v3378 = vadd.f32 %v3376, %v3377
        %v3379 = vsel %vm1710, %v3369, 0.0
        %v3380 = vadd.f32 %v3378, %v3379
        %v3381 = vsel %vm1710, %v3285, 0.0
        %v3382 = vsel %vm1710, %v3314, 0.0
        %v3383 = vadd.f32 %v3381, %v3382
        %v3384 = vsel %vm1710, %v3343, 0.0
        %v3385 = vadd.f32 %v3383, %v3384
        %v3386 = vsel %vm1710, %v3372, 0.0
        %v3387 = vadd.f32 %v3385, %v3386
        %v3389 = vperm.slane %v2569, 0
        %v3391 = vadd.f32 %v3380, %v3389
        %v3392 = vadd.f32 %v3387, %v3389
        %v3393 = vadd.f32 %v3391, %v2461
        %v3394 = vadd.f32 %v3392, %v2462
        %v3395 = vld [vmem:[%s51] sm:$0x1]
        %v3396 = vld [vmem:[%s53] sm:$0x1]
        %v3397 = vld [vmem:[%s55] sm:$0xff]
        %v3398 = vld [vmem:[%s55 + $0x8] sm:$0xff]
        %v3399 = vld [vmem:[%s55 + $0x10] sm:$0xff]
        %v3400 = vld [vmem:[%s55 + $0x18] sm:$0xff]
        %v3401 = vld [vmem:[%s55 + $0x20] sm:$0xff]
        %v3402 = vld [vmem:[%s55 + $0x28] sm:$0xff]
        %v3403 = vld [vmem:[%s55 + $0x30] sm:$0xff]
        %v3404 = vld [vmem:[%s55 + $0x38] sm:$0xff]
        %v3405 = vld [vmem:[%s55 + $0x40] sm:$0xff]
        %v3406 = vld [vmem:[%s55 + $0x48] sm:$0xff]
        %v3407 = vld [vmem:[%s55 + $0x50] sm:$0xff]
        %v3408 = vld [vmem:[%s55 + $0x58] sm:$0xff]
        %v3409 = vld [vmem:[%s55 + $0x60] sm:$0xff]
        %v3410 = vld [vmem:[%s55 + $0x68] sm:$0xff]
        %v3411 = vld [vmem:[%s55 + $0x70] sm:$0xff]
        %v3412 = vld [vmem:[%s55 + $0x78] sm:$0xff]
        %v3413 = vld [vmem:[%s55 + $0x80] sm:$0xff]
        %v3414 = vld [vmem:[%s55 + $0x88] sm:$0xff]
        %v3415 = vld [vmem:[%s55 + $0x90] sm:$0xff]
        %v3416 = vld [vmem:[%s55 + $0x98] sm:$0xff]
        %v3417 = vld [vmem:[%s55 + $0xa0] sm:$0xff]
        %v3418 = vld [vmem:[%s55 + $0xa8] sm:$0xff]
        %v3419 = vld [vmem:[%s55 + $0xb0] sm:$0xff]
        %v3420 = vld [vmem:[%s55 + $0xb8] sm:$0xff]
        %v3421 = vld [vmem:[%s55 + $0xc0] sm:$0xff]
        %v3422 = vld [vmem:[%s55 + $0xc8] sm:$0xff]
        %v3423 = vld [vmem:[%s55 + $0xd0] sm:$0xff]
        %v3424 = vld [vmem:[%s55 + $0xd8] sm:$0xff]
        %v3425 = vld [vmem:[%s55 + $0xe0] sm:$0xff]
        %v3426 = vld [vmem:[%s55 + $0xe8] sm:$0xff]
        %v3427 = vld [vmem:[%s55 + $0xf0] sm:$0xff]
        %v3428 = vld [vmem:[%s55 + $0xf8] sm:$0xff]
        %v3429 = vld [vmem:[%s57] sm:$0xf]
        %v3430 = vld [vmem:[%s59] sm:$0xff]
        %v3431 = vld [vmem:[%s59 + $0x8] sm:$0xff]
        %v3432 = vld [vmem:[%s59 + $0x10] sm:$0xff]
        %v3433 = vld [vmem:[%s59 + $0x18] sm:$0xff]
        %v3434 = vld [vmem:[%s59 + $0x20] sm:$0xff]
        %v3435 = vld [vmem:[%s59 + $0x28] sm:$0xff]
        %v3436 = vld [vmem:[%s59 + $0x30] sm:$0xff]
        %v3437 = vld [vmem:[%s59 + $0x38] sm:$0xff]
        %v3438 = vld [vmem:[%s59 + $0x40] sm:$0xff]
        %v3439 = vld [vmem:[%s59 + $0x48] sm:$0xff]
        %v3440 = vld [vmem:[%s59 + $0x50] sm:$0xff]
        %v3441 = vld [vmem:[%s59 + $0x58] sm:$0xff]
        %v3442 = vld [vmem:[%s59 + $0x60] sm:$0xff]
        %v3443 = vld [vmem:[%s59 + $0x68] sm:$0xff]
        %v3444 = vld [vmem:[%s59 + $0x70] sm:$0xff]
        %v3445 = vld [vmem:[%s59 + $0x78] sm:$0xff]
        %v3446 = vld [vmem:[%s59 + $0x80] sm:$0xff]
        %v3447 = vld [vmem:[%s59 + $0x88] sm:$0xff]
        %v3448 = vld [vmem:[%s59 + $0x90] sm:$0xff]
        %v3449 = vld [vmem:[%s59 + $0x98] sm:$0xff]
        %v3450 = vld [vmem:[%s59 + $0xa0] sm:$0xff]
        %v3451 = vld [vmem:[%s59 + $0xa8] sm:$0xff]
        %v3452 = vld [vmem:[%s59 + $0xb0] sm:$0xff]
        %v3453 = vld [vmem:[%s59 + $0xb8] sm:$0xff]
        %v3454 = vld [vmem:[%s59 + $0xc0] sm:$0xff]
        %v3455 = vld [vmem:[%s59 + $0xc8] sm:$0xff]
        %v3456 = vld [vmem:[%s59 + $0xd0] sm:$0xff]
        %v3457 = vld [vmem:[%s59 + $0xd8] sm:$0xff]
        %v3458 = vld [vmem:[%s59 + $0xe0] sm:$0xff]
        %v3459 = vld [vmem:[%s59 + $0xe8] sm:$0xff]
        %v3460 = vld [vmem:[%s59 + $0xf0] sm:$0xff]
        %v3461 = vld [vmem:[%s59 + $0xf8] sm:$0xff]
        %v3462 = vld [vmem:[%s61] sm:$0x1]
        %v3463 = vsel %vm1710, %v3393, 0.0
        %3464 = vadd.xlane.f32.xlu0 %v3463
        %v3465 = vpop.xlane.xlu0 %3464
        %v3466 = vsel %vm1710, %v3394, 0.0
        %3467 = vadd.xlane.f32.xlu0 %v3466
        %v3468 = vpop.xlane.xlu0 %3467
        %v3469 = vmul.f32 %v3465, %v1723
        %v3470 = vmul.f32 %v3468, %v1723
        %v3471 = vsub.f32 %v3393, %v3469
        %v3472 = vsub.f32 %v3394, %v3470
        %v3473 = vmul.f32 %v3471, %v3471
        %v3474 = vmul.f32 %v3472, %v3472
        %v3475 = vsel %vm1710, %v3473, 0.0
        %3476 = vadd.xlane.f32.xlu0 %v3475
        %v3477 = vpop.xlane.xlu0 %3476
        %v3478 = vsel %vm1710, %v3474, 0.0
        %3479 = vadd.xlane.f32.xlu0 %v3478
        %v3480 = vpop.xlane.xlu0 %3479
        %v3481 = vmul.f32 %v3477, %v1723
        %v3482 = vmul.f32 %v3480, %v1723
        %v3483 = vadd.f32 %v3481, 1e-05
        %v3484 = vadd.f32 %v3482, 1e-05
        %v3485 = vrsqrt.pop %v3483
        %v3486 = vmul.f32 %v3485, %v3483
        %v3487 = vmul.f32 %v3486, %v3485
        %v3488 = vmul.f32 0.5, %v3487
        %v3489 = vsub.f32 1.5, %v3488
        %v3490 = vmul.f32 %v3485, %v3489
        %vm3491 = vweird.f32 %v3483
        %vm3492 = vweird.f32 %v3485
        %vm3493 = vmor %vm3491, %vm3492
        %v3494 = vsel %vm3493, %v3485, %v3490
        %v3495 = vrsqrt.pop %v3484
        %v3496 = vmul.f32 %v3495, %v3484
        %v3497 = vmul.f32 %v3496, %v3495
        %v3498 = vmul.f32 0.5, %v3497
        %v3499 = vsub.f32 1.5, %v3498
        %v3500 = vmul.f32 %v3495, %v3499
        %vm3501 = vweird.f32 %v3484
        %vm3502 = vweird.f32 %v3495
        %vm3503 = vmor %vm3501, %vm3502
        %v3504 = vsel %vm3503, %v3495, %v3500
        %v3505 = vmul.f32 %v3471, %v3494
        %v3506 = vmul.f32 %v3472, %v3504
        %v3508 = vperm.slane %v3395, 0
        %v3510 = vmul.f32 %v3505, %v3508
        %v3511 = vmul.f32 %v3506, %v3508
        %v3513 = vperm.slane %v3396, 0
        %v3515 = vadd.f32 %v3510, %v3513
        %v3516 = vadd.f32 %v3511, %v3513
        %v3518 = vperm.slane %v3429, 0
        %v3519 = vperm.slane %v3429, 1
        %v3520 = vperm.slane %v3429, 2
        %v3521 = vperm.slane %v3429, 3
        %v3527 = vsel %vm1710, %v3515, 0
        %v3530 = vsel %vm1710, %v3516, 0
        %3532 = vmatpush.msra.mxu0 0.0
        %3533 = vmatpush.msra.mxu0 0.0
        %3534 = vmatpush.msra.mxu0 0.0
        %3535 = vmatpush.msra.mxu0 0.0
        %3536 = vmatpush.msra.mxu0 0.0
        %3537 = vmatpush.msra.mxu0 0.0
        %3538 = vmatpush.msra.mxu0 0.0
        %3539 = vmatpush.msra.mxu0 0.0
        %3540 = vmatpush.msra.mxu0 %v3425
        %3541 = vmatpush.msra.mxu0 %v3421
        %3542 = vmatpush.msra.mxu0 %v3417
        %3543 = vmatpush.msra.mxu0 %v3413
        %3544 = vmatpush.msra.mxu0 %v3409
        %3545 = vmatpush.msra.mxu0 %v3405
        %3546 = vmatpush.msra.mxu0 %v3401
        %3547 = vmatpush.msra.mxu0 %v3397
        %3548 = vmatmul.f32.gmra.mxu0 %v3527
        %v3549 = vpop.f32.mrf.mxu0
        %v3550 = vadd.f32 %v3518, %v3549
        %3551 = vmatmul.f32.gmra.mxu0 %v3530
        %v3552 = vpop.f32.mrf.mxu0
        %v3553 = vadd.f32 %v3518, %v3552
        %3554 = vdwg.mxu0
        %3555 = vmatpush.msra.mxu0 0.0
        %3556 = vmatpush.msra.mxu0 0.0
        %3557 = vmatpush.msra.mxu0 0.0
        %3558 = vmatpush.msra.mxu0 0.0
        %3559 = vmatpush.msra.mxu0 0.0
        %3560 = vmatpush.msra.mxu0 0.0
        %3561 = vmatpush.msra.mxu0 0.0
        %3562 = vmatpush.msra.mxu0 0.0
        %3563 = vmatpush.msra.mxu0 %v3426
        %3564 = vmatpush.msra.mxu0 %v3422
        %3565 = vmatpush.msra.mxu0 %v3418
        %3566 = vmatpush.msra.mxu0 %v3414
        %3567 = vmatpush.msra.mxu0 %v3410
        %3568 = vmatpush.msra.mxu0 %v3406
        %3569 = vmatpush.msra.mxu0 %v3402
        %3570 = vmatpush.msra.mxu0 %v3398
        %3571 = vmatmul.f32.gmra.mxu0 %v3527
        %v3572 = vpop.f32.mrf.mxu0
        %v3573 = vadd.f32 %v3519, %v3572
        %3574 = vmatmul.f32.gmra.mxu0 %v3530
        %v3575 = vpop.f32.mrf.mxu0
        %v3576 = vadd.f32 %v3519, %v3575
        %3577 = vdwg.mxu0
        %3578 = vmatpush.msra.mxu0 0.0
        %3579 = vmatpush.msra.mxu0 0.0
        %3580 = vmatpush.msra.mxu0 0.0
        %3581 = vmatpush.msra.mxu0 0.0
        %3582 = vmatpush.msra.mxu0 0.0
        %3583 = vmatpush.msra.mxu0 0.0
        %3584 = vmatpush.msra.mxu0 0.0
        %3585 = vmatpush.msra.mxu0 0.0
        %3586 = vmatpush.msra.mxu0 %v3427
        %3587 = vmatpush.msra.mxu0 %v3423
        %3588 = vmatpush.msra.mxu0 %v3419
        %3589 = vmatpush.msra.mxu0 %v3415
        %3590 = vmatpush.msra.mxu0 %v3411
        %3591 = vmatpush.msra.mxu0 %v3407
        %3592 = vmatpush.msra.mxu0 %v3403
        %3593 = vmatpush.msra.mxu0 %v3399
        %3594 = vmatmul.f32.gmra.mxu0 %v3527
        %v3595 = vpop.f32.mrf.mxu0
        %v3596 = vadd.f32 %v3520, %v3595
        %3597 = vmatmul.f32.gmra.mxu0 %v3530
        %v3598 = vpop.f32.mrf.mxu0
        %v3599 = vadd.f32 %v3520, %v3598
        %3600 = vdwg.mxu0
        %3601 = vmatpush.msra.mxu0 0.0
        %3602 = vmatpush.msra.mxu0 0.0
        %3603 = vmatpush.msra.mxu0 0.0
        %3604 = vmatpush.msra.mxu0 0.0
        %3605 = vmatpush.msra.mxu0 0.0
        %3606 = vmatpush.msra.mxu0 0.0
        %3607 = vmatpush.msra.mxu0 0.0
        %3608 = vmatpush.msra.mxu0 0.0
        %3609 = vmatpush.msra.mxu0 %v3428
        %3610 = vmatpush.msra.mxu0 %v3424
        %3611 = vmatpush.msra.mxu0 %v3420
        %3612 = vmatpush.msra.mxu0 %v3416
        %3613 = vmatpush.msra.mxu0 %v3412
        %3614 = vmatpush.msra.mxu0 %v3408
        %3615 = vmatpush.msra.mxu0 %v3404
        %3616 = vmatpush.msra.mxu0 %v3400
        %3617 = vmatmul.f32.gmra.mxu0 %v3527
        %v3618 = vpop.f32.mrf.mxu0
        %v3619 = vadd.f32 %v3521, %v3618
        %3620 = vmatmul.f32.gmra.mxu0 %v3530
        %v3621 = vpop.f32.mrf.mxu0
        %v3622 = vadd.f32 %v3521, %v3621
        %3623 = vdwg.mxu0
        %v3624 = vmul.f32 %v3596, 0.5
        %v3625 = vmul.f32 %v3619, 0.5
        %v3626 = vmul.f32 %v3599, 0.5
        %v3627 = vmul.f32 %v3622, 0.5
        %v3628 = vmul.f32 %v3596, 0.70710677
        %v3629 = vmul.f32 %v3619, 0.70710677
        %v3630 = vmul.f32 %v3599, 0.70710677
        %v3631 = vmul.f32 %v3622, 0.70710677
        %v3632 = vmul.f32 %v3628, %v3628
        %v3633 = vmin.f32 16.0, %v3632
        %v3634 = vmul.f32 %v3633, 2.1237322e-06
        %v3635 = vadd.f32 %v3634, 0.00028619796
        %v3636 = vmul.f32 %v3633, %v3635
        %v3637 = vadd.f32 %v3636, 0.0036580483
        %v3638 = vmul.f32 %v3633, %v3637
        %v3639 = vadd.f32 %v3638, 0.05243302
        %v3640 = vmul.f32 %v3633, %v3639
        %v3641 = vadd.f32 %v3640, 0.18741608
        %v3642 = vmul.f32 %v3633, %v3641
        %v3643 = vadd.f32 %v3642, 1.1283791
        %v3644 = vmul.f32 %v3628, %v3643
        %v3645 = vmul.f32 %v3633, 3.8918573e-05
        %v3646 = vadd.f32 %v3645, 0.001143296
        %v3647 = vmul.f32 %v3633, %v3646
        %v3648 = vadd.f32 %v3647, 0.014752088
        %v3649 = vmul.f32 %v3633, %v3648
        %v3650 = vadd.f32 %v3649, 0.112945676
        %v3651 = vmul.f32 %v3633, %v3650
        %v3652 = vadd.f32 %v3651, 0.4994258
        %v3653 = vmul.f32 %v3633, %v3652
        %v3654 = vadd.f32 %v3653, 1.0
        %v3655 = vrcp.pop %v3654
        %v3656 = vmul.f32 %v3654, %v3655
        %v3657 = vsub.f32 1.0, %v3656
        %v3658 = vmul.f32 %v3655, %v3657
        %v3659 = vadd.f32 %v3655, %v3658
        %vm3660 = vweird.f32 %v3654
        %vm3661 = vweird.f32 %v3655
        %vm3662 = vmor %vm3660, %vm3661
        %v3663 = vsel %vm3662, %v3655, %v3659
        %v3664 = vand.u32 2147483647, %v3654
        %vm3665 = vcmp.eq.f32.partialorder %v3664, 8.507059e+37
        %v3666 = vand.u32 %v3654, 2147483648
        %v3667 = vor.u32 1.1754944e-38, %v3666
        %v3668 = vsel %vm3665, %v3667, %v3663
        %v3669 = vmul.f32 %v3644, %v3668
        %v3670 = vmin.f32 %v3669, 1.0
        %v3671 = vmax.f32 %v3670, -1.0
        %v3672 = vmul.f32 %v3629, %v3629
        %v3673 = vmin.f32 16.0, %v3672
        %v3674 = vmul.f32 %v3673, 2.1237322e-06
        %v3675 = vadd.f32 %v3674, 0.00028619796
        %v3676 = vmul.f32 %v3673, %v3675
        %v3677 = vadd.f32 %v3676, 0.0036580483
        %v3678 = vmul.f32 %v3673, %v3677
        %v3679 = vadd.f32 %v3678, 0.05243302
        %v3680 = vmul.f32 %v3673, %v3679
        %v3681 = vadd.f32 %v3680, 0.18741608
        %v3682 = vmul.f32 %v3673, %v3681
        %v3683 = vadd.f32 %v3682, 1.1283791
        %v3684 = vmul.f32 %v3629, %v3683
        %v3685 = vmul.f32 %v3673, 3.8918573e-05
        %v3686 = vadd.f32 %v3685, 0.001143296
        %v3687 = vmul.f32 %v3673, %v3686
        %v3688 = vadd.f32 %v3687, 0.014752088
        %v3689 = vmul.f32 %v3673, %v3688
        %v3690 = vadd.f32 %v3689, 0.112945676
        %v3691 = vmul.f32 %v3673, %v3690
        %v3692 = vadd.f32 %v3691, 0.4994258
        %v3693 = vmul.f32 %v3673, %v3692
        %v3694 = vadd.f32 %v3693, 1.0
        %v3695 = vrcp.pop %v3694
        %v3696 = vmul.f32 %v3694, %v3695
        %v3697 = vsub.f32 1.0, %v3696
        %v3698 = vmul.f32 %v3695, %v3697
        %v3699 = vadd.f32 %v3695, %v3698
        %vm3700 = vweird.f32 %v3694
        %vm3701 = vweird.f32 %v3695
        %vm3702 = vmor %vm3700, %vm3701
        %v3703 = vsel %vm3702, %v3695, %v3699
        %v3704 = vand.u32 2147483647, %v3694
        %vm3705 = vcmp.eq.f32.partialorder %v3704, 8.507059e+37
        %v3706 = vand.u32 %v3694, 2147483648
        %v3707 = vor.u32 1.1754944e-38, %v3706
        %v3708 = vsel %vm3705, %v3707, %v3703
        %v3709 = vmul.f32 %v3684, %v3708
        %v3710 = vmin.f32 %v3709, 1.0
        %v3711 = vmax.f32 %v3710, -1.0
        %v3712 = vmul.f32 %v3630, %v3630
        %v3713 = vmin.f32 16.0, %v3712
        %v3714 = vmul.f32 %v3713, 2.1237322e-06
        %v3715 = vadd.f32 %v3714, 0.00028619796
        %v3716 = vmul.f32 %v3713, %v3715
        %v3717 = vadd.f32 %v3716, 0.0036580483
        %v3718 = vmul.f32 %v3713, %v3717
        %v3719 = vadd.f32 %v3718, 0.05243302
        %v3720 = vmul.f32 %v3713, %v3719
        %v3721 = vadd.f32 %v3720, 0.18741608
        %v3722 = vmul.f32 %v3713, %v3721
        %v3723 = vadd.f32 %v3722, 1.1283791
        %v3724 = vmul.f32 %v3630, %v3723
        %v3725 = vmul.f32 %v3713, 3.8918573e-05
        %v3726 = vadd.f32 %v3725, 0.001143296
        %v3727 = vmul.f32 %v3713, %v3726
        %v3728 = vadd.f32 %v3727, 0.014752088
        %v3729 = vmul.f32 %v3713, %v3728
        %v3730 = vadd.f32 %v3729, 0.112945676
        %v3731 = vmul.f32 %v3713, %v3730
        %v3732 = vadd.f32 %v3731, 0.4994258
        %v3733 = vmul.f32 %v3713, %v3732
        %v3734 = vadd.f32 %v3733, 1.0
        %v3735 = vrcp.pop %v3734
        %v3736 = vmul.f32 %v3734, %v3735
        %v3737 = vsub.f32 1.0, %v3736
        %v3738 = vmul.f32 %v3735, %v3737
        %v3739 = vadd.f32 %v3735, %v3738
        %vm3740 = vweird.f32 %v3734
        %vm3741 = vweird.f32 %v3735
        %vm3742 = vmor %vm3740, %vm3741
        %v3743 = vsel %vm3742, %v3735, %v3739
        %v3744 = vand.u32 2147483647, %v3734
        %vm3745 = vcmp.eq.f32.partialorder %v3744, 8.507059e+37
        %v3746 = vand.u32 %v3734, 2147483648
        %v3747 = vor.u32 1.1754944e-38, %v3746
        %v3748 = vsel %vm3745, %v3747, %v3743
        %v3749 = vmul.f32 %v3724, %v3748
        %v3750 = vmin.f32 %v3749, 1.0
        %v3751 = vmax.f32 %v3750, -1.0
        %v3752 = vmul.f32 %v3631, %v3631
        %v3753 = vmin.f32 16.0, %v3752
        %v3754 = vmul.f32 %v3753, 2.1237322e-06
        %v3755 = vadd.f32 %v3754, 0.00028619796
        %v3756 = vmul.f32 %v3753, %v3755
        %v3757 = vadd.f32 %v3756, 0.0036580483
        %v3758 = vmul.f32 %v3753, %v3757
        %v3759 = vadd.f32 %v3758, 0.05243302
        %v3760 = vmul.f32 %v3753, %v3759
        %v3761 = vadd.f32 %v3760, 0.18741608
        %v3762 = vmul.f32 %v3753, %v3761
        %v3763 = vadd.f32 %v3762, 1.1283791
        %v3764 = vmul.f32 %v3631, %v3763
        %v3765 = vmul.f32 %v3753, 3.8918573e-05
        %v3766 = vadd.f32 %v3765, 0.001143296
        %v3767 = vmul.f32 %v3753, %v3766
        %v3768 = vadd.f32 %v3767, 0.014752088
        %v3769 = vmul.f32 %v3753, %v3768
        %v3770 = vadd.f32 %v3769, 0.112945676
        %v3771 = vmul.f32 %v3753, %v3770
        %v3772 = vadd.f32 %v3771, 0.4994258
        %v3773 = vmul.f32 %v3753, %v3772
        %v3774 = vadd.f32 %v3773, 1.0
        %v3775 = vrcp.pop %v3774
        %v3776 = vmul.f32 %v3774, %v3775
        %v3777 = vsub.f32 1.0, %v3776
        %v3778 = vmul.f32 %v3775, %v3777
        %v3779 = vadd.f32 %v3775, %v3778
        %vm3780 = vweird.f32 %v3774
        %vm3781 = vweird.f32 %v3775
        %vm3782 = vmor %vm3780, %vm3781
        %v3783 = vsel %vm3782, %v3775, %v3779
        %v3784 = vand.u32 2147483647, %v3774
        %vm3785 = vcmp.eq.f32.partialorder %v3784, 8.507059e+37
        %v3786 = vand.u32 %v3774, 2147483648
        %v3787 = vor.u32 1.1754944e-38, %v3786
        %v3788 = vsel %vm3785, %v3787, %v3783
        %v3789 = vmul.f32 %v3764, %v3788
        %v3790 = vmin.f32 %v3789, 1.0
        %v3791 = vmax.f32 %v3790, -1.0
        %v3792 = vadd.f32 %v3671, 1.0
        %v3793 = vadd.f32 %v3711, 1.0
        %v3794 = vadd.f32 %v3751, 1.0
        %v3795 = vadd.f32 %v3791, 1.0
        %v3796 = vmul.f32 %v3624, %v3792
        %v3797 = vmul.f32 %v3625, %v3793
        %v3798 = vmul.f32 %v3626, %v3794
        %v3799 = vmul.f32 %v3627, %v3795
        %v3800 = vmul.f32 %v3550, %v3796
        %v3801 = vmul.f32 %v3573, %v3797
        %v3802 = vmul.f32 %v3553, %v3798
        %v3803 = vmul.f32 %v3576, %v3799
        %v3805 = vperm.slane %v3462, 0
        %3807 = vmatpush.msra.mxu0 %v3445
        %3808 = vmatpush.msra.mxu0 %v3444
        %3809 = vmatpush.msra.mxu0 %v3443
        %3810 = vmatpush.msra.mxu0 %v3442
        %3811 = vmatpush.msra.mxu0 %v3441
        %3812 = vmatpush.msra.mxu0 %v3440
        %3813 = vmatpush.msra.mxu0 %v3439
        %3814 = vmatpush.msra.mxu0 %v3438
        %3815 = vmatpush.msra.mxu0 %v3437
        %3816 = vmatpush.msra.mxu0 %v3436
        %3817 = vmatpush.msra.mxu0 %v3435
        %3818 = vmatpush.msra.mxu0 %v3434
        %3819 = vmatpush.msra.mxu0 %v3433
        %3820 = vmatpush.msra.mxu0 %v3432
        %3821 = vmatpush.msra.mxu0 %v3431
        %3822 = vmatpush.msra.mxu0 %v3430
        %3823 = vmatmul.f32.gmra.mxu0 %v3800
        %v3824 = vpop.f32.mrf.mxu0
        %v3825 = vadd.f32 %v3805, %v3824
        %3826 = vmatmul.f32.gmra.mxu0 %v3802
        %v3827 = vpop.f32.mrf.mxu0
        %v3828 = vadd.f32 %v3805, %v3827
        %3829 = vdwg.mxu0
        %3830 = vmatpush.msra.mxu0 %v3461
        %3831 = vmatpush.msra.mxu0 %v3460
        %3832 = vmatpush.msra.mxu0 %v3459
        %3833 = vmatpush.msra.mxu0 %v3458
        %3834 = vmatpush.msra.mxu0 %v3457
        %3835 = vmatpush.msra.mxu0 %v3456
        %3836 = vmatpush.msra.mxu0 %v3455
        %3837 = vmatpush.msra.mxu0 %v3454
        %3838 = vmatpush.msra.mxu0 %v3453
        %3839 = vmatpush.msra.mxu0 %v3452
        %3840 = vmatpush.msra.mxu0 %v3451
        %3841 = vmatpush.msra.mxu0 %v3450
        %3842 = vmatpush.msra.mxu0 %v3449
        %3843 = vmatpush.msra.mxu0 %v3448
        %3844 = vmatpush.msra.mxu0 %v3447
        %3845 = vmatpush.msra.mxu0 %v3446
        %3846 = vmatmul.f32.gmra.mxu0 %v3801
        %v3847 = vpop.f32.mrf.mxu0
        %v3848 = vadd.f32 %v3825, %v3847
        %3849 = vmatmul.f32.gmra.mxu0 %v3803
        %v3850 = vpop.f32.mrf.mxu0
        %v3851 = vadd.f32 %v3828, %v3850
        %3852 = vdwg.mxu0
        %v3853 = vadd.f32 %v3848, %v3393
        %v3854 = vadd.f32 %v3851, %v3394
        %v3855 = vld [vmem:[%s63] sm:$0x1]
        %v3856 = vld [vmem:[%s65] sm:$0x1]
        %v3857 = vld [vmem:[%s67] sm:$0xff]
        %v3858 = vld [vmem:[%s67 + $0x8] sm:$0xff]
        %v3859 = vld [vmem:[%s67 + $0x10] sm:$0xff]
        %v3860 = vld [vmem:[%s67 + $0x18] sm:$0xff]
        %v3861 = vld [vmem:[%s67 + $0x20] sm:$0xff]
        %v3862 = vld [vmem:[%s67 + $0x28] sm:$0xff]
        %v3863 = vld [vmem:[%s67 + $0x30] sm:$0xff]
        %v3864 = vld [vmem:[%s67 + $0x38] sm:$0xff]
        %v3865 = vld [vmem:[%s67 + $0x40] sm:$0xff]
        %v3866 = vld [vmem:[%s67 + $0x48] sm:$0xff]
        %v3867 = vld [vmem:[%s67 + $0x50] sm:$0xff]
        %v3868 = vld [vmem:[%s67 + $0x58] sm:$0xff]
        %v3869 = vld [vmem:[%s67 + $0x60] sm:$0xff]
        %v3870 = vld [vmem:[%s67 + $0x68] sm:$0xff]
        %v3871 = vld [vmem:[%s67 + $0x70] sm:$0xff]
        %v3872 = vld [vmem:[%s67 + $0x78] sm:$0xff]
        %v3873 = vld [vmem:[%s67 + $0x80] sm:$0xff]
        %v3874 = vld [vmem:[%s67 + $0x88] sm:$0xff]
        %v3875 = vld [vmem:[%s67 + $0x90] sm:$0xff]
        %v3876 = vld [vmem:[%s67 + $0x98] sm:$0xff]
        %v3877 = vld [vmem:[%s67 + $0xa0] sm:$0xff]
        %v3878 = vld [vmem:[%s67 + $0xa8] sm:$0xff]
        %v3879 = vld [vmem:[%s67 + $0xb0] sm:$0xff]
        %v3880 = vld [vmem:[%s67 + $0xb8] sm:$0xff]
        %v3881 = vld [vmem:[%s67 + $0xc0] sm:$0xff]
        %v3882 = vld [vmem:[%s67 + $0xc8] sm:$0xff]
        %v3883 = vld [vmem:[%s67 + $0xd0] sm:$0xff]
        %v3884 = vld [vmem:[%s67 + $0xd8] sm:$0xff]
        %v3885 = vld [vmem:[%s67 + $0xe0] sm:$0xff]
        %v3886 = vld [vmem:[%s67 + $0xe8] sm:$0xff]
        %v3887 = vld [vmem:[%s67 + $0xf0] sm:$0xff]
        %v3888 = vld [vmem:[%s67 + $0xf8] sm:$0xff]
        %v3889 = vld [vmem:[%s69] sm:$0xff]
        %v3890 = vld [vmem:[%s69 + $0x8] sm:$0xff]
        %v3891 = vld [vmem:[%s69 + $0x10] sm:$0xff]
        %v3892 = vld [vmem:[%s69 + $0x18] sm:$0xff]
        %v3893 = vld [vmem:[%s69 + $0x20] sm:$0xff]
        %v3894 = vld [vmem:[%s69 + $0x28] sm:$0xff]
        %v3895 = vld [vmem:[%s69 + $0x30] sm:$0xff]
        %v3896 = vld [vmem:[%s69 + $0x38] sm:$0xff]
        %v3897 = vld [vmem:[%s69 + $0x40] sm:$0xff]
        %v3898 = vld [vmem:[%s69 + $0x48] sm:$0xff]
        %v3899 = vld [vmem:[%s69 + $0x50] sm:$0xff]
        %v3900 = vld [vmem:[%s69 + $0x58] sm:$0xff]
        %v3901 = vld [vmem:[%s69 + $0x60] sm:$0xff]
        %v3902 = vld [vmem:[%s69 + $0x68] sm:$0xff]
        %v3903 = vld [vmem:[%s69 + $0x70] sm:$0xff]
        %v3904 = vld [vmem:[%s69 + $0x78] sm:$0xff]
        %v3905 = vld [vmem:[%s69 + $0x80] sm:$0xff]
        %v3906 = vld [vmem:[%s69 + $0x88] sm:$0xff]
        %v3907 = vld [vmem:[%s69 + $0x90] sm:$0xff]
        %v3908 = vld [vmem:[%s69 + $0x98] sm:$0xff]
        %v3909 = vld [vmem:[%s69 + $0xa0] sm:$0xff]
        %v3910 = vld [vmem:[%s69 + $0xa8] sm:$0xff]
        %v3911 = vld [vmem:[%s69 + $0xb0] sm:$0xff]
        %v3912 = vld [vmem:[%s69 + $0xb8] sm:$0xff]
        %v3913 = vld [vmem:[%s69 + $0xc0] sm:$0xff]
        %v3914 = vld [vmem:[%s69 + $0xc8] sm:$0xff]
        %v3915 = vld [vmem:[%s69 + $0xd0] sm:$0xff]
        %v3916 = vld [vmem:[%s69 + $0xd8] sm:$0xff]
        %v3917 = vld [vmem:[%s69 + $0xe0] sm:$0xff]
        %v3918 = vld [vmem:[%s69 + $0xe8] sm:$0xff]
        %v3919 = vld [vmem:[%s69 + $0xf0] sm:$0xff]
        %v3920 = vld [vmem:[%s69 + $0xf8] sm:$0xff]
        %v3921 = vld [vmem:[%s71] sm:$0xff]
        %v3922 = vld [vmem:[%s71 + $0x8] sm:$0xff]
        %v3923 = vld [vmem:[%s71 + $0x10] sm:$0xff]
        %v3924 = vld [vmem:[%s71 + $0x18] sm:$0xff]
        %v3925 = vld [vmem:[%s71 + $0x20] sm:$0xff]
        %v3926 = vld [vmem:[%s71 + $0x28] sm:$0xff]
        %v3927 = vld [vmem:[%s71 + $0x30] sm:$0xff]
        %v3928 = vld [vmem:[%s71 + $0x38] sm:$0xff]
        %v3929 = vld [vmem:[%s71 + $0x40] sm:$0xff]
        %v3930 = vld [vmem:[%s71 + $0x48] sm:$0xff]
        %v3931 = vld [vmem:[%s71 + $0x50] sm:$0xff]
        %v3932 = vld [vmem:[%s71 + $0x58] sm:$0xff]
        %v3933 = vld [vmem:[%s71 + $0x60] sm:$0xff]
        %v3934 = vld [vmem:[%s71 + $0x68] sm:$0xff]
        %v3935 = vld [vmem:[%s71 + $0x70] sm:$0xff]
        %v3936 = vld [vmem:[%s71 + $0x78] sm:$0xff]
        %v3937 = vld [vmem:[%s71 + $0x80] sm:$0xff]
        %v3938 = vld [vmem:[%s71 + $0x88] sm:$0xff]
        %v3939 = vld [vmem:[%s71 + $0x90] sm:$0xff]
        %v3940 = vld [vmem:[%s71 + $0x98] sm:$0xff]
        %v3941 = vld [vmem:[%s71 + $0xa0] sm:$0xff]
        %v3942 = vld [vmem:[%s71 + $0xa8] sm:$0xff]
        %v3943 = vld [vmem:[%s71 + $0xb0] sm:$0xff]
        %v3944 = vld [vmem:[%s71 + $0xb8] sm:$0xff]
        %v3945 = vld [vmem:[%s71 + $0xc0] sm:$0xff]
        %v3946 = vld [vmem:[%s71 + $0xc8] sm:$0xff]
        %v3947 = vld [vmem:[%s71 + $0xd0] sm:$0xff]
        %v3948 = vld [vmem:[%s71 + $0xd8] sm:$0xff]
        %v3949 = vld [vmem:[%s71 + $0xe0] sm:$0xff]
        %v3950 = vld [vmem:[%s71 + $0xe8] sm:$0xff]
        %v3951 = vld [vmem:[%s71 + $0xf0] sm:$0xff]
        %v3952 = vld [vmem:[%s71 + $0xf8] sm:$0xff]
        %v3953 = vld [vmem:[%s73] sm:$0xff]
        %v3954 = vld [vmem:[%s73 + $0x8] sm:$0xff]
        %v3955 = vld [vmem:[%s73 + $0x10] sm:$0xff]
        %v3956 = vld [vmem:[%s73 + $0x18] sm:$0xff]
        %v3957 = vld [vmem:[%s73 + $0x20] sm:$0xff]
        %v3958 = vld [vmem:[%s73 + $0x28] sm:$0xff]
        %v3959 = vld [vmem:[%s73 + $0x30] sm:$0xff]
        %v3960 = vld [vmem:[%s73 + $0x38] sm:$0xff]
        %v3961 = vld [vmem:[%s75] sm:$0x1]
        %v3962 = vsel %vm1710, %v3853, 0.0
        %3963 = vadd.xlane.f32.xlu0 %v3962
        %v3964 = vpop.xlane.xlu0 %3963
        %v3965 = vsel %vm1710, %v3854, 0.0
        %3966 = vadd.xlane.f32.xlu0 %v3965
        %v3967 = vpop.xlane.xlu0 %3966
        %v3968 = vmul.f32 %v3964, %v1723
        %v3969 = vmul.f32 %v3967, %v1723
        %v3970 = vsub.f32 %v3853, %v3968
        %v3971 = vsub.f32 %v3854, %v3969
        %v3972 = vmul.f32 %v3970, %v3970
        %v3973 = vmul.f32 %v3971, %v3971
        %v3974 = vsel %vm1710, %v3972, 0.0
        %3975 = vadd.xlane.f32.xlu0 %v3974
        %v3976 = vpop.xlane.xlu0 %3975
        %v3977 = vsel %vm1710, %v3973, 0.0
        %3978 = vadd.xlane.f32.xlu0 %v3977
        %v3979 = vpop.xlane.xlu0 %3978
        %v3980 = vmul.f32 %v3976, %v1723
        %v3981 = vmul.f32 %v3979, %v1723
        %v3982 = vadd.f32 %v3980, 1e-05
        %v3983 = vadd.f32 %v3981, 1e-05
        %v3984 = vrsqrt.pop %v3982
        %v3985 = vmul.f32 %v3984, %v3982
        %v3986 = vmul.f32 %v3985, %v3984
        %v3987 = vmul.f32 0.5, %v3986
        %v3988 = vsub.f32 1.5, %v3987
        %v3989 = vmul.f32 %v3984, %v3988
        %vm3990 = vweird.f32 %v3982
        %vm3991 = vweird.f32 %v3984
        %vm3992 = vmor %vm3990, %vm3991
        %v3993 = vsel %vm3992, %v3984, %v3989
        %v3994 = vrsqrt.pop %v3983
        %v3995 = vmul.f32 %v3994, %v3983
        %v3996 = vmul.f32 %v3995, %v3994
        %v3997 = vmul.f32 0.5, %v3996
        %v3998 = vsub.f32 1.5, %v3997
        %v3999 = vmul.f32 %v3994, %v3998
        %vm4000 = vweird.f32 %v3983
        %vm4001 = vweird.f32 %v3994
        %vm4002 = vmor %vm4000, %vm4001
        %v4003 = vsel %vm4002, %v3994, %v3999
        %v4004 = vmul.f32 %v3970, %v3993
        %v4005 = vmul.f32 %v3971, %v4003
        %v4007 = vperm.slane %v3855, 0
        %v4009 = vmul.f32 %v4004, %v4007
        %v4010 = vmul.f32 %v4005, %v4007
        %v4012 = vperm.slane %v3856, 0
        %v4014 = vadd.f32 %v4009, %v4012
        %v4015 = vadd.f32 %v4010, %v4012
        %v4017 = vsel %vm1710, %v4014, 0
        %v4020 = vsel %vm1710, %v4015, 0
        %4022 = vmatpush.msra.mxu0 0.0
        %4023 = vmatpush.msra.mxu0 0.0
        %4024 = vmatpush.msra.mxu0 0.0
        %4025 = vmatpush.msra.mxu0 0.0
        %4026 = vmatpush.msra.mxu0 0.0
        %4027 = vmatpush.msra.mxu0 0.0
        %4028 = vmatpush.msra.mxu0 0.0
        %4029 = vmatpush.msra.mxu0 0.0
        %4030 = vmatpush.msra.mxu0 %v3864
        %4031 = vmatpush.msra.mxu0 %v3863
        %4032 = vmatpush.msra.mxu0 %v3862
        %4033 = vmatpush.msra.mxu0 %v3861
        %4034 = vmatpush.msra.mxu0 %v3860
        %4035 = vmatpush.msra.mxu0 %v3859
        %4036 = vmatpush.msra.mxu0 %v3858
        %4037 = vmatpush.msra.mxu0 %v3857
        %4038 = vmatmul.f32.gmra.mxu0 %v4017
        %v4039 = vpop.f32.mrf.mxu0
        %v4040 = vadd.f32 0.0, %v4039
        %4041 = vmatmul.f32.gmra.mxu0 %v4020
        %v4042 = vpop.f32.mrf.mxu0
        %v4043 = vadd.f32 0.0, %v4042
        %4044 = vdwg.mxu0
        %4045 = vmatpush.msra.mxu0 0.0
        %4046 = vmatpush.msra.mxu0 0.0
        %4047 = vmatpush.msra.mxu0 0.0
        %4048 = vmatpush.msra.mxu0 0.0
        %4049 = vmatpush.msra.mxu0 0.0
        %4050 = vmatpush.msra.mxu0 0.0
        %4051 = vmatpush.msra.mxu0 0.0
        %4052 = vmatpush.msra.mxu0 0.0
        %4053 = vmatpush.msra.mxu0 %v3872
        %4054 = vmatpush.msra.mxu0 %v3871
        %4055 = vmatpush.msra.mxu0 %v3870
        %4056 = vmatpush.msra.mxu0 %v3869
        %4057 = vmatpush.msra.mxu0 %v3868
        %4058 = vmatpush.msra.mxu0 %v3867
        %4059 = vmatpush.msra.mxu0 %v3866
        %4060 = vmatpush.msra.mxu0 %v3865
        %4061 = vmatmul.f32.gmra.mxu0 %v4017
        %v4062 = vpop.f32.mrf.mxu0
        %v4063 = vadd.f32 0.0, %v4062
        %4064 = vmatmul.f32.gmra.mxu0 %v4020
        %v4065 = vpop.f32.mrf.mxu0
        %v4066 = vadd.f32 0.0, %v4065
        %4067 = vdwg.mxu0
        %4068 = vmatpush.msra.mxu0 0.0
        %4069 = vmatpush.msra.mxu0 0.0
        %4070 = vmatpush.msra.mxu0 0.0
        %4071 = vmatpush.msra.mxu0 0.0
        %4072 = vmatpush.msra.mxu0 0.0
        %4073 = vmatpush.msra.mxu0 0.0
        %4074 = vmatpush.msra.mxu0 0.0
        %4075 = vmatpush.msra.mxu0 0.0
        %4076 = vmatpush.msra.mxu0 %v3880
        %4077 = vmatpush.msra.mxu0 %v3879
        %4078 = vmatpush.msra.mxu0 %v3878
        %4079 = vmatpush.msra.mxu0 %v3877
        %4080 = vmatpush.msra.mxu0 %v3876
        %4081 = vmatpush.msra.mxu0 %v3875
        %4082 = vmatpush.msra.mxu0 %v3874
        %4083 = vmatpush.msra.mxu0 %v3873
        %4084 = vmatmul.f32.gmra.mxu0 %v4017
        %v4085 = vpop.f32.mrf.mxu0
        %v4086 = vadd.f32 0.0, %v4085
        %4087 = vmatmul.f32.gmra.mxu0 %v4020
        %v4088 = vpop.f32.mrf.mxu0
        %v4089 = vadd.f32 0.0, %v4088
        %4090 = vdwg.mxu0
        %4091 = vmatpush.msra.mxu0 0.0
        %4092 = vmatpush.msra.mxu0 0.0
        %4093 = vmatpush.msra.mxu0 0.0
        %4094 = vmatpush.msra.mxu0 0.0
        %4095 = vmatpush.msra.mxu0 0.0
        %4096 = vmatpush.msra.mxu0 0.0
        %4097 = vmatpush.msra.mxu0 0.0
        %4098 = vmatpush.msra.mxu0 0.0
        %4099 = vmatpush.msra.mxu0 %v3888
        %4100 = vmatpush.msra.mxu0 %v3887
        %4101 = vmatpush.msra.mxu0 %v3886
        %4102 = vmatpush.msra.mxu0 %v3885
        %4103 = vmatpush.msra.mxu0 %v3884
        %4104 = vmatpush.msra.mxu0 %v3883
        %4105 = vmatpush.msra.mxu0 %v3882
        %4106 = vmatpush.msra.mxu0 %v3881
        %4107 = vmatmul.f32.gmra.mxu0 %v4017
        %v4108 = vpop.f32.mrf.mxu0
        %v4109 = vadd.f32 0.0, %v4108
        %4110 = vmatmul.f32.gmra.mxu0 %v4020
        %v4111 = vpop.f32.mrf.mxu0
        %v4112 = vadd.f32 0.0, %v4111
        %4113 = vdwg.mxu0
        %v4114 = vmul.f32 %v4040, 0.25
        %v4115 = vmul.f32 %v4043, 0.25
        %v4116 = vmul.f32 %v4063, 0.25
        %v4117 = vmul.f32 %v4066, 0.25
        %v4118 = vmul.f32 %v4086, 0.25
        %v4119 = vmul.f32 %v4089, 0.25
        %v4120 = vmul.f32 %v4109, 0.25
        %v4121 = vmul.f32 %v4112, 0.25
        %4122 = vmatpush.msra.mxu0 0.0
        %4123 = vmatpush.msra.mxu0 0.0
        %4124 = vmatpush.msra.mxu0 0.0
        %4125 = vmatpush.msra.mxu0 0.0
        %4126 = vmatpush.msra.mxu0 0.0
        %4127 = vmatpush.msra.mxu0 0.0
        %4128 = vmatpush.msra.mxu0 0.0
        %4129 = vmatpush.msra.mxu0 0.0
        %4130 = vmatpush.msra.mxu0 %v3896
        %4131 = vmatpush.msra.mxu0 %v3895
        %4132 = vmatpush.msra.mxu0 %v3894
        %4133 = vmatpush.msra.mxu0 %v3893
        %4134 = vmatpush.msra.mxu0 %v3892
        %4135 = vmatpush.msra.mxu0 %v3891
        %4136 = vmatpush.msra.mxu0 %v3890
        %4137 = vmatpush.msra.mxu0 %v3889
        %4138 = vmatmul.f32.gmra.mxu0 %v4017
        %v4139 = vpop.f32.mrf.mxu0
        %v4140 = vadd.f32 0.0, %v4139
        %4141 = vmatmul.f32.gmra.mxu0 %v4020
        %v4142 = vpop.f32.mrf.mxu0
        %v4143 = vadd.f32 0.0, %v4142
        %4144 = vdwg.mxu0
        %4145 = vmatpush.msra.mxu0 0.0
        %4146 = vmatpush.msra.mxu0 0.0
        %4147 = vmatpush.msra.mxu0 0.0
        %4148 = vmatpush.msra.mxu0 0.0
        %4149 = vmatpush.msra.mxu0 0.0
        %4150 = vmatpush.msra.mxu0 0.0
        %4151 = vmatpush.msra.mxu0 0.0
        %4152 = vmatpush.msra.mxu0 0.0
        %4153 = vmatpush.msra.mxu0 %v3904
        %4154 = vmatpush.msra.mxu0 %v3903
        %4155 = vmatpush.msra.mxu0 %v3902
        %4156 = vmatpush.msra.mxu0 %v3901
        %4157 = vmatpush.msra.mxu0 %v3900
        %4158 = vmatpush.msra.mxu0 %v3899
        %4159 = vmatpush.msra.mxu0 %v3898
        %4160 = vmatpush.msra.mxu0 %v3897
        %4161 = vmatmul.f32.gmra.mxu0 %v4017
        %v4162 = vpop.f32.mrf.mxu0
        %v4163 = vadd.f32 0.0, %v4162
        %4164 = vmatmul.f32.gmra.mxu0 %v4020
        %v4165 = vpop.f32.mrf.mxu0
        %v4166 = vadd.f32 0.0, %v4165
        %4167 = vdwg.mxu0
        %4168 = vmatpush.msra.mxu0 0.0
        %4169 = vmatpush.msra.mxu0 0.0
        %4170 = vmatpush.msra.mxu0 0.0
        %4171 = vmatpush.msra.mxu0 0.0
        %4172 = vmatpush.msra.mxu0 0.0
        %4173 = vmatpush.msra.mxu0 0.0
        %4174 = vmatpush.msra.mxu0 0.0
        %4175 = vmatpush.msra.mxu0 0.0
        %4176 = vmatpush.msra.mxu0 %v3912
        %4177 = vmatpush.msra.mxu0 %v3911
        %4178 = vmatpush.msra.mxu0 %v3910
        %4179 = vmatpush.msra.mxu0 %v3909
        %4180 = vmatpush.msra.mxu0 %v3908
        %4181 = vmatpush.msra.mxu0 %v3907
        %4182 = vmatpush.msra.mxu0 %v3906
        %4183 = vmatpush.msra.mxu0 %v3905
        %4184 = vmatmul.f32.gmra.mxu0 %v4017
        %v4185 = vpop.f32.mrf.mxu0
        %v4186 = vadd.f32 0.0, %v4185
        %4187 = vmatmul.f32.gmra.mxu0 %v4020
        %v4188 = vpop.f32.mrf.mxu0
        %v4189 = vadd.f32 0.0, %v4188
        %4190 = vdwg.mxu0
        %4191 = vmatpush.msra.mxu0 0.0
        %4192 = vmatpush.msra.mxu0 0.0
        %4193 = vmatpush.msra.mxu0 0.0
        %4194 = vmatpush.msra.mxu0 0.0
        %4195 = vmatpush.msra.mxu0 0.0
        %4196 = vmatpush.msra.mxu0 0.0
        %4197 = vmatpush.msra.mxu0 0.0
        %4198 = vmatpush.msra.mxu0 0.0
        %4199 = vmatpush.msra.mxu0 %v3920
        %4200 = vmatpush.msra.mxu0 %v3919
        %4201 = vmatpush.msra.mxu0 %v3918
        %4202 = vmatpush.msra.mxu0 %v3917
        %4203 = vmatpush.msra.mxu0 %v3916
        %4204 = vmatpush.msra.mxu0 %v3915
        %4205 = vmatpush.msra.mxu0 %v3914
        %4206 = vmatpush.msra.mxu0 %v3913
        %4207 = vmatmul.f32.gmra.mxu0 %v4017
        %v4208 = vpop.f32.mrf.mxu0
        %v4209 = vadd.f32 0.0, %v4208
        %4210 = vmatmul.f32.gmra.mxu0 %v4020
        %v4211 = vpop.f32.mrf.mxu0
        %v4212 = vadd.f32 0.0, %v4211
        %4213 = vdwg.mxu0
        %4214 = vmatpush.msra.mxu0 0.0
        %4215 = vmatpush.msra.mxu0 0.0
        %4216 = vmatpush.msra.mxu0 0.0
        %4217 = vmatpush.msra.mxu0 0.0
        %4218 = vmatpush.msra.mxu0 0.0
        %4219 = vmatpush.msra.mxu0 0.0
        %4220 = vmatpush.msra.mxu0 0.0
        %4221 = vmatpush.msra.mxu0 0.0
        %4222 = vmatpush.msra.mxu0 %v3928
        %4223 = vmatpush.msra.mxu0 %v3927
        %4224 = vmatpush.msra.mxu0 %v3926
        %4225 = vmatpush.msra.mxu0 %v3925
        %4226 = vmatpush.msra.mxu0 %v3924
        %4227 = vmatpush.msra.mxu0 %v3923
        %4228 = vmatpush.msra.mxu0 %v3922
        %4229 = vmatpush.msra.mxu0 %v3921
        %4230 = vmatmul.f32.gmra.mxu0 %v4017
        %v4231 = vpop.f32.mrf.mxu0
        %v4232 = vadd.f32 0.0, %v4231
        %4233 = vmatmul.f32.gmra.mxu0 %v4020
        %v4234 = vpop.f32.mrf.mxu0
        %v4235 = vadd.f32 0.0, %v4234
        %4236 = vdwg.mxu0
        %4237 = vmatpush.msra.mxu0 0.0
        %4238 = vmatpush.msra.mxu0 0.0
        %4239 = vmatpush.msra.mxu0 0.0
        %4240 = vmatpush.msra.mxu0 0.0
        %4241 = vmatpush.msra.mxu0 0.0
        %4242 = vmatpush.msra.mxu0 0.0
        %4243 = vmatpush.msra.mxu0 0.0
        %4244 = vmatpush.msra.mxu0 0.0
        %4245 = vmatpush.msra.mxu0 %v3936
        %4246 = vmatpush.msra.mxu0 %v3935
        %4247 = vmatpush.msra.mxu0 %v3934
        %4248 = vmatpush.msra.mxu0 %v3933
        %4249 = vmatpush.msra.mxu0 %v3932
        %4250 = vmatpush.msra.mxu0 %v3931
        %4251 = vmatpush.msra.mxu0 %v3930
        %4252 = vmatpush.msra.mxu0 %v3929
        %4253 = vmatmul.f32.gmra.mxu0 %v4017
        %v4254 = vpop.f32.mrf.mxu0
        %v4255 = vadd.f32 0.0, %v4254
        %4256 = vmatmul.f32.gmra.mxu0 %v4020
        %v4257 = vpop.f32.mrf.mxu0
        %v4258 = vadd.f32 0.0, %v4257
        %4259 = vdwg.mxu0
        %4260 = vmatpush.msra.mxu0 0.0
        %4261 = vmatpush.msra.mxu0 0.0
        %4262 = vmatpush.msra.mxu0 0.0
        %4263 = vmatpush.msra.mxu0 0.0
        %4264 = vmatpush.msra.mxu0 0.0
        %4265 = vmatpush.msra.mxu0 0.0
        %4266 = vmatpush.msra.mxu0 0.0
        %4267 = vmatpush.msra.mxu0 0.0
        %4268 = vmatpush.msra.mxu0 %v3944
        %4269 = vmatpush.msra.mxu0 %v3943
        %4270 = vmatpush.msra.mxu0 %v3942
        %4271 = vmatpush.msra.mxu0 %v3941
        %4272 = vmatpush.msra.mxu0 %v3940
        %4273 = vmatpush.msra.mxu0 %v3939
        %4274 = vmatpush.msra.mxu0 %v3938
        %4275 = vmatpush.msra.mxu0 %v3937
        %4276 = vmatmul.f32.gmra.mxu0 %v4017
        %v4277 = vpop.f32.mrf.mxu0
        %v4278 = vadd.f32 0.0, %v4277
        %4279 = vmatmul.f32.gmra.mxu0 %v4020
        %v4280 = vpop.f32.mrf.mxu0
        %v4281 = vadd.f32 0.0, %v4280
        %4282 = vdwg.mxu0
        %4283 = vmatpush.msra.mxu0 0.0
        %4284 = vmatpush.msra.mxu0 0.0
        %4285 = vmatpush.msra.mxu0 0.0
        %4286 = vmatpush.msra.mxu0 0.0
        %4287 = vmatpush.msra.mxu0 0.0
        %4288 = vmatpush.msra.mxu0 0.0
        %4289 = vmatpush.msra.mxu0 0.0
        %4290 = vmatpush.msra.mxu0 0.0
        %4291 = vmatpush.msra.mxu0 %v3952
        %4292 = vmatpush.msra.mxu0 %v3951
        %4293 = vmatpush.msra.mxu0 %v3950
        %4294 = vmatpush.msra.mxu0 %v3949
        %4295 = vmatpush.msra.mxu0 %v3948
        %4296 = vmatpush.msra.mxu0 %v3947
        %4297 = vmatpush.msra.mxu0 %v3946
        %4298 = vmatpush.msra.mxu0 %v3945
        %4299 = vmatmul.f32.gmra.mxu0 %v4017
        %v4300 = vpop.f32.mrf.mxu0
        %v4301 = vadd.f32 0.0, %v4300
        %4302 = vmatmul.f32.gmra.mxu0 %v4020
        %v4303 = vpop.f32.mrf.mxu0
        %v4304 = vadd.f32 0.0, %v4303
        %4305 = vdwg.mxu0
        %v4307 = vsel %vm1884, %v4114, 0
        %v4310 = vsel %vm1884, %v4115, 0
        %v4313 = vsel %vm1884, %v4140, 0
        %v4316 = vsel %vm1884, %v4143, 0
        %4318 = vmatpush.xpose.msra.mxu0 0.0
        %4319 = vmatpush.xpose.msra.mxu0 0.0
        %4320 = vmatpush.xpose.msra.mxu0 0.0
        %4321 = vmatpush.xpose.msra.mxu0 0.0
        %4322 = vmatpush.xpose.msra.mxu0 0.0
        %4323 = vmatpush.xpose.msra.mxu0 0.0
        %4324 = vmatpush.xpose.msra.mxu0 0.0
        %4325 = vmatpush.xpose.msra.mxu0 0.0
        %4326 = vmatpush.xpose.msra.mxu0 0.0
        %4327 = vmatpush.xpose.msra.mxu0 0.0
        %4328 = vmatpush.xpose.msra.mxu0 0.0
        %4329 = vmatpush.xpose.msra.mxu0 0.0
        %4330 = vmatpush.xpose.msra.mxu0 0.0
        %4331 = vmatpush.xpose.msra.mxu0 0.0
        %4332 = vmatpush.xpose.msra.mxu0 %v4316
        %4333 = vmatpush.xpose.msra.mxu0 %v4313
        %4334 = vmatmul.f32.gmra.mxu0 %v4307
        %v4335 = vpop.f32.mrf.mxu0
        %v4336 = vadd.f32 0.0, %v4335
        %4337 = vmatmul.f32.gmra.mxu0 %v4310
        %v4338 = vpop.f32.mrf.mxu0
        %v4339 = vadd.f32 0.0, %v4338
        %4340 = vdwg.mxu0
        %v4342 = vsel %vm1884, %v4116, 0
        %v4345 = vsel %vm1884, %v4117, 0
        %v4348 = vsel %vm1884, %v4163, 0
        %v4351 = vsel %vm1884, %v4166, 0
        %4353 = vmatpush.xpose.msra.mxu0 0.0
        %4354 = vmatpush.xpose.msra.mxu0 0.0
        %4355 = vmatpush.xpose.msra.mxu0 0.0
        %4356 = vmatpush.xpose.msra.mxu0 0.0
        %4357 = vmatpush.xpose.msra.mxu0 0.0
        %4358 = vmatpush.xpose.msra.mxu0 0.0
        %4359 = vmatpush.xpose.msra.mxu0 0.0
        %4360 = vmatpush.xpose.msra.mxu0 0.0
        %4361 = vmatpush.xpose.msra.mxu0 0.0
        %4362 = vmatpush.xpose.msra.mxu0 0.0
        %4363 = vmatpush.xpose.msra.mxu0 0.0
        %4364 = vmatpush.xpose.msra.mxu0 0.0
        %4365 = vmatpush.xpose.msra.mxu0 0.0
        %4366 = vmatpush.xpose.msra.mxu0 0.0
        %4367 = vmatpush.xpose.msra.mxu0 %v4351
        %4368 = vmatpush.xpose.msra.mxu0 %v4348
        %4369 = vmatmul.f32.gmra.mxu0 %v4342
        %v4370 = vpop.f32.mrf.mxu0
        %v4371 = vadd.f32 0.0, %v4370
        %4372 = vmatmul.f32.gmra.mxu0 %v4345
        %v4373 = vpop.f32.mrf.mxu0
        %v4374 = vadd.f32 0.0, %v4373
        %4375 = vdwg.mxu0
        %v4377 = vsel %vm1884, %v4118, 0
        %v4380 = vsel %vm1884, %v4119, 0
        %v4383 = vsel %vm1884, %v4186, 0
        %v4386 = vsel %vm1884, %v4189, 0
        %4388 = vmatpush.xpose.msra.mxu0 0.0
        %4389 = vmatpush.xpose.msra.mxu0 0.0
        %4390 = vmatpush.xpose.msra.mxu0 0.0
        %4391 = vmatpush.xpose.msra.mxu0 0.0
        %4392 = vmatpush.xpose.msra.mxu0 0.0
        %4393 = vmatpush.xpose.msra.mxu0 0.0
        %4394 = vmatpush.xpose.msra.mxu0 0.0
        %4395 = vmatpush.xpose.msra.mxu0 0.0
        %4396 = vmatpush.xpose.msra.mxu0 0.0
        %4397 = vmatpush.xpose.msra.mxu0 0.0
        %4398 = vmatpush.xpose.msra.mxu0 0.0
        %4399 = vmatpush.xpose.msra.mxu0 0.0
        %4400 = vmatpush.xpose.msra.mxu0 0.0
        %4401 = vmatpush.xpose.msra.mxu0 0.0
        %4402 = vmatpush.xpose.msra.mxu0 %v4386
        %4403 = vmatpush.xpose.msra.mxu0 %v4383
        %4404 = vmatmul.f32.gmra.mxu0 %v4377
        %v4405 = vpop.f32.mrf.mxu0
        %v4406 = vadd.f32 0.0, %v4405
        %4407 = vmatmul.f32.gmra.mxu0 %v4380
        %v4408 = vpop.f32.mrf.mxu0
        %v4409 = vadd.f32 0.0, %v4408
        %4410 = vdwg.mxu0
        %v4412 = vsel %vm1884, %v4120, 0
        %v4415 = vsel %vm1884, %v4121, 0
        %v4418 = vsel %vm1884, %v4209, 0
        %v4421 = vsel %vm1884, %v4212, 0
        %4423 = vmatpush.xpose.msra.mxu0 0.0
        %4424 = vmatpush.xpose.msra.mxu0 0.0
        %4425 = vmatpush.xpose.msra.mxu0 0.0
        %4426 = vmatpush.xpose.msra.mxu0 0.0
        %4427 = vmatpush.xpose.msra.mxu0 0.0
        %4428 = vmatpush.xpose.msra.mxu0 0.0
        %4429 = vmatpush.xpose.msra.mxu0 0.0
        %4430 = vmatpush.xpose.msra.mxu0 0.0
        %4431 = vmatpush.xpose.msra.mxu0 0.0
        %4432 = vmatpush.xpose.msra.mxu0 0.0
        %4433 = vmatpush.xpose.msra.mxu0 0.0
        %4434 = vmatpush.xpose.msra.mxu0 0.0
        %4435 = vmatpush.xpose.msra.mxu0 0.0
        %4436 = vmatpush.xpose.msra.mxu0 0.0
        %4437 = vmatpush.xpose.msra.mxu0 %v4421
        %4438 = vmatpush.xpose.msra.mxu0 %v4418
        %4439 = vmatmul.f32.gmra.mxu0 %v4412
        %v4440 = vpop.f32.mrf.mxu0
        %v4441 = vadd.f32 0.0, %v4440
        %4442 = vmatmul.f32.gmra.mxu0 %v4415
        %v4443 = vpop.f32.mrf.mxu0
        %v4444 = vadd.f32 0.0, %v4443
        %4445 = vdwg.mxu0
        %v4446 = vsel %vm1884, %v4336, -inf
        %4447 = vmax.xlane.f32.xlu0 %v4446
        %v4448 = vpop.xlane.xlu0 %4447
        %v4449 = vsel %vm1884, %v4339, -inf
        %4450 = vmax.xlane.f32.xlu0 %v4449
        %v4451 = vpop.xlane.xlu0 %4450
        %v4452 = vsel %vm1884, %v4371, -inf
        %4453 = vmax.xlane.f32.xlu0 %v4452
        %v4454 = vpop.xlane.xlu0 %4453
        %v4455 = vsel %vm1884, %v4374, -inf
        %4456 = vmax.xlane.f32.xlu0 %v4455
        %v4457 = vpop.xlane.xlu0 %4456
        %v4458 = vsel %vm1884, %v4406, -inf
        %4459 = vmax.xlane.f32.xlu0 %v4458
        %v4460 = vpop.xlane.xlu0 %4459
        %v4461 = vsel %vm1884, %v4409, -inf
        %4462 = vmax.xlane.f32.xlu0 %v4461
        %v4463 = vpop.xlane.xlu0 %4462
        %v4464 = vsel %vm1884, %v4441, -inf
        %4465 = vmax.xlane.f32.xlu0 %v4464
        %v4466 = vpop.xlane.xlu0 %4465
        %v4467 = vsel %vm1884, %v4444, -inf
        %4468 = vmax.xlane.f32.xlu0 %v4467
        %v4469 = vpop.xlane.xlu0 %4468
        %v4470 = vsub.f32 %v4336, %v4448
        %v4471 = vsub.f32 %v4339, %v4451
        %v4472 = vsub.f32 %v4371, %v4454
        %v4473 = vsub.f32 %v4374, %v4457
        %v4474 = vsub.f32 %v4406, %v4460
        %v4475 = vsub.f32 %v4409, %v4463
        %v4476 = vsub.f32 %v4441, %v4466
        %v4477 = vsub.f32 %v4444, %v4469
        %v4478 = vmul.f32 %v4470, 1.442695
        %v4479 = vpow.pop %v4478
        %v4480 = vmul.f32 %v4471, 1.442695
        %v4481 = vpow.pop %v4480
        %v4482 = vmul.f32 %v4472, 1.442695
        %v4483 = vpow.pop %v4482
        %v4484 = vmul.f32 %v4473, 1.442695
        %v4485 = vpow.pop %v4484
        %v4486 = vmul.f32 %v4474, 1.442695
        %v4487 = vpow.pop %v4486
        %v4488 = vmul.f32 %v4475, 1.442695
        %v4489 = vpow.pop %v4488
        %v4490 = vmul.f32 %v4476, 1.442695
        %v4491 = vpow.pop %v4490
        %v4492 = vmul.f32 %v4477, 1.442695
        %v4493 = vpow.pop %v4492
        %v4494 = vsel %vm1884, %v4479, 0.0
        %4495 = vadd.xlane.f32.xlu0 %v4494
        %v4496 = vpop.xlane.xlu0 %4495
        %v4497 = vsel %vm1884, %v4481, 0.0
        %4498 = vadd.xlane.f32.xlu0 %v4497
        %v4499 = vpop.xlane.xlu0 %4498
        %v4500 = vsel %vm1884, %v4483, 0.0
        %4501 = vadd.xlane.f32.xlu0 %v4500
        %v4502 = vpop.xlane.xlu0 %4501
        %v4503 = vsel %vm1884, %v4485, 0.0
        %4504 = vadd.xlane.f32.xlu0 %v4503
        %v4505 = vpop.xlane.xlu0 %4504
        %v4506 = vsel %vm1884, %v4487, 0.0
        %4507 = vadd.xlane.f32.xlu0 %v4506
        %v4508 = vpop.xlane.xlu0 %4507
        %v4509 = vsel %vm1884, %v4489, 0.0
        %4510 = vadd.xlane.f32.xlu0 %v4509
        %v4511 = vpop.xlane.xlu0 %4510
        %v4512 = vsel %vm1884, %v4491, 0.0
        %4513 = vadd.xlane.f32.xlu0 %v4512
        %v4514 = vpop.xlane.xlu0 %4513
        %v4515 = vsel %vm1884, %v4493, 0.0
        %4516 = vadd.xlane.f32.xlu0 %v4515
        %v4517 = vpop.xlane.xlu0 %4516
        %v4518 = vrcp.pop %v4496
        %v4519 = vrcp.pop %v4499
        %v4520 = vrcp.pop %v4502
        %v4521 = vrcp.pop %v4505
        %v4522 = vrcp.pop %v4508
        %v4523 = vrcp.pop %v4511
        %v4524 = vrcp.pop %v4514
        %v4525 = vrcp.pop %v4517
        %v4526 = vmul.f32 %v4479, %v4518
        %v4527 = vmul.f32 %v4481, %v4519
        %v4528 = vmul.f32 %v4483, %v4520
        %v4529 = vmul.f32 %v4485, %v4521
        %v4530 = vmul.f32 %v4487, %v4522
        %v4531 = vmul.f32 %v4489, %v4523
        %v4532 = vmul.f32 %v4491, %v4524
        %v4533 = vmul.f32 %v4493, %v4525
        %v4535 = vsel %vm1884, %v4526, 0
        %v4538 = vsel %vm1884, %v4527, 0
        %4540 = vmatpush.msra.mxu0 0.0
        %4541 = vmatpush.msra.mxu0 0.0
        %4542 = vmatpush.msra.mxu0 0.0
        %4543 = vmatpush.msra.mxu0 0.0
        %4544 = vmatpush.msra.mxu0 0.0
        %4545 = vmatpush.msra.mxu0 0.0
        %4546 = vmatpush.msra.mxu0 0.0
        %4547 = vmatpush.msra.mxu0 0.0
        %4548 = vmatpush.msra.mxu0 0.0
        %4549 = vmatpush.msra.mxu0 0.0
        %4550 = vmatpush.msra.mxu0 0.0
        %4551 = vmatpush.msra.mxu0 0.0
        %4552 = vmatpush.msra.mxu0 0.0
        %4553 = vmatpush.msra.mxu0 0.0
        %4554 = vmatpush.msra.mxu0 %v4235
        %4555 = vmatpush.msra.mxu0 %v4232
        %4556 = vmatmul.f32.gmra.mxu0 %v4535
        %v4557 = vpop.f32.mrf.mxu0
        %v4558 = vadd.f32 0.0, %v4557
        %4559 = vmatmul.f32.gmra.mxu0 %v4538
        %v4560 = vpop.f32.mrf.mxu0
        %v4561 = vadd.f32 0.0, %v4560
        %4562 = vdwg.mxu0
        %v4564 = vsel %vm1884, %v4528, 0
        %v4567 = vsel %vm1884, %v4529, 0
        %4569 = vmatpush.msra.mxu0 0.0
        %4570 = vmatpush.msra.mxu0 0.0
        %4571 = vmatpush.msra.mxu0 0.0
        %4572 = vmatpush.msra.mxu0 0.0
        %4573 = vmatpush.msra.mxu0 0.0
        %4574 = vmatpush.msra.mxu0 0.0
        %4575 = vmatpush.msra.mxu0 0.0
        %4576 = vmatpush.msra.mxu0 0.0
        %4577 = vmatpush.msra.mxu0 0.0
        %4578 = vmatpush.msra.mxu0 0.0
        %4579 = vmatpush.msra.mxu0 0.0
        %4580 = vmatpush.msra.mxu0 0.0
        %4581 = vmatpush.msra.mxu0 0.0
        %4582 = vmatpush.msra.mxu0 0.0
        %4583 = vmatpush.msra.mxu0 %v4258
        %4584 = vmatpush.msra.mxu0 %v4255
        %4585 = vmatmul.f32.gmra.mxu0 %v4564
        %v4586 = vpop.f32.mrf.mxu0
        %v4587 = vadd.f32 0.0, %v4586
        %4588 = vmatmul.f32.gmra.mxu0 %v4567
        %v4589 = vpop.f32.mrf.mxu0
        %v4590 = vadd.f32 0.0, %v4589
        %4591 = vdwg.mxu0
        %v4593 = vsel %vm1884, %v4530, 0
        %v4596 = vsel %vm1884, %v4531, 0
        %4598 = vmatpush.msra.mxu0 0.0
        %4599 = vmatpush.msra.mxu0 0.0
        %4600 = vmatpush.msra.mxu0 0.0
        %4601 = vmatpush.msra.mxu0 0.0
        %4602 = vmatpush.msra.mxu0 0.0
        %4603 = vmatpush.msra.mxu0 0.0
        %4604 = vmatpush.msra.mxu0 0.0
        %4605 = vmatpush.msra.mxu0 0.0
        %4606 = vmatpush.msra.mxu0 0.0
        %4607 = vmatpush.msra.mxu0 0.0
        %4608 = vmatpush.msra.mxu0 0.0
        %4609 = vmatpush.msra.mxu0 0.0
        %4610 = vmatpush.msra.mxu0 0.0
        %4611 = vmatpush.msra.mxu0 0.0
        %4612 = vmatpush.msra.mxu0 %v4281
        %4613 = vmatpush.msra.mxu0 %v4278
        %4614 = vmatmul.f32.gmra.mxu0 %v4593
        %v4615 = vpop.f32.mrf.mxu0
        %v4616 = vadd.f32 0.0, %v4615
        %4617 = vmatmul.f32.gmra.mxu0 %v4596
        %v4618 = vpop.f32.mrf.mxu0
        %v4619 = vadd.f32 0.0, %v4618
        %4620 = vdwg.mxu0
        %v4622 = vsel %vm1884, %v4532, 0
        %v4625 = vsel %vm1884, %v4533, 0
        %4627 = vmatpush.msra.mxu0 0.0
        %4628 = vmatpush.msra.mxu0 0.0
        %4629 = vmatpush.msra.mxu0 0.0
        %4630 = vmatpush.msra.mxu0 0.0
        %4631 = vmatpush.msra.mxu0 0.0
        %4632 = vmatpush.msra.mxu0 0.0
        %4633 = vmatpush.msra.mxu0 0.0
        %4634 = vmatpush.msra.mxu0 0.0
        %4635 = vmatpush.msra.mxu0 0.0
        %4636 = vmatpush.msra.mxu0 0.0
        %4637 = vmatpush.msra.mxu0 0.0
        %4638 = vmatpush.msra.mxu0 0.0
        %4639 = vmatpush.msra.mxu0 0.0
        %4640 = vmatpush.msra.mxu0 0.0
        %4641 = vmatpush.msra.mxu0 %v4304
        %4642 = vmatpush.msra.mxu0 %v4301
        %4643 = vmatmul.f32.gmra.mxu0 %v4622
        %v4644 = vpop.f32.mrf.mxu0
        %v4645 = vadd.f32 0.0, %v4644
        %4646 = vmatmul.f32.gmra.mxu0 %v4625
        %v4647 = vpop.f32.mrf.mxu0
        %v4648 = vadd.f32 0.0, %v4647
        %4649 = vdwg.mxu0
        %v4651 = vsel %vm1884, %v4558, 0
        %v4654 = vsel %vm1884, %v4561, 0
        %4656 = vmatpush.msra.mxu0 0.0
        %4657 = vmatpush.msra.mxu0 0.0
        %4658 = vmatpush.msra.mxu0 0.0
        %4659 = vmatpush.msra.mxu0 0.0
        %4660 = vmatpush.msra.mxu0 0.0
        %4661 = vmatpush.msra.mxu0 0.0
        %4662 = vmatpush.msra.mxu0 0.0
        %4663 = vmatpush.msra.mxu0 0.0
        %4664 = vmatpush.msra.mxu0 0.0
        %4665 = vmatpush.msra.mxu0 0.0
        %4666 = vmatpush.msra.mxu0 0.0
        %4667 = vmatpush.msra.mxu0 0.0
        %4668 = vmatpush.msra.mxu0 0.0
        %4669 = vmatpush.msra.mxu0 0.0
        %4670 = vmatpush.msra.mxu0 %v3954
        %4671 = vmatpush.msra.mxu0 %v3953
        %4672 = vmatmul.f32.gmra.mxu0 %v4651
        %v4673 = vpop.f32.mrf.mxu0
        %v4674 = vadd.f32 0.0, %v4673
        %4675 = vmatmul.f32.gmra.mxu0 %v4654
        %v4676 = vpop.f32.mrf.mxu0
        %v4677 = vadd.f32 0.0, %v4676
        %4678 = vdwg.mxu0
        %v4680 = vsel %vm1884, %v4587, 0
        %v4683 = vsel %vm1884, %v4590, 0
        %4685 = vmatpush.msra.mxu0 0.0
        %4686 = vmatpush.msra.mxu0 0.0
        %4687 = vmatpush.msra.mxu0 0.0
        %4688 = vmatpush.msra.mxu0 0.0
        %4689 = vmatpush.msra.mxu0 0.0
        %4690 = vmatpush.msra.mxu0 0.0
        %4691 = vmatpush.msra.mxu0 0.0
        %4692 = vmatpush.msra.mxu0 0.0
        %4693 = vmatpush.msra.mxu0 0.0
        %4694 = vmatpush.msra.mxu0 0.0
        %4695 = vmatpush.msra.mxu0 0.0
        %4696 = vmatpush.msra.mxu0 0.0
        %4697 = vmatpush.msra.mxu0 0.0
        %4698 = vmatpush.msra.mxu0 0.0
        %4699 = vmatpush.msra.mxu0 %v3956
        %4700 = vmatpush.msra.mxu0 %v3955
        %4701 = vmatmul.f32.gmra.mxu0 %v4680
        %v4702 = vpop.f32.mrf.mxu0
        %v4703 = vadd.f32 0.0, %v4702
        %4704 = vmatmul.f32.gmra.mxu0 %v4683
        %v4705 = vpop.f32.mrf.mxu0
        %v4706 = vadd.f32 0.0, %v4705
        %4707 = vdwg.mxu0
        %v4709 = vsel %vm1884, %v4616, 0
        %v4712 = vsel %vm1884, %v4619, 0
        %4714 = vmatpush.msra.mxu0 0.0
        %4715 = vmatpush.msra.mxu0 0.0
        %4716 = vmatpush.msra.mxu0 0.0
        %4717 = vmatpush.msra.mxu0 0.0
        %4718 = vmatpush.msra.mxu0 0.0
        %4719 = vmatpush.msra.mxu0 0.0
        %4720 = vmatpush.msra.mxu0 0.0
        %4721 = vmatpush.msra.mxu0 0.0
        %4722 = vmatpush.msra.mxu0 0.0
        %4723 = vmatpush.msra.mxu0 0.0
        %4724 = vmatpush.msra.mxu0 0.0
        %4725 = vmatpush.msra.mxu0 0.0
        %4726 = vmatpush.msra.mxu0 0.0
        %4727 = vmatpush.msra.mxu0 0.0
        %4728 = vmatpush.msra.mxu0 %v3958
        %4729 = vmatpush.msra.mxu0 %v3957
        %4730 = vmatmul.f32.gmra.mxu0 %v4709
        %v4731 = vpop.f32.mrf.mxu0
        %v4732 = vadd.f32 0.0, %v4731
        %4733 = vmatmul.f32.gmra.mxu0 %v4712
        %v4734 = vpop.f32.mrf.mxu0
        %v4735 = vadd.f32 0.0, %v4734
        %4736 = vdwg.mxu0
        %v4738 = vsel %vm1884, %v4645, 0
        %v4741 = vsel %vm1884, %v4648, 0
        %4743 = vmatpush.msra.mxu0 0.0
        %4744 = vmatpush.msra.mxu0 0.0
        %4745 = vmatpush.msra.mxu0 0.0
        %4746 = vmatpush.msra.mxu0 0.0
        %4747 = vmatpush.msra.mxu0 0.0
        %4748 = vmatpush.msra.mxu0 0.0
        %4749 = vmatpush.msra.mxu0 0.0
        %4750 = vmatpush.msra.mxu0 0.0
        %4751 = vmatpush.msra.mxu0 0.0
        %4752 = vmatpush.msra.mxu0 0.0
        %4753 = vmatpush.msra.mxu0 0.0
        %4754 = vmatpush.msra.mxu0 0.0
        %4755 = vmatpush.msra.mxu0 0.0
        %4756 = vmatpush.msra.mxu0 0.0
        %4757 = vmatpush.msra.mxu0 %v3960
        %4758 = vmatpush.msra.mxu0 %v3959
        %4759 = vmatmul.f32.gmra.mxu0 %v4738
        %v4760 = vpop.f32.mrf.mxu0
        %v4761 = vadd.f32 0.0, %v4760
        %4762 = vmatmul.f32.gmra.mxu0 %v4741
        %v4763 = vpop.f32.mrf.mxu0
        %v4764 = vadd.f32 0.0, %v4763
        %4765 = vdwg.mxu0
        %v4766 = vsel %vm1710, %v4674, 0.0
        %v4767 = vsel %vm1710, %v4703, 0.0
        %v4768 = vadd.f32 %v4766, %v4767
        %v4769 = vsel %vm1710, %v4732, 0.0
        %v4770 = vadd.f32 %v4768, %v4769
        %v4771 = vsel %vm1710, %v4761, 0.0
        %v4772 = vadd.f32 %v4770, %v4771
        %v4773 = vsel %vm1710, %v4677, 0.0
        %v4774 = vsel %vm1710, %v4706, 0.0
        %v4775 = vadd.f32 %v4773, %v4774
        %v4776 = vsel %vm1710, %v4735, 0.0
        %v4777 = vadd.f32 %v4775, %v4776
        %v4778 = vsel %vm1710, %v4764, 0.0
        %v4779 = vadd.f32 %v4777, %v4778
        %v4781 = vperm.slane %v3961, 0
        %v4783 = vadd.f32 %v4772, %v4781
        %v4784 = vadd.f32 %v4779, %v4781
        %v4785 = vadd.f32 %v4783, %v3853
        %v4786 = vadd.f32 %v4784, %v3854
        %v4787 = vld [vmem:[%s77] sm:$0x1]
        %v4788 = vld [vmem:[%s79] sm:$0x1]
        %v4789 = vld [vmem:[%s81] sm:$0xff]
        %v4790 = vld [vmem:[%s81 + $0x8] sm:$0xff]
        %v4791 = vld [vmem:[%s81 + $0x10] sm:$0xff]
        %v4792 = vld [vmem:[%s81 + $0x18] sm:$0xff]
        %v4793 = vld [vmem:[%s81 + $0x20] sm:$0xff]
        %v4794 = vld [vmem:[%s81 + $0x28] sm:$0xff]
        %v4795 = vld [vmem:[%s81 + $0x30] sm:$0xff]
        %v4796 = vld [vmem:[%s81 + $0x38] sm:$0xff]
        %v4797 = vld [vmem:[%s81 + $0x40] sm:$0xff]
        %v4798 = vld [vmem:[%s81 + $0x48] sm:$0xff]
        %v4799 = vld [vmem:[%s81 + $0x50] sm:$0xff]
        %v4800 = vld [vmem:[%s81 + $0x58] sm:$0xff]
        %v4801 = vld [vmem:[%s81 + $0x60] sm:$0xff]
        %v4802 = vld [vmem:[%s81 + $0x68] sm:$0xff]
        %v4803 = vld [vmem:[%s81 + $0x70] sm:$0xff]
        %v4804 = vld [vmem:[%s81 + $0x78] sm:$0xff]
        %v4805 = vld [vmem:[%s81 + $0x80] sm:$0xff]
        %v4806 = vld [vmem:[%s81 + $0x88] sm:$0xff]
        %v4807 = vld [vmem:[%s81 + $0x90] sm:$0xff]
        %v4808 = vld [vmem:[%s81 + $0x98] sm:$0xff]
        %v4809 = vld [vmem:[%s81 + $0xa0] sm:$0xff]
        %v4810 = vld [vmem:[%s81 + $0xa8] sm:$0xff]
        %v4811 = vld [vmem:[%s81 + $0xb0] sm:$0xff]
        %v4812 = vld [vmem:[%s81 + $0xb8] sm:$0xff]
        %v4813 = vld [vmem:[%s81 + $0xc0] sm:$0xff]
        %v4814 = vld [vmem:[%s81 + $0xc8] sm:$0xff]
        %v4815 = vld [vmem:[%s81 + $0xd0] sm:$0xff]
        %v4816 = vld [vmem:[%s81 + $0xd8] sm:$0xff]
        %v4817 = vld [vmem:[%s81 + $0xe0] sm:$0xff]
        %v4818 = vld [vmem:[%s81 + $0xe8] sm:$0xff]
        %v4819 = vld [vmem:[%s81 + $0xf0] sm:$0xff]
        %v4820 = vld [vmem:[%s81 + $0xf8] sm:$0xff]
        %v4821 = vld [vmem:[%s83] sm:$0xf]
        %v4822 = vld [vmem:[%s85] sm:$0xff]
        %v4823 = vld [vmem:[%s85 + $0x8] sm:$0xff]
        %v4824 = vld [vmem:[%s85 + $0x10] sm:$0xff]
        %v4825 = vld [vmem:[%s85 + $0x18] sm:$0xff]
        %v4826 = vld [vmem:[%s85 + $0x20] sm:$0xff]
        %v4827 = vld [vmem:[%s85 + $0x28] sm:$0xff]
        %v4828 = vld [vmem:[%s85 + $0x30] sm:$0xff]
        %v4829 = vld [vmem:[%s85 + $0x38] sm:$0xff]
        %v4830 = vld [vmem:[%s85 + $0x40] sm:$0xff]
        %v4831 = vld [vmem:[%s85 + $0x48] sm:$0xff]
        %v4832 = vld [vmem:[%s85 + $0x50] sm:$0xff]
        %v4833 = vld [vmem:[%s85 + $0x58] sm:$0xff]
        %v4834 = vld [vmem:[%s85 + $0x60] sm:$0xff]
        %v4835 = vld [vmem:[%s85 + $0x68] sm:$0xff]
        %v4836 = vld [vmem:[%s85 + $0x70] sm:$0xff]
        %v4837 = vld [vmem:[%s85 + $0x78] sm:$0xff]
        %v4838 = vld [vmem:[%s85 + $0x80] sm:$0xff]
        %v4839 = vld [vmem:[%s85 + $0x88] sm:$0xff]
        %v4840 = vld [vmem:[%s85 + $0x90] sm:$0xff]
        %v4841 = vld [vmem:[%s85 + $0x98] sm:$0xff]
        %v4842 = vld [vmem:[%s85 + $0xa0] sm:$0xff]
        %v4843 = vld [vmem:[%s85 + $0xa8] sm:$0xff]
        %v4844 = vld [vmem:[%s85 + $0xb0] sm:$0xff]
        %v4845 = vld [vmem:[%s85 + $0xb8] sm:$0xff]
        %v4846 = vld [vmem:[%s85 + $0xc0] sm:$0xff]
        %v4847 = vld [vmem:[%s85 + $0xc8] sm:$0xff]
        %v4848 = vld [vmem:[%s85 + $0xd0] sm:$0xff]
        %v4849 = vld [vmem:[%s85 + $0xd8] sm:$0xff]
        %v4850 = vld [vmem:[%s85 + $0xe0] sm:$0xff]
        %v4851 = vld [vmem:[%s85 + $0xe8] sm:$0xff]
        %v4852 = vld [vmem:[%s85 + $0xf0] sm:$0xff]
        %v4853 = vld [vmem:[%s85 + $0xf8] sm:$0xff]
        %v4854 = vld [vmem:[%s87] sm:$0x1]
        %v4855 = vsel %vm1710, %v4785, 0.0
        %4856 = vadd.xlane.f32.xlu0 %v4855
        %v4857 = vpop.xlane.xlu0 %4856
        %v4858 = vsel %vm1710, %v4786, 0.0
        %4859 = vadd.xlane.f32.xlu0 %v4858
        %v4860 = vpop.xlane.xlu0 %4859
        %v4861 = vmul.f32 %v4857, %v1723
        %v4862 = vmul.f32 %v4860, %v1723
        %v4863 = vsub.f32 %v4785, %v4861
        %v4864 = vsub.f32 %v4786, %v4862
        %v4865 = vmul.f32 %v4863, %v4863
        %v4866 = vmul.f32 %v4864, %v4864
        %v4867 = vsel %vm1710, %v4865, 0.0
        %4868 = vadd.xlane.f32.xlu0 %v4867
        %v4869 = vpop.xlane.xlu0 %4868
        %v4870 = vsel %vm1710, %v4866, 0.0
        %4871 = vadd.xlane.f32.xlu0 %v4870
        %v4872 = vpop.xlane.xlu0 %4871
        %v4873 = vmul.f32 %v4869, %v1723
        %v4874 = vmul.f32 %v4872, %v1723
        %v4875 = vadd.f32 %v4873, 1e-05
        %v4876 = vadd.f32 %v4874, 1e-05
        %v4877 = vrsqrt.pop %v4875
        %v4878 = vmul.f32 %v4877, %v4875
        %v4879 = vmul.f32 %v4878, %v4877
        %v4880 = vmul.f32 0.5, %v4879
        %v4881 = vsub.f32 1.5, %v4880
        %v4882 = vmul.f32 %v4877, %v4881
        %vm4883 = vweird.f32 %v4875
        %vm4884 = vweird.f32 %v4877
        %vm4885 = vmor %vm4883, %vm4884
        %v4886 = vsel %vm4885, %v4877, %v4882
        %v4887 = vrsqrt.pop %v4876
        %v4888 = vmul.f32 %v4887, %v4876
        %v4889 = vmul.f32 %v4888, %v4887
        %v4890 = vmul.f32 0.5, %v4889
        %v4891 = vsub.f32 1.5, %v4890
        %v4892 = vmul.f32 %v4887, %v4891
        %vm4893 = vweird.f32 %v4876
        %vm4894 = vweird.f32 %v4887
        %vm4895 = vmor %vm4893, %vm4894
        %v4896 = vsel %vm4895, %v4887, %v4892
        %v4897 = vmul.f32 %v4863, %v4886
        %v4898 = vmul.f32 %v4864, %v4896
        %v4900 = vperm.slane %v4787, 0
        %v4902 = vmul.f32 %v4897, %v4900
        %v4903 = vmul.f32 %v4898, %v4900
        %v4905 = vperm.slane %v4788, 0
        %v4907 = vadd.f32 %v4902, %v4905
        %v4908 = vadd.f32 %v4903, %v4905
        %v4910 = vperm.slane %v4821, 0
        %v4911 = vperm.slane %v4821, 1
        %v4912 = vperm.slane %v4821, 2
        %v4913 = vperm.slane %v4821, 3
        %v4919 = vsel %vm1710, %v4907, 0
        %v4922 = vsel %vm1710, %v4908, 0
        %4924 = vmatpush.msra.mxu0 0.0
        %4925 = vmatpush.msra.mxu0 0.0
        %4926 = vmatpush.msra.mxu0 0.0
        %4927 = vmatpush.msra.mxu0 0.0
        %4928 = vmatpush.msra.mxu0 0.0
        %4929 = vmatpush.msra.mxu0 0.0
        %4930 = vmatpush.msra.mxu0 0.0
        %4931 = vmatpush.msra.mxu0 0.0
        %4932 = vmatpush.msra.mxu0 %v4817
        %4933 = vmatpush.msra.mxu0 %v4813
        %4934 = vmatpush.msra.mxu0 %v4809
        %4935 = vmatpush.msra.mxu0 %v4805
        %4936 = vmatpush.msra.mxu0 %v4801
        %4937 = vmatpush.msra.mxu0 %v4797
        %4938 = vmatpush.msra.mxu0 %v4793
        %4939 = vmatpush.msra.mxu0 %v4789
        %4940 = vmatmul.f32.gmra.mxu0 %v4919
        %v4941 = vpop.f32.mrf.mxu0
        %v4942 = vadd.f32 %v4910, %v4941
        %4943 = vmatmul.f32.gmra.mxu0 %v4922
        %v4944 = vpop.f32.mrf.mxu0
        %v4945 = vadd.f32 %v4910, %v4944
        %4946 = vdwg.mxu0
        %4947 = vmatpush.msra.mxu0 0.0
        %4948 = vmatpush.msra.mxu0 0.0
        %4949 = vmatpush.msra.mxu0 0.0
        %4950 = vmatpush.msra.mxu0 0.0
        %4951 = vmatpush.msra.mxu0 0.0
        %4952 = vmatpush.msra.mxu0 0.0
        %4953 = vmatpush.msra.mxu0 0.0
        %4954 = vmatpush.msra.mxu0 0.0
        %4955 = vmatpush.msra.mxu0 %v4818
        %4956 = vmatpush.msra.mxu0 %v4814
        %4957 = vmatpush.msra.mxu0 %v4810
        %4958 = vmatpush.msra.mxu0 %v4806
        %4959 = vmatpush.msra.mxu0 %v4802
        %4960 = vmatpush.msra.mxu0 %v4798
        %4961 = vmatpush.msra.mxu0 %v4794
        %4962 = vmatpush.msra.mxu0 %v4790
        %4963 = vmatmul.f32.gmra.mxu0 %v4919
        %v4964 = vpop.f32.mrf.mxu0
        %v4965 = vadd.f32 %v4911, %v4964
        %4966 = vmatmul.f32.gmra.mxu0 %v4922
        %v4967 = vpop.f32.mrf.mxu0
        %v4968 = vadd.f32 %v4911, %v4967
        %4969 = vdwg.mxu0
        %4970 = vmatpush.msra.mxu0 0.0
        %4971 = vmatpush.msra.mxu0 0.0
        %4972 = vmatpush.msra.mxu0 0.0
        %4973 = vmatpush.msra.mxu0 0.0
        %4974 = vmatpush.msra.mxu0 0.0
        %4975 = vmatpush.msra.mxu0 0.0
        %4976 = vmatpush.msra.mxu0 0.0
        %4977 = vmatpush.msra.mxu0 0.0
        %4978 = vmatpush.msra.mxu0 %v4819
        %4979 = vmatpush.msra.mxu0 %v4815
        %4980 = vmatpush.msra.mxu0 %v4811
        %4981 = vmatpush.msra.mxu0 %v4807
        %4982 = vmatpush.msra.mxu0 %v4803
        %4983 = vmatpush.msra.mxu0 %v4799
        %4984 = vmatpush.msra.mxu0 %v4795
        %4985 = vmatpush.msra.mxu0 %v4791
        %4986 = vmatmul.f32.gmra.mxu0 %v4919
        %v4987 = vpop.f32.mrf.mxu0
        %v4988 = vadd.f32 %v4912, %v4987
        %4989 = vmatmul.f32.gmra.mxu0 %v4922
        %v4990 = vpop.f32.mrf.mxu0
        %v4991 = vadd.f32 %v4912, %v4990
        %4992 = vdwg.mxu0
        %4993 = vmatpush.msra.mxu0 0.0
        %4994 = vmatpush.msra.mxu0 0.0
        %4995 = vmatpush.msra.mxu0 0.0
        %4996 = vmatpush.msra.mxu0 0.0
        %4997 = vmatpush.msra.mxu0 0.0
        %4998 = vmatpush.msra.mxu0 0.0
        %4999 = vmatpush.msra.mxu0 0.0
        %5000 = vmatpush.msra.mxu0 0.0
        %5001 = vmatpush.msra.mxu0 %v4820
        %5002 = vmatpush.msra.mxu0 %v4816
        %5003 = vmatpush.msra.mxu0 %v4812
        %5004 = vmatpush.msra.mxu0 %v4808
        %5005 = vmatpush.msra.mxu0 %v4804
        %5006 = vmatpush.msra.mxu0 %v4800
        %5007 = vmatpush.msra.mxu0 %v4796
        %5008 = vmatpush.msra.mxu0 %v4792
        %5009 = vmatmul.f32.gmra.mxu0 %v4919
        %v5010 = vpop.f32.mrf.mxu0
        %v5011 = vadd.f32 %v4913, %v5010
        %5012 = vmatmul.f32.gmra.mxu0 %v4922
        %v5013 = vpop.f32.mrf.mxu0
        %v5014 = vadd.f32 %v4913, %v5013
        %5015 = vdwg.mxu0
        %v5016 = vmul.f32 %v4988, 0.5
        %v5017 = vmul.f32 %v5011, 0.5
        %v5018 = vmul.f32 %v4991, 0.5
        %v5019 = vmul.f32 %v5014, 0.5
        %v5020 = vmul.f32 %v4988, 0.70710677
        %v5021 = vmul.f32 %v5011, 0.70710677
        %v5022 = vmul.f32 %v4991, 0.70710677
        %v5023 = vmul.f32 %v5014, 0.70710677
        %v5024 = vmul.f32 %v5020, %v5020
        %v5025 = vmin.f32 16.0, %v5024
        %v5026 = vmul.f32 %v5025, 2.1237322e-06
        %v5027 = vadd.f32 %v5026, 0.00028619796
        %v5028 = vmul.f32 %v5025, %v5027
        %v5029 = vadd.f32 %v5028, 0.0036580483
        %v5030 = vmul.f32 %v5025, %v5029
        %v5031 = vadd.f32 %v5030, 0.05243302
        %v5032 = vmul.f32 %v5025, %v5031
        %v5033 = vadd.f32 %v5032, 0.18741608
        %v5034 = vmul.f32 %v5025, %v5033
        %v5035 = vadd.f32 %v5034, 1.1283791
        %v5036 = vmul.f32 %v5020, %v5035
        %v5037 = vmul.f32 %v5025, 3.8918573e-05
        %v5038 = vadd.f32 %v5037, 0.001143296
        %v5039 = vmul.f32 %v5025, %v5038
        %v5040 = vadd.f32 %v5039, 0.014752088
        %v5041 = vmul.f32 %v5025, %v5040
        %v5042 = vadd.f32 %v5041, 0.112945676
        %v5043 = vmul.f32 %v5025, %v5042
        %v5044 = vadd.f32 %v5043, 0.4994258
        %v5045 = vmul.f32 %v5025, %v5044
        %v5046 = vadd.f32 %v5045, 1.0
        %v5047 = vrcp.pop %v5046
        %v5048 = vmul.f32 %v5046, %v5047
        %v5049 = vsub.f32 1.0, %v5048
        %v5050 = vmul.f32 %v5047, %v5049
        %v5051 = vadd.f32 %v5047, %v5050
        %vm5052 = vweird.f32 %v5046
        %vm5053 = vweird.f32 %v5047
        %vm5054 = vmor %vm5052, %vm5053
        %v5055 = vsel %vm5054, %v5047, %v5051
        %v5056 = vand.u32 2147483647, %v5046
        %vm5057 = vcmp.eq.f32.partialorder %v5056, 8.507059e+37
        %v5058 = vand.u32 %v5046, 2147483648
        %v5059 = vor.u32 1.1754944e-38, %v5058
        %v5060 = vsel %vm5057, %v5059, %v5055
        %v5061 = vmul.f32 %v5036, %v5060
        %v5062 = vmin.f32 %v5061, 1.0
        %v5063 = vmax.f32 %v5062, -1.0
        %v5064 = vmul.f32 %v5021, %v5021
        %v5065 = vmin.f32 16.0, %v5064
        %v5066 = vmul.f32 %v5065, 2.1237322e-06
        %v5067 = vadd.f32 %v5066, 0.00028619796
        %v5068 = vmul.f32 %v5065, %v5067
        %v5069 = vadd.f32 %v5068, 0.0036580483
        %v5070 = vmul.f32 %v5065, %v5069
        %v5071 = vadd.f32 %v5070, 0.05243302
        %v5072 = vmul.f32 %v5065, %v5071
        %v5073 = vadd.f32 %v5072, 0.18741608
        %v5074 = vmul.f32 %v5065, %v5073
        %v5075 = vadd.f32 %v5074, 1.1283791
        %v5076 = vmul.f32 %v5021, %v5075
        %v5077 = vmul.f32 %v5065, 3.8918573e-05
        %v5078 = vadd.f32 %v5077, 0.001143296
        %v5079 = vmul.f32 %v5065, %v5078
        %v5080 = vadd.f32 %v5079, 0.014752088
        %v5081 = vmul.f32 %v5065, %v5080
        %v5082 = vadd.f32 %v5081, 0.112945676
        %v5083 = vmul.f32 %v5065, %v5082
        %v5084 = vadd.f32 %v5083, 0.4994258
        %v5085 = vmul.f32 %v5065, %v5084
        %v5086 = vadd.f32 %v5085, 1.0
        %v5087 = vrcp.pop %v5086
        %v5088 = vmul.f32 %v5086, %v5087
        %v5089 = vsub.f32 1.0, %v5088
        %v5090 = vmul.f32 %v5087, %v5089
        %v5091 = vadd.f32 %v5087, %v5090
        %vm5092 = vweird.f32 %v5086
        %vm5093 = vweird.f32 %v5087
        %vm5094 = vmor %vm5092, %vm5093
        %v5095 = vsel %vm5094, %v5087, %v5091
        %v5096 = vand.u32 2147483647, %v5086
        %vm5097 = vcmp.eq.f32.partialorder %v5096, 8.507059e+37
        %v5098 = vand.u32 %v5086, 2147483648
        %v5099 = vor.u32 1.1754944e-38, %v5098
        %v5100 = vsel %vm5097, %v5099, %v5095
        %v5101 = vmul.f32 %v5076, %v5100
        %v5102 = vmin.f32 %v5101, 1.0
        %v5103 = vmax.f32 %v5102, -1.0
        %v5104 = vmul.f32 %v5022, %v5022
        %v5105 = vmin.f32 16.0, %v5104
        %v5106 = vmul.f32 %v5105, 2.1237322e-06
        %v5107 = vadd.f32 %v5106, 0.00028619796
        %v5108 = vmul.f32 %v5105, %v5107
        %v5109 = vadd.f32 %v5108, 0.0036580483
        %v5110 = vmul.f32 %v5105, %v5109
        %v5111 = vadd.f32 %v5110, 0.05243302
        %v5112 = vmul.f32 %v5105, %v5111
        %v5113 = vadd.f32 %v5112, 0.18741608
        %v5114 = vmul.f32 %v5105, %v5113
        %v5115 = vadd.f32 %v5114, 1.1283791
        %v5116 = vmul.f32 %v5022, %v5115
        %v5117 = vmul.f32 %v5105, 3.8918573e-05
        %v5118 = vadd.f32 %v5117, 0.001143296
        %v5119 = vmul.f32 %v5105, %v5118
        %v5120 = vadd.f32 %v5119, 0.014752088
        %v5121 = vmul.f32 %v5105, %v5120
        %v5122 = vadd.f32 %v5121, 0.112945676
        %v5123 = vmul.f32 %v5105, %v5122
        %v5124 = vadd.f32 %v5123, 0.4994258
        %v5125 = vmul.f32 %v5105, %v5124
        %v5126 = vadd.f32 %v5125, 1.0
        %v5127 = vrcp.pop %v5126
        %v5128 = vmul.f32 %v5126, %v5127
        %v5129 = vsub.f32 1.0, %v5128
        %v5130 = vmul.f32 %v5127, %v5129
        %v5131 = vadd.f32 %v5127, %v5130
        %vm5132 = vweird.f32 %v5126
        %vm5133 = vweird.f32 %v5127
        %vm5134 = vmor %vm5132, %vm5133
        %v5135 = vsel %vm5134, %v5127, %v5131
        %v5136 = vand.u32 2147483647, %v5126
        %vm5137 = vcmp.eq.f32.partialorder %v5136, 8.507059e+37
        %v5138 = vand.u32 %v5126, 2147483648
        %v5139 = vor.u32 1.1754944e-38, %v5138
        %v5140 = vsel %vm5137, %v5139, %v5135
        %v5141 = vmul.f32 %v5116, %v5140
        %v5142 = vmin.f32 %v5141, 1.0
        %v5143 = vmax.f32 %v5142, -1.0
        %v5144 = vmul.f32 %v5023, %v5023
        %v5145 = vmin.f32 16.0, %v5144
        %v5146 = vmul.f32 %v5145, 2.1237322e-06
        %v5147 = vadd.f32 %v5146, 0.00028619796
        %v5148 = vmul.f32 %v5145, %v5147
        %v5149 = vadd.f32 %v5148, 0.0036580483
        %v5150 = vmul.f32 %v5145, %v5149
        %v5151 = vadd.f32 %v5150, 0.05243302
        %v5152 = vmul.f32 %v5145, %v5151
        %v5153 = vadd.f32 %v5152, 0.18741608
        %v5154 = vmul.f32 %v5145, %v5153
        %v5155 = vadd.f32 %v5154, 1.1283791
        %v5156 = vmul.f32 %v5023, %v5155
        %v5157 = vmul.f32 %v5145, 3.8918573e-05
        %v5158 = vadd.f32 %v5157, 0.001143296
        %v5159 = vmul.f32 %v5145, %v5158
        %v5160 = vadd.f32 %v5159, 0.014752088
        %v5161 = vmul.f32 %v5145, %v5160
        %v5162 = vadd.f32 %v5161, 0.112945676
        %v5163 = vmul.f32 %v5145, %v5162
        %v5164 = vadd.f32 %v5163, 0.4994258
        %v5165 = vmul.f32 %v5145, %v5164
        %v5166 = vadd.f32 %v5165, 1.0
        %v5167 = vrcp.pop %v5166
        %v5168 = vmul.f32 %v5166, %v5167
        %v5169 = vsub.f32 1.0, %v5168
        %v5170 = vmul.f32 %v5167, %v5169
        %v5171 = vadd.f32 %v5167, %v5170
        %vm5172 = vweird.f32 %v5166
        %vm5173 = vweird.f32 %v5167
        %vm5174 = vmor %vm5172, %vm5173
        %v5175 = vsel %vm5174, %v5167, %v5171
        %v5176 = vand.u32 2147483647, %v5166
        %vm5177 = vcmp.eq.f32.partialorder %v5176, 8.507059e+37
        %v5178 = vand.u32 %v5166, 2147483648
        %v5179 = vor.u32 1.1754944e-38, %v5178
        %v5180 = vsel %vm5177, %v5179, %v5175
        %v5181 = vmul.f32 %v5156, %v5180
        %v5182 = vmin.f32 %v5181, 1.0
        %v5183 = vmax.f32 %v5182, -1.0
        %v5184 = vadd.f32 %v5063, 1.0
        %v5185 = vadd.f32 %v5103, 1.0
        %v5186 = vadd.f32 %v5143, 1.0
        %v5187 = vadd.f32 %v5183, 1.0
        %v5188 = vmul.f32 %v5016, %v5184
        %v5189 = vmul.f32 %v5017, %v5185
        %v5190 = vmul.f32 %v5018, %v5186
        %v5191 = vmul.f32 %v5019, %v5187
        %v5192 = vmul.f32 %v4942, %v5188
        %v5193 = vmul.f32 %v4965, %v5189
        %v5194 = vmul.f32 %v4945, %v5190
        %v5195 = vmul.f32 %v4968, %v5191
        %v5197 = vperm.slane %v4854, 0
        %5199 = vmatpush.msra.mxu0 %v4837
        %5200 = vmatpush.msra.mxu0 %v4836
        %5201 = vmatpush.msra.mxu0 %v4835
        %5202 = vmatpush.msra.mxu0 %v4834
        %5203 = vmatpush.msra.mxu0 %v4833
        %5204 = vmatpush.msra.mxu0 %v4832
        %5205 = vmatpush.msra.mxu0 %v4831
        %5206 = vmatpush.msra.mxu0 %v4830
        %5207 = vmatpush.msra.mxu0 %v4829
        %5208 = vmatpush.msra.mxu0 %v4828
        %5209 = vmatpush.msra.mxu0 %v4827
        %5210 = vmatpush.msra.mxu0 %v4826
        %5211 = vmatpush.msra.mxu0 %v4825
        %5212 = vmatpush.msra.mxu0 %v4824
        %5213 = vmatpush.msra.mxu0 %v4823
        %5214 = vmatpush.msra.mxu0 %v4822
        %5215 = vmatmul.f32.gmra.mxu0 %v5192
        %v5216 = vpop.f32.mrf.mxu0
        %v5217 = vadd.f32 %v5197, %v5216
        %5218 = vmatmul.f32.gmra.mxu0 %v5194
        %v5219 = vpop.f32.mrf.mxu0
        %v5220 = vadd.f32 %v5197, %v5219
        %5221 = vdwg.mxu0
        %5222 = vmatpush.msra.mxu0 %v4853
        %5223 = vmatpush.msra.mxu0 %v4852
        %5224 = vmatpush.msra.mxu0 %v4851
        %5225 = vmatpush.msra.mxu0 %v4850
        %5226 = vmatpush.msra.mxu0 %v4849
        %5227 = vmatpush.msra.mxu0 %v4848
        %5228 = vmatpush.msra.mxu0 %v4847
        %5229 = vmatpush.msra.mxu0 %v4846
        %5230 = vmatpush.msra.mxu0 %v4845
        %5231 = vmatpush.msra.mxu0 %v4844
        %5232 = vmatpush.msra.mxu0 %v4843
        %5233 = vmatpush.msra.mxu0 %v4842
        %5234 = vmatpush.msra.mxu0 %v4841
        %5235 = vmatpush.msra.mxu0 %v4840
        %5236 = vmatpush.msra.mxu0 %v4839
        %5237 = vmatpush.msra.mxu0 %v4838
        %5238 = vmatmul.f32.gmra.mxu0 %v5193
        %v5239 = vpop.f32.mrf.mxu0
        %v5240 = vadd.f32 %v5217, %v5239
        %5241 = vmatmul.f32.gmra.mxu0 %v5195
        %v5242 = vpop.f32.mrf.mxu0
        %v5243 = vadd.f32 %v5220, %v5242
        %5244 = vdwg.mxu0
        %v5245 = vadd.f32 %v5240, %v4785
        %v5246 = vadd.f32 %v5243, %v4786
        %v5247 = vld [vmem:[%s89] sm:$0x1]
        %v5248 = vld [vmem:[%s91] sm:$0x1]
        %v5249 = vld [vmem:[#allocation2] sm:$0x1]
        %v5250 = vld [vmem:[#allocation5] sm:$0x1]
        %v5251 = vld [vmem:[%s97] sm:$0xff]
        %v5252 = vld [vmem:[%s97 + $0x8] sm:$0xff]
        %v5253 = vld [vmem:[%s97 + $0x10] sm:$0xff]
        %v5254 = vld [vmem:[%s97 + $0x18] sm:$0xff]
        %v5255 = vld [vmem:[%s99] sm:$0xff]
        %v5256 = vld [vmem:[%s99 + $0x8] sm:$0xff]
        %v5257 = vld [vmem:[%s99 + $0x10] sm:$0xff]
        %v5258 = vld [vmem:[%s99 + $0x18] sm:$0xff]
        %v5259 = vld [vmem:[%s99 + $0x20] sm:$0xff]
        %v5260 = vld [vmem:[%s99 + $0x28] sm:$0xff]
        %v5261 = vld [vmem:[%s99 + $0x30] sm:$0xff]
        %v5262 = vld [vmem:[%s99 + $0x38] sm:$0xff]
        %v5263 = vld [vmem:[%s101] sm:$0xff]
        %v5264 = vld [vmem:[%s101 + $0x8] sm:$0xff]
        %v5265 = vld [vmem:[%s101 + $0x10] sm:$0xff]
        %v5266 = vld [vmem:[%s101 + $0x18] sm:$0xff]
        %v5267 = vld [vmem:[%s101 + $0x20] sm:$0xff]
        %v5268 = vld [vmem:[%s101 + $0x28] sm:$0xff]
        %v5269 = vld [vmem:[%s101 + $0x30] sm:$0xff]
        %v5270 = vld [vmem:[%s101 + $0x38] sm:$0xff]
        %v5271 = vld [vmem:[%s103] sm:$0xff]
        %v5272 = vld [vmem:[%s103 + $0x8] sm:$0xff]
        %v5273 = vld [vmem:[#allocation7] sm:$0x1]
        %v5274 = vld [vmem:[%s5] sm:$0x1]
        %vm5275 = vcmask 253952
        %v5276 = vsel %vm5275, %v5274, 0.0
        %5277 = vadd.xlane.f32.xlu0 %v5276
        %v5278 = vpop.xlane.xlu0 %5277
        %v5279 = vmul.f32 %v5278, %v1782
        %v5280 = vsub.f32 %v5274, %v5279
        %v5281 = vmul.f32 %v5280, %v5280
        %v5282 = vsel %vm5275, %v5281, 0.0
        %5283 = vadd.xlane.f32.xlu0 %v5282
        %v5284 = vpop.xlane.xlu0 %5283
        %v5285 = vmul.f32 %v5284, %v1782
        %v5286 = vadd.f32 %v5285, 1e-05
        %v5287 = vrsqrt.pop %v5286
        %v5288 = vmul.f32 %v5287, %v5286
        %v5289 = vmul.f32 %v5288, %v5287
        %v5290 = vmul.f32 0.5, %v5289
        %v5291 = vsub.f32 1.5, %v5290
        %v5292 = vmul.f32 %v5287, %v5291
        %vm5293 = vweird.f32 %v5286
        %vm5294 = vweird.f32 %v5287
        %vm5295 = vmor %vm5293, %vm5294
        %v5296 = vsel %vm5295, %v5287, %v5292
        %v5297 = vmul.f32 %v5280, %v5296
        %v5298 = vmul.f32 %v5297, %v5247
        %v5299 = vadd.f32 %v5298, %v5248
        %v5300 = vsel %vm1710, %v5245, 0.0
        %5301 = vadd.xlane.f32.xlu0 %v5300
        %v5302 = vpop.xlane.xlu0 %5301
        %v5303 = vsel %vm1710, %v5246, 0.0
        %5304 = vadd.xlane.f32.xlu0 %v5303
        %v5305 = vpop.xlane.xlu0 %5304
        %v5306 = vmul.f32 %v5302, %v1723
        %v5307 = vmul.f32 %v5305, %v1723
        %v5308 = vsub.f32 %v5245, %v5306
        %v5309 = vsub.f32 %v5246, %v5307
        %v5310 = vmul.f32 %v5308, %v5308
        %v5311 = vmul.f32 %v5309, %v5309
        %v5312 = vsel %vm1710, %v5310, 0.0
        %5313 = vadd.xlane.f32.xlu0 %v5312
        %v5314 = vpop.xlane.xlu0 %5313
        %v5315 = vsel %vm1710, %v5311, 0.0
        %5316 = vadd.xlane.f32.xlu0 %v5315
        %v5317 = vpop.xlane.xlu0 %5316
        %v5318 = vmul.f32 %v5314, %v1723
        %v5319 = vmul.f32 %v5317, %v1723
        %v5320 = vadd.f32 %v5318, 1e-05
        %v5321 = vadd.f32 %v5319, 1e-05
        %v5322 = vrsqrt.pop %v5320
        %v5323 = vmul.f32 %v5322, %v5320
        %v5324 = vmul.f32 %v5323, %v5322
        %v5325 = vmul.f32 0.5, %v5324
        %v5326 = vsub.f32 1.5, %v5325
        %v5327 = vmul.f32 %v5322, %v5326
        %vm5328 = vweird.f32 %v5320
        %vm5329 = vweird.f32 %v5322
        %vm5330 = vmor %vm5328, %vm5329
        %v5331 = vsel %vm5330, %v5322, %v5327
        %v5332 = vrsqrt.pop %v5321
        %v5333 = vmul.f32 %v5332, %v5321
        %v5334 = vmul.f32 %v5333, %v5332
        %v5335 = vmul.f32 0.5, %v5334
        %v5336 = vsub.f32 1.5, %v5335
        %v5337 = vmul.f32 %v5332, %v5336
        %vm5338 = vweird.f32 %v5321
        %vm5339 = vweird.f32 %v5332
        %vm5340 = vmor %vm5338, %vm5339
        %v5341 = vsel %vm5340, %v5332, %v5337
        %v5342 = vmul.f32 %v5308, %v5331
        %v5343 = vmul.f32 %v5309, %v5341
        %v5345 = vperm.slane %v5249, 0
        %v5347 = vmul.f32 %v5342, %v5345
        %v5348 = vmul.f32 %v5343, %v5345
        %v5350 = vperm.slane %v5250, 0
        %v5352 = vadd.f32 %v5347, %v5350
        %v5353 = vadd.f32 %v5348, %v5350
        %v5355 = vsel %vm1772, %v5299, 0
        %5357 = vmatpush.msra.mxu0 0.0
        %5358 = vmatpush.msra.mxu0 0.0
        %5359 = vmatpush.msra.mxu0 0.0
        %5360 = vmatpush.msra.mxu0 0.0
        %5361 = vmatpush.msra.mxu0 0.0
        %5362 = vmatpush.msra.mxu0 0.0
        %5363 = vmatpush.msra.mxu0 0.0
        %5364 = vmatpush.msra.mxu0 0.0
        %5365 = vmatpush.msra.mxu0 0.0
        %5366 = vmatpush.msra.mxu0 0.0
        %5367 = vmatpush.msra.mxu0 0.0
        %5368 = vmatpush.msra.mxu0 0.0
        %5369 = vmatpush.msra.mxu0 %v5254
        %5370 = vmatpush.msra.mxu0 %v5253
        %5371 = vmatpush.msra.mxu0 %v5252
        %5372 = vmatpush.msra.mxu0 %v5251
        %5373 = vmatmul.f32.gmra.mxu0 %v5355
        %v5374 = vpop.f32.mrf.mxu0
        %v5375 = vadd.f32 0.0, %v5374
        %5376 = vdwg.mxu0
        %v5377 = vmul.f32 %v5375, 0.25
        %v5379 = vsel %vm1710, %v5352, 0
        %v5382 = vsel %vm1710, %v5353, 0
        %5384 = vmatpush.msra.mxu0 0.0
        %5385 = vmatpush.msra.mxu0 0.0
        %5386 = vmatpush.msra.mxu0 0.0
        %5387 = vmatpush.msra.mxu0 0.0
        %5388 = vmatpush.msra.mxu0 0.0
        %5389 = vmatpush.msra.mxu0 0.0
        %5390 = vmatpush.msra.mxu0 0.0
        %5391 = vmatpush.msra.mxu0 0.0
        %5392 = vmatpush.msra.mxu0 %v5262
        %5393 = vmatpush.msra.mxu0 %v5261
        %5394 = vmatpush.msra.mxu0 %v5260
        %5395 = vmatpush.msra.mxu0 %v5259
        %5396 = vmatpush.msra.mxu0 %v5258
        %5397 = vmatpush.msra.mxu0 %v5257
        %5398 = vmatpush.msra.mxu0 %v5256
        %5399 = vmatpush.msra.mxu0 %v5255
        %5400 = vmatmul.f32.gmra.mxu0 %v5379
        %v5401 = vpop.f32.mrf.mxu0
        %v5402 = vadd.f32 0.0, %v5401
        %5403 = vmatmul.f32.gmra.mxu0 %v5382
        %v5404 = vpop.f32.mrf.mxu0
        %v5405 = vadd.f32 0.0, %v5404
        %5406 = vdwg.mxu0
        %5407 = vmatpush.msra.mxu0 0.0
        %5408 = vmatpush.msra.mxu0 0.0
        %5409 = vmatpush.msra.mxu0 0.0
        %5410 = vmatpush.msra.mxu0 0.0
        %5411 = vmatpush.msra.mxu0 0.0
        %5412 = vmatpush.msra.mxu0 0.0
        %5413 = vmatpush.msra.mxu0 0.0
        %5414 = vmatpush.msra.mxu0 0.0
        %5415 = vmatpush.msra.mxu0 %v5270
        %5416 = vmatpush.msra.mxu0 %v5269
        %5417 = vmatpush.msra.mxu0 %v5268
        %5418 = vmatpush.msra.mxu0 %v5267
        %5419 = vmatpush.msra.mxu0 %v5266
        %5420 = vmatpush.msra.mxu0 %v5265
        %5421 = vmatpush.msra.mxu0 %v5264
        %5422 = vmatpush.msra.mxu0 %v5263
        %5423 = vmatmul.f32.gmra.mxu0 %v5379
        %v5424 = vpop.f32.mrf.mxu0
        %v5425 = vadd.f32 0.0, %v5424
        %5426 = vmatmul.f32.gmra.mxu0 %v5382
        %v5427 = vpop.f32.mrf.mxu0
        %v5428 = vadd.f32 0.0, %v5427
        %5429 = vdwg.mxu0
        %v5431 = vsel %vm1884, %v5377, 0
        %v5434 = vsel %vm1884, %v5402, 0
        %v5437 = vsel %vm1884, %v5405, 0
        %5439 = vmatpush.xpose.msra.mxu0 0.0
        %5440 = vmatpush.xpose.msra.mxu0 0.0
        %5441 = vmatpush.xpose.msra.mxu0 0.0
        %5442 = vmatpush.xpose.msra.mxu0 0.0
        %5443 = vmatpush.xpose.msra.mxu0 0.0
        %5444 = vmatpush.xpose.msra.mxu0 0.0
        %5445 = vmatpush.xpose.msra.mxu0 0.0
        %5446 = vmatpush.xpose.msra.mxu0 0.0
        %5447 = vmatpush.xpose.msra.mxu0 0.0
        %5448 = vmatpush.xpose.msra.mxu0 0.0
        %5449 = vmatpush.xpose.msra.mxu0 0.0
        %5450 = vmatpush.xpose.msra.mxu0 0.0
        %5451 = vmatpush.xpose.msra.mxu0 0.0
        %5452 = vmatpush.xpose.msra.mxu0 0.0
        %5453 = vmatpush.xpose.msra.mxu0 %v5437
        %5454 = vmatpush.xpose.msra.mxu0 %v5434
        %5455 = vmatmul.f32.gmra.mxu0 %v5431
        %v5456 = vpop.f32.mrf.mxu0
        %v5457 = vadd.f32 0.0, %v5456
        %5458 = vdwg.mxu0
        %vm5459 = vcmask 122880
        %v5460 = vsel %vm5459, %v5457, -inf
        %5461 = vmax.xlane.f32.xlu0 %v5460
        %v5462 = vpop.xlane.xlu0 %5461
        %v5463 = vsub.f32 %v5457, %v5462
        %v5464 = vmul.f32 %v5463, 1.442695
        %v5465 = vpow.pop %v5464
        %v5466 = vsel %vm5459, %v5465, 0.0
        %5467 = vadd.xlane.f32.xlu0 %v5466
        %v5468 = vpop.xlane.xlu0 %5467
        %v5469 = vrcp.pop %v5468
        %v5470 = vmul.f32 %v5465, %v5469
        %v5472 = vsel %vm1884, %v5470, 0
        %5474 = vmatpush.msra.mxu0 0.0
        %5475 = vmatpush.msra.mxu0 0.0
        %5476 = vmatpush.msra.mxu0 0.0
        %5477 = vmatpush.msra.mxu0 0.0
        %5478 = vmatpush.msra.mxu0 0.0
        %5479 = vmatpush.msra.mxu0 0.0
        %5480 = vmatpush.msra.mxu0 0.0
        %5481 = vmatpush.msra.mxu0 0.0
        %5482 = vmatpush.msra.mxu0 0.0
        %5483 = vmatpush.msra.mxu0 0.0
        %5484 = vmatpush.msra.mxu0 0.0
        %5485 = vmatpush.msra.mxu0 0.0
        %5486 = vmatpush.msra.mxu0 0.0
        %5487 = vmatpush.msra.mxu0 0.0
        %5488 = vmatpush.msra.mxu0 %v5428
        %5489 = vmatpush.msra.mxu0 %v5425
        %5490 = vmatmul.f32.gmra.mxu0 %v5472
        %v5491 = vpop.f32.mrf.mxu0
        %v5492 = vadd.f32 0.0, %v5491
        %5493 = vdwg.mxu0
        %v5495 = vsel %vm1884, %v5492, 0
        %5497 = vmatpush.msra.mxu0 0.0
        %5498 = vmatpush.msra.mxu0 0.0
        %5499 = vmatpush.msra.mxu0 0.0
        %5500 = vmatpush.msra.mxu0 0.0
        %5501 = vmatpush.msra.mxu0 0.0
        %5502 = vmatpush.msra.mxu0 0.0
        %5503 = vmatpush.msra.mxu0 0.0
        %5504 = vmatpush.msra.mxu0 0.0
        %5505 = vmatpush.msra.mxu0 0.0
        %5506 = vmatpush.msra.mxu0 0.0
        %5507 = vmatpush.msra.mxu0 0.0
        %5508 = vmatpush.msra.mxu0 0.0
        %5509 = vmatpush.msra.mxu0 0.0
        %5510 = vmatpush.msra.mxu0 0.0
        %5511 = vmatpush.msra.mxu0 %v5272
        %5512 = vmatpush.msra.mxu0 %v5271
        %5513 = vmatmul.f32.gmra.mxu0 %v5495
        %v5514 = vpop.f32.mrf.mxu0
        %v5515 = vadd.f32 %v5273, %v5514
        %5516 = vdwg.mxu0
        %v5517 = vld [vmem:[%s107] sm:$0xff]
        %v5518 = vld [vmem:[%s107 + $0x8] sm:$0xff]
        %v5519 = vld [vmem:[%s107 + $0x10] sm:$0xff]
        %v5520 = vld [vmem:[%s107 + $0x18] sm:$0xff]
        %v5521 = vld [vmem:[#allocation8] sm:$0x1]
        %v5523 = vsel %vm1772, %v5515, 0
        %5525 = vmatpush.msra.mxu0 0.0
        %5526 = vmatpush.msra.mxu0 0.0
        %5527 = vmatpush.msra.mxu0 0.0
        %5528 = vmatpush.msra.mxu0 0.0
        %5529 = vmatpush.msra.mxu0 0.0
        %5530 = vmatpush.msra.mxu0 0.0
        %5531 = vmatpush.msra.mxu0 0.0
        %5532 = vmatpush.msra.mxu0 0.0
        %5533 = vmatpush.msra.mxu0 0.0
        %5534 = vmatpush.msra.mxu0 0.0
        %5535 = vmatpush.msra.mxu0 0.0
        %5536 = vmatpush.msra.mxu0 0.0
        %5537 = vmatpush.msra.mxu0 %v5520
        %5538 = vmatpush.msra.mxu0 %v5519
        %5539 = vmatpush.msra.mxu0 %v5518
        %5540 = vmatpush.msra.mxu0 %v5517
        %5541 = vmatmul.f32.gmra.mxu0 %v5523
        %v5542 = vpop.f32.mrf.mxu0
        %v5543 = vadd.f32 %v5521, %v5542
        %5544 = vdwg.mxu0
        %vm5545 = vcmask 57344
        %5546 = vst.msk [vmem:[%s1679] sm:$0x1] %vm5545, %v5543
        %s5547 = sand.u32 %s1296, 1
        %s5548 = scalar_lea.sflag [#allocation4], %s5547
        %s5549 = sand.u32 %s1296, 1
        %s5550 = scalar_lea.vmem [#allocation10], %s5549
        // Predicated region
        $region257: #{_lambda_.1} parent=239 // pred_check
          %p5551 = pneg %p1306
        $region258: #{_lambda_.1} parent=239 // pred_check_branch
          %5553 = sbr.rel (%p5551) target = $region260
        $region259: #{_lambda_.1} parent=239 // pred_region
          %5555 = vsyncadd %s5548, 0
          %s5556 = scalar_lea.hbm %s111, %s128
          %s5558 = sshll.u32 %s5550, 4
          %s5559 = int_to_ptr.vmem [resolvable:$true] %s5558
          %s5560 = sshll.u32 %s5556, 4
          %s5561 = int_to_ptr.hbm [resolvable:$true] %s5560
          %5563 = dma.vmem_to_hbm [thread:$0]  %s5559, 16, %s5561, %s5548
        $region260: #{_lambda_.1} parent=239 // pred_fallthru
          _
      $region240: #{_lambda_.1} parent=5 // pred_fallthru
        _
      %p5564 = scmp.le.s32.totalorder 2, %s123
      // Predicated region
      $region261: #{_lambda_.1} parent=5 // pred_check
        %p5565 = pneg %p5564
      $region262: #{_lambda_.1} parent=5 // pred_check_branch
        %5567 = sbr.rel (%p5565) target = $region264
      $region263: #{_lambda_.1} parent=5 // pred_region
        %s5568 = ssub.s32 %s123, 2
        // Predicated region
        $region265: #{_lambda_.1} parent=263 // pred_check
          %p5569 = pneg %p1312
        $region266: #{_lambda_.1} parent=263 // pred_check_branch
          %5571 = sbr.rel (%p5569) target = $region268
        $region267: #{_lambda_.1} parent=263 // pred_region
          %s5572 = sand.u32 %s1297, 1
          %s5573 = scalar_lea.sflag [#allocation4], %s5572
          %s5574 = sand.u32 %s1297, 1
          %s5575 = scalar_lea.vmem [#allocation10], %s5574
          %5577 = dma.done %s5573, 16
        $region268: #{_lambda_.1} parent=263 // pred_fallthru
          _
      $region264: #{_lambda_.1} parent=5 // pred_fallthru
        _
    $region6: #{_lambda_.1} parent=1 // loop_footer
      %s127 = sadd.s32 1, %s123
    $region7: #{_lambda_.1} parent=1 // loop_footer_branch
      %122 = sbr.rel target = $region3
    $region8: #{_lambda_.1} parent=1 // loop_exit
      _
    %5578 = vsyncpa [#allocation3], 1
    %s5579 = scalar_lea.sflag [#allocation3], 1
    %5580 = vsyncpa %s5579, 1
    %5581 = vsyncpa [#allocation6], 1
    %5582 = vsyncpa [#allocation9], 1
    %5583 = vsyncpa [#allocation4], 1
    %s5584 = scalar_lea.sflag [#allocation4], 1
    %5585 = vsyncpa %s5584, 1

</llo_original>
